<compile_context>
chip_gen: v6e
topology: v6e:2x2x1
jax: 0.10.0
libtpu: 0.0.40
codegen_flags: <defaults>
</compile_context>

<pallas_src>
import functools

import jax
import jax.numpy as jnp
from jax.experimental import pallas as pl
from jax.experimental.pallas import tpu as pltpu


# ---------------------------------------------------------------------------
# helpers
# ---------------------------------------------------------------------------
def _layernorm(x, g, b, eps=1e-5):
    mu = jnp.mean(x, axis=-1, keepdims=True)
    var = jnp.mean(jnp.square(x - mu), axis=-1, keepdims=True)
    return (x - mu) * jax.lax.rsqrt(var + eps) * g + b


def _pick_batch_tile(B, T_pad):
    """Pick Bt so M = Bt*T_pad hits the MXU row tile.

    Prefers >= 2 grid steps (so the batch axis can shard across v7x's two
    TensorCores) while keeping M >= 256 (v6e/v7x) or >= 128 (v5e); for small
    B the grid collapses to a single step (Bt = B).
    """
    divisors = [d for d in range(1, B + 1) if B % d == 0]
    for rows in (256, 128):
        cand = [d for d in divisors if d * T_pad >= rows and B // d >= 2]
        if cand:
            return min(cand)
    cand = [d for d in divisors if d * T_pad >= 128]
    if cand:
        return min(cand)
    return B


# ---------------------------------------------------------------------------
# fused kernel: patch embedding prologue + transformer blocks + final LN
# ---------------------------------------------------------------------------
def _mae_fused_kernel(num_layer, num_head, T_pad, T_valid, Bt,
                      xw_ref, add_ref, wblk_ref,
                      ln1g_ref, ln1b_ref, wqkv_ref, bqkv_ref,
                      wproj_ref, bproj_ref, ln2g_ref, ln2b_ref,
                      wfc1_ref, bfc1_ref, wfc2_ref, bfc2_ref,
                      lnfg_ref, lnfb_ref, o_ref):
    M, D = o_ref.shape                      # M = Bt * T_pad
    hd = D // num_head
    scale = float(hd) ** -0.5

    # ---- fused patch embedding: one lane-dense (M, C*P) @ (C*P, D) matmul ----
    xw = xw_ref[...].astype(jnp.bfloat16)
    x = jnp.dot(xw, wblk_ref[...], preferred_element_type=jnp.float32)
    x = x + add_ref[...]                    # proj bias + pos emb + cls (0 on pad rows)

    # pad token rows (>= T_valid) are masked out of every softmax as keys
    col = jax.lax.broadcasted_iota(jnp.int32, (T_pad, T_pad), 1)
    key_mask = jnp.where(col >= T_valid, -1e30, 0.0).astype(jnp.float32)

    # TODO(synk): for num_layer > 4 switch to lax.fori_loop with dynamic
    # weight indexing (wqkv_ref[pl.ds(l, 1)]) to bound code size / live ranges.
    # TODO(synk): for large D / num_layer, stream per-layer weights via an
    # extra "arbitrary" grid axis instead of keeping all layers resident
    # (v7x has only 64 MiB VMEM).
    for l in range(num_layer):
        # ---- multi-head self-attention (pre-norm) ----
        h = _layernorm(x, ln1g_ref[l], ln1b_ref[l])
        qkv = jnp.dot(h.astype(jnp.bfloat16), wqkv_ref[l],
                      preferred_element_type=jnp.float32) + bqkv_ref[l]
        wp = wproj_ref[l]                                   # (D, D) bf16
        y = x + bproj_ref[l]
        for hh in range(num_head):
            c0 = hh * hd
            q = qkv[:, c0:c0 + hd].reshape(Bt, T_pad, hd)
            k = qkv[:, D + c0:D + c0 + hd].reshape(Bt, T_pad, hd)
            v = qkv[:, 2 * D + c0:2 * D + c0 + hd].reshape(Bt, T_pad, hd)
            # batched over Bt; q.k contracted on the last dims (no k.T)
            s = jnp.einsum('bqd,bkd->bqk', q, k,
                           preferred_element_type=jnp.float32)
            s = s * scale + key_mask[None, :, :]
            s = s - jnp.max(s, axis=-1, keepdims=True)
            p = jnp.exp(s)
            p = p * pl.reciprocal(jnp.sum(p, axis=-1, keepdims=True))
            o_h = jnp.einsum('bqk,bkd->bqd', p, v,
                             preferred_element_type=jnp.float32)
            o_h = o_h.reshape(M, hd)
            # fold the output projection into a per-head MXU accumulation
            y = y + jnp.dot(o_h.astype(jnp.bfloat16), wp[c0:c0 + hd, :],
                            preferred_element_type=jnp.float32)
        x = y

        # ---- MLP (pre-norm) ----
        h2 = _layernorm(x, ln2g_ref[l], ln2b_ref[l])
        m = jnp.dot(h2.astype(jnp.bfloat16), wfc1_ref[l],
                    preferred_element_type=jnp.float32) + bfc1_ref[l]
        # TODO(synk): timm's Block uses exact (erf) GELU; erf lowering on
        # Mosaic is not guaranteed, so the tanh approximation is used here.
        m = jax.nn.gelu(m, approximate=True)
        x = x + jnp.dot(m.astype(jnp.bfloat16), wfc2_ref[l],
                        preferred_element_type=jnp.float32) + bfc2_ref[l]

    # final LayerNorm (self.layer_norm) -> full-tile aligned store; pad rows
    # are dropped with a plain XLA slice outside the kernel.
    o_ref[...] = _layernorm(x, lnfg_ref[...], lnfb_ref[...])


def _fused_pallas_call(xw, add_tiled, wblk, params, num_layer, num_head,
                       T_pad, T_valid, B, Bt, D):
    M_total = B * T_pad
    Mb = Bt * T_pad
    KW = xw.shape[1]
    H = params["wfc1"].shape[-1]
    hd = D // num_head

    weight_names = ["ln1_g", "ln1_b", "wqkv", "bqkv", "wproj", "bproj",
                    "ln2_g", "ln2_b", "wfc1", "bfc1", "wfc2", "bfc2",
                    "lnf_g", "lnf_b"]
    weights = [params[n] for n in weight_names]

    def const_spec(arr):
        nd = arr.ndim
        return pl.BlockSpec(arr.shape, lambda i, _nd=nd: (0,) * _nd)

    in_specs = ([pl.BlockSpec((Mb, KW), lambda i: (i, 0)),
                 const_spec(add_tiled),
                 const_spec(wblk)]
                + [const_spec(w) for w in weights])

    flops = int(2 * M_total * KW * D
                + num_layer * (2 * M_total * D * 3 * D
                               + 4 * B * num_head * T_pad * T_pad * hd
                               + 2 * M_total * D * D
                               + 4 * M_total * D * H))
    transc = int(num_layer * (B * num_head * T_pad * T_pad + M_total * H))
    bytes_accessed = int(xw.nbytes + add_tiled.nbytes + wblk.nbytes
                         + sum(int(w.nbytes) for w in weights)
                         + M_total * D * 4)

    kernel = functools.partial(_mae_fused_kernel, num_layer, num_head,
                               T_pad, T_valid, Bt)
    return pl.pallas_call(
        kernel,
        out_shape=jax.ShapeDtypeStruct((M_total, D), jnp.float32),
        grid=(B // Bt,),
        in_specs=in_specs,
        out_specs=pl.BlockSpec((Mb, D), lambda i: (i, 0)),
        compiler_params=pltpu.CompilerParams(
            dimension_semantics=("parallel",)),
        cost_estimate=pl.CostEstimate(flops=flops, transcendentals=transc,
                                      bytes_accessed=bytes_accessed),
    )(xw, add_tiled, wblk, *weights)


# ---------------------------------------------------------------------------
# parameter init (deterministic, synthetic) + forward wrapper
# ---------------------------------------------------------------------------
def init_params(key, num_channels, patch_size, emb_dim, num_layer, seq_len):
    C, E, L = num_channels, emb_dim, num_layer
    D = C * E
    H = 4 * D
    ks = jax.random.split(key, 8)
    bf = jnp.bfloat16

    def nrm(k, shape, std=0.02, dtype=jnp.float32):
        return (std * jax.random.normal(k, shape)).astype(dtype)

    return {
        "proj_w": nrm(ks[0], (patch_size, E)),
        "proj_b": jnp.zeros((E,), jnp.float32),
        "cls_token": nrm(ks[1], (1, 1, 1, E)),              # trunc_normal_ ~ N(0,.02)
        "pos_embedding": nrm(ks[2], (1, C, seq_len + 1, E)),
        "ln1_g": jnp.ones((L, 1, D), jnp.float32),
        "ln1_b": jnp.zeros((L, 1, D), jnp.float32),
        "wqkv": nrm(ks[3], (L, D, 3 * D), dtype=bf),
        "bqkv": jnp.zeros((L, 1, 3 * D), jnp.float32),
        "wproj": nrm(ks[4], (L, D, D), dtype=bf),
        "bproj": jnp.zeros((L, 1, D), jnp.float32),
        "ln2_g": jnp.ones((L, 1, D), jnp.float32),
        "ln2_b": jnp.zeros((L, 1, D), jnp.float32),
        "wfc1": nrm(ks[5], (L, D, H), dtype=bf),
        "bfc1": jnp.zeros((L, 1, H), jnp.float32),
        "wfc2": nrm(ks[6], (L, H, D), dtype=bf),
        "bfc2": jnp.zeros((L, 1, D), jnp.float32),
        "lnf_g": jnp.ones((1, D), jnp.float32),
        "lnf_b": jnp.zeros((1, D), jnp.float32),
    }


def mae_encoder_forward(img, params, patch_size, emb_dim, num_layer, num_head,
                        batch_tile=None):
    B, C, L = img.shape
    P = patch_size
    S = L // P
    T = S + 1
    E = emb_dim
    D = C * E
    T_pad = ((T + 7) // 8) * 8          # pad tokens to the sublane tile (9 -> 16)
    n_groups = D // E                   # == C (c,t) token-rows packed per 128-wide row
    KW = n_groups * P

    if batch_tile is None:
        batch_tile = _pick_batch_tile(B, T_pad)
    Bt = batch_tile
    assert B % Bt == 0

    # --- wrapper-side layout plumbing (cheap XLA ops; no compute hoisted) ---
    # img.unfold(2, P, P) with step == size is a pure reshape.
    patches = img.reshape(B, C, S, P)
    # Insert a zero "patch" in the cls slot (its value is supplied additively
    # below), zero-pad the (c, t) token rows to T_pad*C, then regroup C
    # consecutive E-wide token rows into one D-wide transformer row.  This raw
    # regrouping reproduces torch's `.view(B, T, C*E)` of the contiguous
    # (B, C, T, E) tensor exactly (it interleaves channels and tokens).
    aug = jnp.pad(patches, ((0, 0), (0, 0), (1, 0), (0, 0)))      # (B, C, T, P)
    flat = aug.reshape(B, C * T, P)
    flat = jnp.pad(flat, ((0, 0), (0, T_pad * n_groups - C * T), (0, 0)))
    xw = flat.reshape(B * T_pad, KW)                              # (B*T_pad, C*P)

    # block-diagonal projection weight so the embed is ONE lane-dense matmul
    wp = params["proj_w"].astype(jnp.bfloat16)
    wblk = jnp.zeros((KW, D), jnp.bfloat16)
    for g in range(n_groups):
        wblk = wblk.at[g * P:(g + 1) * P, g * E:(g + 1) * E].set(wp)

    # additive term: proj bias + pos embedding on patch rows, cls + pos on the
    # cls rows, zeros on pad rows; laid out in the same scrambled row layout.
    pos = params["pos_embedding"][0].astype(jnp.float32)          # (C, T, E)
    cls = params["cls_token"][0, 0, 0].astype(jnp.float32)        # (E,)
    bias = params["proj_b"].reshape(E).astype(jnp.float32)
    add = pos.at[:, 1:, :].add(bias[None, None, :])
    add = add.at[:, 0, :].add(cls[None, :])
    add_rows = jnp.pad(add.reshape(C * T * E),
                       (0, T_pad * D - C * T * E)).reshape(T_pad, D)
    add_tiled = jnp.tile(add_rows, (Bt, 1))                       # (Bt*T_pad, D)

    out = _fused_pallas_call(xw, add_tiled, wblk, params,
                             num_layer, num_head, T_pad, T, B, Bt, D)

    # drop the pad token rows outside the kernel (store inside is full-tile),
    # then torch's features.view(B, C, T, E) raw reinterpretation.
    feats = out.reshape(B, T_pad, D)[:, :T, :].reshape(B, C, T, E)

    # PatchShuffle with mask_ratio=0 keeps every patch in original order.
    # TODO(synk): patch_indices come from random.sample in PyTorch (non-
    # deterministic, unused for compute at mask_ratio=0); returned as ranges.
    patch_indices = [[list(range(S)) for _ in range(C)] for _ in range(B)]
    return feats, patch_indices


if __name__ == "__main__":
    # module hardcodes a signal length of 3840; large patch_size keeps the
    # sequence short: S = 3840 / 480 = 8 patches per channel, T = 9 tokens.
    batch_size = 2
    num_channels = 4
    patch_size = 480
    emb_dim = 32
    num_layer = 2
    num_head = 4
    sig_len = 3840
    S = sig_len // patch_size

    key = jax.random.PRNGKey(0)
    k_img, k_par = jax.random.split(key)
    img = jax.random.normal(k_img, (batch_size, num_channels, sig_len),
                            dtype=jnp.float32)
    params = init_params(k_par, num_channels, patch_size, emb_dim,
                         num_layer, S)

    feats, patch_indices = mae_encoder_forward(
        img, params, patch_size, emb_dim, num_layer, num_head)
    feats = jax.block_until_ready(feats)

    assert feats.shape == (batch_size, num_channels, S + 1, emb_dim)
    assert feats.dtype == jnp.float32
    assert bool(jnp.all(jnp.isfinite(feats)))
    print("KERNEL_OK")
</pallas_src>

<mosaic_0001>
module attributes {stable_mosaic.version = 11 : i64} {
  func.func @_mae_fused_kernel(%arg0: i32, %arg1: memref<32x1920xf32, #tpu.memory_space<vmem>>, %arg2: memref<32x128xf32, #tpu.memory_space<vmem>>, %arg3: memref<1920x128xbf16, #tpu.memory_space<vmem>>, %arg4: memref<2x1x128xf32, #tpu.memory_space<vmem>>, %arg5: memref<2x1x128xf32, #tpu.memory_space<vmem>>, %arg6: memref<2x128x384xbf16, #tpu.memory_space<vmem>>, %arg7: memref<2x1x384xf32, #tpu.memory_space<vmem>>, %arg8: memref<2x128x128xbf16, #tpu.memory_space<vmem>>, %arg9: memref<2x1x128xf32, #tpu.memory_space<vmem>>, %arg10: memref<2x1x128xf32, #tpu.memory_space<vmem>>, %arg11: memref<2x1x128xf32, #tpu.memory_space<vmem>>, %arg12: memref<2x128x512xbf16, #tpu.memory_space<vmem>>, %arg13: memref<2x1x512xf32, #tpu.memory_space<vmem>>, %arg14: memref<2x512x128xbf16, #tpu.memory_space<vmem>>, %arg15: memref<2x1x128xf32, #tpu.memory_space<vmem>>, %arg16: memref<1x128xf32, #tpu.memory_space<vmem>>, %arg17: memref<1x128xf32, #tpu.memory_space<vmem>>, %arg18: memref<32x128xf32, #tpu.memory_space<vmem>>) attributes {dimension_semantics = [#tpu.dimension_semantics<parallel>], iteration_bounds = array<i64: 1>, scalar_prefetch = 0 : i64, scratch_operands = 0 : i64, tpu.core_type = #tpu.core_type<tc>, window_params = [{transform_indices = @transform_0, window_bounds = array<i64: 32, 1920>}, {pipeline_mode = #tpu.pipeline_mode<synchronous>, transform_indices = @transform_1, window_bounds = array<i64: 32, 128>}, {pipeline_mode = #tpu.pipeline_mode<synchronous>, transform_indices = @transform_2, window_bounds = array<i64: 1920, 128>}, {pipeline_mode = #tpu.pipeline_mode<synchronous>, transform_indices = @transform_3, window_bounds = array<i64: 2, 1, 128>}, {pipeline_mode = #tpu.pipeline_mode<synchronous>, transform_indices = @transform_4, window_bounds = array<i64: 2, 1, 128>}, {pipeline_mode = #tpu.pipeline_mode<synchronous>, transform_indices = @transform_5, window_bounds = array<i64: 2, 128, 384>}, {pipeline_mode = #tpu.pipeline_mode<synchronous>, transform_indices = @transform_6, window_bounds = array<i64: 2, 1, 384>}, {pipeline_mode = #tpu.pipeline_mode<synchronous>, transform_indices = @transform_7, window_bounds = array<i64: 2, 128, 128>}, {pipeline_mode = #tpu.pipeline_mode<synchronous>, transform_indices = @transform_8, window_bounds = array<i64: 2, 1, 128>}, {pipeline_mode = #tpu.pipeline_mode<synchronous>, transform_indices = @transform_9, window_bounds = array<i64: 2, 1, 128>}, {pipeline_mode = #tpu.pipeline_mode<synchronous>, transform_indices = @transform_10, window_bounds = array<i64: 2, 1, 128>}, {pipeline_mode = #tpu.pipeline_mode<synchronous>, transform_indices = @transform_11, window_bounds = array<i64: 2, 128, 512>}, {pipeline_mode = #tpu.pipeline_mode<synchronous>, transform_indices = @transform_12, window_bounds = array<i64: 2, 1, 512>}, {pipeline_mode = #tpu.pipeline_mode<synchronous>, transform_indices = @transform_13, window_bounds = array<i64: 2, 512, 128>}, {pipeline_mode = #tpu.pipeline_mode<synchronous>, transform_indices = @transform_14, window_bounds = array<i64: 2, 1, 128>}, {pipeline_mode = #tpu.pipeline_mode<synchronous>, transform_indices = @transform_15, window_bounds = array<i64: 1, 128>}, {pipeline_mode = #tpu.pipeline_mode<synchronous>, transform_indices = @transform_16, window_bounds = array<i64: 1, 128>}, {transform_indices = @transform_17, window_bounds = array<i64: 32, 128>}]} {
    %c0 = arith.constant 0 : index
    %c0_0 = arith.constant 0 : index
    %0 = vector.load %arg1[%c0, %c0_0] : memref<32x1920xf32, #tpu.memory_space<vmem>>, vector<32x1920xf32>
    %1 = arith.truncf %0 : vector<32x1920xf32> to vector<32x1920xbf16>
    %c0_1 = arith.constant 0 : index
    %c0_2 = arith.constant 0 : index
    %2 = vector.load %arg3[%c0_1, %c0_2] : memref<1920x128xbf16, #tpu.memory_space<vmem>>, vector<1920x128xbf16>
    %cst = arith.constant dense<0.000000e+00> : vector<32x128xf32>
    %3 = tpu.matmul %1, %2, %cst {dimension_numbers = #tpu.dot_dimension_numbers<[1], [0], [0], [1], [0, 0, 1, 1], [], []>} : vector<32x1920xbf16>, vector<1920x128xbf16>, vector<32x128xf32> -> vector<32x128xf32>
    %c0_3 = arith.constant 0 : index
    %c0_4 = arith.constant 0 : index
    %4 = vector.load %arg2[%c0_3, %c0_4] : memref<32x128xf32, #tpu.memory_space<vmem>>, vector<32x128xf32>
    %5 = arith.addf %3, %4 : vector<32x128xf32>
    %6 = tpu.iota {dimensions = array<i32: 1>} : vector<16x16xi32>
    %c9_i32 = arith.constant 9 : i32
    %7 = vector.broadcast %c9_i32 : i32 to vector<16x16xi32>
    %8 = arith.cmpi sge, %6, %7 : vector<16x16xi32>
    %cst_5 = arith.constant -1.000000e+30 : f32
    %cst_6 = arith.constant 0.000000e+00 : f32
    %9 = vector.broadcast %cst_5 : f32 to vector<16x16xf32>
    %10 = vector.broadcast %cst_6 : f32 to vector<16x16xf32>
    %11 = arith.select %8, %9, %10 : vector<16x16xi1>, vector<16x16xf32>
    %c0_7 = arith.constant 0 : index
    %c0_8 = arith.constant 0 : index
    %c0_9 = arith.constant 0 : index
    %12 = vector.load %arg4[%c0_7, %c0_8, %c0_9] : memref<2x1x128xf32, #tpu.memory_space<vmem>>, vector<1x1x128xf32>
    %13 = vector.shape_cast %12 : vector<1x1x128xf32> to vector<1x128xf32>
    %c0_10 = arith.constant 0 : index
    %c0_11 = arith.constant 0 : index
    %c0_12 = arith.constant 0 : index
    %14 = vector.load %arg5[%c0_10, %c0_11, %c0_12] : memref<2x1x128xf32, #tpu.memory_space<vmem>>, vector<1x1x128xf32>
    %15 = vector.shape_cast %14 : vector<1x1x128xf32> to vector<1x128xf32>
    %cst_13 = arith.constant dense<0.000000e+00> : vector<32xf32>
    %16 = vector.multi_reduction <add>, %5, %cst_13 [1] : vector<32x128xf32> to vector<32xf32>
    %17 = vector.shape_cast %16 : vector<32xf32> to vector<32x1xf32>
    %cst_14 = arith.constant 1.280000e+02 : f32
    %18 = vector.broadcast %cst_14 : f32 to vector<32x1xf32>
    %19 = arith.divf %17, %18 : vector<32x1xf32>
    %20 = vector.broadcast %19 : vector<32x1xf32> to vector<32x128xf32>
    %21 = arith.subf %5, %20 : vector<32x128xf32>
    %22 = arith.mulf %21, %21 : vector<32x128xf32>
    %cst_15 = arith.constant dense<0.000000e+00> : vector<32xf32>
    %23 = vector.multi_reduction <add>, %22, %cst_15 [1] : vector<32x128xf32> to vector<32xf32>
    %24 = vector.shape_cast %23 : vector<32xf32> to vector<32x1xf32>
    %cst_16 = arith.constant 1.280000e+02 : f32
    %25 = vector.broadcast %cst_16 : f32 to vector<32x1xf32>
    %26 = arith.divf %24, %25 : vector<32x1xf32>
    %27 = vector.broadcast %19 : vector<32x1xf32> to vector<32x128xf32>
    %28 = arith.subf %5, %27 : vector<32x128xf32>
    %cst_17 = arith.constant 9.99999974E-6 : f32
    %29 = vector.broadcast %cst_17 : f32 to vector<32x1xf32>
    %30 = arith.addf %26, %29 : vector<32x1xf32>
    %31 = math.rsqrt %30 : vector<32x1xf32>
    %32 = vector.broadcast %31 : vector<32x1xf32> to vector<32x128xf32>
    %33 = arith.mulf %28, %32 : vector<32x128xf32>
    %34 = vector.broadcast %13 : vector<1x128xf32> to vector<32x128xf32>
    %35 = arith.mulf %33, %34 : vector<32x128xf32>
    %36 = vector.broadcast %15 : vector<1x128xf32> to vector<32x128xf32>
    %37 = arith.addf %35, %36 : vector<32x128xf32>
    %38 = arith.truncf %37 : vector<32x128xf32> to vector<32x128xbf16>
    %c0_18 = arith.constant 0 : index
    %c0_19 = arith.constant 0 : index
    %c0_20 = arith.constant 0 : index
    %39 = vector.load %arg6[%c0_18, %c0_19, %c0_20] : memref<2x128x384xbf16, #tpu.memory_space<vmem>>, vector<1x128x384xbf16>
    %40 = vector.shape_cast %39 : vector<1x128x384xbf16> to vector<128x384xbf16>
    %cst_21 = arith.constant dense<0.000000e+00> : vector<32x384xf32>
    %41 = tpu.matmul %38, %40, %cst_21 {dimension_numbers = #tpu.dot_dimension_numbers<[1], [0], [0], [1], [0, 0, 1, 1], [], []>} : vector<32x128xbf16>, vector<128x384xbf16>, vector<32x384xf32> -> vector<32x384xf32>
    %c0_22 = arith.constant 0 : index
    %c0_23 = arith.constant 0 : index
    %c0_24 = arith.constant 0 : index
    %42 = vector.load %arg7[%c0_22, %c0_23, %c0_24] : memref<2x1x384xf32, #tpu.memory_space<vmem>>, vector<1x1x384xf32>
    %43 = vector.shape_cast %42 : vector<1x1x384xf32> to vector<1x384xf32>
    %44 = vector.broadcast %43 : vector<1x384xf32> to vector<32x384xf32>
    %45 = arith.addf %41, %44 : vector<32x384xf32>
    %c0_25 = arith.constant 0 : index
    %c0_26 = arith.constant 0 : index
    %c0_27 = arith.constant 0 : index
    %46 = vector.load %arg8[%c0_25, %c0_26, %c0_27] : memref<2x128x128xbf16, #tpu.memory_space<vmem>>, vector<1x128x128xbf16>
    %47 = vector.shape_cast %46 : vector<1x128x128xbf16> to vector<128x128xbf16>
    %c0_28 = arith.constant 0 : index
    %c0_29 = arith.constant 0 : index
    %c0_30 = arith.constant 0 : index
    %48 = vector.load %arg9[%c0_28, %c0_29, %c0_30] : memref<2x1x128xf32, #tpu.memory_space<vmem>>, vector<1x1x128xf32>
    %49 = vector.shape_cast %48 : vector<1x1x128xf32> to vector<1x128xf32>
    %50 = vector.broadcast %49 : vector<1x128xf32> to vector<32x128xf32>
    %51 = arith.addf %5, %50 : vector<32x128xf32>
    %52 = vector.extract_strided_slice %45 {offsets = [0, 0], sizes = [32, 32], strides = [1, 1]} : vector<32x384xf32> to vector<32x32xf32>
    %53 = vector.shape_cast %52 : vector<32x32xf32> to vector<2x16x32xf32>
    %54 = vector.extract_strided_slice %45 {offsets = [0, 128], sizes = [32, 32], strides = [1, 1]} : vector<32x384xf32> to vector<32x32xf32>
    %55 = vector.shape_cast %54 : vector<32x32xf32> to vector<2x16x32xf32>
    %56 = vector.extract_strided_slice %45 {offsets = [0, 256], sizes = [32, 32], strides = [1, 1]} : vector<32x384xf32> to vector<32x32xf32>
    %57 = vector.shape_cast %56 : vector<32x32xf32> to vector<2x16x32xf32>
    "tpu.trace_start"() <{level = 10 : i32, message = "bqd,bkd->bqk"}> : () -> ()
    %cst_31 = arith.constant dense<0.000000e+00> : vector<2x16x16xf32>
    %58 = tpu.matmul %53, %55, %cst_31 {dimension_numbers = #tpu.dot_dimension_numbers<[2], [2], [1], [1], [0, 0, 0, 1, 1, 1], [0], [0]>} : vector<2x16x32xf32>, vector<2x16x32xf32>, vector<2x16x16xf32> -> vector<2x16x16xf32>
    "tpu.trace_stop"() : () -> ()
    %cst_32 = arith.constant 0.176776692 : f32
    %59 = vector.broadcast %cst_32 : f32 to vector<2x16x16xf32>
    %60 = arith.mulf %58, %59 : vector<2x16x16xf32>
    %61 = vector.shape_cast %11 : vector<16x16xf32> to vector<1x16x16xf32>
    %62 = vector.broadcast %61 : vector<1x16x16xf32> to vector<2x16x16xf32>
    %63 = arith.addf %60, %62 : vector<2x16x16xf32>
    %cst_33 = arith.constant dense<0xFF800000> : vector<2x16xf32>
    %64 = vector.multi_reduction <maximumf>, %63, %cst_33 [2] : vector<2x16x16xf32> to vector<2x16xf32>
    %65 = vector.shape_cast %64 : vector<2x16xf32> to vector<2x16x1xf32>
    %66 = vector.broadcast %65 : vector<2x16x1xf32> to vector<2x16x16xf32>
    %67 = arith.subf %63, %66 : vector<2x16x16xf32>
    %68 = math.exp %67 : vector<2x16x16xf32>
    %cst_34 = arith.constant dense<0.000000e+00> : vector<2x16xf32>
    %69 = vector.multi_reduction <add>, %68, %cst_34 [2] : vector<2x16x16xf32> to vector<2x16xf32>
    %70 = vector.shape_cast %69 : vector<2x16xf32> to vector<2x16x1xf32>
    %71 = tpu.reciprocal %70 : vector<2x16x1xf32> -> vector<2x16x1xf32>
    %72 = vector.broadcast %71 : vector<2x16x1xf32> to vector<2x16x16xf32>
    %73 = arith.mulf %68, %72 : vector<2x16x16xf32>
    "tpu.trace_start"() <{level = 10 : i32, message = "bqk,bkd->bqd"}> : () -> ()
    %cst_35 = arith.constant dense<0.000000e+00> : vector<2x16x32xf32>
    %74 = tpu.matmul %73, %57, %cst_35 {dimension_numbers = #tpu.dot_dimension_numbers<[2], [1], [1], [2], [0, 0, 0, 1, 1, 2], [0], [0]>} : vector<2x16x16xf32>, vector<2x16x32xf32>, vector<2x16x32xf32> -> vector<2x16x32xf32>
    "tpu.trace_stop"() : () -> ()
    %75 = vector.shape_cast %74 : vector<2x16x32xf32> to vector<32x32xf32>
    %76 = arith.truncf %75 : vector<32x32xf32> to vector<32x32xbf16>
    %77 = vector.extract_strided_slice %47 {offsets = [0, 0], sizes = [32, 128], strides = [1, 1]} : vector<128x128xbf16> to vector<32x128xbf16>
    %cst_36 = arith.constant dense<0.000000e+00> : vector<32x128xf32>
    %78 = tpu.matmul %76, %77, %cst_36 {dimension_numbers = #tpu.dot_dimension_numbers<[1], [0], [0], [1], [0, 0, 1, 1], [], []>} : vector<32x32xbf16>, vector<32x128xbf16>, vector<32x128xf32> -> vector<32x128xf32>
    %79 = arith.addf %51, %78 : vector<32x128xf32>
    %80 = vector.extract_strided_slice %45 {offsets = [0, 32], sizes = [32, 32], strides = [1, 1]} : vector<32x384xf32> to vector<32x32xf32>
    %81 = vector.shape_cast %80 : vector<32x32xf32> to vector<2x16x32xf32>
    %82 = vector.extract_strided_slice %45 {offsets = [0, 160], sizes = [32, 32], strides = [1, 1]} : vector<32x384xf32> to vector<32x32xf32>
    %83 = vector.shape_cast %82 : vector<32x32xf32> to vector<2x16x32xf32>
    %84 = vector.extract_strided_slice %45 {offsets = [0, 288], sizes = [32, 32], strides = [1, 1]} : vector<32x384xf32> to vector<32x32xf32>
    %85 = vector.shape_cast %84 : vector<32x32xf32> to vector<2x16x32xf32>
    "tpu.trace_start"() <{level = 10 : i32, message = "bqd,bkd->bqk"}> : () -> ()
    %cst_37 = arith.constant dense<0.000000e+00> : vector<2x16x16xf32>
    %86 = tpu.matmul %81, %83, %cst_37 {dimension_numbers = #tpu.dot_dimension_numbers<[2], [2], [1], [1], [0, 0, 0, 1, 1, 1], [0], [0]>} : vector<2x16x32xf32>, vector<2x16x32xf32>, vector<2x16x16xf32> -> vector<2x16x16xf32>
    "tpu.trace_stop"() : () -> ()
    %cst_38 = arith.constant 0.176776692 : f32
    %87 = vector.broadcast %cst_38 : f32 to vector<2x16x16xf32>
    %88 = arith.mulf %86, %87 : vector<2x16x16xf32>
    %89 = vector.shape_cast %11 : vector<16x16xf32> to vector<1x16x16xf32>
    %90 = vector.broadcast %89 : vector<1x16x16xf32> to vector<2x16x16xf32>
    %91 = arith.addf %88, %90 : vector<2x16x16xf32>
    %cst_39 = arith.constant dense<0xFF800000> : vector<2x16xf32>
    %92 = vector.multi_reduction <maximumf>, %91, %cst_39 [2] : vector<2x16x16xf32> to vector<2x16xf32>
    %93 = vector.shape_cast %92 : vector<2x16xf32> to vector<2x16x1xf32>
    %94 = vector.broadcast %93 : vector<2x16x1xf32> to vector<2x16x16xf32>
    %95 = arith.subf %91, %94 : vector<2x16x16xf32>
    %96 = math.exp %95 : vector<2x16x16xf32>
    %cst_40 = arith.constant dense<0.000000e+00> : vector<2x16xf32>
    %97 = vector.multi_reduction <add>, %96, %cst_40 [2] : vector<2x16x16xf32> to vector<2x16xf32>
    %98 = vector.shape_cast %97 : vector<2x16xf32> to vector<2x16x1xf32>
    %99 = tpu.reciprocal %98 : vector<2x16x1xf32> -> vector<2x16x1xf32>
    %100 = vector.broadcast %99 : vector<2x16x1xf32> to vector<2x16x16xf32>
    %101 = arith.mulf %96, %100 : vector<2x16x16xf32>
    "tpu.trace_start"() <{level = 10 : i32, message = "bqk,bkd->bqd"}> : () -> ()
    %cst_41 = arith.constant dense<0.000000e+00> : vector<2x16x32xf32>
    %102 = tpu.matmul %101, %85, %cst_41 {dimension_numbers = #tpu.dot_dimension_numbers<[2], [1], [1], [2], [0, 0, 0, 1, 1, 2], [0], [0]>} : vector<2x16x16xf32>, vector<2x16x32xf32>, vector<2x16x32xf32> -> vector<2x16x32xf32>
    "tpu.trace_stop"() : () -> ()
    %103 = vector.shape_cast %102 : vector<2x16x32xf32> to vector<32x32xf32>
    %104 = arith.truncf %103 : vector<32x32xf32> to vector<32x32xbf16>
    %105 = vector.extract_strided_slice %47 {offsets = [32, 0], sizes = [32, 128], strides = [1, 1]} : vector<128x128xbf16> to vector<32x128xbf16>
    %cst_42 = arith.constant dense<0.000000e+00> : vector<32x128xf32>
    %106 = tpu.matmul %104, %105, %cst_42 {dimension_numbers = #tpu.dot_dimension_numbers<[1], [0], [0], [1], [0, 0, 1, 1], [], []>} : vector<32x32xbf16>, vector<32x128xbf16>, vector<32x128xf32> -> vector<32x128xf32>
    %107 = arith.addf %79, %106 : vector<32x128xf32>
    %108 = vector.extract_strided_slice %45 {offsets = [0, 64], sizes = [32, 32], strides = [1, 1]} : vector<32x384xf32> to vector<32x32xf32>
    %109 = vector.shape_cast %108 : vector<32x32xf32> to vector<2x16x32xf32>
    %110 = vector.extract_strided_slice %45 {offsets = [0, 192], sizes = [32, 32], strides = [1, 1]} : vector<32x384xf32> to vector<32x32xf32>
    %111 = vector.shape_cast %110 : vector<32x32xf32> to vector<2x16x32xf32>
    %112 = vector.extract_strided_slice %45 {offsets = [0, 320], sizes = [32, 32], strides = [1, 1]} : vector<32x384xf32> to vector<32x32xf32>
    %113 = vector.shape_cast %112 : vector<32x32xf32> to vector<2x16x32xf32>
    "tpu.trace_start"() <{level = 10 : i32, message = "bqd,bkd->bqk"}> : () -> ()
    %cst_43 = arith.constant dense<0.000000e+00> : vector<2x16x16xf32>
    %114 = tpu.matmul %109, %111, %cst_43 {dimension_numbers = #tpu.dot_dimension_numbers<[2], [2], [1], [1], [0, 0, 0, 1, 1, 1], [0], [0]>} : vector<2x16x32xf32>, vector<2x16x32xf32>, vector<2x16x16xf32> -> vector<2x16x16xf32>
    "tpu.trace_stop"() : () -> ()
    %cst_44 = arith.constant 0.176776692 : f32
    %115 = vector.broadcast %cst_44 : f32 to vector<2x16x16xf32>
    %116 = arith.mulf %114, %115 : vector<2x16x16xf32>
    %117 = vector.shape_cast %11 : vector<16x16xf32> to vector<1x16x16xf32>
    %118 = vector.broadcast %117 : vector<1x16x16xf32> to vector<2x16x16xf32>
    %119 = arith.addf %116, %118 : vector<2x16x16xf32>
    %cst_45 = arith.constant dense<0xFF800000> : vector<2x16xf32>
    %120 = vector.multi_reduction <maximumf>, %119, %cst_45 [2] : vector<2x16x16xf32> to vector<2x16xf32>
    %121 = vector.shape_cast %120 : vector<2x16xf32> to vector<2x16x1xf32>
    %122 = vector.broadcast %121 : vector<2x16x1xf32> to vector<2x16x16xf32>
    %123 = arith.subf %119, %122 : vector<2x16x16xf32>
    %124 = math.exp %123 : vector<2x16x16xf32>
    %cst_46 = arith.constant dense<0.000000e+00> : vector<2x16xf32>
    %125 = vector.multi_reduction <add>, %124, %cst_46 [2] : vector<2x16x16xf32> to vector<2x16xf32>
    %126 = vector.shape_cast %125 : vector<2x16xf32> to vector<2x16x1xf32>
    %127 = tpu.reciprocal %126 : vector<2x16x1xf32> -> vector<2x16x1xf32>
    %128 = vector.broadcast %127 : vector<2x16x1xf32> to vector<2x16x16xf32>
    %129 = arith.mulf %124, %128 : vector<2x16x16xf32>
    "tpu.trace_start"() <{level = 10 : i32, message = "bqk,bkd->bqd"}> : () -> ()
    %cst_47 = arith.constant dense<0.000000e+00> : vector<2x16x32xf32>
    %130 = tpu.matmul %129, %113, %cst_47 {dimension_numbers = #tpu.dot_dimension_numbers<[2], [1], [1], [2], [0, 0, 0, 1, 1, 2], [0], [0]>} : vector<2x16x16xf32>, vector<2x16x32xf32>, vector<2x16x32xf32> -> vector<2x16x32xf32>
    "tpu.trace_stop"() : () -> ()
    %131 = vector.shape_cast %130 : vector<2x16x32xf32> to vector<32x32xf32>
    %132 = arith.truncf %131 : vector<32x32xf32> to vector<32x32xbf16>
    %133 = vector.extract_strided_slice %47 {offsets = [64, 0], sizes = [32, 128], strides = [1, 1]} : vector<128x128xbf16> to vector<32x128xbf16>
    %cst_48 = arith.constant dense<0.000000e+00> : vector<32x128xf32>
    %134 = tpu.matmul %132, %133, %cst_48 {dimension_numbers = #tpu.dot_dimension_numbers<[1], [0], [0], [1], [0, 0, 1, 1], [], []>} : vector<32x32xbf16>, vector<32x128xbf16>, vector<32x128xf32> -> vector<32x128xf32>
    %135 = arith.addf %107, %134 : vector<32x128xf32>
    %136 = vector.extract_strided_slice %45 {offsets = [0, 96], sizes = [32, 32], strides = [1, 1]} : vector<32x384xf32> to vector<32x32xf32>
    %137 = vector.shape_cast %136 : vector<32x32xf32> to vector<2x16x32xf32>
    %138 = vector.extract_strided_slice %45 {offsets = [0, 224], sizes = [32, 32], strides = [1, 1]} : vector<32x384xf32> to vector<32x32xf32>
    %139 = vector.shape_cast %138 : vector<32x32xf32> to vector<2x16x32xf32>
    %140 = vector.extract_strided_slice %45 {offsets = [0, 352], sizes = [32, 32], strides = [1, 1]} : vector<32x384xf32> to vector<32x32xf32>
    %141 = vector.shape_cast %140 : vector<32x32xf32> to vector<2x16x32xf32>
    "tpu.trace_start"() <{level = 10 : i32, message = "bqd,bkd->bqk"}> : () -> ()
    %cst_49 = arith.constant dense<0.000000e+00> : vector<2x16x16xf32>
    %142 = tpu.matmul %137, %139, %cst_49 {dimension_numbers = #tpu.dot_dimension_numbers<[2], [2], [1], [1], [0, 0, 0, 1, 1, 1], [0], [0]>} : vector<2x16x32xf32>, vector<2x16x32xf32>, vector<2x16x16xf32> -> vector<2x16x16xf32>
    "tpu.trace_stop"() : () -> ()
    %cst_50 = arith.constant 0.176776692 : f32
    %143 = vector.broadcast %cst_50 : f32 to vector<2x16x16xf32>
    %144 = arith.mulf %142, %143 : vector<2x16x16xf32>
    %145 = vector.shape_cast %11 : vector<16x16xf32> to vector<1x16x16xf32>
    %146 = vector.broadcast %145 : vector<1x16x16xf32> to vector<2x16x16xf32>
    %147 = arith.addf %144, %146 : vector<2x16x16xf32>
    %cst_51 = arith.constant dense<0xFF800000> : vector<2x16xf32>
    %148 = vector.multi_reduction <maximumf>, %147, %cst_51 [2] : vector<2x16x16xf32> to vector<2x16xf32>
    %149 = vector.shape_cast %148 : vector<2x16xf32> to vector<2x16x1xf32>
    %150 = vector.broadcast %149 : vector<2x16x1xf32> to vector<2x16x16xf32>
    %151 = arith.subf %147, %150 : vector<2x16x16xf32>
    %152 = math.exp %151 : vector<2x16x16xf32>
    %cst_52 = arith.constant dense<0.000000e+00> : vector<2x16xf32>
    %153 = vector.multi_reduction <add>, %152, %cst_52 [2] : vector<2x16x16xf32> to vector<2x16xf32>
    %154 = vector.shape_cast %153 : vector<2x16xf32> to vector<2x16x1xf32>
    %155 = tpu.reciprocal %154 : vector<2x16x1xf32> -> vector<2x16x1xf32>
    %156 = vector.broadcast %155 : vector<2x16x1xf32> to vector<2x16x16xf32>
    %157 = arith.mulf %152, %156 : vector<2x16x16xf32>
    "tpu.trace_start"() <{level = 10 : i32, message = "bqk,bkd->bqd"}> : () -> ()
    %cst_53 = arith.constant dense<0.000000e+00> : vector<2x16x32xf32>
    %158 = tpu.matmul %157, %141, %cst_53 {dimension_numbers = #tpu.dot_dimension_numbers<[2], [1], [1], [2], [0, 0, 0, 1, 1, 2], [0], [0]>} : vector<2x16x16xf32>, vector<2x16x32xf32>, vector<2x16x32xf32> -> vector<2x16x32xf32>
    "tpu.trace_stop"() : () -> ()
    %159 = vector.shape_cast %158 : vector<2x16x32xf32> to vector<32x32xf32>
    %160 = arith.truncf %159 : vector<32x32xf32> to vector<32x32xbf16>
    %161 = vector.extract_strided_slice %47 {offsets = [96, 0], sizes = [32, 128], strides = [1, 1]} : vector<128x128xbf16> to vector<32x128xbf16>
    %cst_54 = arith.constant dense<0.000000e+00> : vector<32x128xf32>
    %162 = tpu.matmul %160, %161, %cst_54 {dimension_numbers = #tpu.dot_dimension_numbers<[1], [0], [0], [1], [0, 0, 1, 1], [], []>} : vector<32x32xbf16>, vector<32x128xbf16>, vector<32x128xf32> -> vector<32x128xf32>
    %163 = arith.addf %135, %162 : vector<32x128xf32>
    %c0_55 = arith.constant 0 : index
    %c0_56 = arith.constant 0 : index
    %c0_57 = arith.constant 0 : index
    %164 = vector.load %arg10[%c0_55, %c0_56, %c0_57] : memref<2x1x128xf32, #tpu.memory_space<vmem>>, vector<1x1x128xf32>
    %165 = vector.shape_cast %164 : vector<1x1x128xf32> to vector<1x128xf32>
    %c0_58 = arith.constant 0 : index
    %c0_59 = arith.constant 0 : index
    %c0_60 = arith.constant 0 : index
    %166 = vector.load %arg11[%c0_58, %c0_59, %c0_60] : memref<2x1x128xf32, #tpu.memory_space<vmem>>, vector<1x1x128xf32>
    %167 = vector.shape_cast %166 : vector<1x1x128xf32> to vector<1x128xf32>
    %cst_61 = arith.constant dense<0.000000e+00> : vector<32xf32>
    %168 = vector.multi_reduction <add>, %163, %cst_61 [1] : vector<32x128xf32> to vector<32xf32>
    %169 = vector.shape_cast %168 : vector<32xf32> to vector<32x1xf32>
    %cst_62 = arith.constant 1.280000e+02 : f32
    %170 = vector.broadcast %cst_62 : f32 to vector<32x1xf32>
    %171 = arith.divf %169, %170 : vector<32x1xf32>
    %172 = vector.broadcast %171 : vector<32x1xf32> to vector<32x128xf32>
    %173 = arith.subf %163, %172 : vector<32x128xf32>
    %174 = arith.mulf %173, %173 : vector<32x128xf32>
    %cst_63 = arith.constant dense<0.000000e+00> : vector<32xf32>
    %175 = vector.multi_reduction <add>, %174, %cst_63 [1] : vector<32x128xf32> to vector<32xf32>
    %176 = vector.shape_cast %175 : vector<32xf32> to vector<32x1xf32>
    %cst_64 = arith.constant 1.280000e+02 : f32
    %177 = vector.broadcast %cst_64 : f32 to vector<32x1xf32>
    %178 = arith.divf %176, %177 : vector<32x1xf32>
    %179 = vector.broadcast %171 : vector<32x1xf32> to vector<32x128xf32>
    %180 = arith.subf %163, %179 : vector<32x128xf32>
    %cst_65 = arith.constant 9.99999974E-6 : f32
    %181 = vector.broadcast %cst_65 : f32 to vector<32x1xf32>
    %182 = arith.addf %178, %181 : vector<32x1xf32>
    %183 = math.rsqrt %182 : vector<32x1xf32>
    %184 = vector.broadcast %183 : vector<32x1xf32> to vector<32x128xf32>
    %185 = arith.mulf %180, %184 : vector<32x128xf32>
    %186 = vector.broadcast %165 : vector<1x128xf32> to vector<32x128xf32>
    %187 = arith.mulf %185, %186 : vector<32x128xf32>
    %188 = vector.broadcast %167 : vector<1x128xf32> to vector<32x128xf32>
    %189 = arith.addf %187, %188 : vector<32x128xf32>
    %190 = arith.truncf %189 : vector<32x128xf32> to vector<32x128xbf16>
    %c0_66 = arith.constant 0 : index
    %c0_67 = arith.constant 0 : index
    %c0_68 = arith.constant 0 : index
    %191 = vector.load %arg12[%c0_66, %c0_67, %c0_68] : memref<2x128x512xbf16, #tpu.memory_space<vmem>>, vector<1x128x512xbf16>
    %192 = vector.shape_cast %191 : vector<1x128x512xbf16> to vector<128x512xbf16>
    %cst_69 = arith.constant dense<0.000000e+00> : vector<32x512xf32>
    %193 = tpu.matmul %190, %192, %cst_69 {dimension_numbers = #tpu.dot_dimension_numbers<[1], [0], [0], [1], [0, 0, 1, 1], [], []>} : vector<32x128xbf16>, vector<128x512xbf16>, vector<32x512xf32> -> vector<32x512xf32>
    %c0_70 = arith.constant 0 : index
    %c0_71 = arith.constant 0 : index
    %c0_72 = arith.constant 0 : index
    %194 = vector.load %arg13[%c0_70, %c0_71, %c0_72] : memref<2x1x512xf32, #tpu.memory_space<vmem>>, vector<1x1x512xf32>
    %195 = vector.shape_cast %194 : vector<1x1x512xf32> to vector<1x512xf32>
    %196 = vector.broadcast %195 : vector<1x512xf32> to vector<32x512xf32>
    %197 = arith.addf %193, %196 : vector<32x512xf32>
    %198 = arith.mulf %197, %197 : vector<32x512xf32>
    %199 = arith.mulf %197, %198 : vector<32x512xf32>
    %cst_73 = arith.constant 4.471500e-02 : f32
    %200 = vector.broadcast %cst_73 : f32 to vector<32x512xf32>
    %201 = arith.mulf %200, %199 : vector<32x512xf32>
    %202 = arith.addf %197, %201 : vector<32x512xf32>
    %cst_74 = arith.constant 0.797884583 : f32
    %203 = vector.broadcast %cst_74 : f32 to vector<32x512xf32>
    %204 = arith.mulf %203, %202 : vector<32x512xf32>
    %205 = math.tanh %204 : vector<32x512xf32>
    %cst_75 = arith.constant 1.000000e+00 : f32
    %206 = vector.broadcast %cst_75 : f32 to vector<32x512xf32>
    %207 = arith.addf %206, %205 : vector<32x512xf32>
    %cst_76 = arith.constant 5.000000e-01 : f32
    %208 = vector.broadcast %cst_76 : f32 to vector<32x512xf32>
    %209 = arith.mulf %208, %207 : vector<32x512xf32>
    %210 = arith.mulf %197, %209 : vector<32x512xf32>
    %211 = arith.truncf %210 : vector<32x512xf32> to vector<32x512xbf16>
    %c0_77 = arith.constant 0 : index
    %c0_78 = arith.constant 0 : index
    %c0_79 = arith.constant 0 : index
    %212 = vector.load %arg14[%c0_77, %c0_78, %c0_79] : memref<2x512x128xbf16, #tpu.memory_space<vmem>>, vector<1x512x128xbf16>
    %213 = vector.shape_cast %212 : vector<1x512x128xbf16> to vector<512x128xbf16>
    %cst_80 = arith.constant dense<0.000000e+00> : vector<32x128xf32>
    %214 = tpu.matmul %211, %213, %cst_80 {dimension_numbers = #tpu.dot_dimension_numbers<[1], [0], [0], [1], [0, 0, 1, 1], [], []>} : vector<32x512xbf16>, vector<512x128xbf16>, vector<32x128xf32> -> vector<32x128xf32>
    %215 = arith.addf %163, %214 : vector<32x128xf32>
    %c0_81 = arith.constant 0 : index
    %c0_82 = arith.constant 0 : index
    %c0_83 = arith.constant 0 : index
    %216 = vector.load %arg15[%c0_81, %c0_82, %c0_83] : memref<2x1x128xf32, #tpu.memory_space<vmem>>, vector<1x1x128xf32>
    %217 = vector.shape_cast %216 : vector<1x1x128xf32> to vector<1x128xf32>
    %218 = vector.broadcast %217 : vector<1x128xf32> to vector<32x128xf32>
    %219 = arith.addf %215, %218 : vector<32x128xf32>
    %c1 = arith.constant 1 : index
    %c0_84 = arith.constant 0 : index
    %c0_85 = arith.constant 0 : index
    %220 = vector.load %arg4[%c1, %c0_84, %c0_85] : memref<2x1x128xf32, #tpu.memory_space<vmem>>, vector<1x1x128xf32>
    %221 = vector.shape_cast %220 : vector<1x1x128xf32> to vector<1x128xf32>
    %c1_86 = arith.constant 1 : index
    %c0_87 = arith.constant 0 : index
    %c0_88 = arith.constant 0 : index
    %222 = vector.load %arg5[%c1_86, %c0_87, %c0_88] : memref<2x1x128xf32, #tpu.memory_space<vmem>>, vector<1x1x128xf32>
    %223 = vector.shape_cast %222 : vector<1x1x128xf32> to vector<1x128xf32>
    %cst_89 = arith.constant dense<0.000000e+00> : vector<32xf32>
    %224 = vector.multi_reduction <add>, %219, %cst_89 [1] : vector<32x128xf32> to vector<32xf32>
    %225 = vector.shape_cast %224 : vector<32xf32> to vector<32x1xf32>
    %cst_90 = arith.constant 1.280000e+02 : f32
    %226 = vector.broadcast %cst_90 : f32 to vector<32x1xf32>
    %227 = arith.divf %225, %226 : vector<32x1xf32>
    %228 = vector.broadcast %227 : vector<32x1xf32> to vector<32x128xf32>
    %229 = arith.subf %219, %228 : vector<32x128xf32>
    %230 = arith.mulf %229, %229 : vector<32x128xf32>
    %cst_91 = arith.constant dense<0.000000e+00> : vector<32xf32>
    %231 = vector.multi_reduction <add>, %230, %cst_91 [1] : vector<32x128xf32> to vector<32xf32>
    %232 = vector.shape_cast %231 : vector<32xf32> to vector<32x1xf32>
    %cst_92 = arith.constant 1.280000e+02 : f32
    %233 = vector.broadcast %cst_92 : f32 to vector<32x1xf32>
    %234 = arith.divf %232, %233 : vector<32x1xf32>
    %235 = vector.broadcast %227 : vector<32x1xf32> to vector<32x128xf32>
    %236 = arith.subf %219, %235 : vector<32x128xf32>
    %cst_93 = arith.constant 9.99999974E-6 : f32
    %237 = vector.broadcast %cst_93 : f32 to vector<32x1xf32>
    %238 = arith.addf %234, %237 : vector<32x1xf32>
    %239 = math.rsqrt %238 : vector<32x1xf32>
    %240 = vector.broadcast %239 : vector<32x1xf32> to vector<32x128xf32>
    %241 = arith.mulf %236, %240 : vector<32x128xf32>
    %242 = vector.broadcast %221 : vector<1x128xf32> to vector<32x128xf32>
    %243 = arith.mulf %241, %242 : vector<32x128xf32>
    %244 = vector.broadcast %223 : vector<1x128xf32> to vector<32x128xf32>
    %245 = arith.addf %243, %244 : vector<32x128xf32>
    %246 = arith.truncf %245 : vector<32x128xf32> to vector<32x128xbf16>
    %c1_94 = arith.constant 1 : index
    %c0_95 = arith.constant 0 : index
    %c0_96 = arith.constant 0 : index
    %247 = vector.load %arg6[%c1_94, %c0_95, %c0_96] : memref<2x128x384xbf16, #tpu.memory_space<vmem>>, vector<1x128x384xbf16>
    %248 = vector.shape_cast %247 : vector<1x128x384xbf16> to vector<128x384xbf16>
    %cst_97 = arith.constant dense<0.000000e+00> : vector<32x384xf32>
    %249 = tpu.matmul %246, %248, %cst_97 {dimension_numbers = #tpu.dot_dimension_numbers<[1], [0], [0], [1], [0, 0, 1, 1], [], []>} : vector<32x128xbf16>, vector<128x384xbf16>, vector<32x384xf32> -> vector<32x384xf32>
    %c1_98 = arith.constant 1 : index
    %c0_99 = arith.constant 0 : index
    %c0_100 = arith.constant 0 : index
    %250 = vector.load %arg7[%c1_98, %c0_99, %c0_100] : memref<2x1x384xf32, #tpu.memory_space<vmem>>, vector<1x1x384xf32>
    %251 = vector.shape_cast %250 : vector<1x1x384xf32> to vector<1x384xf32>
    %252 = vector.broadcast %251 : vector<1x384xf32> to vector<32x384xf32>
    %253 = arith.addf %249, %252 : vector<32x384xf32>
    %c1_101 = arith.constant 1 : index
    %c0_102 = arith.constant 0 : index
    %c0_103 = arith.constant 0 : index
    %254 = vector.load %arg8[%c1_101, %c0_102, %c0_103] : memref<2x128x128xbf16, #tpu.memory_space<vmem>>, vector<1x128x128xbf16>
    %255 = vector.shape_cast %254 : vector<1x128x128xbf16> to vector<128x128xbf16>
    %c1_104 = arith.constant 1 : index
    %c0_105 = arith.constant 0 : index
    %c0_106 = arith.constant 0 : index
    %256 = vector.load %arg9[%c1_104, %c0_105, %c0_106] : memref<2x1x128xf32, #tpu.memory_space<vmem>>, vector<1x1x128xf32>
    %257 = vector.shape_cast %256 : vector<1x1x128xf32> to vector<1x128xf32>
    %258 = vector.broadcast %257 : vector<1x128xf32> to vector<32x128xf32>
    %259 = arith.addf %219, %258 : vector<32x128xf32>
    %260 = vector.extract_strided_slice %253 {offsets = [0, 0], sizes = [32, 32], strides = [1, 1]} : vector<32x384xf32> to vector<32x32xf32>
    %261 = vector.shape_cast %260 : vector<32x32xf32> to vector<2x16x32xf32>
    %262 = vector.extract_strided_slice %253 {offsets = [0, 128], sizes = [32, 32], strides = [1, 1]} : vector<32x384xf32> to vector<32x32xf32>
    %263 = vector.shape_cast %262 : vector<32x32xf32> to vector<2x16x32xf32>
    %264 = vector.extract_strided_slice %253 {offsets = [0, 256], sizes = [32, 32], strides = [1, 1]} : vector<32x384xf32> to vector<32x32xf32>
    %265 = vector.shape_cast %264 : vector<32x32xf32> to vector<2x16x32xf32>
    "tpu.trace_start"() <{level = 10 : i32, message = "bqd,bkd->bqk"}> : () -> ()
    %cst_107 = arith.constant dense<0.000000e+00> : vector<2x16x16xf32>
    %266 = tpu.matmul %261, %263, %cst_107 {dimension_numbers = #tpu.dot_dimension_numbers<[2], [2], [1], [1], [0, 0, 0, 1, 1, 1], [0], [0]>} : vector<2x16x32xf32>, vector<2x16x32xf32>, vector<2x16x16xf32> -> vector<2x16x16xf32>
    "tpu.trace_stop"() : () -> ()
    %cst_108 = arith.constant 0.176776692 : f32
    %267 = vector.broadcast %cst_108 : f32 to vector<2x16x16xf32>
    %268 = arith.mulf %266, %267 : vector<2x16x16xf32>
    %269 = vector.shape_cast %11 : vector<16x16xf32> to vector<1x16x16xf32>
    %270 = vector.broadcast %269 : vector<1x16x16xf32> to vector<2x16x16xf32>
    %271 = arith.addf %268, %270 : vector<2x16x16xf32>
    %cst_109 = arith.constant dense<0xFF800000> : vector<2x16xf32>
    %272 = vector.multi_reduction <maximumf>, %271, %cst_109 [2] : vector<2x16x16xf32> to vector<2x16xf32>
    %273 = vector.shape_cast %272 : vector<2x16xf32> to vector<2x16x1xf32>
    %274 = vector.broadcast %273 : vector<2x16x1xf32> to vector<2x16x16xf32>
    %275 = arith.subf %271, %274 : vector<2x16x16xf32>
    %276 = math.exp %275 : vector<2x16x16xf32>
    %cst_110 = arith.constant dense<0.000000e+00> : vector<2x16xf32>
    %277 = vector.multi_reduction <add>, %276, %cst_110 [2] : vector<2x16x16xf32> to vector<2x16xf32>
    %278 = vector.shape_cast %277 : vector<2x16xf32> to vector<2x16x1xf32>
    %279 = tpu.reciprocal %278 : vector<2x16x1xf32> -> vector<2x16x1xf32>
    %280 = vector.broadcast %279 : vector<2x16x1xf32> to vector<2x16x16xf32>
    %281 = arith.mulf %276, %280 : vector<2x16x16xf32>
    "tpu.trace_start"() <{level = 10 : i32, message = "bqk,bkd->bqd"}> : () -> ()
    %cst_111 = arith.constant dense<0.000000e+00> : vector<2x16x32xf32>
    %282 = tpu.matmul %281, %265, %cst_111 {dimension_numbers = #tpu.dot_dimension_numbers<[2], [1], [1], [2], [0, 0, 0, 1, 1, 2], [0], [0]>} : vector<2x16x16xf32>, vector<2x16x32xf32>, vector<2x16x32xf32> -> vector<2x16x32xf32>
    "tpu.trace_stop"() : () -> ()
    %283 = vector.shape_cast %282 : vector<2x16x32xf32> to vector<32x32xf32>
    %284 = arith.truncf %283 : vector<32x32xf32> to vector<32x32xbf16>
    %285 = vector.extract_strided_slice %255 {offsets = [0, 0], sizes = [32, 128], strides = [1, 1]} : vector<128x128xbf16> to vector<32x128xbf16>
    %cst_112 = arith.constant dense<0.000000e+00> : vector<32x128xf32>
    %286 = tpu.matmul %284, %285, %cst_112 {dimension_numbers = #tpu.dot_dimension_numbers<[1], [0], [0], [1], [0, 0, 1, 1], [], []>} : vector<32x32xbf16>, vector<32x128xbf16>, vector<32x128xf32> -> vector<32x128xf32>
    %287 = arith.addf %259, %286 : vector<32x128xf32>
    %288 = vector.extract_strided_slice %253 {offsets = [0, 32], sizes = [32, 32], strides = [1, 1]} : vector<32x384xf32> to vector<32x32xf32>
    %289 = vector.shape_cast %288 : vector<32x32xf32> to vector<2x16x32xf32>
    %290 = vector.extract_strided_slice %253 {offsets = [0, 160], sizes = [32, 32], strides = [1, 1]} : vector<32x384xf32> to vector<32x32xf32>
    %291 = vector.shape_cast %290 : vector<32x32xf32> to vector<2x16x32xf32>
    %292 = vector.extract_strided_slice %253 {offsets = [0, 288], sizes = [32, 32], strides = [1, 1]} : vector<32x384xf32> to vector<32x32xf32>
    %293 = vector.shape_cast %292 : vector<32x32xf32> to vector<2x16x32xf32>
    "tpu.trace_start"() <{level = 10 : i32, message = "bqd,bkd->bqk"}> : () -> ()
    %cst_113 = arith.constant dense<0.000000e+00> : vector<2x16x16xf32>
    %294 = tpu.matmul %289, %291, %cst_113 {dimension_numbers = #tpu.dot_dimension_numbers<[2], [2], [1], [1], [0, 0, 0, 1, 1, 1], [0], [0]>} : vector<2x16x32xf32>, vector<2x16x32xf32>, vector<2x16x16xf32> -> vector<2x16x16xf32>
    "tpu.trace_stop"() : () -> ()
    %cst_114 = arith.constant 0.176776692 : f32
    %295 = vector.broadcast %cst_114 : f32 to vector<2x16x16xf32>
    %296 = arith.mulf %294, %295 : vector<2x16x16xf32>
    %297 = vector.shape_cast %11 : vector<16x16xf32> to vector<1x16x16xf32>
    %298 = vector.broadcast %297 : vector<1x16x16xf32> to vector<2x16x16xf32>
    %299 = arith.addf %296, %298 : vector<2x16x16xf32>
    %cst_115 = arith.constant dense<0xFF800000> : vector<2x16xf32>
    %300 = vector.multi_reduction <maximumf>, %299, %cst_115 [2] : vector<2x16x16xf32> to vector<2x16xf32>
    %301 = vector.shape_cast %300 : vector<2x16xf32> to vector<2x16x1xf32>
    %302 = vector.broadcast %301 : vector<2x16x1xf32> to vector<2x16x16xf32>
    %303 = arith.subf %299, %302 : vector<2x16x16xf32>
    %304 = math.exp %303 : vector<2x16x16xf32>
    %cst_116 = arith.constant dense<0.000000e+00> : vector<2x16xf32>
    %305 = vector.multi_reduction <add>, %304, %cst_116 [2] : vector<2x16x16xf32> to vector<2x16xf32>
    %306 = vector.shape_cast %305 : vector<2x16xf32> to vector<2x16x1xf32>
    %307 = tpu.reciprocal %306 : vector<2x16x1xf32> -> vector<2x16x1xf32>
    %308 = vector.broadcast %307 : vector<2x16x1xf32> to vector<2x16x16xf32>
    %309 = arith.mulf %304, %308 : vector<2x16x16xf32>
    "tpu.trace_start"() <{level = 10 : i32, message = "bqk,bkd->bqd"}> : () -> ()
    %cst_117 = arith.constant dense<0.000000e+00> : vector<2x16x32xf32>
    %310 = tpu.matmul %309, %293, %cst_117 {dimension_numbers = #tpu.dot_dimension_numbers<[2], [1], [1], [2], [0, 0, 0, 1, 1, 2], [0], [0]>} : vector<2x16x16xf32>, vector<2x16x32xf32>, vector<2x16x32xf32> -> vector<2x16x32xf32>
    "tpu.trace_stop"() : () -> ()
    %311 = vector.shape_cast %310 : vector<2x16x32xf32> to vector<32x32xf32>
    %312 = arith.truncf %311 : vector<32x32xf32> to vector<32x32xbf16>
    %313 = vector.extract_strided_slice %255 {offsets = [32, 0], sizes = [32, 128], strides = [1, 1]} : vector<128x128xbf16> to vector<32x128xbf16>
    %cst_118 = arith.constant dense<0.000000e+00> : vector<32x128xf32>
    %314 = tpu.matmul %312, %313, %cst_118 {dimension_numbers = #tpu.dot_dimension_numbers<[1], [0], [0], [1], [0, 0, 1, 1], [], []>} : vector<32x32xbf16>, vector<32x128xbf16>, vector<32x128xf32> -> vector<32x128xf32>
    %315 = arith.addf %287, %314 : vector<32x128xf32>
    %316 = vector.extract_strided_slice %253 {offsets = [0, 64], sizes = [32, 32], strides = [1, 1]} : vector<32x384xf32> to vector<32x32xf32>
    %317 = vector.shape_cast %316 : vector<32x32xf32> to vector<2x16x32xf32>
    %318 = vector.extract_strided_slice %253 {offsets = [0, 192], sizes = [32, 32], strides = [1, 1]} : vector<32x384xf32> to vector<32x32xf32>
    %319 = vector.shape_cast %318 : vector<32x32xf32> to vector<2x16x32xf32>
    %320 = vector.extract_strided_slice %253 {offsets = [0, 320], sizes = [32, 32], strides = [1, 1]} : vector<32x384xf32> to vector<32x32xf32>
    %321 = vector.shape_cast %320 : vector<32x32xf32> to vector<2x16x32xf32>
    "tpu.trace_start"() <{level = 10 : i32, message = "bqd,bkd->bqk"}> : () -> ()
    %cst_119 = arith.constant dense<0.000000e+00> : vector<2x16x16xf32>
    %322 = tpu.matmul %317, %319, %cst_119 {dimension_numbers = #tpu.dot_dimension_numbers<[2], [2], [1], [1], [0, 0, 0, 1, 1, 1], [0], [0]>} : vector<2x16x32xf32>, vector<2x16x32xf32>, vector<2x16x16xf32> -> vector<2x16x16xf32>
    "tpu.trace_stop"() : () -> ()
    %cst_120 = arith.constant 0.176776692 : f32
    %323 = vector.broadcast %cst_120 : f32 to vector<2x16x16xf32>
    %324 = arith.mulf %322, %323 : vector<2x16x16xf32>
    %325 = vector.shape_cast %11 : vector<16x16xf32> to vector<1x16x16xf32>
    %326 = vector.broadcast %325 : vector<1x16x16xf32> to vector<2x16x16xf32>
    %327 = arith.addf %324, %326 : vector<2x16x16xf32>
    %cst_121 = arith.constant dense<0xFF800000> : vector<2x16xf32>
    %328 = vector.multi_reduction <maximumf>, %327, %cst_121 [2] : vector<2x16x16xf32> to vector<2x16xf32>
    %329 = vector.shape_cast %328 : vector<2x16xf32> to vector<2x16x1xf32>
    %330 = vector.broadcast %329 : vector<2x16x1xf32> to vector<2x16x16xf32>
    %331 = arith.subf %327, %330 : vector<2x16x16xf32>
    %332 = math.exp %331 : vector<2x16x16xf32>
    %cst_122 = arith.constant dense<0.000000e+00> : vector<2x16xf32>
    %333 = vector.multi_reduction <add>, %332, %cst_122 [2] : vector<2x16x16xf32> to vector<2x16xf32>
    %334 = vector.shape_cast %333 : vector<2x16xf32> to vector<2x16x1xf32>
    %335 = tpu.reciprocal %334 : vector<2x16x1xf32> -> vector<2x16x1xf32>
    %336 = vector.broadcast %335 : vector<2x16x1xf32> to vector<2x16x16xf32>
    %337 = arith.mulf %332, %336 : vector<2x16x16xf32>
    "tpu.trace_start"() <{level = 10 : i32, message = "bqk,bkd->bqd"}> : () -> ()
    %cst_123 = arith.constant dense<0.000000e+00> : vector<2x16x32xf32>
    %338 = tpu.matmul %337, %321, %cst_123 {dimension_numbers = #tpu.dot_dimension_numbers<[2], [1], [1], [2], [0, 0, 0, 1, 1, 2], [0], [0]>} : vector<2x16x16xf32>, vector<2x16x32xf32>, vector<2x16x32xf32> -> vector<2x16x32xf32>
    "tpu.trace_stop"() : () -> ()
    %339 = vector.shape_cast %338 : vector<2x16x32xf32> to vector<32x32xf32>
    %340 = arith.truncf %339 : vector<32x32xf32> to vector<32x32xbf16>
    %341 = vector.extract_strided_slice %255 {offsets = [64, 0], sizes = [32, 128], strides = [1, 1]} : vector<128x128xbf16> to vector<32x128xbf16>
    %cst_124 = arith.constant dense<0.000000e+00> : vector<32x128xf32>
    %342 = tpu.matmul %340, %341, %cst_124 {dimension_numbers = #tpu.dot_dimension_numbers<[1], [0], [0], [1], [0, 0, 1, 1], [], []>} : vector<32x32xbf16>, vector<32x128xbf16>, vector<32x128xf32> -> vector<32x128xf32>
    %343 = arith.addf %315, %342 : vector<32x128xf32>
    %344 = vector.extract_strided_slice %253 {offsets = [0, 96], sizes = [32, 32], strides = [1, 1]} : vector<32x384xf32> to vector<32x32xf32>
    %345 = vector.shape_cast %344 : vector<32x32xf32> to vector<2x16x32xf32>
    %346 = vector.extract_strided_slice %253 {offsets = [0, 224], sizes = [32, 32], strides = [1, 1]} : vector<32x384xf32> to vector<32x32xf32>
    %347 = vector.shape_cast %346 : vector<32x32xf32> to vector<2x16x32xf32>
    %348 = vector.extract_strided_slice %253 {offsets = [0, 352], sizes = [32, 32], strides = [1, 1]} : vector<32x384xf32> to vector<32x32xf32>
    %349 = vector.shape_cast %348 : vector<32x32xf32> to vector<2x16x32xf32>
    "tpu.trace_start"() <{level = 10 : i32, message = "bqd,bkd->bqk"}> : () -> ()
    %cst_125 = arith.constant dense<0.000000e+00> : vector<2x16x16xf32>
    %350 = tpu.matmul %345, %347, %cst_125 {dimension_numbers = #tpu.dot_dimension_numbers<[2], [2], [1], [1], [0, 0, 0, 1, 1, 1], [0], [0]>} : vector<2x16x32xf32>, vector<2x16x32xf32>, vector<2x16x16xf32> -> vector<2x16x16xf32>
    "tpu.trace_stop"() : () -> ()
    %cst_126 = arith.constant 0.176776692 : f32
    %351 = vector.broadcast %cst_126 : f32 to vector<2x16x16xf32>
    %352 = arith.mulf %350, %351 : vector<2x16x16xf32>
    %353 = vector.shape_cast %11 : vector<16x16xf32> to vector<1x16x16xf32>
    %354 = vector.broadcast %353 : vector<1x16x16xf32> to vector<2x16x16xf32>
    %355 = arith.addf %352, %354 : vector<2x16x16xf32>
    %cst_127 = arith.constant dense<0xFF800000> : vector<2x16xf32>
    %356 = vector.multi_reduction <maximumf>, %355, %cst_127 [2] : vector<2x16x16xf32> to vector<2x16xf32>
    %357 = vector.shape_cast %356 : vector<2x16xf32> to vector<2x16x1xf32>
    %358 = vector.broadcast %357 : vector<2x16x1xf32> to vector<2x16x16xf32>
    %359 = arith.subf %355, %358 : vector<2x16x16xf32>
    %360 = math.exp %359 : vector<2x16x16xf32>
    %cst_128 = arith.constant dense<0.000000e+00> : vector<2x16xf32>
    %361 = vector.multi_reduction <add>, %360, %cst_128 [2] : vector<2x16x16xf32> to vector<2x16xf32>
    %362 = vector.shape_cast %361 : vector<2x16xf32> to vector<2x16x1xf32>
    %363 = tpu.reciprocal %362 : vector<2x16x1xf32> -> vector<2x16x1xf32>
    %364 = vector.broadcast %363 : vector<2x16x1xf32> to vector<2x16x16xf32>
    %365 = arith.mulf %360, %364 : vector<2x16x16xf32>
    "tpu.trace_start"() <{level = 10 : i32, message = "bqk,bkd->bqd"}> : () -> ()
    %cst_129 = arith.constant dense<0.000000e+00> : vector<2x16x32xf32>
    %366 = tpu.matmul %365, %349, %cst_129 {dimension_numbers = #tpu.dot_dimension_numbers<[2], [1], [1], [2], [0, 0, 0, 1, 1, 2], [0], [0]>} : vector<2x16x16xf32>, vector<2x16x32xf32>, vector<2x16x32xf32> -> vector<2x16x32xf32>
    "tpu.trace_stop"() : () -> ()
    %367 = vector.shape_cast %366 : vector<2x16x32xf32> to vector<32x32xf32>
    %368 = arith.truncf %367 : vector<32x32xf32> to vector<32x32xbf16>
    %369 = vector.extract_strided_slice %255 {offsets = [96, 0], sizes = [32, 128], strides = [1, 1]} : vector<128x128xbf16> to vector<32x128xbf16>
    %cst_130 = arith.constant dense<0.000000e+00> : vector<32x128xf32>
    %370 = tpu.matmul %368, %369, %cst_130 {dimension_numbers = #tpu.dot_dimension_numbers<[1], [0], [0], [1], [0, 0, 1, 1], [], []>} : vector<32x32xbf16>, vector<32x128xbf16>, vector<32x128xf32> -> vector<32x128xf32>
    %371 = arith.addf %343, %370 : vector<32x128xf32>
    %c1_131 = arith.constant 1 : index
    %c0_132 = arith.constant 0 : index
    %c0_133 = arith.constant 0 : index
    %372 = vector.load %arg10[%c1_131, %c0_132, %c0_133] : memref<2x1x128xf32, #tpu.memory_space<vmem>>, vector<1x1x128xf32>
    %373 = vector.shape_cast %372 : vector<1x1x128xf32> to vector<1x128xf32>
    %c1_134 = arith.constant 1 : index
    %c0_135 = arith.constant 0 : index
    %c0_136 = arith.constant 0 : index
    %374 = vector.load %arg11[%c1_134, %c0_135, %c0_136] : memref<2x1x128xf32, #tpu.memory_space<vmem>>, vector<1x1x128xf32>
    %375 = vector.shape_cast %374 : vector<1x1x128xf32> to vector<1x128xf32>
    %cst_137 = arith.constant dense<0.000000e+00> : vector<32xf32>
    %376 = vector.multi_reduction <add>, %371, %cst_137 [1] : vector<32x128xf32> to vector<32xf32>
    %377 = vector.shape_cast %376 : vector<32xf32> to vector<32x1xf32>
    %cst_138 = arith.constant 1.280000e+02 : f32
    %378 = vector.broadcast %cst_138 : f32 to vector<32x1xf32>
    %379 = arith.divf %377, %378 : vector<32x1xf32>
    %380 = vector.broadcast %379 : vector<32x1xf32> to vector<32x128xf32>
    %381 = arith.subf %371, %380 : vector<32x128xf32>
    %382 = arith.mulf %381, %381 : vector<32x128xf32>
    %cst_139 = arith.constant dense<0.000000e+00> : vector<32xf32>
    %383 = vector.multi_reduction <add>, %382, %cst_139 [1] : vector<32x128xf32> to vector<32xf32>
    %384 = vector.shape_cast %383 : vector<32xf32> to vector<32x1xf32>
    %cst_140 = arith.constant 1.280000e+02 : f32
    %385 = vector.broadcast %cst_140 : f32 to vector<32x1xf32>
    %386 = arith.divf %384, %385 : vector<32x1xf32>
    %387 = vector.broadcast %379 : vector<32x1xf32> to vector<32x128xf32>
    %388 = arith.subf %371, %387 : vector<32x128xf32>
    %cst_141 = arith.constant 9.99999974E-6 : f32
    %389 = vector.broadcast %cst_141 : f32 to vector<32x1xf32>
    %390 = arith.addf %386, %389 : vector<32x1xf32>
    %391 = math.rsqrt %390 : vector<32x1xf32>
    %392 = vector.broadcast %391 : vector<32x1xf32> to vector<32x128xf32>
    %393 = arith.mulf %388, %392 : vector<32x128xf32>
    %394 = vector.broadcast %373 : vector<1x128xf32> to vector<32x128xf32>
    %395 = arith.mulf %393, %394 : vector<32x128xf32>
    %396 = vector.broadcast %375 : vector<1x128xf32> to vector<32x128xf32>
    %397 = arith.addf %395, %396 : vector<32x128xf32>
    %398 = arith.truncf %397 : vector<32x128xf32> to vector<32x128xbf16>
    %c1_142 = arith.constant 1 : index
    %c0_143 = arith.constant 0 : index
    %c0_144 = arith.constant 0 : index
    %399 = vector.load %arg12[%c1_142, %c0_143, %c0_144] : memref<2x128x512xbf16, #tpu.memory_space<vmem>>, vector<1x128x512xbf16>
    %400 = vector.shape_cast %399 : vector<1x128x512xbf16> to vector<128x512xbf16>
    %cst_145 = arith.constant dense<0.000000e+00> : vector<32x512xf32>
    %401 = tpu.matmul %398, %400, %cst_145 {dimension_numbers = #tpu.dot_dimension_numbers<[1], [0], [0], [1], [0, 0, 1, 1], [], []>} : vector<32x128xbf16>, vector<128x512xbf16>, vector<32x512xf32> -> vector<32x512xf32>
    %c1_146 = arith.constant 1 : index
    %c0_147 = arith.constant 0 : index
    %c0_148 = arith.constant 0 : index
    %402 = vector.load %arg13[%c1_146, %c0_147, %c0_148] : memref<2x1x512xf32, #tpu.memory_space<vmem>>, vector<1x1x512xf32>
    %403 = vector.shape_cast %402 : vector<1x1x512xf32> to vector<1x512xf32>
    %404 = vector.broadcast %403 : vector<1x512xf32> to vector<32x512xf32>
    %405 = arith.addf %401, %404 : vector<32x512xf32>
    %406 = arith.mulf %405, %405 : vector<32x512xf32>
    %407 = arith.mulf %405, %406 : vector<32x512xf32>
    %cst_149 = arith.constant 4.471500e-02 : f32
    %408 = vector.broadcast %cst_149 : f32 to vector<32x512xf32>
    %409 = arith.mulf %408, %407 : vector<32x512xf32>
    %410 = arith.addf %405, %409 : vector<32x512xf32>
    %cst_150 = arith.constant 0.797884583 : f32
    %411 = vector.broadcast %cst_150 : f32 to vector<32x512xf32>
    %412 = arith.mulf %411, %410 : vector<32x512xf32>
    %413 = math.tanh %412 : vector<32x512xf32>
    %cst_151 = arith.constant 1.000000e+00 : f32
    %414 = vector.broadcast %cst_151 : f32 to vector<32x512xf32>
    %415 = arith.addf %414, %413 : vector<32x512xf32>
    %cst_152 = arith.constant 5.000000e-01 : f32
    %416 = vector.broadcast %cst_152 : f32 to vector<32x512xf32>
    %417 = arith.mulf %416, %415 : vector<32x512xf32>
    %418 = arith.mulf %405, %417 : vector<32x512xf32>
    %419 = arith.truncf %418 : vector<32x512xf32> to vector<32x512xbf16>
    %c1_153 = arith.constant 1 : index
    %c0_154 = arith.constant 0 : index
    %c0_155 = arith.constant 0 : index
    %420 = vector.load %arg14[%c1_153, %c0_154, %c0_155] : memref<2x512x128xbf16, #tpu.memory_space<vmem>>, vector<1x512x128xbf16>
    %421 = vector.shape_cast %420 : vector<1x512x128xbf16> to vector<512x128xbf16>
    %cst_156 = arith.constant dense<0.000000e+00> : vector<32x128xf32>
    %422 = tpu.matmul %419, %421, %cst_156 {dimension_numbers = #tpu.dot_dimension_numbers<[1], [0], [0], [1], [0, 0, 1, 1], [], []>} : vector<32x512xbf16>, vector<512x128xbf16>, vector<32x128xf32> -> vector<32x128xf32>
    %423 = arith.addf %371, %422 : vector<32x128xf32>
    %c1_157 = arith.constant 1 : index
    %c0_158 = arith.constant 0 : index
    %c0_159 = arith.constant 0 : index
    %424 = vector.load %arg15[%c1_157, %c0_158, %c0_159] : memref<2x1x128xf32, #tpu.memory_space<vmem>>, vector<1x1x128xf32>
    %425 = vector.shape_cast %424 : vector<1x1x128xf32> to vector<1x128xf32>
    %426 = vector.broadcast %425 : vector<1x128xf32> to vector<32x128xf32>
    %427 = arith.addf %423, %426 : vector<32x128xf32>
    %c0_160 = arith.constant 0 : index
    %c0_161 = arith.constant 0 : index
    %428 = vector.load %arg16[%c0_160, %c0_161] : memref<1x128xf32, #tpu.memory_space<vmem>>, vector<1x128xf32>
    %c0_162 = arith.constant 0 : index
    %c0_163 = arith.constant 0 : index
    %429 = vector.load %arg17[%c0_162, %c0_163] : memref<1x128xf32, #tpu.memory_space<vmem>>, vector<1x128xf32>
    %cst_164 = arith.constant dense<0.000000e+00> : vector<32xf32>
    %430 = vector.multi_reduction <add>, %427, %cst_164 [1] : vector<32x128xf32> to vector<32xf32>
    %431 = vector.shape_cast %430 : vector<32xf32> to vector<32x1xf32>
    %cst_165 = arith.constant 1.280000e+02 : f32
    %432 = vector.broadcast %cst_165 : f32 to vector<32x1xf32>
    %433 = arith.divf %431, %432 : vector<32x1xf32>
    %434 = vector.broadcast %433 : vector<32x1xf32> to vector<32x128xf32>
    %435 = arith.subf %427, %434 : vector<32x128xf32>
    %436 = arith.mulf %435, %435 : vector<32x128xf32>
    %cst_166 = arith.constant dense<0.000000e+00> : vector<32xf32>
    %437 = vector.multi_reduction <add>, %436, %cst_166 [1] : vector<32x128xf32> to vector<32xf32>
    %438 = vector.shape_cast %437 : vector<32xf32> to vector<32x1xf32>
    %cst_167 = arith.constant 1.280000e+02 : f32
    %439 = vector.broadcast %cst_167 : f32 to vector<32x1xf32>
    %440 = arith.divf %438, %439 : vector<32x1xf32>
    %441 = vector.broadcast %433 : vector<32x1xf32> to vector<32x128xf32>
    %442 = arith.subf %427, %441 : vector<32x128xf32>
    %cst_168 = arith.constant 9.99999974E-6 : f32
    %443 = vector.broadcast %cst_168 : f32 to vector<32x1xf32>
    %444 = arith.addf %440, %443 : vector<32x1xf32>
    %445 = math.rsqrt %444 : vector<32x1xf32>
    %446 = vector.broadcast %445 : vector<32x1xf32> to vector<32x128xf32>
    %447 = arith.mulf %442, %446 : vector<32x128xf32>
    %448 = vector.broadcast %428 : vector<1x128xf32> to vector<32x128xf32>
    %449 = arith.mulf %447, %448 : vector<32x128xf32>
    %450 = vector.broadcast %429 : vector<1x128xf32> to vector<32x128xf32>
    %451 = arith.addf %449, %450 : vector<32x128xf32>
    %c0_169 = arith.constant 0 : index
    %c0_170 = arith.constant 0 : index
    %452 = vector.load %arg18[%c0_169, %c0_170] : memref<32x128xf32, #tpu.memory_space<vmem>>, vector<32x128xf32>
    tpu.vector_store %arg18[%c0_169, %c0_170], %451 {strides = array<i32>} : memref<32x128xf32, #tpu.memory_space<vmem>>, vector<32x128xf32>,
    return
  }
  func.func @transform_0(%arg0: i32) -> (i32, i32) {
    %c0_i32 = arith.constant 0 : i32
    %c0_i32_0 = arith.constant 0 : i32
    return %arg0, %c0_i32 : i32, i32
  }
  func.func @transform_1(%arg0: i32) -> (i32, i32) {
    %c0_i32 = arith.constant 0 : i32
    %c0_i32_0 = arith.constant 0 : i32
    %c0_i32_1 = arith.constant 0 : i32
    return %c0_i32, %c0_i32_0 : i32, i32
  }
  func.func @transform_2(%arg0: i32) -> (i32, i32) {
    %c0_i32 = arith.constant 0 : i32
    %c0_i32_0 = arith.constant 0 : i32
    %c0_i32_1 = arith.constant 0 : i32
    return %c0_i32, %c0_i32_0 : i32, i32
  }
  func.func @transform_3(%arg0: i32) -> (i32, i32, i32) {
    %c0_i32 = arith.constant 0 : i32
    %c0_i32_0 = arith.constant 0 : i32
    %c0_i32_1 = arith.constant 0 : i32
    %c0_i32_2 = arith.constant 0 : i32
    return %c0_i32, %c0_i32_0, %c0_i32_1 : i32, i32, i32
  }
  func.func @transform_4(%arg0: i32) -> (i32, i32, i32) {
    %c0_i32 = arith.constant 0 : i32
    %c0_i32_0 = arith.constant 0 : i32
    %c0_i32_1 = arith.constant 0 : i32
    %c0_i32_2 = arith.constant 0 : i32
    return %c0_i32, %c0_i32_0, %c0_i32_1 : i32, i32, i32
  }
  func.func @transform_5(%arg0: i32) -> (i32, i32, i32) {
    %c0_i32 = arith.constant 0 : i32
    %c0_i32_0 = arith.constant 0 : i32
    %c0_i32_1 = arith.constant 0 : i32
    %c0_i32_2 = arith.constant 0 : i32
    return %c0_i32, %c0_i32_0, %c0_i32_1 : i32, i32, i32
  }
  func.func @transform_6(%arg0: i32) -> (i32, i32, i32) {
    %c0_i32 = arith.constant 0 : i32
    %c0_i32_0 = arith.constant 0 : i32
    %c0_i32_1 = arith.constant 0 : i32
    %c0_i32_2 = arith.constant 0 : i32
    return %c0_i32, %c0_i32_0, %c0_i32_1 : i32, i32, i32
  }
  func.func @transform_7(%arg0: i32) -> (i32, i32, i32) {
    %c0_i32 = arith.constant 0 : i32
    %c0_i32_0 = arith.constant 0 : i32
    %c0_i32_1 = arith.constant 0 : i32
    %c0_i32_2 = arith.constant 0 : i32
    return %c0_i32, %c0_i32_0, %c0_i32_1 : i32, i32, i32
  }
  func.func @transform_8(%arg0: i32) -> (i32, i32, i32) {
    %c0_i32 = arith.constant 0 : i32
    %c0_i32_0 = arith.constant 0 : i32
    %c0_i32_1 = arith.constant 0 : i32
    %c0_i32_2 = arith.constant 0 : i32
    return %c0_i32, %c0_i32_0, %c0_i32_1 : i32, i32, i32
  }
  func.func @transform_9(%arg0: i32) -> (i32, i32, i32) {
    %c0_i32 = arith.constant 0 : i32
    %c0_i32_0 = arith.constant 0 : i32
    %c0_i32_1 = arith.constant 0 : i32
    %c0_i32_2 = arith.constant 0 : i32
    return %c0_i32, %c0_i32_0, %c0_i32_1 : i32, i32, i32
  }
  func.func @transform_10(%arg0: i32) -> (i32, i32, i32) {
    %c0_i32 = arith.constant 0 : i32
    %c0_i32_0 = arith.constant 0 : i32
    %c0_i32_1 = arith.constant 0 : i32
    %c0_i32_2 = arith.constant 0 : i32
    return %c0_i32, %c0_i32_0, %c0_i32_1 : i32, i32, i32
  }
  func.func @transform_11(%arg0: i32) -> (i32, i32, i32) {
    %c0_i32 = arith.constant 0 : i32
    %c0_i32_0 = arith.constant 0 : i32
    %c0_i32_1 = arith.constant 0 : i32
    %c0_i32_2 = arith.constant 0 : i32
    return %c0_i32, %c0_i32_0, %c0_i32_1 : i32, i32, i32
  }
  func.func @transform_12(%arg0: i32) -> (i32, i32, i32) {
    %c0_i32 = arith.constant 0 : i32
    %c0_i32_0 = arith.constant 0 : i32
    %c0_i32_1 = arith.constant 0 : i32
    %c0_i32_2 = arith.constant 0 : i32
    return %c0_i32, %c0_i32_0, %c0_i32_1 : i32, i32, i32
  }
  func.func @transform_13(%arg0: i32) -> (i32, i32, i32) {
    %c0_i32 = arith.constant 0 : i32
    %c0_i32_0 = arith.constant 0 : i32
    %c0_i32_1 = arith.constant 0 : i32
    %c0_i32_2 = arith.constant 0 : i32
    return %c0_i32, %c0_i32_0, %c0_i32_1 : i32, i32, i32
  }
  func.func @transform_14(%arg0: i32) -> (i32, i32, i32) {
    %c0_i32 = arith.constant 0 : i32
    %c0_i32_0 = arith.constant 0 : i32
    %c0_i32_1 = arith.constant 0 : i32
    %c0_i32_2 = arith.constant 0 : i32
    return %c0_i32, %c0_i32_0, %c0_i32_1 : i32, i32, i32
  }
  func.func @transform_15(%arg0: i32) -> (i32, i32) {
    %c0_i32 = arith.constant 0 : i32
    %c0_i32_0 = arith.constant 0 : i32
    %c0_i32_1 = arith.constant 0 : i32
    return %c0_i32, %c0_i32_0 : i32, i32
  }
  func.func @transform_16(%arg0: i32) -> (i32, i32) {
    %c0_i32 = arith.constant 0 : i32
    %c0_i32_0 = arith.constant 0 : i32
    %c0_i32_1 = arith.constant 0 : i32
    return %c0_i32, %c0_i32_0 : i32, i32
  }
  func.func @transform_17(%arg0: i32) -> (i32, i32) {
    %c0_i32 = arith.constant 0 : i32
    %c0_i32_0 = arith.constant 0 : i32
    return %arg0, %c0_i32 : i32, i32
  }
}

</mosaic_0001>

<llo_original>
// kernel: tpu_custom_call.1
$region0: #{tpu_custom_call.1}
  #allocation0 [shape = 'u32[]', space=smem, size = 0x4, offset = 0x4, fixed_abs, tag = 'smem constant byte address 0x4 - core index']
  #allocation1 [shape = 'u32[144,128]{1,0:T(1,128)}', space=vmem, size = 0x12000, scoped, tag = 'internal scratch']
  %s0 = inlined_call_operand.hbm [shape: f32[32,1920], index: 0, kind: input, shape index: {}]
  %s1 = inlined_call_operand.hbm [shape: f32[32,128], index: 1, kind: input, shape index: {}]
  %s2 = inlined_call_operand.hbm [shape: bf16[1920,128], index: 2, kind: input, shape index: {}]
  %s3 = inlined_call_operand.vmem [shape: f32[2,1,128], index: 3, kind: input, shape index: {}]
  %s4 = inlined_call_operand.hbm [shape: f32[2,1,128], index: 4, kind: input, shape index: {}]
  %s5 = inlined_call_operand.hbm [shape: bf16[2,128,384], index: 5, kind: input, shape index: {}]
  %s6 = inlined_call_operand.vmem [shape: f32[2,1,384], index: 6, kind: input, shape index: {}]
  %s7 = inlined_call_operand.hbm [shape: bf16[2,128,128], index: 7, kind: input, shape index: {}]
  %s8 = inlined_call_operand.hbm [shape: f32[2,1,128], index: 8, kind: input, shape index: {}]
  %s9 = inlined_call_operand.hbm [shape: f32[2,1,128], index: 9, kind: input, shape index: {}]
  %s10 = inlined_call_operand.vmem [shape: f32[2,1,128], index: 10, kind: input, shape index: {}]
  %s11 = inlined_call_operand.hbm [shape: bf16[2,128,512], index: 11, kind: input, shape index: {}]
  %s12 = inlined_call_operand.vmem [shape: f32[2,1,512], index: 12, kind: input, shape index: {}]
  %s13 = inlined_call_operand.hbm [shape: bf16[2,512,128], index: 13, kind: input, shape index: {}]
  %s14 = inlined_call_operand.vmem [shape: f32[2,1,128], index: 14, kind: input, shape index: {}]
  %s15 = inlined_call_operand.vmem [shape: f32[1,128], index: 15, kind: input, shape index: {}]
  %s16 = inlined_call_operand.vmem [shape: f32[1,128], index: 16, kind: input, shape index: {}]
  %s17 = inlined_call_operand.hbm [shape: f32[32,128], index: 17, kind: output, shape index: {}]
  %s18 = sld [smem:[#allocation0]]
  $region118: #{tpu_custom_call.1} parent=0
    _
  %s20 = ssub.s32 1, %s18
  %s21 = scalar_select 0, %s20, %s18
  $region1: #{tpu_custom_call.1} parent=0
    #allocation2 [shape = 'u8[245760]{0}', space=vmem, size = 0x3c000, scoped, tag = 'input window, operand 0, single buffered']
    #allocation3 [shape = 's32[1]{0}', space=sflag, size = 0x4, scoped, tag = 'scoped memory for tpu_custom_call.1']
    #allocation4 [shape = 's32[1]{0}', space=sflag, size = 0x4, scoped, tag = 'scoped memory for tpu_custom_call.1']
    #allocation5 [shape = 'u8[16384]{0}', space=vmem, size = 0x4000, scoped, tag = 'input window, operand 1, single buffered']
    #allocation6 [shape = 's32[1]{0}', space=sflag, size = 0x4, scoped, tag = 'scoped memory for tpu_custom_call.1']
    #allocation7 [shape = 'u8[491520]{0}', space=vmem, size = 0x78000, scoped, tag = 'input window, operand 2, single buffered']
    #allocation8 [shape = 'u8[1024]{0}', space=vmem, size = 0x400, scoped, tag = 'input window, operand 4, single buffered']
    #allocation9 [shape = 's32[1]{0}', space=sflag, size = 0x4, scoped, tag = 'scoped memory for tpu_custom_call.1']
    #allocation10 [shape = 'u8[196608]{0}', space=vmem, size = 0x30000, scoped, tag = 'input window, operand 5, single buffered']
    #allocation11 [shape = 'u8[65536]{0}', space=vmem, size = 0x10000, scoped, tag = 'input window, operand 7, single buffered']
    #allocation12 [shape = 's32[1]{0}', space=sflag, size = 0x4, scoped, tag = 'scoped memory for tpu_custom_call.1']
    #allocation13 [shape = 'u8[1024]{0}', space=vmem, size = 0x400, scoped, tag = 'input window, operand 8, single buffered']
    #allocation14 [shape = 'u8[1024]{0}', space=vmem, size = 0x400, scoped, tag = 'input window, operand 9, single buffered']
    #allocation15 [shape = 's32[1]{0}', space=sflag, size = 0x4, scoped, tag = 'scoped memory for tpu_custom_call.1']
    #allocation16 [shape = 'u8[262144]{0}', space=vmem, size = 0x40000, scoped, tag = 'input window, operand 11, single buffered']
    #allocation17 [shape = 'u8[262144]{0}', space=vmem, size = 0x40000, scoped, tag = 'input window, operand 13, single buffered']
    #allocation18 [shape = 's32[1]{0}', space=sflag, size = 0x4, scoped, tag = 'scoped memory for tpu_custom_call.1']
    #allocation19 [shape = 'u8[16384]{0}', space=vmem, size = 0x4000, scoped, tag = 'output window, operand 0, single buffered']
    %22 = vsyncpa [#allocation3], 0
    %23 = vsyncpa [#allocation6], 0
    %24 = vsyncpa [#allocation9], 0
    %25 = vsyncpa [#allocation12], 0
    %26 = vsyncpa [#allocation15], 0
    %27 = vsyncpa [#allocation18], 0
    %28 = vsyncpa [#allocation4], 0
    // Predicated region
    $region2: #{tpu_custom_call.1} parent=1 // pred_check
      _
    $region3: #{tpu_custom_call.1} parent=1 // pred_check_branch
      %30 = sbr.rel (0) target = $region5
    $region4: #{tpu_custom_call.1} parent=1 // pred_region
      %s32 = ssub.s32 7680, 7680
      %33 = vsyncadd [#allocation3], %s32
      %s34 = sshll.u32 [#allocation2], 4
      %s35 = int_to_ptr.vmem [resolvable:$true] %s34
      %40 = dma.hbm_to_vmem [thread:$0]  %s0, 7680, %s35, [#allocation3], 1920, 1920, 120
    $region5: #{tpu_custom_call.1} parent=1 // pred_fallthru
      _
    // Predicated region
    $region6: #{tpu_custom_call.1} parent=1 // pred_check
      _
    $region7: #{tpu_custom_call.1} parent=1 // pred_check_branch
      %42 = sbr.rel (0) target = $region9
    $region8: #{tpu_custom_call.1} parent=1 // pred_region
      %s44 = ssub.s32 512, 512
      %45 = vsyncadd [#allocation6], %s44
      %s46 = sshll.u32 [#allocation5], 4
      %s47 = int_to_ptr.vmem [resolvable:$true] %s46
      %52 = dma.hbm_to_vmem [thread:$0]  %s1, 512, %s47, [#allocation6], 128, 128, 8
    $region9: #{tpu_custom_call.1} parent=1 // pred_fallthru
      _
    // Predicated region
    $region10: #{tpu_custom_call.1} parent=1 // pred_check
      _
    $region11: #{tpu_custom_call.1} parent=1 // pred_check_branch
      %54 = sbr.rel (0) target = $region13
    $region12: #{tpu_custom_call.1} parent=1 // pred_region
      %s56 = ssub.s32 15360, 15360
      %57 = vsyncadd [#allocation6], %s56
      %s58 = sshll.u32 [#allocation7], 4
      %s59 = int_to_ptr.vmem [resolvable:$true] %s58
      %64 = dma.hbm_to_vmem [thread:$0]  %s2, 15360, %s59, [#allocation6], 64, 64, 4
    $region13: #{tpu_custom_call.1} parent=1 // pred_fallthru
      _
    // Predicated region
    $region14: #{tpu_custom_call.1} parent=1 // pred_check
      _
    $region15: #{tpu_custom_call.1} parent=1 // pred_check_branch
      %66 = sbr.rel (0) target = $region17
    $region16: #{tpu_custom_call.1} parent=1 // pred_region
      _
    $region17: #{tpu_custom_call.1} parent=1 // pred_fallthru
      _
    // Predicated region
    $region18: #{tpu_custom_call.1} parent=1 // pred_check
      _
    $region19: #{tpu_custom_call.1} parent=1 // pred_check_branch
      %68 = sbr.rel (0) target = $region21
    $region20: #{tpu_custom_call.1} parent=1 // pred_region
      %s70 = ssub.s32 32, 32
      %71 = vsyncadd [#allocation9], %s70
      %s72 = sshll.u32 [#allocation8], 4
      %s73 = int_to_ptr.vmem [resolvable:$true] %s72
      %78 = dma.hbm_to_vmem [thread:$0]  %s4, 32, %s73, [#allocation9], 16, 16, 1
    $region21: #{tpu_custom_call.1} parent=1 // pred_fallthru
      _
    // Predicated region
    $region22: #{tpu_custom_call.1} parent=1 // pred_check
      _
    $region23: #{tpu_custom_call.1} parent=1 // pred_check_branch
      %80 = sbr.rel (0) target = $region25
    $region24: #{tpu_custom_call.1} parent=1 // pred_region
      %s82 = ssub.s32 6144, 6144
      %83 = vsyncadd [#allocation9], %s82
      %s84 = sshll.u32 [#allocation10], 4
      %s85 = int_to_ptr.vmem [resolvable:$true] %s84
      %90 = dma.hbm_to_vmem [thread:$0]  %s5, 6144, %s85, [#allocation9], 192, 192, 12
    $region25: #{tpu_custom_call.1} parent=1 // pred_fallthru
      _
    // Predicated region
    $region26: #{tpu_custom_call.1} parent=1 // pred_check
      _
    $region27: #{tpu_custom_call.1} parent=1 // pred_check_branch
      %92 = sbr.rel (0) target = $region29
    $region28: #{tpu_custom_call.1} parent=1 // pred_region
      _
    $region29: #{tpu_custom_call.1} parent=1 // pred_fallthru
      _
    // Predicated region
    $region30: #{tpu_custom_call.1} parent=1 // pred_check
      _
    $region31: #{tpu_custom_call.1} parent=1 // pred_check_branch
      %94 = sbr.rel (0) target = $region33
    $region32: #{tpu_custom_call.1} parent=1 // pred_region
      %s96 = ssub.s32 2048, 2048
      %97 = vsyncadd [#allocation12], %s96
      %s98 = sshll.u32 [#allocation11], 4
      %s99 = int_to_ptr.vmem [resolvable:$true] %s98
      %104 = dma.hbm_to_vmem [thread:$0]  %s7, 2048, %s99, [#allocation12], 64, 64, 4
    $region33: #{tpu_custom_call.1} parent=1 // pred_fallthru
      _
    // Predicated region
    $region34: #{tpu_custom_call.1} parent=1 // pred_check
      _
    $region35: #{tpu_custom_call.1} parent=1 // pred_check_branch
      %106 = sbr.rel (0) target = $region37
    $region36: #{tpu_custom_call.1} parent=1 // pred_region
      %s108 = ssub.s32 32, 32
      %109 = vsyncadd [#allocation12], %s108
      %s110 = sshll.u32 [#allocation13], 4
      %s111 = int_to_ptr.vmem [resolvable:$true] %s110
      %116 = dma.hbm_to_vmem [thread:$0]  %s8, 32, %s111, [#allocation12], 16, 16, 1
    $region37: #{tpu_custom_call.1} parent=1 // pred_fallthru
      _
    // Predicated region
    $region38: #{tpu_custom_call.1} parent=1 // pred_check
      _
    $region39: #{tpu_custom_call.1} parent=1 // pred_check_branch
      %118 = sbr.rel (0) target = $region41
    $region40: #{tpu_custom_call.1} parent=1 // pred_region
      %s120 = ssub.s32 32, 32
      %121 = vsyncadd [#allocation15], %s120
      %s122 = sshll.u32 [#allocation14], 4
      %s123 = int_to_ptr.vmem [resolvable:$true] %s122
      %128 = dma.hbm_to_vmem [thread:$0]  %s9, 32, %s123, [#allocation15], 16, 16, 1
    $region41: #{tpu_custom_call.1} parent=1 // pred_fallthru
      _
    // Predicated region
    $region42: #{tpu_custom_call.1} parent=1 // pred_check
      _
    $region43: #{tpu_custom_call.1} parent=1 // pred_check_branch
      %130 = sbr.rel (0) target = $region45
    $region44: #{tpu_custom_call.1} parent=1 // pred_region
      _
    $region45: #{tpu_custom_call.1} parent=1 // pred_fallthru
      _
    // Predicated region
    $region46: #{tpu_custom_call.1} parent=1 // pred_check
      _
    $region47: #{tpu_custom_call.1} parent=1 // pred_check_branch
      %132 = sbr.rel (0) target = $region49
    $region48: #{tpu_custom_call.1} parent=1 // pred_region
      %s134 = ssub.s32 8192, 8192
      %135 = vsyncadd [#allocation15], %s134
      %s136 = sshll.u32 [#allocation16], 4
      %s137 = int_to_ptr.vmem [resolvable:$true] %s136
      %142 = dma.hbm_to_vmem [thread:$0]  %s11, 8192, %s137, [#allocation15], 256, 256, 16
    $region49: #{tpu_custom_call.1} parent=1 // pred_fallthru
      _
    // Predicated region
    $region50: #{tpu_custom_call.1} parent=1 // pred_check
      _
    $region51: #{tpu_custom_call.1} parent=1 // pred_check_branch
      %144 = sbr.rel (0) target = $region53
    $region52: #{tpu_custom_call.1} parent=1 // pred_region
      _
    $region53: #{tpu_custom_call.1} parent=1 // pred_fallthru
      _
    // Predicated region
    $region54: #{tpu_custom_call.1} parent=1 // pred_check
      _
    $region55: #{tpu_custom_call.1} parent=1 // pred_check_branch
      %146 = sbr.rel (0) target = $region57
    $region56: #{tpu_custom_call.1} parent=1 // pred_region
      %s148 = ssub.s32 8192, 8192
      %149 = vsyncadd [#allocation18], %s148
      %s150 = sshll.u32 [#allocation17], 4
      %s151 = int_to_ptr.vmem [resolvable:$true] %s150
      %156 = dma.hbm_to_vmem [thread:$0]  %s13, 8192, %s151, [#allocation18], 64, 64, 4
    $region57: #{tpu_custom_call.1} parent=1 // pred_fallthru
      _
    // Predicated region
    $region58: #{tpu_custom_call.1} parent=1 // pred_check
      _
    $region59: #{tpu_custom_call.1} parent=1 // pred_check_branch
      %158 = sbr.rel (0) target = $region61
    $region60: #{tpu_custom_call.1} parent=1 // pred_region
      _
    $region61: #{tpu_custom_call.1} parent=1 // pred_fallthru
      _
    // Predicated region
    $region62: #{tpu_custom_call.1} parent=1 // pred_check
      _
    $region63: #{tpu_custom_call.1} parent=1 // pred_check_branch
      %160 = sbr.rel (0) target = $region65
    $region64: #{tpu_custom_call.1} parent=1 // pred_region
      _
    $region65: #{tpu_custom_call.1} parent=1 // pred_fallthru
      _
    // Predicated region
    $region66: #{tpu_custom_call.1} parent=1 // pred_check
      _
    $region67: #{tpu_custom_call.1} parent=1 // pred_check_branch
      %162 = sbr.rel (0) target = $region69
    $region68: #{tpu_custom_call.1} parent=1 // pred_region
      _
    $region69: #{tpu_custom_call.1} parent=1 // pred_fallthru
      _
    // Predicated region
    $region70: #{tpu_custom_call.1} parent=1 // pred_check
      _
    $region71: #{tpu_custom_call.1} parent=1 // pred_check_branch
      %164 = sbr.rel (0) target = $region73
    $region72: #{tpu_custom_call.1} parent=1 // pred_region
      %165 = dma.done [#allocation3], 7680
    $region73: #{tpu_custom_call.1} parent=1 // pred_fallthru
      _
    // Predicated region
    $region74: #{tpu_custom_call.1} parent=1 // pred_check
      _
    $region75: #{tpu_custom_call.1} parent=1 // pred_check_branch
      %167 = sbr.rel (0) target = $region77
    $region76: #{tpu_custom_call.1} parent=1 // pred_region
      %168 = dma.done [#allocation6], 512
    $region77: #{tpu_custom_call.1} parent=1 // pred_fallthru
      _
    // Predicated region
    $region78: #{tpu_custom_call.1} parent=1 // pred_check
      _
    $region79: #{tpu_custom_call.1} parent=1 // pred_check_branch
      %170 = sbr.rel (0) target = $region81
    $region80: #{tpu_custom_call.1} parent=1 // pred_region
      %171 = dma.done [#allocation6], 15360
    $region81: #{tpu_custom_call.1} parent=1 // pred_fallthru
      _
    // Predicated region
    $region82: #{tpu_custom_call.1} parent=1 // pred_check
      _
    $region83: #{tpu_custom_call.1} parent=1 // pred_check_branch
      %173 = sbr.rel (0) target = $region85
    $region84: #{tpu_custom_call.1} parent=1 // pred_region
      %174 = dma.done [#allocation9], 32
    $region85: #{tpu_custom_call.1} parent=1 // pred_fallthru
      _
    // Predicated region
    $region86: #{tpu_custom_call.1} parent=1 // pred_check
      _
    $region87: #{tpu_custom_call.1} parent=1 // pred_check_branch
      %176 = sbr.rel (0) target = $region89
    $region88: #{tpu_custom_call.1} parent=1 // pred_region
      %177 = dma.done [#allocation9], 6144
    $region89: #{tpu_custom_call.1} parent=1 // pred_fallthru
      _
    // Predicated region
    $region90: #{tpu_custom_call.1} parent=1 // pred_check
      _
    $region91: #{tpu_custom_call.1} parent=1 // pred_check_branch
      %179 = sbr.rel (0) target = $region93
    $region92: #{tpu_custom_call.1} parent=1 // pred_region
      %180 = dma.done [#allocation12], 2048
    $region93: #{tpu_custom_call.1} parent=1 // pred_fallthru
      _
    // Predicated region
    $region94: #{tpu_custom_call.1} parent=1 // pred_check
      _
    $region95: #{tpu_custom_call.1} parent=1 // pred_check_branch
      %182 = sbr.rel (0) target = $region97
    $region96: #{tpu_custom_call.1} parent=1 // pred_region
      %183 = dma.done [#allocation12], 32
    $region97: #{tpu_custom_call.1} parent=1 // pred_fallthru
      _
    // Predicated region
    $region98: #{tpu_custom_call.1} parent=1 // pred_check
      _
    $region99: #{tpu_custom_call.1} parent=1 // pred_check_branch
      %185 = sbr.rel (0) target = $region101
    $region100: #{tpu_custom_call.1} parent=1 // pred_region
      %186 = dma.done [#allocation15], 32
    $region101: #{tpu_custom_call.1} parent=1 // pred_fallthru
      _
    // Predicated region
    $region102: #{tpu_custom_call.1} parent=1 // pred_check
      _
    $region103: #{tpu_custom_call.1} parent=1 // pred_check_branch
      %188 = sbr.rel (0) target = $region105
    $region104: #{tpu_custom_call.1} parent=1 // pred_region
      %189 = dma.done [#allocation15], 8192
    $region105: #{tpu_custom_call.1} parent=1 // pred_fallthru
      _
    // Predicated region
    $region106: #{tpu_custom_call.1} parent=1 // pred_check
      _
    $region107: #{tpu_custom_call.1} parent=1 // pred_check_branch
      %191 = sbr.rel (0) target = $region109
    $region108: #{tpu_custom_call.1} parent=1 // pred_region
      %192 = dma.done [#allocation18], 8192
    $region109: #{tpu_custom_call.1} parent=1 // pred_fallthru
      _
    %v194 = vld [vmem:[#allocation2] sm:$0xff]
    %v195 = vld [vmem:[#allocation2 + $0x8] sm:$0xff]
    %v196 = vld [vmem:[#allocation2 + $0x10] sm:$0xff]
    %v197 = vld [vmem:[#allocation2 + $0x18] sm:$0xff]
    %v198 = vld [vmem:[#allocation2 + $0x20] sm:$0xff]
    %v199 = vld [vmem:[#allocation2 + $0x28] sm:$0xff]
    %v200 = vld [vmem:[#allocation2 + $0x30] sm:$0xff]
    %v201 = vld [vmem:[#allocation2 + $0x38] sm:$0xff]
    %v202 = vld [vmem:[#allocation2 + $0x40] sm:$0xff]
    %v203 = vld [vmem:[#allocation2 + $0x48] sm:$0xff]
    %v204 = vld [vmem:[#allocation2 + $0x50] sm:$0xff]
    %v205 = vld [vmem:[#allocation2 + $0x58] sm:$0xff]
    %v206 = vld [vmem:[#allocation2 + $0x60] sm:$0xff]
    %v207 = vld [vmem:[#allocation2 + $0x68] sm:$0xff]
    %v208 = vld [vmem:[#allocation2 + $0x70] sm:$0xff]
    %v209 = vld [vmem:[#allocation2 + $0x78] sm:$0xff]
    %v210 = vld [vmem:[#allocation2 + $0x80] sm:$0xff]
    %v211 = vld [vmem:[#allocation2 + $0x88] sm:$0xff]
    %v212 = vld [vmem:[#allocation2 + $0x90] sm:$0xff]
    %v213 = vld [vmem:[#allocation2 + $0x98] sm:$0xff]
    %v214 = vld [vmem:[#allocation2 + $0xa0] sm:$0xff]
    %v215 = vld [vmem:[#allocation2 + $0xa8] sm:$0xff]
    %v216 = vld [vmem:[#allocation2 + $0xb0] sm:$0xff]
    %v217 = vld [vmem:[#allocation2 + $0xb8] sm:$0xff]
    %v218 = vld [vmem:[#allocation2 + $0xc0] sm:$0xff]
    %v219 = vld [vmem:[#allocation2 + $0xc8] sm:$0xff]
    %v220 = vld [vmem:[#allocation2 + $0xd0] sm:$0xff]
    %v221 = vld [vmem:[#allocation2 + $0xd8] sm:$0xff]
    %v222 = vld [vmem:[#allocation2 + $0xe0] sm:$0xff]
    %v223 = vld [vmem:[#allocation2 + $0xe8] sm:$0xff]
    %v224 = vld [vmem:[#allocation2 + $0xf0] sm:$0xff]
    %v225 = vld [vmem:[#allocation2 + $0xf8] sm:$0xff]
    %v226 = vld [vmem:[#allocation2 + $0x100] sm:$0xff]
    %v227 = vld [vmem:[#allocation2 + $0x108] sm:$0xff]
    %v228 = vld [vmem:[#allocation2 + $0x110] sm:$0xff]
    %v229 = vld [vmem:[#allocation2 + $0x118] sm:$0xff]
    %v230 = vld [vmem:[#allocation2 + $0x120] sm:$0xff]
    %v231 = vld [vmem:[#allocation2 + $0x128] sm:$0xff]
    %v232 = vld [vmem:[#allocation2 + $0x130] sm:$0xff]
    %v233 = vld [vmem:[#allocation2 + $0x138] sm:$0xff]
    %v234 = vld [vmem:[#allocation2 + $0x140] sm:$0xff]
    %v235 = vld [vmem:[#allocation2 + $0x148] sm:$0xff]
    %v236 = vld [vmem:[#allocation2 + $0x150] sm:$0xff]
    %v237 = vld [vmem:[#allocation2 + $0x158] sm:$0xff]
    %v238 = vld [vmem:[#allocation2 + $0x160] sm:$0xff]
    %v239 = vld [vmem:[#allocation2 + $0x168] sm:$0xff]
    %v240 = vld [vmem:[#allocation2 + $0x170] sm:$0xff]
    %v241 = vld [vmem:[#allocation2 + $0x178] sm:$0xff]
    %v242 = vld [vmem:[#allocation2 + $0x180] sm:$0xff]
    %v243 = vld [vmem:[#allocation2 + $0x188] sm:$0xff]
    %v244 = vld [vmem:[#allocation2 + $0x190] sm:$0xff]
    %v245 = vld [vmem:[#allocation2 + $0x198] sm:$0xff]
    %v246 = vld [vmem:[#allocation2 + $0x1a0] sm:$0xff]
    %v247 = vld [vmem:[#allocation2 + $0x1a8] sm:$0xff]
    %v248 = vld [vmem:[#allocation2 + $0x1b0] sm:$0xff]
    %v249 = vld [vmem:[#allocation2 + $0x1b8] sm:$0xff]
    %v250 = vld [vmem:[#allocation2 + $0x1c0] sm:$0xff]
    %v251 = vld [vmem:[#allocation2 + $0x1c8] sm:$0xff]
    %v252 = vld [vmem:[#allocation2 + $0x1d0] sm:$0xff]
    %v253 = vld [vmem:[#allocation2 + $0x1d8] sm:$0xff]
    %v254 = vpack.c.bf16 %v209, %v194
    %v255 = vpack.c.bf16 %v210, %v195
    %v256 = vpack.c.bf16 %v211, %v196
    %v257 = vpack.c.bf16 %v212, %v197
    %v258 = vpack.c.bf16 %v213, %v198
    %v259 = vpack.c.bf16 %v214, %v199
    %v260 = vpack.c.bf16 %v215, %v200
    %v261 = vpack.c.bf16 %v216, %v201
    %v262 = vpack.c.bf16 %v217, %v202
    %v263 = vpack.c.bf16 %v218, %v203
    %v264 = vpack.c.bf16 %v219, %v204
    %v265 = vpack.c.bf16 %v220, %v205
    %v266 = vpack.c.bf16 %v221, %v206
    %v267 = vpack.c.bf16 %v222, %v207
    %v268 = vpack.c.bf16 %v223, %v208
    %v269 = vpack.c.bf16 %v239, %v224
    %v270 = vpack.c.bf16 %v240, %v225
    %v271 = vpack.c.bf16 %v241, %v226
    %v272 = vpack.c.bf16 %v242, %v227
    %v273 = vpack.c.bf16 %v243, %v228
    %v274 = vpack.c.bf16 %v244, %v229
    %v275 = vpack.c.bf16 %v245, %v230
    %v276 = vpack.c.bf16 %v246, %v231
    %v277 = vpack.c.bf16 %v247, %v232
    %v278 = vpack.c.bf16 %v248, %v233
    %v279 = vpack.c.bf16 %v249, %v234
    %v280 = vpack.c.bf16 %v250, %v235
    %v281 = vpack.c.bf16 %v251, %v236
    %v282 = vpack.c.bf16 %v252, %v237
    %v283 = vpack.c.bf16 %v253, %v238
    %v284 = vld [vmem:[#allocation7] sm:$0xf]
    %v285 = vld [vmem:[#allocation7 + $0x4] sm:$0xf]
    %v286 = vld [vmem:[#allocation7 + $0x8] sm:$0xf]
    %v287 = vld [vmem:[#allocation7 + $0xc] sm:$0xf]
    %v288 = vld [vmem:[#allocation7 + $0x10] sm:$0xf]
    %v289 = vld [vmem:[#allocation7 + $0x14] sm:$0xf]
    %v290 = vld [vmem:[#allocation7 + $0x18] sm:$0xf]
    %v291 = vld [vmem:[#allocation7 + $0x1c] sm:$0xf]
    %v292 = vld [vmem:[#allocation7 + $0x20] sm:$0xf]
    %v293 = vld [vmem:[#allocation7 + $0x24] sm:$0xf]
    %v294 = vld [vmem:[#allocation7 + $0x28] sm:$0xf]
    %v295 = vld [vmem:[#allocation7 + $0x2c] sm:$0xf]
    %v296 = vld [vmem:[#allocation7 + $0x30] sm:$0xf]
    %v297 = vld [vmem:[#allocation7 + $0x34] sm:$0xf]
    %v298 = vld [vmem:[#allocation7 + $0x38] sm:$0xf]
    %v299 = vld [vmem:[#allocation7 + $0x3c] sm:$0xf]
    %v300 = vld [vmem:[#allocation7 + $0x40] sm:$0xf]
    %v301 = vld [vmem:[#allocation7 + $0x44] sm:$0xf]
    %v302 = vld [vmem:[#allocation7 + $0x48] sm:$0xf]
    %v303 = vld [vmem:[#allocation7 + $0x4c] sm:$0xf]
    %v304 = vld [vmem:[#allocation7 + $0x50] sm:$0xf]
    %v305 = vld [vmem:[#allocation7 + $0x54] sm:$0xf]
    %v306 = vld [vmem:[#allocation7 + $0x58] sm:$0xf]
    %v307 = vld [vmem:[#allocation7 + $0x5c] sm:$0xf]
    %v308 = vld [vmem:[#allocation7 + $0x60] sm:$0xf]
    %v309 = vld [vmem:[#allocation7 + $0x64] sm:$0xf]
    %v310 = vld [vmem:[#allocation7 + $0x68] sm:$0xf]
    %v311 = vld [vmem:[#allocation7 + $0x6c] sm:$0xf]
    %v312 = vld [vmem:[#allocation7 + $0x70] sm:$0xf]
    %v313 = vld [vmem:[#allocation7 + $0x74] sm:$0xf]
    %v314 = vld [vmem:[#allocation7 + $0x78] sm:$0xf]
    %v315 = vld [vmem:[#allocation7 + $0x7c] sm:$0xf]
    %v316 = vld [vmem:[#allocation7 + $0x80] sm:$0xf]
    %v317 = vld [vmem:[#allocation7 + $0x84] sm:$0xf]
    %v318 = vld [vmem:[#allocation7 + $0x88] sm:$0xf]
    %v319 = vld [vmem:[#allocation7 + $0x8c] sm:$0xf]
    %v320 = vld [vmem:[#allocation7 + $0x90] sm:$0xf]
    %v321 = vld [vmem:[#allocation7 + $0x94] sm:$0xf]
    %v322 = vld [vmem:[#allocation7 + $0x98] sm:$0xf]
    %v323 = vld [vmem:[#allocation7 + $0x9c] sm:$0xf]
    %v324 = vld [vmem:[#allocation7 + $0xa0] sm:$0xf]
    %v325 = vld [vmem:[#allocation7 + $0xa4] sm:$0xf]
    %v326 = vld [vmem:[#allocation7 + $0xa8] sm:$0xf]
    %v327 = vld [vmem:[#allocation7 + $0xac] sm:$0xf]
    %v328 = vld [vmem:[#allocation7 + $0xb0] sm:$0xf]
    %v329 = vld [vmem:[#allocation7 + $0xb4] sm:$0xf]
    %v330 = vld [vmem:[#allocation7 + $0xb8] sm:$0xf]
    %v331 = vld [vmem:[#allocation7 + $0xbc] sm:$0xf]
    %v332 = vld [vmem:[#allocation7 + $0xc0] sm:$0xf]
    %v333 = vld [vmem:[#allocation7 + $0xc4] sm:$0xf]
    %v334 = vld [vmem:[#allocation7 + $0xc8] sm:$0xf]
    %v335 = vld [vmem:[#allocation7 + $0xcc] sm:$0xf]
    %v336 = vld [vmem:[#allocation7 + $0xd0] sm:$0xf]
    %v337 = vld [vmem:[#allocation7 + $0xd4] sm:$0xf]
    %v338 = vld [vmem:[#allocation7 + $0xd8] sm:$0xf]
    %v339 = vld [vmem:[#allocation7 + $0xdc] sm:$0xf]
    %v340 = vld [vmem:[#allocation7 + $0xe0] sm:$0xf]
    %v341 = vld [vmem:[#allocation7 + $0xe4] sm:$0xf]
    %v342 = vld [vmem:[#allocation7 + $0xe8] sm:$0xf]
    %v343 = vld [vmem:[#allocation7 + $0xec] sm:$0xf]
    %v344 = vld [vmem:[#allocation7 + $0xf0] sm:$0xf]
    %v345 = vld [vmem:[#allocation7 + $0xf4] sm:$0xf]
    %v346 = vld [vmem:[#allocation7 + $0xf8] sm:$0xf]
    %v347 = vld [vmem:[#allocation7 + $0xfc] sm:$0xf]
    %v348 = vld [vmem:[#allocation7 + $0x100] sm:$0xf]
    %v349 = vld [vmem:[#allocation7 + $0x104] sm:$0xf]
    %v350 = vld [vmem:[#allocation7 + $0x108] sm:$0xf]
    %v351 = vld [vmem:[#allocation7 + $0x10c] sm:$0xf]
    %v352 = vld [vmem:[#allocation7 + $0x110] sm:$0xf]
    %v353 = vld [vmem:[#allocation7 + $0x114] sm:$0xf]
    %v354 = vld [vmem:[#allocation7 + $0x118] sm:$0xf]
    %v355 = vld [vmem:[#allocation7 + $0x11c] sm:$0xf]
    %v356 = vld [vmem:[#allocation7 + $0x120] sm:$0xf]
    %v357 = vld [vmem:[#allocation7 + $0x124] sm:$0xf]
    %v358 = vld [vmem:[#allocation7 + $0x128] sm:$0xf]
    %v359 = vld [vmem:[#allocation7 + $0x12c] sm:$0xf]
    %v360 = vld [vmem:[#allocation7 + $0x130] sm:$0xf]
    %v361 = vld [vmem:[#allocation7 + $0x134] sm:$0xf]
    %v362 = vld [vmem:[#allocation7 + $0x138] sm:$0xf]
    %v363 = vld [vmem:[#allocation7 + $0x13c] sm:$0xf]
    %v364 = vld [vmem:[#allocation7 + $0x140] sm:$0xf]
    %v365 = vld [vmem:[#allocation7 + $0x144] sm:$0xf]
    %v366 = vld [vmem:[#allocation7 + $0x148] sm:$0xf]
    %v367 = vld [vmem:[#allocation7 + $0x14c] sm:$0xf]
    %v368 = vld [vmem:[#allocation7 + $0x150] sm:$0xf]
    %v369 = vld [vmem:[#allocation7 + $0x154] sm:$0xf]
    %v370 = vld [vmem:[#allocation7 + $0x158] sm:$0xf]
    %v371 = vld [vmem:[#allocation7 + $0x15c] sm:$0xf]
    %v372 = vld [vmem:[#allocation7 + $0x160] sm:$0xf]
    %v373 = vld [vmem:[#allocation7 + $0x164] sm:$0xf]
    %v374 = vld [vmem:[#allocation7 + $0x168] sm:$0xf]
    %v375 = vld [vmem:[#allocation7 + $0x16c] sm:$0xf]
    %v376 = vld [vmem:[#allocation7 + $0x170] sm:$0xf]
    %v377 = vld [vmem:[#allocation7 + $0x174] sm:$0xf]
    %v378 = vld [vmem:[#allocation7 + $0x178] sm:$0xf]
    %v379 = vld [vmem:[#allocation7 + $0x17c] sm:$0xf]
    %v380 = vld [vmem:[#allocation7 + $0x180] sm:$0xf]
    %v381 = vld [vmem:[#allocation7 + $0x184] sm:$0xf]
    %v382 = vld [vmem:[#allocation7 + $0x188] sm:$0xf]
    %v383 = vld [vmem:[#allocation7 + $0x18c] sm:$0xf]
    %v384 = vld [vmem:[#allocation7 + $0x190] sm:$0xf]
    %v385 = vld [vmem:[#allocation7 + $0x194] sm:$0xf]
    %v386 = vld [vmem:[#allocation7 + $0x198] sm:$0xf]
    %v387 = vld [vmem:[#allocation7 + $0x19c] sm:$0xf]
    %v388 = vld [vmem:[#allocation7 + $0x1a0] sm:$0xf]
    %v389 = vld [vmem:[#allocation7 + $0x1a4] sm:$0xf]
    %v390 = vld [vmem:[#allocation7 + $0x1a8] sm:$0xf]
    %v391 = vld [vmem:[#allocation7 + $0x1ac] sm:$0xf]
    %v392 = vld [vmem:[#allocation7 + $0x1b0] sm:$0xf]
    %v393 = vld [vmem:[#allocation7 + $0x1b4] sm:$0xf]
    %v394 = vld [vmem:[#allocation7 + $0x1b8] sm:$0xf]
    %v395 = vld [vmem:[#allocation7 + $0x1bc] sm:$0xf]
    %v396 = vld [vmem:[#allocation7 + $0x1c0] sm:$0xf]
    %v397 = vld [vmem:[#allocation7 + $0x1c4] sm:$0xf]
    %v398 = vld [vmem:[#allocation7 + $0x1c8] sm:$0xf]
    %v399 = vld [vmem:[#allocation7 + $0x1cc] sm:$0xf]
    %v400 = vld [vmem:[#allocation7 + $0x1d0] sm:$0xf]
    %v401 = vld [vmem:[#allocation7 + $0x1d4] sm:$0xf]
    %v402 = vld [vmem:[#allocation7 + $0x1d8] sm:$0xf]
    %v403 = vld [vmem:[#allocation7 + $0x1dc] sm:$0xf]
    %v404 = vld [vmem:[#allocation7 + $0x1e0] sm:$0xf]
    %v405 = vld [vmem:[#allocation7 + $0x1e4] sm:$0xf]
    %v406 = vld [vmem:[#allocation7 + $0x1e8] sm:$0xf]
    %v407 = vld [vmem:[#allocation7 + $0x1ec] sm:$0xf]
    %v408 = vld [vmem:[#allocation7 + $0x1f0] sm:$0xf]
    %v409 = vld [vmem:[#allocation7 + $0x1f4] sm:$0xf]
    %v410 = vld [vmem:[#allocation7 + $0x1f8] sm:$0xf]
    %v411 = vld [vmem:[#allocation7 + $0x1fc] sm:$0xf]
    %v412 = vld [vmem:[#allocation7 + $0x200] sm:$0xf]
    %v413 = vld [vmem:[#allocation7 + $0x204] sm:$0xf]
    %v414 = vld [vmem:[#allocation7 + $0x208] sm:$0xf]
    %v415 = vld [vmem:[#allocation7 + $0x20c] sm:$0xf]
    %v416 = vld [vmem:[#allocation7 + $0x210] sm:$0xf]
    %v417 = vld [vmem:[#allocation7 + $0x214] sm:$0xf]
    %v418 = vld [vmem:[#allocation7 + $0x218] sm:$0xf]
    %v419 = vld [vmem:[#allocation7 + $0x21c] sm:$0xf]
    %v420 = vld [vmem:[#allocation7 + $0x220] sm:$0xf]
    %v421 = vld [vmem:[#allocation7 + $0x224] sm:$0xf]
    %v422 = vld [vmem:[#allocation7 + $0x228] sm:$0xf]
    %v423 = vld [vmem:[#allocation7 + $0x22c] sm:$0xf]
    %v424 = vld [vmem:[#allocation7 + $0x230] sm:$0xf]
    %v425 = vld [vmem:[#allocation7 + $0x234] sm:$0xf]
    %v426 = vld [vmem:[#allocation7 + $0x238] sm:$0xf]
    %v427 = vld [vmem:[#allocation7 + $0x23c] sm:$0xf]
    %v428 = vld [vmem:[#allocation7 + $0x240] sm:$0xf]
    %v429 = vld [vmem:[#allocation7 + $0x244] sm:$0xf]
    %v430 = vld [vmem:[#allocation7 + $0x248] sm:$0xf]
    %v431 = vld [vmem:[#allocation7 + $0x24c] sm:$0xf]
    %v432 = vld [vmem:[#allocation7 + $0x250] sm:$0xf]
    %v433 = vld [vmem:[#allocation7 + $0x254] sm:$0xf]
    %v434 = vld [vmem:[#allocation7 + $0x258] sm:$0xf]
    %v435 = vld [vmem:[#allocation7 + $0x25c] sm:$0xf]
    %v436 = vld [vmem:[#allocation7 + $0x260] sm:$0xf]
    %v437 = vld [vmem:[#allocation7 + $0x264] sm:$0xf]
    %v438 = vld [vmem:[#allocation7 + $0x268] sm:$0xf]
    %v439 = vld [vmem:[#allocation7 + $0x26c] sm:$0xf]
    %v440 = vld [vmem:[#allocation7 + $0x270] sm:$0xf]
    %v441 = vld [vmem:[#allocation7 + $0x274] sm:$0xf]
    %v442 = vld [vmem:[#allocation7 + $0x278] sm:$0xf]
    %v443 = vld [vmem:[#allocation7 + $0x27c] sm:$0xf]
    %v444 = vld [vmem:[#allocation7 + $0x280] sm:$0xf]
    %v445 = vld [vmem:[#allocation7 + $0x284] sm:$0xf]
    %v446 = vld [vmem:[#allocation7 + $0x288] sm:$0xf]
    %v447 = vld [vmem:[#allocation7 + $0x28c] sm:$0xf]
    %v448 = vld [vmem:[#allocation7 + $0x290] sm:$0xf]
    %v449 = vld [vmem:[#allocation7 + $0x294] sm:$0xf]
    %v450 = vld [vmem:[#allocation7 + $0x298] sm:$0xf]
    %v451 = vld [vmem:[#allocation7 + $0x29c] sm:$0xf]
    %v452 = vld [vmem:[#allocation7 + $0x2a0] sm:$0xf]
    %v453 = vld [vmem:[#allocation7 + $0x2a4] sm:$0xf]
    %v454 = vld [vmem:[#allocation7 + $0x2a8] sm:$0xf]
    %v455 = vld [vmem:[#allocation7 + $0x2ac] sm:$0xf]
    %v456 = vld [vmem:[#allocation7 + $0x2b0] sm:$0xf]
    %v457 = vld [vmem:[#allocation7 + $0x2b4] sm:$0xf]
    %v458 = vld [vmem:[#allocation7 + $0x2b8] sm:$0xf]
    %v459 = vld [vmem:[#allocation7 + $0x2bc] sm:$0xf]
    %v460 = vld [vmem:[#allocation7 + $0x2c0] sm:$0xf]
    %v461 = vld [vmem:[#allocation7 + $0x2c4] sm:$0xf]
    %v462 = vld [vmem:[#allocation7 + $0x2c8] sm:$0xf]
    %v463 = vld [vmem:[#allocation7 + $0x2cc] sm:$0xf]
    %v464 = vld [vmem:[#allocation7 + $0x2d0] sm:$0xf]
    %v465 = vld [vmem:[#allocation7 + $0x2d4] sm:$0xf]
    %v466 = vld [vmem:[#allocation7 + $0x2d8] sm:$0xf]
    %v467 = vld [vmem:[#allocation7 + $0x2dc] sm:$0xf]
    %v468 = vld [vmem:[#allocation7 + $0x2e0] sm:$0xf]
    %v469 = vld [vmem:[#allocation7 + $0x2e4] sm:$0xf]
    %v470 = vld [vmem:[#allocation7 + $0x2e8] sm:$0xf]
    %v471 = vld [vmem:[#allocation7 + $0x2ec] sm:$0xf]
    %v472 = vld [vmem:[#allocation7 + $0x2f0] sm:$0xf]
    %v473 = vld [vmem:[#allocation7 + $0x2f4] sm:$0xf]
    %v474 = vld [vmem:[#allocation7 + $0x2f8] sm:$0xf]
    %v475 = vld [vmem:[#allocation7 + $0x2fc] sm:$0xf]
    %v476 = vld [vmem:[#allocation7 + $0x300] sm:$0xf]
    %v477 = vld [vmem:[#allocation7 + $0x304] sm:$0xf]
    %v478 = vld [vmem:[#allocation7 + $0x308] sm:$0xf]
    %v479 = vld [vmem:[#allocation7 + $0x30c] sm:$0xf]
    %v480 = vld [vmem:[#allocation7 + $0x310] sm:$0xf]
    %v481 = vld [vmem:[#allocation7 + $0x314] sm:$0xf]
    %v482 = vld [vmem:[#allocation7 + $0x318] sm:$0xf]
    %v483 = vld [vmem:[#allocation7 + $0x31c] sm:$0xf]
    %v484 = vld [vmem:[#allocation7 + $0x320] sm:$0xf]
    %v485 = vld [vmem:[#allocation7 + $0x324] sm:$0xf]
    %v486 = vld [vmem:[#allocation7 + $0x328] sm:$0xf]
    %v487 = vld [vmem:[#allocation7 + $0x32c] sm:$0xf]
    %v488 = vld [vmem:[#allocation7 + $0x330] sm:$0xf]
    %v489 = vld [vmem:[#allocation7 + $0x334] sm:$0xf]
    %v490 = vld [vmem:[#allocation7 + $0x338] sm:$0xf]
    %v491 = vld [vmem:[#allocation7 + $0x33c] sm:$0xf]
    %v492 = vld [vmem:[#allocation7 + $0x340] sm:$0xf]
    %v493 = vld [vmem:[#allocation7 + $0x344] sm:$0xf]
    %v494 = vld [vmem:[#allocation7 + $0x348] sm:$0xf]
    %v495 = vld [vmem:[#allocation7 + $0x34c] sm:$0xf]
    %v496 = vld [vmem:[#allocation7 + $0x350] sm:$0xf]
    %v497 = vld [vmem:[#allocation7 + $0x354] sm:$0xf]
    %v498 = vld [vmem:[#allocation7 + $0x358] sm:$0xf]
    %v499 = vld [vmem:[#allocation7 + $0x35c] sm:$0xf]
    %v500 = vld [vmem:[#allocation7 + $0x360] sm:$0xf]
    %v501 = vld [vmem:[#allocation7 + $0x364] sm:$0xf]
    %v502 = vld [vmem:[#allocation7 + $0x368] sm:$0xf]
    %v503 = vld [vmem:[#allocation7 + $0x36c] sm:$0xf]
    %v504 = vld [vmem:[#allocation7 + $0x370] sm:$0xf]
    %v505 = vld [vmem:[#allocation7 + $0x374] sm:$0xf]
    %v506 = vld [vmem:[#allocation7 + $0x378] sm:$0xf]
    %v507 = vld [vmem:[#allocation7 + $0x37c] sm:$0xf]
    %v508 = vld [vmem:[#allocation7 + $0x380] sm:$0xf]
    %v509 = vld [vmem:[#allocation7 + $0x384] sm:$0xf]
    %v510 = vld [vmem:[#allocation7 + $0x388] sm:$0xf]
    %v511 = vld [vmem:[#allocation7 + $0x38c] sm:$0xf]
    %v512 = vld [vmem:[#allocation7 + $0x390] sm:$0xf]
    %v513 = vld [vmem:[#allocation7 + $0x394] sm:$0xf]
    %v514 = vld [vmem:[#allocation7 + $0x398] sm:$0xf]
    %v515 = vld [vmem:[#allocation7 + $0x39c] sm:$0xf]
    %v516 = vld [vmem:[#allocation7 + $0x3a0] sm:$0xf]
    %v517 = vld [vmem:[#allocation7 + $0x3a4] sm:$0xf]
    %v518 = vld [vmem:[#allocation7 + $0x3a8] sm:$0xf]
    %v519 = vld [vmem:[#allocation7 + $0x3ac] sm:$0xf]
    %v520 = vld [vmem:[#allocation7 + $0x3b0] sm:$0xf]
    %v521 = vld [vmem:[#allocation7 + $0x3b4] sm:$0xf]
    %v522 = vld [vmem:[#allocation7 + $0x3b8] sm:$0xf]
    %v523 = vld [vmem:[#allocation7 + $0x3bc] sm:$0xf]
    %v524 = vld [vmem:[#allocation5] sm:$0xff]
    %v525 = vld [vmem:[#allocation5 + $0x8] sm:$0xff]
    %v526 = vld [vmem:[#allocation5 + $0x10] sm:$0xff]
    %v527 = vld [vmem:[#allocation5 + $0x18] sm:$0xff]
    %v768 = vunpack.c.l.b16 %v284
    %v769 = vunpack.c.l.b16 %v285
    %v770 = vunpack.c.l.b16 %v286
    %v771 = vunpack.c.l.b16 %v287
    %v772 = vunpack.c.l.b16 %v288
    %v773 = vunpack.c.l.b16 %v289
    %v774 = vunpack.c.l.b16 %v290
    %v775 = vunpack.c.l.b16 %v291
    %v776 = vunpack.c.l.b16 %v292
    %v777 = vunpack.c.l.b16 %v293
    %v778 = vunpack.c.l.b16 %v294
    %v779 = vunpack.c.l.b16 %v295
    %v780 = vunpack.c.l.b16 %v296
    %v781 = vunpack.c.l.b16 %v297
    %v782 = vunpack.c.l.b16 %v298
    %v783 = vunpack.c.l.b16 %v299
    %v784 = vunpack.c.l.b16 %v300
    %v785 = vunpack.c.l.b16 %v301
    %v786 = vunpack.c.l.b16 %v302
    %v787 = vunpack.c.l.b16 %v303
    %v788 = vunpack.c.l.b16 %v304
    %v789 = vunpack.c.l.b16 %v305
    %v790 = vunpack.c.l.b16 %v306
    %v791 = vunpack.c.l.b16 %v307
    %v792 = vunpack.c.l.b16 %v308
    %v793 = vunpack.c.l.b16 %v309
    %v794 = vunpack.c.l.b16 %v310
    %v795 = vunpack.c.l.b16 %v311
    %v796 = vunpack.c.l.b16 %v312
    %v797 = vunpack.c.l.b16 %v313
    %v798 = vunpack.c.l.b16 %v314
    %v799 = vunpack.c.l.b16 %v315
    %v800 = vunpack.c.l.b16 %v316
    %v801 = vunpack.c.l.b16 %v317
    %v802 = vunpack.c.l.b16 %v318
    %v803 = vunpack.c.l.b16 %v319
    %v804 = vunpack.c.l.b16 %v320
    %v805 = vunpack.c.l.b16 %v321
    %v806 = vunpack.c.l.b16 %v322
    %v807 = vunpack.c.l.b16 %v323
    %v808 = vunpack.c.l.b16 %v324
    %v809 = vunpack.c.l.b16 %v325
    %v810 = vunpack.c.l.b16 %v326
    %v811 = vunpack.c.l.b16 %v327
    %v812 = vunpack.c.l.b16 %v328
    %v813 = vunpack.c.l.b16 %v329
    %v814 = vunpack.c.l.b16 %v330
    %v815 = vunpack.c.l.b16 %v331
    %v816 = vunpack.c.l.b16 %v332
    %v817 = vunpack.c.l.b16 %v333
    %v818 = vunpack.c.l.b16 %v334
    %v819 = vunpack.c.l.b16 %v335
    %v820 = vunpack.c.l.b16 %v336
    %v821 = vunpack.c.l.b16 %v337
    %v822 = vunpack.c.l.b16 %v338
    %v823 = vunpack.c.l.b16 %v339
    %v824 = vunpack.c.l.b16 %v340
    %v825 = vunpack.c.l.b16 %v341
    %v826 = vunpack.c.l.b16 %v342
    %v827 = vunpack.c.l.b16 %v343
    %v828 = vunpack.c.l.b16 %v344
    %v829 = vunpack.c.l.b16 %v345
    %v830 = vunpack.c.l.b16 %v346
    %v831 = vunpack.c.l.b16 %v347
    %v832 = vunpack.c.l.b16 %v348
    %v833 = vunpack.c.l.b16 %v349
    %v834 = vunpack.c.l.b16 %v350
    %v835 = vunpack.c.l.b16 %v351
    %v836 = vunpack.c.l.b16 %v352
    %v837 = vunpack.c.l.b16 %v353
    %v838 = vunpack.c.l.b16 %v354
    %v839 = vunpack.c.l.b16 %v355
    %v840 = vunpack.c.l.b16 %v356
    %v841 = vunpack.c.l.b16 %v357
    %v842 = vunpack.c.l.b16 %v358
    %v843 = vunpack.c.l.b16 %v359
    %v844 = vunpack.c.l.b16 %v360
    %v845 = vunpack.c.l.b16 %v361
    %v846 = vunpack.c.l.b16 %v362
    %v847 = vunpack.c.l.b16 %v363
    %v848 = vunpack.c.l.b16 %v364
    %v849 = vunpack.c.l.b16 %v365
    %v850 = vunpack.c.l.b16 %v366
    %v851 = vunpack.c.l.b16 %v367
    %v852 = vunpack.c.l.b16 %v368
    %v853 = vunpack.c.l.b16 %v369
    %v854 = vunpack.c.l.b16 %v370
    %v855 = vunpack.c.l.b16 %v371
    %v856 = vunpack.c.l.b16 %v372
    %v857 = vunpack.c.l.b16 %v373
    %v858 = vunpack.c.l.b16 %v374
    %v859 = vunpack.c.l.b16 %v375
    %v860 = vunpack.c.l.b16 %v376
    %v861 = vunpack.c.l.b16 %v377
    %v862 = vunpack.c.l.b16 %v378
    %v863 = vunpack.c.l.b16 %v379
    %v864 = vunpack.c.l.b16 %v380
    %v865 = vunpack.c.l.b16 %v381
    %v866 = vunpack.c.l.b16 %v382
    %v867 = vunpack.c.l.b16 %v383
    %v868 = vunpack.c.l.b16 %v384
    %v869 = vunpack.c.l.b16 %v385
    %v870 = vunpack.c.l.b16 %v386
    %v871 = vunpack.c.l.b16 %v387
    %v872 = vunpack.c.l.b16 %v388
    %v873 = vunpack.c.l.b16 %v389
    %v874 = vunpack.c.l.b16 %v390
    %v875 = vunpack.c.l.b16 %v391
    %v876 = vunpack.c.l.b16 %v392
    %v877 = vunpack.c.l.b16 %v393
    %v878 = vunpack.c.l.b16 %v394
    %v879 = vunpack.c.l.b16 %v395
    %v880 = vunpack.c.l.b16 %v396
    %v881 = vunpack.c.l.b16 %v397
    %v882 = vunpack.c.l.b16 %v398
    %v883 = vunpack.c.l.b16 %v399
    %v884 = vunpack.c.l.b16 %v400
    %v885 = vunpack.c.l.b16 %v401
    %v886 = vunpack.c.l.b16 %v402
    %v887 = vunpack.c.l.b16 %v403
    %v888 = vunpack.c.l.b16 %v404
    %v889 = vunpack.c.l.b16 %v405
    %v890 = vunpack.c.l.b16 %v406
    %v891 = vunpack.c.l.b16 %v407
    %v892 = vunpack.c.l.b16 %v408
    %v893 = vunpack.c.l.b16 %v409
    %v894 = vunpack.c.l.b16 %v410
    %v895 = vunpack.c.l.b16 %v411
    %v896 = vunpack.c.l.b16 %v412
    %v897 = vunpack.c.l.b16 %v413
    %v898 = vunpack.c.l.b16 %v414
    %v899 = vunpack.c.l.b16 %v415
    %v900 = vunpack.c.l.b16 %v416
    %v901 = vunpack.c.l.b16 %v417
    %v902 = vunpack.c.l.b16 %v418
    %v903 = vunpack.c.l.b16 %v419
    %v904 = vunpack.c.l.b16 %v420
    %v905 = vunpack.c.l.b16 %v421
    %v906 = vunpack.c.l.b16 %v422
    %v907 = vunpack.c.l.b16 %v423
    %v908 = vunpack.c.l.b16 %v424
    %v909 = vunpack.c.l.b16 %v425
    %v910 = vunpack.c.l.b16 %v426
    %v911 = vunpack.c.l.b16 %v427
    %v912 = vunpack.c.l.b16 %v428
    %v913 = vunpack.c.l.b16 %v429
    %v914 = vunpack.c.l.b16 %v430
    %v915 = vunpack.c.l.b16 %v431
    %v916 = vunpack.c.l.b16 %v432
    %v917 = vunpack.c.l.b16 %v433
    %v918 = vunpack.c.l.b16 %v434
    %v919 = vunpack.c.l.b16 %v435
    %v920 = vunpack.c.l.b16 %v436
    %v921 = vunpack.c.l.b16 %v437
    %v922 = vunpack.c.l.b16 %v438
    %v923 = vunpack.c.l.b16 %v439
    %v924 = vunpack.c.l.b16 %v440
    %v925 = vunpack.c.l.b16 %v441
    %v926 = vunpack.c.l.b16 %v442
    %v927 = vunpack.c.l.b16 %v443
    %v928 = vunpack.c.l.b16 %v444
    %v929 = vunpack.c.l.b16 %v445
    %v930 = vunpack.c.l.b16 %v446
    %v931 = vunpack.c.l.b16 %v447
    %v932 = vunpack.c.l.b16 %v448
    %v933 = vunpack.c.l.b16 %v449
    %v934 = vunpack.c.l.b16 %v450
    %v935 = vunpack.c.l.b16 %v451
    %v936 = vunpack.c.l.b16 %v452
    %v937 = vunpack.c.l.b16 %v453
    %v938 = vunpack.c.l.b16 %v454
    %v939 = vunpack.c.l.b16 %v455
    %v940 = vunpack.c.l.b16 %v456
    %v941 = vunpack.c.l.b16 %v457
    %v942 = vunpack.c.l.b16 %v458
    %v943 = vunpack.c.l.b16 %v459
    %v944 = vunpack.c.l.b16 %v460
    %v945 = vunpack.c.l.b16 %v461
    %v946 = vunpack.c.l.b16 %v462
    %v947 = vunpack.c.l.b16 %v463
    %v948 = vunpack.c.l.b16 %v464
    %v949 = vunpack.c.l.b16 %v465
    %v950 = vunpack.c.l.b16 %v466
    %v951 = vunpack.c.l.b16 %v467
    %v952 = vunpack.c.l.b16 %v468
    %v953 = vunpack.c.l.b16 %v469
    %v954 = vunpack.c.l.b16 %v470
    %v955 = vunpack.c.l.b16 %v471
    %v956 = vunpack.c.l.b16 %v472
    %v957 = vunpack.c.l.b16 %v473
    %v958 = vunpack.c.l.b16 %v474
    %v959 = vunpack.c.l.b16 %v475
    %v960 = vunpack.c.l.b16 %v476
    %v961 = vunpack.c.l.b16 %v477
    %v962 = vunpack.c.l.b16 %v478
    %v963 = vunpack.c.l.b16 %v479
    %v964 = vunpack.c.l.b16 %v480
    %v965 = vunpack.c.l.b16 %v481
    %v966 = vunpack.c.l.b16 %v482
    %v967 = vunpack.c.l.b16 %v483
    %v968 = vunpack.c.l.b16 %v484
    %v969 = vunpack.c.l.b16 %v485
    %v970 = vunpack.c.l.b16 %v486
    %v971 = vunpack.c.l.b16 %v487
    %v972 = vunpack.c.l.b16 %v488
    %v973 = vunpack.c.l.b16 %v489
    %v974 = vunpack.c.l.b16 %v490
    %v975 = vunpack.c.l.b16 %v491
    %v976 = vunpack.c.l.b16 %v492
    %v977 = vunpack.c.l.b16 %v493
    %v978 = vunpack.c.l.b16 %v494
    %v979 = vunpack.c.l.b16 %v495
    %v980 = vunpack.c.l.b16 %v496
    %v981 = vunpack.c.l.b16 %v497
    %v982 = vunpack.c.l.b16 %v498
    %v983 = vunpack.c.l.b16 %v499
    %v984 = vunpack.c.l.b16 %v500
    %v985 = vunpack.c.l.b16 %v501
    %v986 = vunpack.c.l.b16 %v502
    %v987 = vunpack.c.l.b16 %v503
    %v988 = vunpack.c.l.b16 %v504
    %v989 = vunpack.c.l.b16 %v505
    %v990 = vunpack.c.l.b16 %v506
    %v991 = vunpack.c.l.b16 %v507
    %v992 = vunpack.c.l.b16 %v508
    %v993 = vunpack.c.l.b16 %v509
    %v994 = vunpack.c.l.b16 %v510
    %v995 = vunpack.c.l.b16 %v511
    %v996 = vunpack.c.l.b16 %v512
    %v997 = vunpack.c.l.b16 %v513
    %v998 = vunpack.c.l.b16 %v514
    %v999 = vunpack.c.l.b16 %v515
    %v1000 = vunpack.c.l.b16 %v516
    %v1001 = vunpack.c.l.b16 %v517
    %v1002 = vunpack.c.l.b16 %v518
    %v1003 = vunpack.c.l.b16 %v519
    %v1004 = vunpack.c.l.b16 %v520
    %v1005 = vunpack.c.l.b16 %v521
    %v1006 = vunpack.c.l.b16 %v522
    %v1007 = vunpack.c.l.b16 %v523
    %v1008 = vpack.c.b16 %v769, %v768
    %v1009 = vpack.c.b16 %v771, %v770
    %v1010 = vpack.c.b16 %v773, %v772
    %v1011 = vpack.c.b16 %v775, %v774
    %v1012 = vpack.c.b16 %v777, %v776
    %v1013 = vpack.c.b16 %v779, %v778
    %v1014 = vpack.c.b16 %v781, %v780
    %v1015 = vpack.c.b16 %v783, %v782
    %v1016 = vpack.c.b16 %v785, %v784
    %v1017 = vpack.c.b16 %v787, %v786
    %v1018 = vpack.c.b16 %v789, %v788
    %v1019 = vpack.c.b16 %v791, %v790
    %v1020 = vpack.c.b16 %v793, %v792
    %v1021 = vpack.c.b16 %v795, %v794
    %v1022 = vpack.c.b16 %v797, %v796
    %v1023 = vpack.c.b16 %v799, %v798
    %v1024 = vpack.c.b16 %v801, %v800
    %v1025 = vpack.c.b16 %v803, %v802
    %v1026 = vpack.c.b16 %v805, %v804
    %v1027 = vpack.c.b16 %v807, %v806
    %v1028 = vpack.c.b16 %v809, %v808
    %v1029 = vpack.c.b16 %v811, %v810
    %v1030 = vpack.c.b16 %v813, %v812
    %v1031 = vpack.c.b16 %v815, %v814
    %v1032 = vpack.c.b16 %v817, %v816
    %v1033 = vpack.c.b16 %v819, %v818
    %v1034 = vpack.c.b16 %v821, %v820
    %v1035 = vpack.c.b16 %v823, %v822
    %v1036 = vpack.c.b16 %v825, %v824
    %v1037 = vpack.c.b16 %v827, %v826
    %v1038 = vpack.c.b16 %v829, %v828
    %v1039 = vpack.c.b16 %v831, %v830
    %v1040 = vpack.c.b16 %v833, %v832
    %v1041 = vpack.c.b16 %v835, %v834
    %v1042 = vpack.c.b16 %v837, %v836
    %v1043 = vpack.c.b16 %v839, %v838
    %v1044 = vpack.c.b16 %v841, %v840
    %v1045 = vpack.c.b16 %v843, %v842
    %v1046 = vpack.c.b16 %v845, %v844
    %v1047 = vpack.c.b16 %v847, %v846
    %v1048 = vpack.c.b16 %v849, %v848
    %v1049 = vpack.c.b16 %v851, %v850
    %v1050 = vpack.c.b16 %v853, %v852
    %v1051 = vpack.c.b16 %v855, %v854
    %v1052 = vpack.c.b16 %v857, %v856
    %v1053 = vpack.c.b16 %v859, %v858
    %v1054 = vpack.c.b16 %v861, %v860
    %v1055 = vpack.c.b16 %v863, %v862
    %v1056 = vpack.c.b16 %v865, %v864
    %v1057 = vpack.c.b16 %v867, %v866
    %v1058 = vpack.c.b16 %v869, %v868
    %v1059 = vpack.c.b16 %v871, %v870
    %v1060 = vpack.c.b16 %v873, %v872
    %v1061 = vpack.c.b16 %v875, %v874
    %v1062 = vpack.c.b16 %v877, %v876
    %v1063 = vpack.c.b16 %v879, %v878
    %v1064 = vpack.c.b16 %v881, %v880
    %v1065 = vpack.c.b16 %v883, %v882
    %v1066 = vpack.c.b16 %v885, %v884
    %v1067 = vpack.c.b16 %v887, %v886
    %v1068 = vpack.c.b16 %v889, %v888
    %v1069 = vpack.c.b16 %v891, %v890
    %v1070 = vpack.c.b16 %v893, %v892
    %v1071 = vpack.c.b16 %v895, %v894
    %v1072 = vpack.c.b16 %v897, %v896
    %v1073 = vpack.c.b16 %v899, %v898
    %v1074 = vpack.c.b16 %v901, %v900
    %v1075 = vpack.c.b16 %v903, %v902
    %v1076 = vpack.c.b16 %v905, %v904
    %v1077 = vpack.c.b16 %v907, %v906
    %v1078 = vpack.c.b16 %v909, %v908
    %v1079 = vpack.c.b16 %v911, %v910
    %v1080 = vpack.c.b16 %v913, %v912
    %v1081 = vpack.c.b16 %v915, %v914
    %v1082 = vpack.c.b16 %v917, %v916
    %v1083 = vpack.c.b16 %v919, %v918
    %v1084 = vpack.c.b16 %v921, %v920
    %v1085 = vpack.c.b16 %v923, %v922
    %v1086 = vpack.c.b16 %v925, %v924
    %v1087 = vpack.c.b16 %v927, %v926
    %v1088 = vpack.c.b16 %v929, %v928
    %v1089 = vpack.c.b16 %v931, %v930
    %v1090 = vpack.c.b16 %v933, %v932
    %v1091 = vpack.c.b16 %v935, %v934
    %v1092 = vpack.c.b16 %v937, %v936
    %v1093 = vpack.c.b16 %v939, %v938
    %v1094 = vpack.c.b16 %v941, %v940
    %v1095 = vpack.c.b16 %v943, %v942
    %v1096 = vpack.c.b16 %v945, %v944
    %v1097 = vpack.c.b16 %v947, %v946
    %v1098 = vpack.c.b16 %v949, %v948
    %v1099 = vpack.c.b16 %v951, %v950
    %v1100 = vpack.c.b16 %v953, %v952
    %v1101 = vpack.c.b16 %v955, %v954
    %v1102 = vpack.c.b16 %v957, %v956
    %v1103 = vpack.c.b16 %v959, %v958
    %v1104 = vpack.c.b16 %v961, %v960
    %v1105 = vpack.c.b16 %v963, %v962
    %v1106 = vpack.c.b16 %v965, %v964
    %v1107 = vpack.c.b16 %v967, %v966
    %v1108 = vpack.c.b16 %v969, %v968
    %v1109 = vpack.c.b16 %v971, %v970
    %v1110 = vpack.c.b16 %v973, %v972
    %v1111 = vpack.c.b16 %v975, %v974
    %v1112 = vpack.c.b16 %v977, %v976
    %v1113 = vpack.c.b16 %v979, %v978
    %v1114 = vpack.c.b16 %v981, %v980
    %v1115 = vpack.c.b16 %v983, %v982
    %v1116 = vpack.c.b16 %v985, %v984
    %v1117 = vpack.c.b16 %v987, %v986
    %v1118 = vpack.c.b16 %v989, %v988
    %v1119 = vpack.c.b16 %v991, %v990
    %v1120 = vpack.c.b16 %v993, %v992
    %v1121 = vpack.c.b16 %v995, %v994
    %v1122 = vpack.c.b16 %v997, %v996
    %v1123 = vpack.c.b16 %v999, %v998
    %v1124 = vpack.c.b16 %v1001, %v1000
    %v1125 = vpack.c.b16 %v1003, %v1002
    %v1126 = vpack.c.b16 %v1005, %v1004
    %v1127 = vpack.c.b16 %v1007, %v1006
    %1248 = vmatprep.subr.bf16.mxu0 0
    %1249 = vmatpush1.bf16.msra.mxu0 %v1015
    %1250 = vmatprep.subr.bf16.mxu0 0
    %1251 = vmatpush1.bf16.msra.mxu0 %v1014
    %1252 = vmatprep.subr.bf16.mxu0 0
    %1253 = vmatpush1.bf16.msra.mxu0 %v1013
    %1254 = vmatprep.subr.bf16.mxu0 0
    %1255 = vmatpush1.bf16.msra.mxu0 %v1012
    %1256 = vmatprep.subr.bf16.mxu0 0
    %1257 = vmatpush1.bf16.msra.mxu0 %v1011
    %1258 = vmatprep.subr.bf16.mxu0 0
    %1259 = vmatpush1.bf16.msra.mxu0 %v1010
    %1260 = vmatprep.subr.bf16.mxu0 0
    %1261 = vmatpush1.bf16.msra.mxu0 %v1009
    %1262 = vmatprep.subr.bf16.mxu0 0
    %1263 = vmatpush1.bf16.msra.mxu0 %v1008
    %1264 = vmatprep.subr.bf16.mxu0 0
    %1265 = vmatpush2.bf16.msra.mxu0 %v1023
    %1266 = vmatprep.subr.bf16.mxu0 0
    %1267 = vmatpush2.bf16.msra.mxu0 %v1022
    %1268 = vmatprep.subr.bf16.mxu0 0
    %1269 = vmatpush2.bf16.msra.mxu0 %v1021
    %1270 = vmatprep.subr.bf16.mxu0 0
    %1271 = vmatpush2.bf16.msra.mxu0 %v1020
    %1272 = vmatprep.subr.bf16.mxu0 0
    %1273 = vmatpush2.bf16.msra.mxu0 %v1019
    %1274 = vmatprep.subr.bf16.mxu0 0
    %1275 = vmatpush2.bf16.msra.mxu0 %v1018
    %1276 = vmatprep.subr.bf16.mxu0 0
    %1277 = vmatpush2.bf16.msra.mxu0 %v1017
    %1278 = vmatprep.subr.bf16.mxu0 0
    %1279 = vmatpush2.bf16.msra.mxu0 %v1016
    %1280 = vmatprep.mubr.bf16.mxu0 %v255
    %1281 = vmatmul.mubr.bf16.gmra.mxu0 %v254
    %v1282 = vpop.f32.mrf.mxu0
    %v1283 = vadd.f32 %v524, %v1282
    %v1284 = vpop.f32.mrf.mxu0
    %v1285 = vpop.f32.mrf.mxu0
    %v1286 = vadd.f32 %v525, %v1285
    %v1287 = vpop.f32.mrf.mxu0
    %1288 = vmatprep.mubr.bf16.mxu0 %v270
    %1289 = vmatmul.mubr.bf16.gmra.mxu0 %v269
    %v1290 = vpop.f32.mrf.mxu0
    %v1291 = vadd.f32 %v526, %v1290
    %v1292 = vpop.f32.mrf.mxu0
    %v1293 = vpop.f32.mrf.mxu0
    %v1294 = vadd.f32 %v527, %v1293
    %v1295 = vpop.f32.mrf.mxu0
    %1296 = vdwg.mxu0
    %1297 = vmatprep.subr.bf16.mxu0 0
    %1298 = vmatpush1.bf16.msra.mxu0 %v1031
    %1299 = vmatprep.subr.bf16.mxu0 0
    %1300 = vmatpush1.bf16.msra.mxu0 %v1030
    %1301 = vmatprep.subr.bf16.mxu0 0
    %1302 = vmatpush1.bf16.msra.mxu0 %v1029
    %1303 = vmatprep.subr.bf16.mxu0 0
    %1304 = vmatpush1.bf16.msra.mxu0 %v1028
    %1305 = vmatprep.subr.bf16.mxu0 0
    %1306 = vmatpush1.bf16.msra.mxu0 %v1027
    %1307 = vmatprep.subr.bf16.mxu0 0
    %1308 = vmatpush1.bf16.msra.mxu0 %v1026
    %1309 = vmatprep.subr.bf16.mxu0 0
    %1310 = vmatpush1.bf16.msra.mxu0 %v1025
    %1311 = vmatprep.subr.bf16.mxu0 0
    %1312 = vmatpush1.bf16.msra.mxu0 %v1024
    %1313 = vmatprep.subr.bf16.mxu0 0
    %1314 = vmatpush2.bf16.msra.mxu0 %v1039
    %1315 = vmatprep.subr.bf16.mxu0 0
    %1316 = vmatpush2.bf16.msra.mxu0 %v1038
    %1317 = vmatprep.subr.bf16.mxu0 0
    %1318 = vmatpush2.bf16.msra.mxu0 %v1037
    %1319 = vmatprep.subr.bf16.mxu0 0
    %1320 = vmatpush2.bf16.msra.mxu0 %v1036
    %1321 = vmatprep.subr.bf16.mxu0 0
    %1322 = vmatpush2.bf16.msra.mxu0 %v1035
    %1323 = vmatprep.subr.bf16.mxu0 0
    %1324 = vmatpush2.bf16.msra.mxu0 %v1034
    %1325 = vmatprep.subr.bf16.mxu0 0
    %1326 = vmatpush2.bf16.msra.mxu0 %v1033
    %1327 = vmatprep.subr.bf16.mxu0 0
    %1328 = vmatpush2.bf16.msra.mxu0 %v1032
    %1329 = vmatprep.mubr.bf16.mxu0 %v257
    %1330 = vmatmul.mubr.bf16.gmra.mxu0 %v256
    %v1331 = vpop.f32.mrf.mxu0
    %v1332 = vadd.f32 %v1283, %v1331
    %v1333 = vpop.f32.mrf.mxu0
    %v1334 = vpop.f32.mrf.mxu0
    %v1335 = vadd.f32 %v1286, %v1334
    %v1336 = vpop.f32.mrf.mxu0
    %1337 = vmatprep.mubr.bf16.mxu0 %v272
    %1338 = vmatmul.mubr.bf16.gmra.mxu0 %v271
    %v1339 = vpop.f32.mrf.mxu0
    %v1340 = vadd.f32 %v1291, %v1339
    %v1341 = vpop.f32.mrf.mxu0
    %v1342 = vpop.f32.mrf.mxu0
    %v1343 = vadd.f32 %v1294, %v1342
    %v1344 = vpop.f32.mrf.mxu0
    %1345 = vdwg.mxu0
    %1346 = vmatprep.subr.bf16.mxu0 0
    %1347 = vmatpush1.bf16.msra.mxu0 %v1047
    %1348 = vmatprep.subr.bf16.mxu0 0
    %1349 = vmatpush1.bf16.msra.mxu0 %v1046
    %1350 = vmatprep.subr.bf16.mxu0 0
    %1351 = vmatpush1.bf16.msra.mxu0 %v1045
    %1352 = vmatprep.subr.bf16.mxu0 0
    %1353 = vmatpush1.bf16.msra.mxu0 %v1044
    %1354 = vmatprep.subr.bf16.mxu0 0
    %1355 = vmatpush1.bf16.msra.mxu0 %v1043
    %1356 = vmatprep.subr.bf16.mxu0 0
    %1357 = vmatpush1.bf16.msra.mxu0 %v1042
    %1358 = vmatprep.subr.bf16.mxu0 0
    %1359 = vmatpush1.bf16.msra.mxu0 %v1041
    %1360 = vmatprep.subr.bf16.mxu0 0
    %1361 = vmatpush1.bf16.msra.mxu0 %v1040
    %1362 = vmatprep.subr.bf16.mxu0 0
    %1363 = vmatpush2.bf16.msra.mxu0 %v1055
    %1364 = vmatprep.subr.bf16.mxu0 0
    %1365 = vmatpush2.bf16.msra.mxu0 %v1054
    %1366 = vmatprep.subr.bf16.mxu0 0
    %1367 = vmatpush2.bf16.msra.mxu0 %v1053
    %1368 = vmatprep.subr.bf16.mxu0 0
    %1369 = vmatpush2.bf16.msra.mxu0 %v1052
    %1370 = vmatprep.subr.bf16.mxu0 0
    %1371 = vmatpush2.bf16.msra.mxu0 %v1051
    %1372 = vmatprep.subr.bf16.mxu0 0
    %1373 = vmatpush2.bf16.msra.mxu0 %v1050
    %1374 = vmatprep.subr.bf16.mxu0 0
    %1375 = vmatpush2.bf16.msra.mxu0 %v1049
    %1376 = vmatprep.subr.bf16.mxu0 0
    %1377 = vmatpush2.bf16.msra.mxu0 %v1048
    %1378 = vmatprep.mubr.bf16.mxu0 %v259
    %1379 = vmatmul.mubr.bf16.gmra.mxu0 %v258
    %v1380 = vpop.f32.mrf.mxu0
    %v1381 = vadd.f32 %v1332, %v1380
    %v1382 = vpop.f32.mrf.mxu0
    %v1383 = vpop.f32.mrf.mxu0
    %v1384 = vadd.f32 %v1335, %v1383
    %v1385 = vpop.f32.mrf.mxu0
    %1386 = vmatprep.mubr.bf16.mxu0 %v274
    %1387 = vmatmul.mubr.bf16.gmra.mxu0 %v273
    %v1388 = vpop.f32.mrf.mxu0
    %v1389 = vadd.f32 %v1340, %v1388
    %v1390 = vpop.f32.mrf.mxu0
    %v1391 = vpop.f32.mrf.mxu0
    %v1392 = vadd.f32 %v1343, %v1391
    %v1393 = vpop.f32.mrf.mxu0
    %1394 = vdwg.mxu0
    %1395 = vmatprep.subr.bf16.mxu0 0
    %1396 = vmatpush1.bf16.msra.mxu0 %v1063
    %1397 = vmatprep.subr.bf16.mxu0 0
    %1398 = vmatpush1.bf16.msra.mxu0 %v1062
    %1399 = vmatprep.subr.bf16.mxu0 0
    %1400 = vmatpush1.bf16.msra.mxu0 %v1061
    %1401 = vmatprep.subr.bf16.mxu0 0
    %1402 = vmatpush1.bf16.msra.mxu0 %v1060
    %1403 = vmatprep.subr.bf16.mxu0 0
    %1404 = vmatpush1.bf16.msra.mxu0 %v1059
    %1405 = vmatprep.subr.bf16.mxu0 0
    %1406 = vmatpush1.bf16.msra.mxu0 %v1058
    %1407 = vmatprep.subr.bf16.mxu0 0
    %1408 = vmatpush1.bf16.msra.mxu0 %v1057
    %1409 = vmatprep.subr.bf16.mxu0 0
    %1410 = vmatpush1.bf16.msra.mxu0 %v1056
    %1411 = vmatprep.subr.bf16.mxu0 0
    %1412 = vmatpush2.bf16.msra.mxu0 %v1071
    %1413 = vmatprep.subr.bf16.mxu0 0
    %1414 = vmatpush2.bf16.msra.mxu0 %v1070
    %1415 = vmatprep.subr.bf16.mxu0 0
    %1416 = vmatpush2.bf16.msra.mxu0 %v1069
    %1417 = vmatprep.subr.bf16.mxu0 0
    %1418 = vmatpush2.bf16.msra.mxu0 %v1068
    %1419 = vmatprep.subr.bf16.mxu0 0
    %1420 = vmatpush2.bf16.msra.mxu0 %v1067
    %1421 = vmatprep.subr.bf16.mxu0 0
    %1422 = vmatpush2.bf16.msra.mxu0 %v1066
    %1423 = vmatprep.subr.bf16.mxu0 0
    %1424 = vmatpush2.bf16.msra.mxu0 %v1065
    %1425 = vmatprep.subr.bf16.mxu0 0
    %1426 = vmatpush2.bf16.msra.mxu0 %v1064
    %1427 = vmatprep.mubr.bf16.mxu0 %v261
    %1428 = vmatmul.mubr.bf16.gmra.mxu0 %v260
    %v1429 = vpop.f32.mrf.mxu0
    %v1430 = vadd.f32 %v1381, %v1429
    %v1431 = vpop.f32.mrf.mxu0
    %v1432 = vpop.f32.mrf.mxu0
    %v1433 = vadd.f32 %v1384, %v1432
    %v1434 = vpop.f32.mrf.mxu0
    %1435 = vmatprep.mubr.bf16.mxu0 %v276
    %1436 = vmatmul.mubr.bf16.gmra.mxu0 %v275
    %v1437 = vpop.f32.mrf.mxu0
    %v1438 = vadd.f32 %v1389, %v1437
    %v1439 = vpop.f32.mrf.mxu0
    %v1440 = vpop.f32.mrf.mxu0
    %v1441 = vadd.f32 %v1392, %v1440
    %v1442 = vpop.f32.mrf.mxu0
    %1443 = vdwg.mxu0
    %1444 = vmatprep.subr.bf16.mxu0 0
    %1445 = vmatpush1.bf16.msra.mxu0 %v1079
    %1446 = vmatprep.subr.bf16.mxu0 0
    %1447 = vmatpush1.bf16.msra.mxu0 %v1078
    %1448 = vmatprep.subr.bf16.mxu0 0
    %1449 = vmatpush1.bf16.msra.mxu0 %v1077
    %1450 = vmatprep.subr.bf16.mxu0 0
    %1451 = vmatpush1.bf16.msra.mxu0 %v1076
    %1452 = vmatprep.subr.bf16.mxu0 0
    %1453 = vmatpush1.bf16.msra.mxu0 %v1075
    %1454 = vmatprep.subr.bf16.mxu0 0
    %1455 = vmatpush1.bf16.msra.mxu0 %v1074
    %1456 = vmatprep.subr.bf16.mxu0 0
    %1457 = vmatpush1.bf16.msra.mxu0 %v1073
    %1458 = vmatprep.subr.bf16.mxu0 0
    %1459 = vmatpush1.bf16.msra.mxu0 %v1072
    %1460 = vmatprep.subr.bf16.mxu0 0
    %1461 = vmatpush2.bf16.msra.mxu0 %v1087
    %1462 = vmatprep.subr.bf16.mxu0 0
    %1463 = vmatpush2.bf16.msra.mxu0 %v1086
    %1464 = vmatprep.subr.bf16.mxu0 0
    %1465 = vmatpush2.bf16.msra.mxu0 %v1085
    %1466 = vmatprep.subr.bf16.mxu0 0
    %1467 = vmatpush2.bf16.msra.mxu0 %v1084
    %1468 = vmatprep.subr.bf16.mxu0 0
    %1469 = vmatpush2.bf16.msra.mxu0 %v1083
    %1470 = vmatprep.subr.bf16.mxu0 0
    %1471 = vmatpush2.bf16.msra.mxu0 %v1082
    %1472 = vmatprep.subr.bf16.mxu0 0
    %1473 = vmatpush2.bf16.msra.mxu0 %v1081
    %1474 = vmatprep.subr.bf16.mxu0 0
    %1475 = vmatpush2.bf16.msra.mxu0 %v1080
    %1476 = vmatprep.mubr.bf16.mxu0 %v263
    %1477 = vmatmul.mubr.bf16.gmra.mxu0 %v262
    %v1478 = vpop.f32.mrf.mxu0
    %v1479 = vadd.f32 %v1430, %v1478
    %v1480 = vpop.f32.mrf.mxu0
    %v1481 = vpop.f32.mrf.mxu0
    %v1482 = vadd.f32 %v1433, %v1481
    %v1483 = vpop.f32.mrf.mxu0
    %1484 = vmatprep.mubr.bf16.mxu0 %v278
    %1485 = vmatmul.mubr.bf16.gmra.mxu0 %v277
    %v1486 = vpop.f32.mrf.mxu0
    %v1487 = vadd.f32 %v1438, %v1486
    %v1488 = vpop.f32.mrf.mxu0
    %v1489 = vpop.f32.mrf.mxu0
    %v1490 = vadd.f32 %v1441, %v1489
    %v1491 = vpop.f32.mrf.mxu0
    %1492 = vdwg.mxu0
    %1493 = vmatprep.subr.bf16.mxu0 0
    %1494 = vmatpush1.bf16.msra.mxu0 %v1095
    %1495 = vmatprep.subr.bf16.mxu0 0
    %1496 = vmatpush1.bf16.msra.mxu0 %v1094
    %1497 = vmatprep.subr.bf16.mxu0 0
    %1498 = vmatpush1.bf16.msra.mxu0 %v1093
    %1499 = vmatprep.subr.bf16.mxu0 0
    %1500 = vmatpush1.bf16.msra.mxu0 %v1092
    %1501 = vmatprep.subr.bf16.mxu0 0
    %1502 = vmatpush1.bf16.msra.mxu0 %v1091
    %1503 = vmatprep.subr.bf16.mxu0 0
    %1504 = vmatpush1.bf16.msra.mxu0 %v1090
    %1505 = vmatprep.subr.bf16.mxu0 0
    %1506 = vmatpush1.bf16.msra.mxu0 %v1089
    %1507 = vmatprep.subr.bf16.mxu0 0
    %1508 = vmatpush1.bf16.msra.mxu0 %v1088
    %1509 = vmatprep.subr.bf16.mxu0 0
    %1510 = vmatpush2.bf16.msra.mxu0 %v1103
    %1511 = vmatprep.subr.bf16.mxu0 0
    %1512 = vmatpush2.bf16.msra.mxu0 %v1102
    %1513 = vmatprep.subr.bf16.mxu0 0
    %1514 = vmatpush2.bf16.msra.mxu0 %v1101
    %1515 = vmatprep.subr.bf16.mxu0 0
    %1516 = vmatpush2.bf16.msra.mxu0 %v1100
    %1517 = vmatprep.subr.bf16.mxu0 0
    %1518 = vmatpush2.bf16.msra.mxu0 %v1099
    %1519 = vmatprep.subr.bf16.mxu0 0
    %1520 = vmatpush2.bf16.msra.mxu0 %v1098
    %1521 = vmatprep.subr.bf16.mxu0 0
    %1522 = vmatpush2.bf16.msra.mxu0 %v1097
    %1523 = vmatprep.subr.bf16.mxu0 0
    %1524 = vmatpush2.bf16.msra.mxu0 %v1096
    %1525 = vmatprep.mubr.bf16.mxu0 %v265
    %1526 = vmatmul.mubr.bf16.gmra.mxu0 %v264
    %v1527 = vpop.f32.mrf.mxu0
    %v1528 = vadd.f32 %v1479, %v1527
    %v1529 = vpop.f32.mrf.mxu0
    %v1530 = vpop.f32.mrf.mxu0
    %v1531 = vadd.f32 %v1482, %v1530
    %v1532 = vpop.f32.mrf.mxu0
    %1533 = vmatprep.mubr.bf16.mxu0 %v280
    %1534 = vmatmul.mubr.bf16.gmra.mxu0 %v279
    %v1535 = vpop.f32.mrf.mxu0
    %v1536 = vadd.f32 %v1487, %v1535
    %v1537 = vpop.f32.mrf.mxu0
    %v1538 = vpop.f32.mrf.mxu0
    %v1539 = vadd.f32 %v1490, %v1538
    %v1540 = vpop.f32.mrf.mxu0
    %1541 = vdwg.mxu0
    %1542 = vmatprep.subr.bf16.mxu0 0
    %1543 = vmatpush1.bf16.msra.mxu0 %v1111
    %1544 = vmatprep.subr.bf16.mxu0 0
    %1545 = vmatpush1.bf16.msra.mxu0 %v1110
    %1546 = vmatprep.subr.bf16.mxu0 0
    %1547 = vmatpush1.bf16.msra.mxu0 %v1109
    %1548 = vmatprep.subr.bf16.mxu0 0
    %1549 = vmatpush1.bf16.msra.mxu0 %v1108
    %1550 = vmatprep.subr.bf16.mxu0 0
    %1551 = vmatpush1.bf16.msra.mxu0 %v1107
    %1552 = vmatprep.subr.bf16.mxu0 0
    %1553 = vmatpush1.bf16.msra.mxu0 %v1106
    %1554 = vmatprep.subr.bf16.mxu0 0
    %1555 = vmatpush1.bf16.msra.mxu0 %v1105
    %1556 = vmatprep.subr.bf16.mxu0 0
    %1557 = vmatpush1.bf16.msra.mxu0 %v1104
    %1558 = vmatprep.subr.bf16.mxu0 0
    %1559 = vmatpush2.bf16.msra.mxu0 %v1119
    %1560 = vmatprep.subr.bf16.mxu0 0
    %1561 = vmatpush2.bf16.msra.mxu0 %v1118
    %1562 = vmatprep.subr.bf16.mxu0 0
    %1563 = vmatpush2.bf16.msra.mxu0 %v1117
    %1564 = vmatprep.subr.bf16.mxu0 0
    %1565 = vmatpush2.bf16.msra.mxu0 %v1116
    %1566 = vmatprep.subr.bf16.mxu0 0
    %1567 = vmatpush2.bf16.msra.mxu0 %v1115
    %1568 = vmatprep.subr.bf16.mxu0 0
    %1569 = vmatpush2.bf16.msra.mxu0 %v1114
    %1570 = vmatprep.subr.bf16.mxu0 0
    %1571 = vmatpush2.bf16.msra.mxu0 %v1113
    %1572 = vmatprep.subr.bf16.mxu0 0
    %1573 = vmatpush2.bf16.msra.mxu0 %v1112
    %1574 = vmatprep.mubr.bf16.mxu0 %v267
    %1575 = vmatmul.mubr.bf16.gmra.mxu0 %v266
    %v1576 = vpop.f32.mrf.mxu0
    %v1577 = vadd.f32 %v1528, %v1576
    %v1578 = vpop.f32.mrf.mxu0
    %v1579 = vpop.f32.mrf.mxu0
    %v1580 = vadd.f32 %v1531, %v1579
    %v1581 = vpop.f32.mrf.mxu0
    %1582 = vmatprep.mubr.bf16.mxu0 %v282
    %1583 = vmatmul.mubr.bf16.gmra.mxu0 %v281
    %v1584 = vpop.f32.mrf.mxu0
    %v1585 = vadd.f32 %v1536, %v1584
    %v1586 = vpop.f32.mrf.mxu0
    %v1587 = vpop.f32.mrf.mxu0
    %v1588 = vadd.f32 %v1539, %v1587
    %v1589 = vpop.f32.mrf.mxu0
    %1590 = vdwg.mxu0
    %1591 = vmatprep.subr.bf16.mxu0 0
    %1592 = vmatpush1.bf16.msra.mxu0 %v1127
    %1593 = vmatprep.subr.bf16.mxu0 0
    %1594 = vmatpush1.bf16.msra.mxu0 %v1126
    %1595 = vmatprep.subr.bf16.mxu0 0
    %1596 = vmatpush1.bf16.msra.mxu0 %v1125
    %1597 = vmatprep.subr.bf16.mxu0 0
    %1598 = vmatpush1.bf16.msra.mxu0 %v1124
    %1599 = vmatprep.subr.bf16.mxu0 0
    %1600 = vmatpush1.bf16.msra.mxu0 %v1123
    %1601 = vmatprep.subr.bf16.mxu0 0
    %1602 = vmatpush1.bf16.msra.mxu0 %v1122
    %1603 = vmatprep.subr.bf16.mxu0 0
    %1604 = vmatpush1.bf16.msra.mxu0 %v1121
    %1605 = vmatprep.subr.bf16.mxu0 0
    %1606 = vmatpush1.bf16.msra.mxu0 %v1120
    %1607 = vmatprep.subr.bf16.mxu0 0
    %1608 = vmatpush2.bf16.msra.mxu0 0
    %1609 = vmatprep.subr.bf16.mxu0 0
    %1610 = vmatpush2.bf16.msra.mxu0 0
    %1611 = vmatprep.subr.bf16.mxu0 0
    %1612 = vmatpush2.bf16.msra.mxu0 0
    %1613 = vmatprep.subr.bf16.mxu0 0
    %1614 = vmatpush2.bf16.msra.mxu0 0
    %1615 = vmatprep.subr.bf16.mxu0 0
    %1616 = vmatpush2.bf16.msra.mxu0 0
    %1617 = vmatprep.subr.bf16.mxu0 0
    %1618 = vmatpush2.bf16.msra.mxu0 0
    %1619 = vmatprep.subr.bf16.mxu0 0
    %1620 = vmatpush2.bf16.msra.mxu0 0
    %1621 = vmatprep.subr.bf16.mxu0 0
    %1622 = vmatpush2.bf16.msra.mxu0 0
    %1623 = vmatprep.mubr.bf16.mxu0 0
    %1624 = vmatmul.mubr.bf16.gmra.mxu0 %v268
    %v1625 = vpop.f32.mrf.mxu0
    %v1626 = vadd.f32 %v1577, %v1625
    %v1627 = vpop.f32.mrf.mxu0
    %v1628 = vpop.f32.mrf.mxu0
    %v1629 = vadd.f32 %v1580, %v1628
    %v1630 = vpop.f32.mrf.mxu0
    %1631 = vmatprep.mubr.bf16.mxu0 0
    %1632 = vmatmul.mubr.bf16.gmra.mxu0 %v283
    %v1633 = vpop.f32.mrf.mxu0
    %v1634 = vadd.f32 %v1585, %v1633
    %v1635 = vpop.f32.mrf.mxu0
    %v1636 = vpop.f32.mrf.mxu0
    %v1637 = vadd.f32 %v1588, %v1636
    %v1638 = vpop.f32.mrf.mxu0
    %1639 = vdwg.mxu0
    %v1640 = vlaneseq
    %v1641 = vand.u32 %v1640, 127
    %vm1642 = vcmp.ge.s32.totalorder %v1641, 9
    %v1643 = vsel %vm1642, -1e+30, 0.0
    %v1644 = vld [vmem:[%s3] sm:$0x1]
    %v1645 = vld [vmem:[#allocation8] sm:$0x1]
    %1646 = vadd.xlane.f32.xlu0 %v1626
    %v1647 = vpop.xlane.xlu0 %1646
    %1648 = vadd.xlane.f32.xlu0 %v1629
    %v1649 = vpop.xlane.xlu0 %1648
    %1650 = vadd.xlane.f32.xlu0 %v1634
    %v1651 = vpop.xlane.xlu0 %1650
    %1652 = vadd.xlane.f32.xlu0 %v1637
    %v1653 = vpop.xlane.xlu0 %1652
    %v1654 = vrcp.pop 128.0
    %v1655 = vmul.f32 %v1647, %v1654
    %v1656 = vmul.f32 %v1649, %v1654
    %v1657 = vmul.f32 %v1651, %v1654
    %v1658 = vmul.f32 %v1653, %v1654
    %v1659 = vsub.f32 %v1626, %v1655
    %v1660 = vsub.f32 %v1629, %v1656
    %v1661 = vsub.f32 %v1634, %v1657
    %v1662 = vsub.f32 %v1637, %v1658
    %v1663 = vmul.f32 %v1659, %v1659
    %v1664 = vmul.f32 %v1660, %v1660
    %v1665 = vmul.f32 %v1661, %v1661
    %v1666 = vmul.f32 %v1662, %v1662
    %1667 = vadd.xlane.f32.xlu0 %v1663
    %v1668 = vpop.xlane.xlu0 %1667
    %1669 = vadd.xlane.f32.xlu0 %v1664
    %v1670 = vpop.xlane.xlu0 %1669
    %1671 = vadd.xlane.f32.xlu0 %v1665
    %v1672 = vpop.xlane.xlu0 %1671
    %1673 = vadd.xlane.f32.xlu0 %v1666
    %v1674 = vpop.xlane.xlu0 %1673
    %v1675 = vmul.f32 %v1668, %v1654
    %v1676 = vmul.f32 %v1670, %v1654
    %v1677 = vmul.f32 %v1672, %v1654
    %v1678 = vmul.f32 %v1674, %v1654
    %v1679 = vadd.f32 %v1675, 1e-05
    %v1680 = vadd.f32 %v1676, 1e-05
    %v1681 = vadd.f32 %v1677, 1e-05
    %v1682 = vadd.f32 %v1678, 1e-05
    %v1683 = vrsqrt.pop %v1679
    %v1684 = vrsqrt.pop %v1680
    %v1685 = vrsqrt.pop %v1681
    %v1686 = vrsqrt.pop %v1682
    %v1687 = vmul.f32 %v1659, %v1683
    %v1688 = vmul.f32 %v1660, %v1684
    %v1689 = vmul.f32 %v1661, %v1685
    %v1690 = vmul.f32 %v1662, %v1686
    %v1692 = vlaneseq
    %v1693 = vshrl.u32 %v1692, 7
    %v1694 = vsub.s32 0, %v1693
    %v1695 = vrot.slane %v1644, %v1694
    %v1697 = vmul.f32 %v1687, %v1695
    %v1698 = vmul.f32 %v1688, %v1695
    %v1699 = vmul.f32 %v1689, %v1695
    %v1700 = vmul.f32 %v1690, %v1695
    %v1702 = vlaneseq
    %v1703 = vshrl.u32 %v1702, 7
    %v1704 = vsub.s32 0, %v1703
    %v1705 = vrot.slane %v1645, %v1704
    %v1707 = vadd.f32 %v1697, %v1705
    %v1708 = vadd.f32 %v1698, %v1705
    %v1709 = vadd.f32 %v1699, %v1705
    %v1710 = vadd.f32 %v1700, %v1705
    %v1711 = vpack.c.bf16 %v1708, %v1707
    %v1712 = vpack.c.bf16 %v1710, %v1709
    %v1713 = vld [vmem:[#allocation10] sm:$0xff]
    %v1714 = vld [vmem:[#allocation10 + $0x8] sm:$0xf]
    %v1715 = vld [vmem:[#allocation10 + $0xc] sm:$0xff]
    %v1716 = vld [vmem:[#allocation10 + $0x14] sm:$0xf]
    %v1717 = vld [vmem:[#allocation10 + $0x18] sm:$0xff]
    %v1718 = vld [vmem:[#allocation10 + $0x20] sm:$0xf]
    %v1719 = vld [vmem:[#allocation10 + $0x24] sm:$0xff]
    %v1720 = vld [vmem:[#allocation10 + $0x2c] sm:$0xf]
    %v1721 = vld [vmem:[#allocation10 + $0x30] sm:$0xff]
    %v1722 = vld [vmem:[#allocation10 + $0x38] sm:$0xf]
    %v1723 = vld [vmem:[#allocation10 + $0x3c] sm:$0xff]
    %v1724 = vld [vmem:[#allocation10 + $0x44] sm:$0xf]
    %v1725 = vld [vmem:[#allocation10 + $0x48] sm:$0xff]
    %v1726 = vld [vmem:[#allocation10 + $0x50] sm:$0xf]
    %v1727 = vld [vmem:[#allocation10 + $0x54] sm:$0xff]
    %v1728 = vld [vmem:[#allocation10 + $0x5c] sm:$0xf]
    %v1729 = vld [vmem:[#allocation10 + $0x60] sm:$0xff]
    %v1730 = vld [vmem:[#allocation10 + $0x68] sm:$0xf]
    %v1731 = vld [vmem:[#allocation10 + $0x6c] sm:$0xff]
    %v1732 = vld [vmem:[#allocation10 + $0x74] sm:$0xf]
    %v1733 = vld [vmem:[#allocation10 + $0x78] sm:$0xff]
    %v1734 = vld [vmem:[#allocation10 + $0x80] sm:$0xf]
    %v1735 = vld [vmem:[#allocation10 + $0x84] sm:$0xff]
    %v1736 = vld [vmem:[#allocation10 + $0x8c] sm:$0xf]
    %v1737 = vld [vmem:[#allocation10 + $0x90] sm:$0xff]
    %v1738 = vld [vmem:[#allocation10 + $0x98] sm:$0xf]
    %v1739 = vld [vmem:[#allocation10 + $0x9c] sm:$0xff]
    %v1740 = vld [vmem:[#allocation10 + $0xa4] sm:$0xf]
    %v1741 = vld [vmem:[#allocation10 + $0xa8] sm:$0xff]
    %v1742 = vld [vmem:[#allocation10 + $0xb0] sm:$0xf]
    %v1743 = vld [vmem:[#allocation10 + $0xb4] sm:$0xff]
    %v1744 = vld [vmem:[#allocation10 + $0xbc] sm:$0xf]
    %v1745 = vld [vmem:[%s6] sm:$0x7]
    %v1747 = vlaneseq
    %v1748 = vshrl.u32 %v1747, 7
    %v1749 = vsub.s32 0, %v1748
    %v1750 = vrot.slane %v1745, %v1749
    %v1751 = vlaneseq
    %v1752 = vshrl.u32 %v1751, 7
    %v1753 = vsub.s32 1, %v1752
    %v1754 = vrot.slane %v1745, %v1753
    %v1755 = vlaneseq
    %v1756 = vshrl.u32 %v1755, 7
    %v1757 = vsub.s32 2, %v1756
    %v1758 = vrot.slane %v1745, %v1757
    %v1794 = vunpack.c.l.b16 %v1713
    %v1795 = vunpack.c.h.b16 %v1713
    %v1796 = vunpack.c.l.b16 %v1714
    %v1797 = vunpack.c.l.b16 %v1715
    %v1798 = vunpack.c.h.b16 %v1715
    %v1799 = vunpack.c.l.b16 %v1716
    %v1800 = vunpack.c.l.b16 %v1717
    %v1801 = vunpack.c.h.b16 %v1717
    %v1802 = vunpack.c.l.b16 %v1718
    %v1803 = vunpack.c.l.b16 %v1719
    %v1804 = vunpack.c.h.b16 %v1719
    %v1805 = vunpack.c.l.b16 %v1720
    %v1806 = vunpack.c.l.b16 %v1721
    %v1807 = vunpack.c.h.b16 %v1721
    %v1808 = vunpack.c.l.b16 %v1722
    %v1809 = vunpack.c.l.b16 %v1723
    %v1810 = vunpack.c.h.b16 %v1723
    %v1811 = vunpack.c.l.b16 %v1724
    %v1812 = vunpack.c.l.b16 %v1725
    %v1813 = vunpack.c.h.b16 %v1725
    %v1814 = vunpack.c.l.b16 %v1726
    %v1815 = vunpack.c.l.b16 %v1727
    %v1816 = vunpack.c.h.b16 %v1727
    %v1817 = vunpack.c.l.b16 %v1728
    %v1818 = vunpack.c.l.b16 %v1729
    %v1819 = vunpack.c.h.b16 %v1729
    %v1820 = vunpack.c.l.b16 %v1730
    %v1821 = vunpack.c.l.b16 %v1731
    %v1822 = vunpack.c.h.b16 %v1731
    %v1823 = vunpack.c.l.b16 %v1732
    %v1824 = vunpack.c.l.b16 %v1733
    %v1825 = vunpack.c.h.b16 %v1733
    %v1826 = vunpack.c.l.b16 %v1734
    %v1827 = vunpack.c.l.b16 %v1735
    %v1828 = vunpack.c.h.b16 %v1735
    %v1829 = vunpack.c.l.b16 %v1736
    %v1830 = vunpack.c.l.b16 %v1737
    %v1831 = vunpack.c.h.b16 %v1737
    %v1832 = vunpack.c.l.b16 %v1738
    %v1833 = vunpack.c.l.b16 %v1739
    %v1834 = vunpack.c.h.b16 %v1739
    %v1835 = vunpack.c.l.b16 %v1740
    %v1836 = vunpack.c.l.b16 %v1741
    %v1837 = vunpack.c.h.b16 %v1741
    %v1838 = vunpack.c.l.b16 %v1742
    %v1839 = vunpack.c.l.b16 %v1743
    %v1840 = vunpack.c.h.b16 %v1743
    %v1841 = vunpack.c.l.b16 %v1744
    %v1842 = vpack.c.b16 %v1797, %v1794
    %v1843 = vpack.c.b16 %v1798, %v1795
    %v1844 = vpack.c.b16 %v1799, %v1796
    %v1845 = vpack.c.b16 %v1803, %v1800
    %v1846 = vpack.c.b16 %v1804, %v1801
    %v1847 = vpack.c.b16 %v1805, %v1802
    %v1848 = vpack.c.b16 %v1809, %v1806
    %v1849 = vpack.c.b16 %v1810, %v1807
    %v1850 = vpack.c.b16 %v1811, %v1808
    %v1851 = vpack.c.b16 %v1815, %v1812
    %v1852 = vpack.c.b16 %v1816, %v1813
    %v1853 = vpack.c.b16 %v1817, %v1814
    %v1854 = vpack.c.b16 %v1821, %v1818
    %v1855 = vpack.c.b16 %v1822, %v1819
    %v1856 = vpack.c.b16 %v1823, %v1820
    %v1857 = vpack.c.b16 %v1827, %v1824
    %v1858 = vpack.c.b16 %v1828, %v1825
    %v1859 = vpack.c.b16 %v1829, %v1826
    %v1860 = vpack.c.b16 %v1833, %v1830
    %v1861 = vpack.c.b16 %v1834, %v1831
    %v1862 = vpack.c.b16 %v1835, %v1832
    %v1863 = vpack.c.b16 %v1839, %v1836
    %v1864 = vpack.c.b16 %v1840, %v1837
    %v1865 = vpack.c.b16 %v1841, %v1838
    %1890 = vmatprep.subr.bf16.mxu0 %v1864
    %1891 = vmatpush1.bf16.msra.mxu0 %v1863
    %1892 = vmatprep.subr.bf16.mxu0 %v1861
    %1893 = vmatpush1.bf16.msra.mxu0 %v1860
    %1894 = vmatprep.subr.bf16.mxu0 %v1858
    %1895 = vmatpush1.bf16.msra.mxu0 %v1857
    %1896 = vmatprep.subr.bf16.mxu0 %v1855
    %1897 = vmatpush1.bf16.msra.mxu0 %v1854
    %1898 = vmatprep.subr.bf16.mxu0 %v1852
    %1899 = vmatpush1.bf16.msra.mxu0 %v1851
    %1900 = vmatprep.subr.bf16.mxu0 %v1849
    %1901 = vmatpush1.bf16.msra.mxu0 %v1848
    %1902 = vmatprep.subr.bf16.mxu0 %v1846
    %1903 = vmatpush1.bf16.msra.mxu0 %v1845
    %1904 = vmatprep.subr.bf16.mxu0 %v1843
    %1905 = vmatpush1.bf16.msra.mxu0 %v1842
    %1906 = vmatprep.subr.bf16.mxu0 0
    %1907 = vmatpush2.bf16.msra.mxu0 0
    %1908 = vmatprep.subr.bf16.mxu0 0
    %1909 = vmatpush2.bf16.msra.mxu0 0
    %1910 = vmatprep.subr.bf16.mxu0 0
    %1911 = vmatpush2.bf16.msra.mxu0 0
    %1912 = vmatprep.subr.bf16.mxu0 0
    %1913 = vmatpush2.bf16.msra.mxu0 0
    %1914 = vmatprep.subr.bf16.mxu0 0
    %1915 = vmatpush2.bf16.msra.mxu0 0
    %1916 = vmatprep.subr.bf16.mxu0 0
    %1917 = vmatpush2.bf16.msra.mxu0 0
    %1918 = vmatprep.subr.bf16.mxu0 0
    %1919 = vmatpush2.bf16.msra.mxu0 0
    %1920 = vmatprep.subr.bf16.mxu0 0
    %1921 = vmatpush2.bf16.msra.mxu0 0
    %1922 = vmatprep.mubr.bf16.mxu0 0
    %1923 = vmatmul.mubr.bf16.gmra.mxu0 %v1711
    %v1924 = vpop.f32.mrf.mxu0
    %v1925 = vadd.f32 %v1750, %v1924
    %v1926 = vpop.f32.mrf.mxu0
    %v1927 = vadd.f32 %v1754, %v1926
    %v1928 = vpop.f32.mrf.mxu0
    %v1929 = vadd.f32 %v1750, %v1928
    %v1930 = vpop.f32.mrf.mxu0
    %v1931 = vadd.f32 %v1754, %v1930
    %1932 = vmatprep.mubr.bf16.mxu0 0
    %1933 = vmatmul.mubr.bf16.gmra.mxu0 %v1712
    %v1934 = vpop.f32.mrf.mxu0
    %v1935 = vadd.f32 %v1750, %v1934
    %v1936 = vpop.f32.mrf.mxu0
    %v1937 = vadd.f32 %v1754, %v1936
    %v1938 = vpop.f32.mrf.mxu0
    %v1939 = vadd.f32 %v1750, %v1938
    %v1940 = vpop.f32.mrf.mxu0
    %v1941 = vadd.f32 %v1754, %v1940
    %1942 = vdwg.mxu0
    %1943 = vmatprep.subr.bf16.mxu0 0
    %1944 = vmatpush1.bf16.msra.mxu0 %v1865
    %1945 = vmatprep.subr.bf16.mxu0 0
    %1946 = vmatpush1.bf16.msra.mxu0 %v1862
    %1947 = vmatprep.subr.bf16.mxu0 0
    %1948 = vmatpush1.bf16.msra.mxu0 %v1859
    %1949 = vmatprep.subr.bf16.mxu0 0
    %1950 = vmatpush1.bf16.msra.mxu0 %v1856
    %1951 = vmatprep.subr.bf16.mxu0 0
    %1952 = vmatpush1.bf16.msra.mxu0 %v1853
    %1953 = vmatprep.subr.bf16.mxu0 0
    %1954 = vmatpush1.bf16.msra.mxu0 %v1850
    %1955 = vmatprep.subr.bf16.mxu0 0
    %1956 = vmatpush1.bf16.msra.mxu0 %v1847
    %1957 = vmatprep.subr.bf16.mxu0 0
    %1958 = vmatpush1.bf16.msra.mxu0 %v1844
    %1959 = vmatprep.subr.bf16.mxu0 0
    %1960 = vmatpush2.bf16.msra.mxu0 0
    %1961 = vmatprep.subr.bf16.mxu0 0
    %1962 = vmatpush2.bf16.msra.mxu0 0
    %1963 = vmatprep.subr.bf16.mxu0 0
    %1964 = vmatpush2.bf16.msra.mxu0 0
    %1965 = vmatprep.subr.bf16.mxu0 0
    %1966 = vmatpush2.bf16.msra.mxu0 0
    %1967 = vmatprep.subr.bf16.mxu0 0
    %1968 = vmatpush2.bf16.msra.mxu0 0
    %1969 = vmatprep.subr.bf16.mxu0 0
    %1970 = vmatpush2.bf16.msra.mxu0 0
    %1971 = vmatprep.subr.bf16.mxu0 0
    %1972 = vmatpush2.bf16.msra.mxu0 0
    %1973 = vmatprep.subr.bf16.mxu0 0
    %1974 = vmatpush2.bf16.msra.mxu0 0
    %1975 = vmatprep.mubr.bf16.mxu0 0
    %1976 = vmatmul.mubr.bf16.gmra.mxu0 %v1711
    %v1977 = vpop.f32.mrf.mxu0
    %v1978 = vadd.f32 %v1758, %v1977
    %v1979 = vpop.f32.mrf.mxu0
    %v1980 = vpop.f32.mrf.mxu0
    %v1981 = vadd.f32 %v1758, %v1980
    %v1982 = vpop.f32.mrf.mxu0
    %1983 = vmatprep.mubr.bf16.mxu0 0
    %1984 = vmatmul.mubr.bf16.gmra.mxu0 %v1712
    %v1985 = vpop.f32.mrf.mxu0
    %v1986 = vadd.f32 %v1758, %v1985
    %v1987 = vpop.f32.mrf.mxu0
    %v1988 = vpop.f32.mrf.mxu0
    %v1989 = vadd.f32 %v1758, %v1988
    %v1990 = vpop.f32.mrf.mxu0
    %1991 = vdwg.mxu0
    %v1992 = vld [vmem:[#allocation11] sm:$0xf]
    %v1993 = vld [vmem:[#allocation11 + $0x4] sm:$0xf]
    %v1994 = vld [vmem:[#allocation11 + $0x8] sm:$0xf]
    %v1995 = vld [vmem:[#allocation11 + $0xc] sm:$0xf]
    %v1996 = vld [vmem:[#allocation11 + $0x10] sm:$0xf]
    %v1997 = vld [vmem:[#allocation11 + $0x14] sm:$0xf]
    %v1998 = vld [vmem:[#allocation11 + $0x18] sm:$0xf]
    %v1999 = vld [vmem:[#allocation11 + $0x1c] sm:$0xf]
    %v2000 = vld [vmem:[#allocation11 + $0x20] sm:$0xf]
    %v2001 = vld [vmem:[#allocation11 + $0x24] sm:$0xf]
    %v2002 = vld [vmem:[#allocation11 + $0x28] sm:$0xf]
    %v2003 = vld [vmem:[#allocation11 + $0x2c] sm:$0xf]
    %v2004 = vld [vmem:[#allocation11 + $0x30] sm:$0xf]
    %v2005 = vld [vmem:[#allocation11 + $0x34] sm:$0xf]
    %v2006 = vld [vmem:[#allocation11 + $0x38] sm:$0xf]
    %v2007 = vld [vmem:[#allocation11 + $0x3c] sm:$0xf]
    %v2008 = vld [vmem:[#allocation13] sm:$0x1]
    %v2010 = vlaneseq
    %v2011 = vshrl.u32 %v2010, 7
    %v2012 = vsub.s32 0, %v2011
    %v2013 = vrot.slane %v2008, %v2012
    %v2015 = vadd.f32 %v1626, %v2013
    %v2016 = vadd.f32 %v1629, %v2013
    %v2017 = vadd.f32 %v1634, %v2013
    %v2018 = vadd.f32 %v1637, %v2013
    %vm2019 = vcmask 261120
    %v2021 = vsel %vm2019, %v1925, 0
    %v2024 = vsel %vm2019, %v1929, 0
    %v2027 = vsel %vm2019, %v1927, 0
    %v2030 = vsel %vm2019, %v1931, 0
    %2032 = vmatprep.subr.mxu0 0.0
    %2033 = vmatpush1.xpose.msra.mxu0 0.0
    %2034 = vmatprep.subr.mxu0 0.0
    %2035 = vmatpush1.xpose.msra.mxu0 0.0
    %2036 = vmatprep.subr.mxu0 0.0
    %2037 = vmatpush1.xpose.msra.mxu0 0.0
    %2038 = vmatprep.subr.mxu0 0.0
    %2039 = vmatpush1.xpose.msra.mxu0 0.0
    %2040 = vmatprep.subr.mxu0 0.0
    %2041 = vmatpush1.xpose.msra.mxu0 0.0
    %2042 = vmatprep.subr.mxu0 0.0
    %2043 = vmatpush1.xpose.msra.mxu0 0.0
    %2044 = vmatprep.subr.mxu0 0.0
    %2045 = vmatpush1.xpose.msra.mxu0 0.0
    %2046 = vmatprep.subr.mxu0 0.0
    %2047 = vmatpush1.xpose.msra.mxu0 0.0
    %2048 = vmatprep.subr.mxu0 0.0
    %2049 = vmatpush1.xpose.msra.mxu0 0.0
    %2050 = vmatprep.subr.mxu0 0.0
    %2051 = vmatpush1.xpose.msra.mxu0 0.0
    %2052 = vmatprep.subr.mxu0 0.0
    %2053 = vmatpush1.xpose.msra.mxu0 0.0
    %2054 = vmatprep.subr.mxu0 0.0
    %2055 = vmatpush1.xpose.msra.mxu0 0.0
    %2056 = vmatprep.subr.mxu0 0.0
    %2057 = vmatpush1.xpose.msra.mxu0 0.0
    %2058 = vmatprep.subr.mxu0 0.0
    %2059 = vmatpush1.xpose.msra.mxu0 0.0
    %2060 = vmatprep.subr.mxu0 0.0
    %2061 = vmatpush1.xpose.msra.mxu0 %v2030
    %2062 = vmatprep.subr.mxu0 0.0
    %2063 = vmatpush1.xpose.msra.mxu0 %v2027
    %2064 = vmatprep.subr.mxu0 0.0
    %2065 = vmatpush2.xpose.msra.mxu0 0.0
    %2066 = vmatprep.subr.mxu0 0.0
    %2067 = vmatpush2.xpose.msra.mxu0 0.0
    %2068 = vmatprep.subr.mxu0 0.0
    %2069 = vmatpush2.xpose.msra.mxu0 0.0
    %2070 = vmatprep.subr.mxu0 0.0
    %2071 = vmatpush2.xpose.msra.mxu0 0.0
    %2072 = vmatprep.subr.mxu0 0.0
    %2073 = vmatpush2.xpose.msra.mxu0 0.0
    %2074 = vmatprep.subr.mxu0 0.0
    %2075 = vmatpush2.xpose.msra.mxu0 0.0
    %2076 = vmatprep.subr.mxu0 0.0
    %2077 = vmatpush2.xpose.msra.mxu0 0.0
    %2078 = vmatprep.subr.mxu0 0.0
    %2079 = vmatpush2.xpose.msra.mxu0 0.0
    %2080 = vmatprep.subr.mxu0 0.0
    %2081 = vmatpush2.xpose.msra.mxu0 0.0
    %2082 = vmatprep.subr.mxu0 0.0
    %2083 = vmatpush2.xpose.msra.mxu0 0.0
    %2084 = vmatprep.subr.mxu0 0.0
    %2085 = vmatpush2.xpose.msra.mxu0 0.0
    %2086 = vmatprep.subr.mxu0 0.0
    %2087 = vmatpush2.xpose.msra.mxu0 0.0
    %2088 = vmatprep.subr.mxu0 0.0
    %2089 = vmatpush2.xpose.msra.mxu0 0.0
    %2090 = vmatprep.subr.mxu0 0.0
    %2091 = vmatpush2.xpose.msra.mxu0 0.0
    %2092 = vmatprep.subr.mxu0 0.0
    %2093 = vmatpush2.xpose.msra.mxu0 0.0
    %2094 = vmatprep.subr.mxu0 0.0
    %2095 = vmatpush2.xpose.msra.mxu0 0.0
    %2096 = vmatprep.mubr.f32.mxu0 0.0
    %2097 = vmatmul.mubr.f32.gmra.mxu0 %v2021
    %v2098 = vpop.f32.mrf.mxu0
    %v2099 = vadd.f32 0.0, %v2098
    %v2100 = vpop.f32.mrf.mxu0
    %2101 = vmatprep.mubr.f32.mxu0 0.0
    %2102 = vmatmul.mubr.f32.gmra.mxu0 %v2024
    %v2103 = vpop.f32.mrf.mxu0
    %v2104 = vadd.f32 0.0, %v2103
    %v2105 = vpop.f32.mrf.mxu0
    %2106 = vdwg.mxu0
    %v2108 = vsel %vm2019, %v1935, 0
    %v2111 = vsel %vm2019, %v1939, 0
    %v2114 = vsel %vm2019, %v1937, 0
    %v2117 = vsel %vm2019, %v1941, 0
    %2119 = vmatprep.subr.mxu0 0.0
    %2120 = vmatpush1.xpose.msra.mxu0 0.0
    %2121 = vmatprep.subr.mxu0 0.0
    %2122 = vmatpush1.xpose.msra.mxu0 0.0
    %2123 = vmatprep.subr.mxu0 0.0
    %2124 = vmatpush1.xpose.msra.mxu0 0.0
    %2125 = vmatprep.subr.mxu0 0.0
    %2126 = vmatpush1.xpose.msra.mxu0 0.0
    %2127 = vmatprep.subr.mxu0 0.0
    %2128 = vmatpush1.xpose.msra.mxu0 0.0
    %2129 = vmatprep.subr.mxu0 0.0
    %2130 = vmatpush1.xpose.msra.mxu0 0.0
    %2131 = vmatprep.subr.mxu0 0.0
    %2132 = vmatpush1.xpose.msra.mxu0 0.0
    %2133 = vmatprep.subr.mxu0 0.0
    %2134 = vmatpush1.xpose.msra.mxu0 0.0
    %2135 = vmatprep.subr.mxu0 0.0
    %2136 = vmatpush1.xpose.msra.mxu0 0.0
    %2137 = vmatprep.subr.mxu0 0.0
    %2138 = vmatpush1.xpose.msra.mxu0 0.0
    %2139 = vmatprep.subr.mxu0 0.0
    %2140 = vmatpush1.xpose.msra.mxu0 0.0
    %2141 = vmatprep.subr.mxu0 0.0
    %2142 = vmatpush1.xpose.msra.mxu0 0.0
    %2143 = vmatprep.subr.mxu0 0.0
    %2144 = vmatpush1.xpose.msra.mxu0 0.0
    %2145 = vmatprep.subr.mxu0 0.0
    %2146 = vmatpush1.xpose.msra.mxu0 0.0
    %2147 = vmatprep.subr.mxu0 0.0
    %2148 = vmatpush1.xpose.msra.mxu0 %v2117
    %2149 = vmatprep.subr.mxu0 0.0
    %2150 = vmatpush1.xpose.msra.mxu0 %v2114
    %2151 = vmatprep.subr.mxu0 0.0
    %2152 = vmatpush2.xpose.msra.mxu0 0.0
    %2153 = vmatprep.subr.mxu0 0.0
    %2154 = vmatpush2.xpose.msra.mxu0 0.0
    %2155 = vmatprep.subr.mxu0 0.0
    %2156 = vmatpush2.xpose.msra.mxu0 0.0
    %2157 = vmatprep.subr.mxu0 0.0
    %2158 = vmatpush2.xpose.msra.mxu0 0.0
    %2159 = vmatprep.subr.mxu0 0.0
    %2160 = vmatpush2.xpose.msra.mxu0 0.0
    %2161 = vmatprep.subr.mxu0 0.0
    %2162 = vmatpush2.xpose.msra.mxu0 0.0
    %2163 = vmatprep.subr.mxu0 0.0
    %2164 = vmatpush2.xpose.msra.mxu0 0.0
    %2165 = vmatprep.subr.mxu0 0.0
    %2166 = vmatpush2.xpose.msra.mxu0 0.0
    %2167 = vmatprep.subr.mxu0 0.0
    %2168 = vmatpush2.xpose.msra.mxu0 0.0
    %2169 = vmatprep.subr.mxu0 0.0
    %2170 = vmatpush2.xpose.msra.mxu0 0.0
    %2171 = vmatprep.subr.mxu0 0.0
    %2172 = vmatpush2.xpose.msra.mxu0 0.0
    %2173 = vmatprep.subr.mxu0 0.0
    %2174 = vmatpush2.xpose.msra.mxu0 0.0
    %2175 = vmatprep.subr.mxu0 0.0
    %2176 = vmatpush2.xpose.msra.mxu0 0.0
    %2177 = vmatprep.subr.mxu0 0.0
    %2178 = vmatpush2.xpose.msra.mxu0 0.0
    %2179 = vmatprep.subr.mxu0 0.0
    %2180 = vmatpush2.xpose.msra.mxu0 0.0
    %2181 = vmatprep.subr.mxu0 0.0
    %2182 = vmatpush2.xpose.msra.mxu0 0.0
    %2183 = vmatprep.mubr.f32.mxu0 0.0
    %2184 = vmatmul.mubr.f32.gmra.mxu0 %v2108
    %v2185 = vpop.f32.mrf.mxu0
    %v2186 = vadd.f32 0.0, %v2185
    %v2187 = vpop.f32.mrf.mxu0
    %2188 = vmatprep.mubr.f32.mxu0 0.0
    %2189 = vmatmul.mubr.f32.gmra.mxu0 %v2111
    %v2190 = vpop.f32.mrf.mxu0
    %v2191 = vadd.f32 0.0, %v2190
    %v2192 = vpop.f32.mrf.mxu0
    %2193 = vdwg.mxu0
    %v2194 = vmul.f32 %v2099, 0.17677669
    %v2195 = vmul.f32 %v2104, 0.17677669
    %v2196 = vmul.f32 %v2186, 0.17677669
    %v2197 = vmul.f32 %v2191, 0.17677669
    %v2198 = vadd.f32 %v2194, %v1643
    %v2199 = vadd.f32 %v2195, %v1643
    %v2200 = vadd.f32 %v2196, %v1643
    %v2201 = vadd.f32 %v2197, %v1643
    %vm2202 = vcmask 130048
    %v2203 = vsel %vm2202, %v2198, -inf
    %2204 = vmax.xlane.f32.xlu0 %v2203
    %v2205 = vpop.xlane.xlu0 %2204
    %v2206 = vsel %vm2202, %v2199, -inf
    %2207 = vmax.xlane.f32.xlu0 %v2206
    %v2208 = vpop.xlane.xlu0 %2207
    %v2209 = vsel %vm2202, %v2200, -inf
    %2210 = vmax.xlane.f32.xlu0 %v2209
    %v2211 = vpop.xlane.xlu0 %2210
    %v2212 = vsel %vm2202, %v2201, -inf
    %2213 = vmax.xlane.f32.xlu0 %v2212
    %v2214 = vpop.xlane.xlu0 %2213
    %v2215 = vsub.f32 %v2198, %v2205
    %v2216 = vsub.f32 %v2199, %v2208
    %v2217 = vsub.f32 %v2200, %v2211
    %v2218 = vsub.f32 %v2201, %v2214
    %v2219 = vmul.f32 %v2215, 1.442695
    %v2220 = vpow.pop %v2219
    %v2221 = vmul.f32 %v2216, 1.442695
    %v2222 = vpow.pop %v2221
    %v2223 = vmul.f32 %v2217, 1.442695
    %v2224 = vpow.pop %v2223
    %v2225 = vmul.f32 %v2218, 1.442695
    %v2226 = vpow.pop %v2225
    %v2227 = vsel %vm2202, %v2220, 0.0
    %2228 = vadd.xlane.f32.xlu0 %v2227
    %v2229 = vpop.xlane.xlu0 %2228
    %v2230 = vsel %vm2202, %v2222, 0.0
    %2231 = vadd.xlane.f32.xlu0 %v2230
    %v2232 = vpop.xlane.xlu0 %2231
    %v2233 = vsel %vm2202, %v2224, 0.0
    %2234 = vadd.xlane.f32.xlu0 %v2233
    %v2235 = vpop.xlane.xlu0 %2234
    %v2236 = vsel %vm2202, %v2226, 0.0
    %2237 = vadd.xlane.f32.xlu0 %v2236
    %v2238 = vpop.xlane.xlu0 %2237
    %v2239 = vrcp.pop %v2229
    %v2240 = vrcp.pop %v2232
    %v2241 = vrcp.pop %v2235
    %v2242 = vrcp.pop %v2238
    %v2243 = vmul.f32 %v2220, %v2239
    %v2244 = vmul.f32 %v2222, %v2240
    %v2245 = vmul.f32 %v2224, %v2241
    %v2246 = vmul.f32 %v2226, %v2242
    %v2248 = vsel %vm2202, %v2243, 0
    %v2251 = vsel %vm2202, %v2244, 0
    %2253 = vmatprep.subr.mxu0 0.0
    %2254 = vmatpush1.msra.mxu0 0.0
    %2255 = vmatprep.subr.mxu0 0.0
    %2256 = vmatpush1.msra.mxu0 0.0
    %2257 = vmatprep.subr.mxu0 0.0
    %2258 = vmatpush1.msra.mxu0 0.0
    %2259 = vmatprep.subr.mxu0 0.0
    %2260 = vmatpush1.msra.mxu0 0.0
    %2261 = vmatprep.subr.mxu0 0.0
    %2262 = vmatpush1.msra.mxu0 0.0
    %2263 = vmatprep.subr.mxu0 0.0
    %2264 = vmatpush1.msra.mxu0 0.0
    %2265 = vmatprep.subr.mxu0 0.0
    %2266 = vmatpush1.msra.mxu0 0.0
    %2267 = vmatprep.subr.mxu0 0.0
    %2268 = vmatpush1.msra.mxu0 0.0
    %2269 = vmatprep.subr.mxu0 0.0
    %2270 = vmatpush1.msra.mxu0 0.0
    %2271 = vmatprep.subr.mxu0 0.0
    %2272 = vmatpush1.msra.mxu0 0.0
    %2273 = vmatprep.subr.mxu0 0.0
    %2274 = vmatpush1.msra.mxu0 0.0
    %2275 = vmatprep.subr.mxu0 0.0
    %2276 = vmatpush1.msra.mxu0 0.0
    %2277 = vmatprep.subr.mxu0 0.0
    %2278 = vmatpush1.msra.mxu0 0.0
    %2279 = vmatprep.subr.mxu0 0.0
    %2280 = vmatpush1.msra.mxu0 0.0
    %2281 = vmatprep.subr.mxu0 0.0
    %2282 = vmatpush1.msra.mxu0 %v1981
    %2283 = vmatprep.subr.mxu0 0.0
    %2284 = vmatpush1.msra.mxu0 %v1978
    %2285 = vmatprep.subr.mxu0 0.0
    %2286 = vmatpush2.msra.mxu0 0.0
    %2287 = vmatprep.subr.mxu0 0.0
    %2288 = vmatpush2.msra.mxu0 0.0
    %2289 = vmatprep.subr.mxu0 0.0
    %2290 = vmatpush2.msra.mxu0 0.0
    %2291 = vmatprep.subr.mxu0 0.0
    %2292 = vmatpush2.msra.mxu0 0.0
    %2293 = vmatprep.subr.mxu0 0.0
    %2294 = vmatpush2.msra.mxu0 0.0
    %2295 = vmatprep.subr.mxu0 0.0
    %2296 = vmatpush2.msra.mxu0 0.0
    %2297 = vmatprep.subr.mxu0 0.0
    %2298 = vmatpush2.msra.mxu0 0.0
    %2299 = vmatprep.subr.mxu0 0.0
    %2300 = vmatpush2.msra.mxu0 0.0
    %2301 = vmatprep.subr.mxu0 0.0
    %2302 = vmatpush2.msra.mxu0 0.0
    %2303 = vmatprep.subr.mxu0 0.0
    %2304 = vmatpush2.msra.mxu0 0.0
    %2305 = vmatprep.subr.mxu0 0.0
    %2306 = vmatpush2.msra.mxu0 0.0
    %2307 = vmatprep.subr.mxu0 0.0
    %2308 = vmatpush2.msra.mxu0 0.0
    %2309 = vmatprep.subr.mxu0 0.0
    %2310 = vmatpush2.msra.mxu0 0.0
    %2311 = vmatprep.subr.mxu0 0.0
    %2312 = vmatpush2.msra.mxu0 0.0
    %2313 = vmatprep.subr.mxu0 0.0
    %2314 = vmatpush2.msra.mxu0 0.0
    %2315 = vmatprep.subr.mxu0 0.0
    %2316 = vmatpush2.msra.mxu0 0.0
    %2317 = vmatprep.mubr.f32.mxu0 0.0
    %2318 = vmatmul.mubr.f32.gmra.mxu0 %v2248
    %v2319 = vpop.f32.mrf.mxu0
    %v2320 = vadd.f32 0.0, %v2319
    %v2321 = vpop.f32.mrf.mxu0
    %2322 = vmatprep.mubr.f32.mxu0 0.0
    %2323 = vmatmul.mubr.f32.gmra.mxu0 %v2251
    %v2324 = vpop.f32.mrf.mxu0
    %v2325 = vadd.f32 0.0, %v2324
    %v2326 = vpop.f32.mrf.mxu0
    %2327 = vdwg.mxu0
    %v2329 = vsel %vm2202, %v2245, 0
    %v2332 = vsel %vm2202, %v2246, 0
    %2334 = vmatprep.subr.mxu0 0.0
    %2335 = vmatpush1.msra.mxu0 0.0
    %2336 = vmatprep.subr.mxu0 0.0
    %2337 = vmatpush1.msra.mxu0 0.0
    %2338 = vmatprep.subr.mxu0 0.0
    %2339 = vmatpush1.msra.mxu0 0.0
    %2340 = vmatprep.subr.mxu0 0.0
    %2341 = vmatpush1.msra.mxu0 0.0
    %2342 = vmatprep.subr.mxu0 0.0
    %2343 = vmatpush1.msra.mxu0 0.0
    %2344 = vmatprep.subr.mxu0 0.0
    %2345 = vmatpush1.msra.mxu0 0.0
    %2346 = vmatprep.subr.mxu0 0.0
    %2347 = vmatpush1.msra.mxu0 0.0
    %2348 = vmatprep.subr.mxu0 0.0
    %2349 = vmatpush1.msra.mxu0 0.0
    %2350 = vmatprep.subr.mxu0 0.0
    %2351 = vmatpush1.msra.mxu0 0.0
    %2352 = vmatprep.subr.mxu0 0.0
    %2353 = vmatpush1.msra.mxu0 0.0
    %2354 = vmatprep.subr.mxu0 0.0
    %2355 = vmatpush1.msra.mxu0 0.0
    %2356 = vmatprep.subr.mxu0 0.0
    %2357 = vmatpush1.msra.mxu0 0.0
    %2358 = vmatprep.subr.mxu0 0.0
    %2359 = vmatpush1.msra.mxu0 0.0
    %2360 = vmatprep.subr.mxu0 0.0
    %2361 = vmatpush1.msra.mxu0 0.0
    %2362 = vmatprep.subr.mxu0 0.0
    %2363 = vmatpush1.msra.mxu0 %v1989
    %2364 = vmatprep.subr.mxu0 0.0
    %2365 = vmatpush1.msra.mxu0 %v1986
    %2366 = vmatprep.subr.mxu0 0.0
    %2367 = vmatpush2.msra.mxu0 0.0
    %2368 = vmatprep.subr.mxu0 0.0
    %2369 = vmatpush2.msra.mxu0 0.0
    %2370 = vmatprep.subr.mxu0 0.0
    %2371 = vmatpush2.msra.mxu0 0.0
    %2372 = vmatprep.subr.mxu0 0.0
    %2373 = vmatpush2.msra.mxu0 0.0
    %2374 = vmatprep.subr.mxu0 0.0
    %2375 = vmatpush2.msra.mxu0 0.0
    %2376 = vmatprep.subr.mxu0 0.0
    %2377 = vmatpush2.msra.mxu0 0.0
    %2378 = vmatprep.subr.mxu0 0.0
    %2379 = vmatpush2.msra.mxu0 0.0
    %2380 = vmatprep.subr.mxu0 0.0
    %2381 = vmatpush2.msra.mxu0 0.0
    %2382 = vmatprep.subr.mxu0 0.0
    %2383 = vmatpush2.msra.mxu0 0.0
    %2384 = vmatprep.subr.mxu0 0.0
    %2385 = vmatpush2.msra.mxu0 0.0
    %2386 = vmatprep.subr.mxu0 0.0
    %2387 = vmatpush2.msra.mxu0 0.0
    %2388 = vmatprep.subr.mxu0 0.0
    %2389 = vmatpush2.msra.mxu0 0.0
    %2390 = vmatprep.subr.mxu0 0.0
    %2391 = vmatpush2.msra.mxu0 0.0
    %2392 = vmatprep.subr.mxu0 0.0
    %2393 = vmatpush2.msra.mxu0 0.0
    %2394 = vmatprep.subr.mxu0 0.0
    %2395 = vmatpush2.msra.mxu0 0.0
    %2396 = vmatprep.subr.mxu0 0.0
    %2397 = vmatpush2.msra.mxu0 0.0
    %2398 = vmatprep.mubr.f32.mxu0 0.0
    %2399 = vmatmul.mubr.f32.gmra.mxu0 %v2329
    %v2400 = vpop.f32.mrf.mxu0
    %v2401 = vadd.f32 0.0, %v2400
    %v2402 = vpop.f32.mrf.mxu0
    %2403 = vmatprep.mubr.f32.mxu0 0.0
    %2404 = vmatmul.mubr.f32.gmra.mxu0 %v2332
    %v2405 = vpop.f32.mrf.mxu0
    %v2406 = vadd.f32 0.0, %v2405
    %v2407 = vpop.f32.mrf.mxu0
    %2408 = vdwg.mxu0
    %v2409 = vpack.c.bf16 %v2325, %v2320
    %v2410 = vpack.c.bf16 %v2406, %v2401
    %v2415 = vunpack.c.l.b16 %v1992
    %v2416 = vunpack.c.l.b16 %v1993
    %v2417 = vunpack.c.l.b16 %v1994
    %v2418 = vunpack.c.l.b16 %v1995
    %v2419 = vpack.c.b16 %v2416, %v2415
    %v2420 = vpack.c.b16 %v2418, %v2417
    %v2424 = vsel %vm2019, %v2409, 0
    %v2427 = vsel %vm2019, %v2410, 0
    %2429 = vmatprep.subr.bf16.mxu0 0
    %2430 = vmatpush1.bf16.msra.mxu0 0
    %2431 = vmatprep.subr.bf16.mxu0 0
    %2432 = vmatpush1.bf16.msra.mxu0 0
    %2433 = vmatprep.subr.bf16.mxu0 0
    %2434 = vmatpush1.bf16.msra.mxu0 0
    %2435 = vmatprep.subr.bf16.mxu0 0
    %2436 = vmatpush1.bf16.msra.mxu0 0
    %2437 = vmatprep.subr.bf16.mxu0 0
    %2438 = vmatpush1.bf16.msra.mxu0 0
    %2439 = vmatprep.subr.bf16.mxu0 0
    %2440 = vmatpush1.bf16.msra.mxu0 0
    %2441 = vmatprep.subr.bf16.mxu0 0
    %2442 = vmatpush1.bf16.msra.mxu0 %v2420
    %2443 = vmatprep.subr.bf16.mxu0 0
    %2444 = vmatpush1.bf16.msra.mxu0 %v2419
    %2445 = vmatprep.subr.bf16.mxu0 0
    %2446 = vmatpush2.bf16.msra.mxu0 0
    %2447 = vmatprep.subr.bf16.mxu0 0
    %2448 = vmatpush2.bf16.msra.mxu0 0
    %2449 = vmatprep.subr.bf16.mxu0 0
    %2450 = vmatpush2.bf16.msra.mxu0 0
    %2451 = vmatprep.subr.bf16.mxu0 0
    %2452 = vmatpush2.bf16.msra.mxu0 0
    %2453 = vmatprep.subr.bf16.mxu0 0
    %2454 = vmatpush2.bf16.msra.mxu0 0
    %2455 = vmatprep.subr.bf16.mxu0 0
    %2456 = vmatpush2.bf16.msra.mxu0 0
    %2457 = vmatprep.subr.bf16.mxu0 0
    %2458 = vmatpush2.bf16.msra.mxu0 0
    %2459 = vmatprep.subr.bf16.mxu0 0
    %2460 = vmatpush2.bf16.msra.mxu0 0
    %2461 = vmatprep.mubr.bf16.mxu0 0
    %2462 = vmatmul.mubr.bf16.gmra.mxu0 %v2424
    %v2463 = vpop.f32.mrf.mxu0
    %v2464 = vadd.f32 0.0, %v2463
    %v2465 = vpop.f32.mrf.mxu0
    %v2466 = vpop.f32.mrf.mxu0
    %v2467 = vadd.f32 0.0, %v2466
    %v2468 = vpop.f32.mrf.mxu0
    %2469 = vmatprep.mubr.bf16.mxu0 0
    %2470 = vmatmul.mubr.bf16.gmra.mxu0 %v2427
    %v2471 = vpop.f32.mrf.mxu0
    %v2472 = vadd.f32 0.0, %v2471
    %v2473 = vpop.f32.mrf.mxu0
    %v2474 = vpop.f32.mrf.mxu0
    %v2475 = vadd.f32 0.0, %v2474
    %v2476 = vpop.f32.mrf.mxu0
    %2477 = vdwg.mxu0
    %v2478 = vadd.f32 %v2015, %v2464
    %v2479 = vadd.f32 %v2016, %v2467
    %v2480 = vadd.f32 %v2017, %v2472
    %v2481 = vadd.f32 %v2018, %v2475
    %2482 = vrot.lane.b32.xlu0 %v1925, 96
    %v2483 = vpop.permute.xlu0 %2482
    %2484 = vrot.lane.b32.xlu0 %v1929, 96
    %v2485 = vpop.permute.xlu0 %2484
    %2486 = vrot.lane.b32.xlu0 %v1927, 96
    %v2487 = vpop.permute.xlu0 %2486
    %2488 = vrot.lane.b32.xlu0 %v1931, 96
    %v2489 = vpop.permute.xlu0 %2488
    %v2490 = vsel %vm2019, %v2483, 0
    %v2492 = vsel %vm2019, %v2485, 0
    %v2494 = vsel %vm2019, %v2487, 0
    %v2496 = vsel %vm2019, %v2489, 0
    %2498 = vmatprep.subr.mxu0 0.0
    %2499 = vmatpush1.xpose.msra.mxu0 0.0
    %2500 = vmatprep.subr.mxu0 0.0
    %2501 = vmatpush1.xpose.msra.mxu0 0.0
    %2502 = vmatprep.subr.mxu0 0.0
    %2503 = vmatpush1.xpose.msra.mxu0 0.0
    %2504 = vmatprep.subr.mxu0 0.0
    %2505 = vmatpush1.xpose.msra.mxu0 0.0
    %2506 = vmatprep.subr.mxu0 0.0
    %2507 = vmatpush1.xpose.msra.mxu0 0.0
    %2508 = vmatprep.subr.mxu0 0.0
    %2509 = vmatpush1.xpose.msra.mxu0 0.0
    %2510 = vmatprep.subr.mxu0 0.0
    %2511 = vmatpush1.xpose.msra.mxu0 0.0
    %2512 = vmatprep.subr.mxu0 0.0
    %2513 = vmatpush1.xpose.msra.mxu0 0.0
    %2514 = vmatprep.subr.mxu0 0.0
    %2515 = vmatpush1.xpose.msra.mxu0 0.0
    %2516 = vmatprep.subr.mxu0 0.0
    %2517 = vmatpush1.xpose.msra.mxu0 0.0
    %2518 = vmatprep.subr.mxu0 0.0
    %2519 = vmatpush1.xpose.msra.mxu0 0.0
    %2520 = vmatprep.subr.mxu0 0.0
    %2521 = vmatpush1.xpose.msra.mxu0 0.0
    %2522 = vmatprep.subr.mxu0 0.0
    %2523 = vmatpush1.xpose.msra.mxu0 0.0
    %2524 = vmatprep.subr.mxu0 0.0
    %2525 = vmatpush1.xpose.msra.mxu0 0.0
    %2526 = vmatprep.subr.mxu0 0.0
    %2527 = vmatpush1.xpose.msra.mxu0 %v2496
    %2528 = vmatprep.subr.mxu0 0.0
    %2529 = vmatpush1.xpose.msra.mxu0 %v2494
    %2530 = vmatprep.subr.mxu0 0.0
    %2531 = vmatpush2.xpose.msra.mxu0 0.0
    %2532 = vmatprep.subr.mxu0 0.0
    %2533 = vmatpush2.xpose.msra.mxu0 0.0
    %2534 = vmatprep.subr.mxu0 0.0
    %2535 = vmatpush2.xpose.msra.mxu0 0.0
    %2536 = vmatprep.subr.mxu0 0.0
    %2537 = vmatpush2.xpose.msra.mxu0 0.0
    %2538 = vmatprep.subr.mxu0 0.0
    %2539 = vmatpush2.xpose.msra.mxu0 0.0
    %2540 = vmatprep.subr.mxu0 0.0
    %2541 = vmatpush2.xpose.msra.mxu0 0.0
    %2542 = vmatprep.subr.mxu0 0.0
    %2543 = vmatpush2.xpose.msra.mxu0 0.0
    %2544 = vmatprep.subr.mxu0 0.0
    %2545 = vmatpush2.xpose.msra.mxu0 0.0
    %2546 = vmatprep.subr.mxu0 0.0
    %2547 = vmatpush2.xpose.msra.mxu0 0.0
    %2548 = vmatprep.subr.mxu0 0.0
    %2549 = vmatpush2.xpose.msra.mxu0 0.0
    %2550 = vmatprep.subr.mxu0 0.0
    %2551 = vmatpush2.xpose.msra.mxu0 0.0
    %2552 = vmatprep.subr.mxu0 0.0
    %2553 = vmatpush2.xpose.msra.mxu0 0.0
    %2554 = vmatprep.subr.mxu0 0.0
    %2555 = vmatpush2.xpose.msra.mxu0 0.0
    %2556 = vmatprep.subr.mxu0 0.0
    %2557 = vmatpush2.xpose.msra.mxu0 0.0
    %2558 = vmatprep.subr.mxu0 0.0
    %2559 = vmatpush2.xpose.msra.mxu0 0.0
    %2560 = vmatprep.subr.mxu0 0.0
    %2561 = vmatpush2.xpose.msra.mxu0 0.0
    %2562 = vmatprep.mubr.f32.mxu0 0.0
    %2563 = vmatmul.mubr.f32.gmra.mxu0 %v2490
    %v2564 = vpop.f32.mrf.mxu0
    %v2565 = vadd.f32 0.0, %v2564
    %v2566 = vpop.f32.mrf.mxu0
    %2567 = vmatprep.mubr.f32.mxu0 0.0
    %2568 = vmatmul.mubr.f32.gmra.mxu0 %v2492
    %v2569 = vpop.f32.mrf.mxu0
    %v2570 = vadd.f32 0.0, %v2569
    %v2571 = vpop.f32.mrf.mxu0
    %2572 = vdwg.mxu0
    %2573 = vrot.lane.b32.xlu0 %v1935, 96
    %v2574 = vpop.permute.xlu0 %2573
    %2575 = vrot.lane.b32.xlu0 %v1939, 96
    %v2576 = vpop.permute.xlu0 %2575
    %2577 = vrot.lane.b32.xlu0 %v1937, 96
    %v2578 = vpop.permute.xlu0 %2577
    %2579 = vrot.lane.b32.xlu0 %v1941, 96
    %v2580 = vpop.permute.xlu0 %2579
    %v2581 = vsel %vm2019, %v2574, 0
    %v2583 = vsel %vm2019, %v2576, 0
    %v2585 = vsel %vm2019, %v2578, 0
    %v2587 = vsel %vm2019, %v2580, 0
    %2589 = vmatprep.subr.mxu0 0.0
    %2590 = vmatpush1.xpose.msra.mxu0 0.0
    %2591 = vmatprep.subr.mxu0 0.0
    %2592 = vmatpush1.xpose.msra.mxu0 0.0
    %2593 = vmatprep.subr.mxu0 0.0
    %2594 = vmatpush1.xpose.msra.mxu0 0.0
    %2595 = vmatprep.subr.mxu0 0.0
    %2596 = vmatpush1.xpose.msra.mxu0 0.0
    %2597 = vmatprep.subr.mxu0 0.0
    %2598 = vmatpush1.xpose.msra.mxu0 0.0
    %2599 = vmatprep.subr.mxu0 0.0
    %2600 = vmatpush1.xpose.msra.mxu0 0.0
    %2601 = vmatprep.subr.mxu0 0.0
    %2602 = vmatpush1.xpose.msra.mxu0 0.0
    %2603 = vmatprep.subr.mxu0 0.0
    %2604 = vmatpush1.xpose.msra.mxu0 0.0
    %2605 = vmatprep.subr.mxu0 0.0
    %2606 = vmatpush1.xpose.msra.mxu0 0.0
    %2607 = vmatprep.subr.mxu0 0.0
    %2608 = vmatpush1.xpose.msra.mxu0 0.0
    %2609 = vmatprep.subr.mxu0 0.0
    %2610 = vmatpush1.xpose.msra.mxu0 0.0
    %2611 = vmatprep.subr.mxu0 0.0
    %2612 = vmatpush1.xpose.msra.mxu0 0.0
    %2613 = vmatprep.subr.mxu0 0.0
    %2614 = vmatpush1.xpose.msra.mxu0 0.0
    %2615 = vmatprep.subr.mxu0 0.0
    %2616 = vmatpush1.xpose.msra.mxu0 0.0
    %2617 = vmatprep.subr.mxu0 0.0
    %2618 = vmatpush1.xpose.msra.mxu0 %v2587
    %2619 = vmatprep.subr.mxu0 0.0
    %2620 = vmatpush1.xpose.msra.mxu0 %v2585
    %2621 = vmatprep.subr.mxu0 0.0
    %2622 = vmatpush2.xpose.msra.mxu0 0.0
    %2623 = vmatprep.subr.mxu0 0.0
    %2624 = vmatpush2.xpose.msra.mxu0 0.0
    %2625 = vmatprep.subr.mxu0 0.0
    %2626 = vmatpush2.xpose.msra.mxu0 0.0
    %2627 = vmatprep.subr.mxu0 0.0
    %2628 = vmatpush2.xpose.msra.mxu0 0.0
    %2629 = vmatprep.subr.mxu0 0.0
    %2630 = vmatpush2.xpose.msra.mxu0 0.0
    %2631 = vmatprep.subr.mxu0 0.0
    %2632 = vmatpush2.xpose.msra.mxu0 0.0
    %2633 = vmatprep.subr.mxu0 0.0
    %2634 = vmatpush2.xpose.msra.mxu0 0.0
    %2635 = vmatprep.subr.mxu0 0.0
    %2636 = vmatpush2.xpose.msra.mxu0 0.0
    %2637 = vmatprep.subr.mxu0 0.0
    %2638 = vmatpush2.xpose.msra.mxu0 0.0
    %2639 = vmatprep.subr.mxu0 0.0
    %2640 = vmatpush2.xpose.msra.mxu0 0.0
    %2641 = vmatprep.subr.mxu0 0.0
    %2642 = vmatpush2.xpose.msra.mxu0 0.0
    %2643 = vmatprep.subr.mxu0 0.0
    %2644 = vmatpush2.xpose.msra.mxu0 0.0
    %2645 = vmatprep.subr.mxu0 0.0
    %2646 = vmatpush2.xpose.msra.mxu0 0.0
    %2647 = vmatprep.subr.mxu0 0.0
    %2648 = vmatpush2.xpose.msra.mxu0 0.0
    %2649 = vmatprep.subr.mxu0 0.0
    %2650 = vmatpush2.xpose.msra.mxu0 0.0
    %2651 = vmatprep.subr.mxu0 0.0
    %2652 = vmatpush2.xpose.msra.mxu0 0.0
    %2653 = vmatprep.mubr.f32.mxu0 0.0
    %2654 = vmatmul.mubr.f32.gmra.mxu0 %v2581
    %v2655 = vpop.f32.mrf.mxu0
    %v2656 = vadd.f32 0.0, %v2655
    %v2657 = vpop.f32.mrf.mxu0
    %2658 = vmatprep.mubr.f32.mxu0 0.0
    %2659 = vmatmul.mubr.f32.gmra.mxu0 %v2583
    %v2660 = vpop.f32.mrf.mxu0
    %v2661 = vadd.f32 0.0, %v2660
    %v2662 = vpop.f32.mrf.mxu0
    %2663 = vdwg.mxu0
    %v2664 = vmul.f32 %v2565, 0.17677669
    %v2665 = vmul.f32 %v2570, 0.17677669
    %v2666 = vmul.f32 %v2656, 0.17677669
    %v2667 = vmul.f32 %v2661, 0.17677669
    %v2668 = vadd.f32 %v2664, %v1643
    %v2669 = vadd.f32 %v2665, %v1643
    %v2670 = vadd.f32 %v2666, %v1643
    %v2671 = vadd.f32 %v2667, %v1643
    %v2672 = vsel %vm2202, %v2668, -inf
    %2673 = vmax.xlane.f32.xlu0 %v2672
    %v2674 = vpop.xlane.xlu0 %2673
    %v2675 = vsel %vm2202, %v2669, -inf
    %2676 = vmax.xlane.f32.xlu0 %v2675
    %v2677 = vpop.xlane.xlu0 %2676
    %v2678 = vsel %vm2202, %v2670, -inf
    %2679 = vmax.xlane.f32.xlu0 %v2678
    %v2680 = vpop.xlane.xlu0 %2679
    %v2681 = vsel %vm2202, %v2671, -inf
    %2682 = vmax.xlane.f32.xlu0 %v2681
    %v2683 = vpop.xlane.xlu0 %2682
    %v2684 = vsub.f32 %v2668, %v2674
    %v2685 = vsub.f32 %v2669, %v2677
    %v2686 = vsub.f32 %v2670, %v2680
    %v2687 = vsub.f32 %v2671, %v2683
    %v2688 = vmul.f32 %v2684, 1.442695
    %v2689 = vpow.pop %v2688
    %v2690 = vmul.f32 %v2685, 1.442695
    %v2691 = vpow.pop %v2690
    %v2692 = vmul.f32 %v2686, 1.442695
    %v2693 = vpow.pop %v2692
    %v2694 = vmul.f32 %v2687, 1.442695
    %v2695 = vpow.pop %v2694
    %v2696 = vsel %vm2202, %v2689, 0.0
    %2697 = vadd.xlane.f32.xlu0 %v2696
    %v2698 = vpop.xlane.xlu0 %2697
    %v2699 = vsel %vm2202, %v2691, 0.0
    %2700 = vadd.xlane.f32.xlu0 %v2699
    %v2701 = vpop.xlane.xlu0 %2700
    %v2702 = vsel %vm2202, %v2693, 0.0
    %2703 = vadd.xlane.f32.xlu0 %v2702
    %v2704 = vpop.xlane.xlu0 %2703
    %v2705 = vsel %vm2202, %v2695, 0.0
    %2706 = vadd.xlane.f32.xlu0 %v2705
    %v2707 = vpop.xlane.xlu0 %2706
    %v2708 = vrcp.pop %v2698
    %v2709 = vrcp.pop %v2701
    %v2710 = vrcp.pop %v2704
    %v2711 = vrcp.pop %v2707
    %v2712 = vmul.f32 %v2689, %v2708
    %v2713 = vmul.f32 %v2691, %v2709
    %v2714 = vmul.f32 %v2693, %v2710
    %v2715 = vmul.f32 %v2695, %v2711
    %2718 = vrot.lane.b32.xlu0 %v1978, 96
    %v2719 = vpop.permute.xlu0 %2718
    %2720 = vrot.lane.b32.xlu0 %v1981, 96
    %v2721 = vpop.permute.xlu0 %2720
    %v2725 = vsel %vm2202, %v2712, 0
    %v2728 = vsel %vm2202, %v2713, 0
    %2730 = vmatprep.subr.mxu0 0.0
    %2731 = vmatpush1.msra.mxu0 0.0
    %2732 = vmatprep.subr.mxu0 0.0
    %2733 = vmatpush1.msra.mxu0 0.0
    %2734 = vmatprep.subr.mxu0 0.0
    %2735 = vmatpush1.msra.mxu0 0.0
    %2736 = vmatprep.subr.mxu0 0.0
    %2737 = vmatpush1.msra.mxu0 0.0
    %2738 = vmatprep.subr.mxu0 0.0
    %2739 = vmatpush1.msra.mxu0 0.0
    %2740 = vmatprep.subr.mxu0 0.0
    %2741 = vmatpush1.msra.mxu0 0.0
    %2742 = vmatprep.subr.mxu0 0.0
    %2743 = vmatpush1.msra.mxu0 0.0
    %2744 = vmatprep.subr.mxu0 0.0
    %2745 = vmatpush1.msra.mxu0 0.0
    %2746 = vmatprep.subr.mxu0 0.0
    %2747 = vmatpush1.msra.mxu0 0.0
    %2748 = vmatprep.subr.mxu0 0.0
    %2749 = vmatpush1.msra.mxu0 0.0
    %2750 = vmatprep.subr.mxu0 0.0
    %2751 = vmatpush1.msra.mxu0 0.0
    %2752 = vmatprep.subr.mxu0 0.0
    %2753 = vmatpush1.msra.mxu0 0.0
    %2754 = vmatprep.subr.mxu0 0.0
    %2755 = vmatpush1.msra.mxu0 0.0
    %2756 = vmatprep.subr.mxu0 0.0
    %2757 = vmatpush1.msra.mxu0 0.0
    %2758 = vmatprep.subr.mxu0 0.0
    %2759 = vmatpush1.msra.mxu0 %v2721
    %2760 = vmatprep.subr.mxu0 0.0
    %2761 = vmatpush1.msra.mxu0 %v2719
    %2762 = vmatprep.subr.mxu0 0.0
    %2763 = vmatpush2.msra.mxu0 0.0
    %2764 = vmatprep.subr.mxu0 0.0
    %2765 = vmatpush2.msra.mxu0 0.0
    %2766 = vmatprep.subr.mxu0 0.0
    %2767 = vmatpush2.msra.mxu0 0.0
    %2768 = vmatprep.subr.mxu0 0.0
    %2769 = vmatpush2.msra.mxu0 0.0
    %2770 = vmatprep.subr.mxu0 0.0
    %2771 = vmatpush2.msra.mxu0 0.0
    %2772 = vmatprep.subr.mxu0 0.0
    %2773 = vmatpush2.msra.mxu0 0.0
    %2774 = vmatprep.subr.mxu0 0.0
    %2775 = vmatpush2.msra.mxu0 0.0
    %2776 = vmatprep.subr.mxu0 0.0
    %2777 = vmatpush2.msra.mxu0 0.0
    %2778 = vmatprep.subr.mxu0 0.0
    %2779 = vmatpush2.msra.mxu0 0.0
    %2780 = vmatprep.subr.mxu0 0.0
    %2781 = vmatpush2.msra.mxu0 0.0
    %2782 = vmatprep.subr.mxu0 0.0
    %2783 = vmatpush2.msra.mxu0 0.0
    %2784 = vmatprep.subr.mxu0 0.0
    %2785 = vmatpush2.msra.mxu0 0.0
    %2786 = vmatprep.subr.mxu0 0.0
    %2787 = vmatpush2.msra.mxu0 0.0
    %2788 = vmatprep.subr.mxu0 0.0
    %2789 = vmatpush2.msra.mxu0 0.0
    %2790 = vmatprep.subr.mxu0 0.0
    %2791 = vmatpush2.msra.mxu0 0.0
    %2792 = vmatprep.subr.mxu0 0.0
    %2793 = vmatpush2.msra.mxu0 0.0
    %2794 = vmatprep.mubr.f32.mxu0 0.0
    %2795 = vmatmul.mubr.f32.gmra.mxu0 %v2725
    %v2796 = vpop.f32.mrf.mxu0
    %v2797 = vadd.f32 0.0, %v2796
    %v2798 = vpop.f32.mrf.mxu0
    %2799 = vmatprep.mubr.f32.mxu0 0.0
    %2800 = vmatmul.mubr.f32.gmra.mxu0 %v2728
    %v2801 = vpop.f32.mrf.mxu0
    %v2802 = vadd.f32 0.0, %v2801
    %v2803 = vpop.f32.mrf.mxu0
    %2804 = vdwg.mxu0
    %2807 = vrot.lane.b32.xlu0 %v1986, 96
    %v2808 = vpop.permute.xlu0 %2807
    %2809 = vrot.lane.b32.xlu0 %v1989, 96
    %v2810 = vpop.permute.xlu0 %2809
    %v2814 = vsel %vm2202, %v2714, 0
    %v2817 = vsel %vm2202, %v2715, 0
    %2819 = vmatprep.subr.mxu0 0.0
    %2820 = vmatpush1.msra.mxu0 0.0
    %2821 = vmatprep.subr.mxu0 0.0
    %2822 = vmatpush1.msra.mxu0 0.0
    %2823 = vmatprep.subr.mxu0 0.0
    %2824 = vmatpush1.msra.mxu0 0.0
    %2825 = vmatprep.subr.mxu0 0.0
    %2826 = vmatpush1.msra.mxu0 0.0
    %2827 = vmatprep.subr.mxu0 0.0
    %2828 = vmatpush1.msra.mxu0 0.0
    %2829 = vmatprep.subr.mxu0 0.0
    %2830 = vmatpush1.msra.mxu0 0.0
    %2831 = vmatprep.subr.mxu0 0.0
    %2832 = vmatpush1.msra.mxu0 0.0
    %2833 = vmatprep.subr.mxu0 0.0
    %2834 = vmatpush1.msra.mxu0 0.0
    %2835 = vmatprep.subr.mxu0 0.0
    %2836 = vmatpush1.msra.mxu0 0.0
    %2837 = vmatprep.subr.mxu0 0.0
    %2838 = vmatpush1.msra.mxu0 0.0
    %2839 = vmatprep.subr.mxu0 0.0
    %2840 = vmatpush1.msra.mxu0 0.0
    %2841 = vmatprep.subr.mxu0 0.0
    %2842 = vmatpush1.msra.mxu0 0.0
    %2843 = vmatprep.subr.mxu0 0.0
    %2844 = vmatpush1.msra.mxu0 0.0
    %2845 = vmatprep.subr.mxu0 0.0
    %2846 = vmatpush1.msra.mxu0 0.0
    %2847 = vmatprep.subr.mxu0 0.0
    %2848 = vmatpush1.msra.mxu0 %v2810
    %2849 = vmatprep.subr.mxu0 0.0
    %2850 = vmatpush1.msra.mxu0 %v2808
    %2851 = vmatprep.subr.mxu0 0.0
    %2852 = vmatpush2.msra.mxu0 0.0
    %2853 = vmatprep.subr.mxu0 0.0
    %2854 = vmatpush2.msra.mxu0 0.0
    %2855 = vmatprep.subr.mxu0 0.0
    %2856 = vmatpush2.msra.mxu0 0.0
    %2857 = vmatprep.subr.mxu0 0.0
    %2858 = vmatpush2.msra.mxu0 0.0
    %2859 = vmatprep.subr.mxu0 0.0
    %2860 = vmatpush2.msra.mxu0 0.0
    %2861 = vmatprep.subr.mxu0 0.0
    %2862 = vmatpush2.msra.mxu0 0.0
    %2863 = vmatprep.subr.mxu0 0.0
    %2864 = vmatpush2.msra.mxu0 0.0
    %2865 = vmatprep.subr.mxu0 0.0
    %2866 = vmatpush2.msra.mxu0 0.0
    %2867 = vmatprep.subr.mxu0 0.0
    %2868 = vmatpush2.msra.mxu0 0.0
    %2869 = vmatprep.subr.mxu0 0.0
    %2870 = vmatpush2.msra.mxu0 0.0
    %2871 = vmatprep.subr.mxu0 0.0
    %2872 = vmatpush2.msra.mxu0 0.0
    %2873 = vmatprep.subr.mxu0 0.0
    %2874 = vmatpush2.msra.mxu0 0.0
    %2875 = vmatprep.subr.mxu0 0.0
    %2876 = vmatpush2.msra.mxu0 0.0
    %2877 = vmatprep.subr.mxu0 0.0
    %2878 = vmatpush2.msra.mxu0 0.0
    %2879 = vmatprep.subr.mxu0 0.0
    %2880 = vmatpush2.msra.mxu0 0.0
    %2881 = vmatprep.subr.mxu0 0.0
    %2882 = vmatpush2.msra.mxu0 0.0
    %2883 = vmatprep.mubr.f32.mxu0 0.0
    %2884 = vmatmul.mubr.f32.gmra.mxu0 %v2814
    %v2885 = vpop.f32.mrf.mxu0
    %v2886 = vadd.f32 0.0, %v2885
    %v2887 = vpop.f32.mrf.mxu0
    %2888 = vmatprep.mubr.f32.mxu0 0.0
    %2889 = vmatmul.mubr.f32.gmra.mxu0 %v2817
    %v2890 = vpop.f32.mrf.mxu0
    %v2891 = vadd.f32 0.0, %v2890
    %v2892 = vpop.f32.mrf.mxu0
    %2893 = vdwg.mxu0
    %v2894 = vpack.c.bf16 %v2802, %v2797
    %v2895 = vpack.c.bf16 %v2891, %v2886
    %v2900 = vunpack.c.l.b16 %v1996
    %v2901 = vunpack.c.l.b16 %v1997
    %v2902 = vunpack.c.l.b16 %v1998
    %v2903 = vunpack.c.l.b16 %v1999
    %v2904 = vpack.c.b16 %v2901, %v2900
    %v2905 = vpack.c.b16 %v2903, %v2902
    %v2909 = vsel %vm2019, %v2894, 0
    %v2912 = vsel %vm2019, %v2895, 0
    %2914 = vmatprep.subr.bf16.mxu0 0
    %2915 = vmatpush1.bf16.msra.mxu0 0
    %2916 = vmatprep.subr.bf16.mxu0 0
    %2917 = vmatpush1.bf16.msra.mxu0 0
    %2918 = vmatprep.subr.bf16.mxu0 0
    %2919 = vmatpush1.bf16.msra.mxu0 0
    %2920 = vmatprep.subr.bf16.mxu0 0
    %2921 = vmatpush1.bf16.msra.mxu0 0
    %2922 = vmatprep.subr.bf16.mxu0 0
    %2923 = vmatpush1.bf16.msra.mxu0 0
    %2924 = vmatprep.subr.bf16.mxu0 0
    %2925 = vmatpush1.bf16.msra.mxu0 0
    %2926 = vmatprep.subr.bf16.mxu0 0
    %2927 = vmatpush1.bf16.msra.mxu0 %v2905
    %2928 = vmatprep.subr.bf16.mxu0 0
    %2929 = vmatpush1.bf16.msra.mxu0 %v2904
    %2930 = vmatprep.subr.bf16.mxu0 0
    %2931 = vmatpush2.bf16.msra.mxu0 0
    %2932 = vmatprep.subr.bf16.mxu0 0
    %2933 = vmatpush2.bf16.msra.mxu0 0
    %2934 = vmatprep.subr.bf16.mxu0 0
    %2935 = vmatpush2.bf16.msra.mxu0 0
    %2936 = vmatprep.subr.bf16.mxu0 0
    %2937 = vmatpush2.bf16.msra.mxu0 0
    %2938 = vmatprep.subr.bf16.mxu0 0
    %2939 = vmatpush2.bf16.msra.mxu0 0
    %2940 = vmatprep.subr.bf16.mxu0 0
    %2941 = vmatpush2.bf16.msra.mxu0 0
    %2942 = vmatprep.subr.bf16.mxu0 0
    %2943 = vmatpush2.bf16.msra.mxu0 0
    %2944 = vmatprep.subr.bf16.mxu0 0
    %2945 = vmatpush2.bf16.msra.mxu0 0
    %2946 = vmatprep.mubr.bf16.mxu0 0
    %2947 = vmatmul.mubr.bf16.gmra.mxu0 %v2909
    %v2948 = vpop.f32.mrf.mxu0
    %v2949 = vadd.f32 0.0, %v2948
    %v2950 = vpop.f32.mrf.mxu0
    %v2951 = vpop.f32.mrf.mxu0
    %v2952 = vadd.f32 0.0, %v2951
    %v2953 = vpop.f32.mrf.mxu0
    %2954 = vmatprep.mubr.bf16.mxu0 0
    %2955 = vmatmul.mubr.bf16.gmra.mxu0 %v2912
    %v2956 = vpop.f32.mrf.mxu0
    %v2957 = vadd.f32 0.0, %v2956
    %v2958 = vpop.f32.mrf.mxu0
    %v2959 = vpop.f32.mrf.mxu0
    %v2960 = vadd.f32 0.0, %v2959
    %v2961 = vpop.f32.mrf.mxu0
    %2962 = vdwg.mxu0
    %v2963 = vadd.f32 %v2478, %v2949
    %v2964 = vadd.f32 %v2479, %v2952
    %v2965 = vadd.f32 %v2480, %v2957
    %v2966 = vadd.f32 %v2481, %v2960
    %2967 = vrot.lane.b32.xlu0 %v1925, 64
    %v2968 = vpop.permute.xlu0 %2967
    %2969 = vrot.lane.b32.xlu0 %v1929, 64
    %v2970 = vpop.permute.xlu0 %2969
    %2971 = vrot.lane.b32.xlu0 %v1927, 64
    %v2972 = vpop.permute.xlu0 %2971
    %2973 = vrot.lane.b32.xlu0 %v1931, 64
    %v2974 = vpop.permute.xlu0 %2973
    %v2975 = vsel %vm2019, %v2968, 0
    %v2977 = vsel %vm2019, %v2970, 0
    %v2979 = vsel %vm2019, %v2972, 0
    %v2981 = vsel %vm2019, %v2974, 0
    %2983 = vmatprep.subr.mxu0 0.0
    %2984 = vmatpush1.xpose.msra.mxu0 0.0
    %2985 = vmatprep.subr.mxu0 0.0
    %2986 = vmatpush1.xpose.msra.mxu0 0.0
    %2987 = vmatprep.subr.mxu0 0.0
    %2988 = vmatpush1.xpose.msra.mxu0 0.0
    %2989 = vmatprep.subr.mxu0 0.0
    %2990 = vmatpush1.xpose.msra.mxu0 0.0
    %2991 = vmatprep.subr.mxu0 0.0
    %2992 = vmatpush1.xpose.msra.mxu0 0.0
    %2993 = vmatprep.subr.mxu0 0.0
    %2994 = vmatpush1.xpose.msra.mxu0 0.0
    %2995 = vmatprep.subr.mxu0 0.0
    %2996 = vmatpush1.xpose.msra.mxu0 0.0
    %2997 = vmatprep.subr.mxu0 0.0
    %2998 = vmatpush1.xpose.msra.mxu0 0.0
    %2999 = vmatprep.subr.mxu0 0.0
    %3000 = vmatpush1.xpose.msra.mxu0 0.0
    %3001 = vmatprep.subr.mxu0 0.0
    %3002 = vmatpush1.xpose.msra.mxu0 0.0
    %3003 = vmatprep.subr.mxu0 0.0
    %3004 = vmatpush1.xpose.msra.mxu0 0.0
    %3005 = vmatprep.subr.mxu0 0.0
    %3006 = vmatpush1.xpose.msra.mxu0 0.0
    %3007 = vmatprep.subr.mxu0 0.0
    %3008 = vmatpush1.xpose.msra.mxu0 0.0
    %3009 = vmatprep.subr.mxu0 0.0
    %3010 = vmatpush1.xpose.msra.mxu0 0.0
    %3011 = vmatprep.subr.mxu0 0.0
    %3012 = vmatpush1.xpose.msra.mxu0 %v2981
    %3013 = vmatprep.subr.mxu0 0.0
    %3014 = vmatpush1.xpose.msra.mxu0 %v2979
    %3015 = vmatprep.subr.mxu0 0.0
    %3016 = vmatpush2.xpose.msra.mxu0 0.0
    %3017 = vmatprep.subr.mxu0 0.0
    %3018 = vmatpush2.xpose.msra.mxu0 0.0
    %3019 = vmatprep.subr.mxu0 0.0
    %3020 = vmatpush2.xpose.msra.mxu0 0.0
    %3021 = vmatprep.subr.mxu0 0.0
    %3022 = vmatpush2.xpose.msra.mxu0 0.0
    %3023 = vmatprep.subr.mxu0 0.0
    %3024 = vmatpush2.xpose.msra.mxu0 0.0
    %3025 = vmatprep.subr.mxu0 0.0
    %3026 = vmatpush2.xpose.msra.mxu0 0.0
    %3027 = vmatprep.subr.mxu0 0.0
    %3028 = vmatpush2.xpose.msra.mxu0 0.0
    %3029 = vmatprep.subr.mxu0 0.0
    %3030 = vmatpush2.xpose.msra.mxu0 0.0
    %3031 = vmatprep.subr.mxu0 0.0
    %3032 = vmatpush2.xpose.msra.mxu0 0.0
    %3033 = vmatprep.subr.mxu0 0.0
    %3034 = vmatpush2.xpose.msra.mxu0 0.0
    %3035 = vmatprep.subr.mxu0 0.0
    %3036 = vmatpush2.xpose.msra.mxu0 0.0
    %3037 = vmatprep.subr.mxu0 0.0
    %3038 = vmatpush2.xpose.msra.mxu0 0.0
    %3039 = vmatprep.subr.mxu0 0.0
    %3040 = vmatpush2.xpose.msra.mxu0 0.0
    %3041 = vmatprep.subr.mxu0 0.0
    %3042 = vmatpush2.xpose.msra.mxu0 0.0
    %3043 = vmatprep.subr.mxu0 0.0
    %3044 = vmatpush2.xpose.msra.mxu0 0.0
    %3045 = vmatprep.subr.mxu0 0.0
    %3046 = vmatpush2.xpose.msra.mxu0 0.0
    %3047 = vmatprep.mubr.f32.mxu0 0.0
    %3048 = vmatmul.mubr.f32.gmra.mxu0 %v2975
    %v3049 = vpop.f32.mrf.mxu0
    %v3050 = vadd.f32 0.0, %v3049
    %v3051 = vpop.f32.mrf.mxu0
    %3052 = vmatprep.mubr.f32.mxu0 0.0
    %3053 = vmatmul.mubr.f32.gmra.mxu0 %v2977
    %v3054 = vpop.f32.mrf.mxu0
    %v3055 = vadd.f32 0.0, %v3054
    %v3056 = vpop.f32.mrf.mxu0
    %3057 = vdwg.mxu0
    %3058 = vrot.lane.b32.xlu0 %v1935, 64
    %v3059 = vpop.permute.xlu0 %3058
    %3060 = vrot.lane.b32.xlu0 %v1939, 64
    %v3061 = vpop.permute.xlu0 %3060
    %3062 = vrot.lane.b32.xlu0 %v1937, 64
    %v3063 = vpop.permute.xlu0 %3062
    %3064 = vrot.lane.b32.xlu0 %v1941, 64
    %v3065 = vpop.permute.xlu0 %3064
    %v3066 = vsel %vm2019, %v3059, 0
    %v3068 = vsel %vm2019, %v3061, 0
    %v3070 = vsel %vm2019, %v3063, 0
    %v3072 = vsel %vm2019, %v3065, 0
    %3074 = vmatprep.subr.mxu0 0.0
    %3075 = vmatpush1.xpose.msra.mxu0 0.0
    %3076 = vmatprep.subr.mxu0 0.0
    %3077 = vmatpush1.xpose.msra.mxu0 0.0
    %3078 = vmatprep.subr.mxu0 0.0
    %3079 = vmatpush1.xpose.msra.mxu0 0.0
    %3080 = vmatprep.subr.mxu0 0.0
    %3081 = vmatpush1.xpose.msra.mxu0 0.0
    %3082 = vmatprep.subr.mxu0 0.0
    %3083 = vmatpush1.xpose.msra.mxu0 0.0
    %3084 = vmatprep.subr.mxu0 0.0
    %3085 = vmatpush1.xpose.msra.mxu0 0.0
    %3086 = vmatprep.subr.mxu0 0.0
    %3087 = vmatpush1.xpose.msra.mxu0 0.0
    %3088 = vmatprep.subr.mxu0 0.0
    %3089 = vmatpush1.xpose.msra.mxu0 0.0
    %3090 = vmatprep.subr.mxu0 0.0
    %3091 = vmatpush1.xpose.msra.mxu0 0.0
    %3092 = vmatprep.subr.mxu0 0.0
    %3093 = vmatpush1.xpose.msra.mxu0 0.0
    %3094 = vmatprep.subr.mxu0 0.0
    %3095 = vmatpush1.xpose.msra.mxu0 0.0
    %3096 = vmatprep.subr.mxu0 0.0
    %3097 = vmatpush1.xpose.msra.mxu0 0.0
    %3098 = vmatprep.subr.mxu0 0.0
    %3099 = vmatpush1.xpose.msra.mxu0 0.0
    %3100 = vmatprep.subr.mxu0 0.0
    %3101 = vmatpush1.xpose.msra.mxu0 0.0
    %3102 = vmatprep.subr.mxu0 0.0
    %3103 = vmatpush1.xpose.msra.mxu0 %v3072
    %3104 = vmatprep.subr.mxu0 0.0
    %3105 = vmatpush1.xpose.msra.mxu0 %v3070
    %3106 = vmatprep.subr.mxu0 0.0
    %3107 = vmatpush2.xpose.msra.mxu0 0.0
    %3108 = vmatprep.subr.mxu0 0.0
    %3109 = vmatpush2.xpose.msra.mxu0 0.0
    %3110 = vmatprep.subr.mxu0 0.0
    %3111 = vmatpush2.xpose.msra.mxu0 0.0
    %3112 = vmatprep.subr.mxu0 0.0
    %3113 = vmatpush2.xpose.msra.mxu0 0.0
    %3114 = vmatprep.subr.mxu0 0.0
    %3115 = vmatpush2.xpose.msra.mxu0 0.0
    %3116 = vmatprep.subr.mxu0 0.0
    %3117 = vmatpush2.xpose.msra.mxu0 0.0
    %3118 = vmatprep.subr.mxu0 0.0
    %3119 = vmatpush2.xpose.msra.mxu0 0.0
    %3120 = vmatprep.subr.mxu0 0.0
    %3121 = vmatpush2.xpose.msra.mxu0 0.0
    %3122 = vmatprep.subr.mxu0 0.0
    %3123 = vmatpush2.xpose.msra.mxu0 0.0
    %3124 = vmatprep.subr.mxu0 0.0
    %3125 = vmatpush2.xpose.msra.mxu0 0.0
    %3126 = vmatprep.subr.mxu0 0.0
    %3127 = vmatpush2.xpose.msra.mxu0 0.0
    %3128 = vmatprep.subr.mxu0 0.0
    %3129 = vmatpush2.xpose.msra.mxu0 0.0
    %3130 = vmatprep.subr.mxu0 0.0
    %3131 = vmatpush2.xpose.msra.mxu0 0.0
    %3132 = vmatprep.subr.mxu0 0.0
    %3133 = vmatpush2.xpose.msra.mxu0 0.0
    %3134 = vmatprep.subr.mxu0 0.0
    %3135 = vmatpush2.xpose.msra.mxu0 0.0
    %3136 = vmatprep.subr.mxu0 0.0
    %3137 = vmatpush2.xpose.msra.mxu0 0.0
    %3138 = vmatprep.mubr.f32.mxu0 0.0
    %3139 = vmatmul.mubr.f32.gmra.mxu0 %v3066
    %v3140 = vpop.f32.mrf.mxu0
    %v3141 = vadd.f32 0.0, %v3140
    %v3142 = vpop.f32.mrf.mxu0
    %3143 = vmatprep.mubr.f32.mxu0 0.0
    %3144 = vmatmul.mubr.f32.gmra.mxu0 %v3068
    %v3145 = vpop.f32.mrf.mxu0
    %v3146 = vadd.f32 0.0, %v3145
    %v3147 = vpop.f32.mrf.mxu0
    %3148 = vdwg.mxu0
    %v3149 = vmul.f32 %v3050, 0.17677669
    %v3150 = vmul.f32 %v3055, 0.17677669
    %v3151 = vmul.f32 %v3141, 0.17677669
    %v3152 = vmul.f32 %v3146, 0.17677669
    %v3153 = vadd.f32 %v3149, %v1643
    %v3154 = vadd.f32 %v3150, %v1643
    %v3155 = vadd.f32 %v3151, %v1643
    %v3156 = vadd.f32 %v3152, %v1643
    %v3157 = vsel %vm2202, %v3153, -inf
    %3158 = vmax.xlane.f32.xlu0 %v3157
    %v3159 = vpop.xlane.xlu0 %3158
    %v3160 = vsel %vm2202, %v3154, -inf
    %3161 = vmax.xlane.f32.xlu0 %v3160
    %v3162 = vpop.xlane.xlu0 %3161
    %v3163 = vsel %vm2202, %v3155, -inf
    %3164 = vmax.xlane.f32.xlu0 %v3163
    %v3165 = vpop.xlane.xlu0 %3164
    %v3166 = vsel %vm2202, %v3156, -inf
    %3167 = vmax.xlane.f32.xlu0 %v3166
    %v3168 = vpop.xlane.xlu0 %3167
    %v3169 = vsub.f32 %v3153, %v3159
    %v3170 = vsub.f32 %v3154, %v3162
    %v3171 = vsub.f32 %v3155, %v3165
    %v3172 = vsub.f32 %v3156, %v3168
    %v3173 = vmul.f32 %v3169, 1.442695
    %v3174 = vpow.pop %v3173
    %v3175 = vmul.f32 %v3170, 1.442695
    %v3176 = vpow.pop %v3175
    %v3177 = vmul.f32 %v3171, 1.442695
    %v3178 = vpow.pop %v3177
    %v3179 = vmul.f32 %v3172, 1.442695
    %v3180 = vpow.pop %v3179
    %v3181 = vsel %vm2202, %v3174, 0.0
    %3182 = vadd.xlane.f32.xlu0 %v3181
    %v3183 = vpop.xlane.xlu0 %3182
    %v3184 = vsel %vm2202, %v3176, 0.0
    %3185 = vadd.xlane.f32.xlu0 %v3184
    %v3186 = vpop.xlane.xlu0 %3185
    %v3187 = vsel %vm2202, %v3178, 0.0
    %3188 = vadd.xlane.f32.xlu0 %v3187
    %v3189 = vpop.xlane.xlu0 %3188
    %v3190 = vsel %vm2202, %v3180, 0.0
    %3191 = vadd.xlane.f32.xlu0 %v3190
    %v3192 = vpop.xlane.xlu0 %3191
    %v3193 = vrcp.pop %v3183
    %v3194 = vrcp.pop %v3186
    %v3195 = vrcp.pop %v3189
    %v3196 = vrcp.pop %v3192
    %v3197 = vmul.f32 %v3174, %v3193
    %v3198 = vmul.f32 %v3176, %v3194
    %v3199 = vmul.f32 %v3178, %v3195
    %v3200 = vmul.f32 %v3180, %v3196
    %3201 = vrot.lane.b32.xlu0 %v1978, 64
    %v3202 = vpop.permute.xlu0 %3201
    %3203 = vrot.lane.b32.xlu0 %v1981, 64
    %v3204 = vpop.permute.xlu0 %3203
    %v3208 = vsel %vm2202, %v3197, 0
    %v3211 = vsel %vm2202, %v3198, 0
    %3213 = vmatprep.subr.mxu0 0.0
    %3214 = vmatpush1.msra.mxu0 0.0
    %3215 = vmatprep.subr.mxu0 0.0
    %3216 = vmatpush1.msra.mxu0 0.0
    %3217 = vmatprep.subr.mxu0 0.0
    %3218 = vmatpush1.msra.mxu0 0.0
    %3219 = vmatprep.subr.mxu0 0.0
    %3220 = vmatpush1.msra.mxu0 0.0
    %3221 = vmatprep.subr.mxu0 0.0
    %3222 = vmatpush1.msra.mxu0 0.0
    %3223 = vmatprep.subr.mxu0 0.0
    %3224 = vmatpush1.msra.mxu0 0.0
    %3225 = vmatprep.subr.mxu0 0.0
    %3226 = vmatpush1.msra.mxu0 0.0
    %3227 = vmatprep.subr.mxu0 0.0
    %3228 = vmatpush1.msra.mxu0 0.0
    %3229 = vmatprep.subr.mxu0 0.0
    %3230 = vmatpush1.msra.mxu0 0.0
    %3231 = vmatprep.subr.mxu0 0.0
    %3232 = vmatpush1.msra.mxu0 0.0
    %3233 = vmatprep.subr.mxu0 0.0
    %3234 = vmatpush1.msra.mxu0 0.0
    %3235 = vmatprep.subr.mxu0 0.0
    %3236 = vmatpush1.msra.mxu0 0.0
    %3237 = vmatprep.subr.mxu0 0.0
    %3238 = vmatpush1.msra.mxu0 0.0
    %3239 = vmatprep.subr.mxu0 0.0
    %3240 = vmatpush1.msra.mxu0 0.0
    %3241 = vmatprep.subr.mxu0 0.0
    %3242 = vmatpush1.msra.mxu0 %v3204
    %3243 = vmatprep.subr.mxu0 0.0
    %3244 = vmatpush1.msra.mxu0 %v3202
    %3245 = vmatprep.subr.mxu0 0.0
    %3246 = vmatpush2.msra.mxu0 0.0
    %3247 = vmatprep.subr.mxu0 0.0
    %3248 = vmatpush2.msra.mxu0 0.0
    %3249 = vmatprep.subr.mxu0 0.0
    %3250 = vmatpush2.msra.mxu0 0.0
    %3251 = vmatprep.subr.mxu0 0.0
    %3252 = vmatpush2.msra.mxu0 0.0
    %3253 = vmatprep.subr.mxu0 0.0
    %3254 = vmatpush2.msra.mxu0 0.0
    %3255 = vmatprep.subr.mxu0 0.0
    %3256 = vmatpush2.msra.mxu0 0.0
    %3257 = vmatprep.subr.mxu0 0.0
    %3258 = vmatpush2.msra.mxu0 0.0
    %3259 = vmatprep.subr.mxu0 0.0
    %3260 = vmatpush2.msra.mxu0 0.0
    %3261 = vmatprep.subr.mxu0 0.0
    %3262 = vmatpush2.msra.mxu0 0.0
    %3263 = vmatprep.subr.mxu0 0.0
    %3264 = vmatpush2.msra.mxu0 0.0
    %3265 = vmatprep.subr.mxu0 0.0
    %3266 = vmatpush2.msra.mxu0 0.0
    %3267 = vmatprep.subr.mxu0 0.0
    %3268 = vmatpush2.msra.mxu0 0.0
    %3269 = vmatprep.subr.mxu0 0.0
    %3270 = vmatpush2.msra.mxu0 0.0
    %3271 = vmatprep.subr.mxu0 0.0
    %3272 = vmatpush2.msra.mxu0 0.0
    %3273 = vmatprep.subr.mxu0 0.0
    %3274 = vmatpush2.msra.mxu0 0.0
    %3275 = vmatprep.subr.mxu0 0.0
    %3276 = vmatpush2.msra.mxu0 0.0
    %3277 = vmatprep.mubr.f32.mxu0 0.0
    %3278 = vmatmul.mubr.f32.gmra.mxu0 %v3208
    %v3279 = vpop.f32.mrf.mxu0
    %v3280 = vadd.f32 0.0, %v3279
    %v3281 = vpop.f32.mrf.mxu0
    %3282 = vmatprep.mubr.f32.mxu0 0.0
    %3283 = vmatmul.mubr.f32.gmra.mxu0 %v3211
    %v3284 = vpop.f32.mrf.mxu0
    %v3285 = vadd.f32 0.0, %v3284
    %v3286 = vpop.f32.mrf.mxu0
    %3287 = vdwg.mxu0
    %3288 = vrot.lane.b32.xlu0 %v1986, 64
    %v3289 = vpop.permute.xlu0 %3288
    %3290 = vrot.lane.b32.xlu0 %v1989, 64
    %v3291 = vpop.permute.xlu0 %3290
    %v3295 = vsel %vm2202, %v3199, 0
    %v3298 = vsel %vm2202, %v3200, 0
    %3300 = vmatprep.subr.mxu0 0.0
    %3301 = vmatpush1.msra.mxu0 0.0
    %3302 = vmatprep.subr.mxu0 0.0
    %3303 = vmatpush1.msra.mxu0 0.0
    %3304 = vmatprep.subr.mxu0 0.0
    %3305 = vmatpush1.msra.mxu0 0.0
    %3306 = vmatprep.subr.mxu0 0.0
    %3307 = vmatpush1.msra.mxu0 0.0
    %3308 = vmatprep.subr.mxu0 0.0
    %3309 = vmatpush1.msra.mxu0 0.0
    %3310 = vmatprep.subr.mxu0 0.0
    %3311 = vmatpush1.msra.mxu0 0.0
    %3312 = vmatprep.subr.mxu0 0.0
    %3313 = vmatpush1.msra.mxu0 0.0
    %3314 = vmatprep.subr.mxu0 0.0
    %3315 = vmatpush1.msra.mxu0 0.0
    %3316 = vmatprep.subr.mxu0 0.0
    %3317 = vmatpush1.msra.mxu0 0.0
    %3318 = vmatprep.subr.mxu0 0.0
    %3319 = vmatpush1.msra.mxu0 0.0
    %3320 = vmatprep.subr.mxu0 0.0
    %3321 = vmatpush1.msra.mxu0 0.0
    %3322 = vmatprep.subr.mxu0 0.0
    %3323 = vmatpush1.msra.mxu0 0.0
    %3324 = vmatprep.subr.mxu0 0.0
    %3325 = vmatpush1.msra.mxu0 0.0
    %3326 = vmatprep.subr.mxu0 0.0
    %3327 = vmatpush1.msra.mxu0 0.0
    %3328 = vmatprep.subr.mxu0 0.0
    %3329 = vmatpush1.msra.mxu0 %v3291
    %3330 = vmatprep.subr.mxu0 0.0
    %3331 = vmatpush1.msra.mxu0 %v3289
    %3332 = vmatprep.subr.mxu0 0.0
    %3333 = vmatpush2.msra.mxu0 0.0
    %3334 = vmatprep.subr.mxu0 0.0
    %3335 = vmatpush2.msra.mxu0 0.0
    %3336 = vmatprep.subr.mxu0 0.0
    %3337 = vmatpush2.msra.mxu0 0.0
    %3338 = vmatprep.subr.mxu0 0.0
    %3339 = vmatpush2.msra.mxu0 0.0
    %3340 = vmatprep.subr.mxu0 0.0
    %3341 = vmatpush2.msra.mxu0 0.0
    %3342 = vmatprep.subr.mxu0 0.0
    %3343 = vmatpush2.msra.mxu0 0.0
    %3344 = vmatprep.subr.mxu0 0.0
    %3345 = vmatpush2.msra.mxu0 0.0
    %3346 = vmatprep.subr.mxu0 0.0
    %3347 = vmatpush2.msra.mxu0 0.0
    %3348 = vmatprep.subr.mxu0 0.0
    %3349 = vmatpush2.msra.mxu0 0.0
    %3350 = vmatprep.subr.mxu0 0.0
    %3351 = vmatpush2.msra.mxu0 0.0
    %3352 = vmatprep.subr.mxu0 0.0
    %3353 = vmatpush2.msra.mxu0 0.0
    %3354 = vmatprep.subr.mxu0 0.0
    %3355 = vmatpush2.msra.mxu0 0.0
    %3356 = vmatprep.subr.mxu0 0.0
    %3357 = vmatpush2.msra.mxu0 0.0
    %3358 = vmatprep.subr.mxu0 0.0
    %3359 = vmatpush2.msra.mxu0 0.0
    %3360 = vmatprep.subr.mxu0 0.0
    %3361 = vmatpush2.msra.mxu0 0.0
    %3362 = vmatprep.subr.mxu0 0.0
    %3363 = vmatpush2.msra.mxu0 0.0
    %3364 = vmatprep.mubr.f32.mxu0 0.0
    %3365 = vmatmul.mubr.f32.gmra.mxu0 %v3295
    %v3366 = vpop.f32.mrf.mxu0
    %v3367 = vadd.f32 0.0, %v3366
    %v3368 = vpop.f32.mrf.mxu0
    %3369 = vmatprep.mubr.f32.mxu0 0.0
    %3370 = vmatmul.mubr.f32.gmra.mxu0 %v3298
    %v3371 = vpop.f32.mrf.mxu0
    %v3372 = vadd.f32 0.0, %v3371
    %v3373 = vpop.f32.mrf.mxu0
    %3374 = vdwg.mxu0
    %v3375 = vpack.c.bf16 %v3285, %v3280
    %v3376 = vpack.c.bf16 %v3372, %v3367
    %v3381 = vunpack.c.l.b16 %v2000
    %v3382 = vunpack.c.l.b16 %v2001
    %v3383 = vunpack.c.l.b16 %v2002
    %v3384 = vunpack.c.l.b16 %v2003
    %v3385 = vpack.c.b16 %v3382, %v3381
    %v3386 = vpack.c.b16 %v3384, %v3383
    %v3390 = vsel %vm2019, %v3375, 0
    %v3393 = vsel %vm2019, %v3376, 0
    %3395 = vmatprep.subr.bf16.mxu0 0
    %3396 = vmatpush1.bf16.msra.mxu0 0
    %3397 = vmatprep.subr.bf16.mxu0 0
    %3398 = vmatpush1.bf16.msra.mxu0 0
    %3399 = vmatprep.subr.bf16.mxu0 0
    %3400 = vmatpush1.bf16.msra.mxu0 0
    %3401 = vmatprep.subr.bf16.mxu0 0
    %3402 = vmatpush1.bf16.msra.mxu0 0
    %3403 = vmatprep.subr.bf16.mxu0 0
    %3404 = vmatpush1.bf16.msra.mxu0 0
    %3405 = vmatprep.subr.bf16.mxu0 0
    %3406 = vmatpush1.bf16.msra.mxu0 0
    %3407 = vmatprep.subr.bf16.mxu0 0
    %3408 = vmatpush1.bf16.msra.mxu0 %v3386
    %3409 = vmatprep.subr.bf16.mxu0 0
    %3410 = vmatpush1.bf16.msra.mxu0 %v3385
    %3411 = vmatprep.subr.bf16.mxu0 0
    %3412 = vmatpush2.bf16.msra.mxu0 0
    %3413 = vmatprep.subr.bf16.mxu0 0
    %3414 = vmatpush2.bf16.msra.mxu0 0
    %3415 = vmatprep.subr.bf16.mxu0 0
    %3416 = vmatpush2.bf16.msra.mxu0 0
    %3417 = vmatprep.subr.bf16.mxu0 0
    %3418 = vmatpush2.bf16.msra.mxu0 0
    %3419 = vmatprep.subr.bf16.mxu0 0
    %3420 = vmatpush2.bf16.msra.mxu0 0
    %3421 = vmatprep.subr.bf16.mxu0 0
    %3422 = vmatpush2.bf16.msra.mxu0 0
    %3423 = vmatprep.subr.bf16.mxu0 0
    %3424 = vmatpush2.bf16.msra.mxu0 0
    %3425 = vmatprep.subr.bf16.mxu0 0
    %3426 = vmatpush2.bf16.msra.mxu0 0
    %3427 = vmatprep.mubr.bf16.mxu0 0
    %3428 = vmatmul.mubr.bf16.gmra.mxu0 %v3390
    %v3429 = vpop.f32.mrf.mxu0
    %v3430 = vadd.f32 0.0, %v3429
    %v3431 = vpop.f32.mrf.mxu0
    %v3432 = vpop.f32.mrf.mxu0
    %v3433 = vadd.f32 0.0, %v3432
    %v3434 = vpop.f32.mrf.mxu0
    %3435 = vmatprep.mubr.bf16.mxu0 0
    %3436 = vmatmul.mubr.bf16.gmra.mxu0 %v3393
    %v3437 = vpop.f32.mrf.mxu0
    %v3438 = vadd.f32 0.0, %v3437
    %v3439 = vpop.f32.mrf.mxu0
    %v3440 = vpop.f32.mrf.mxu0
    %v3441 = vadd.f32 0.0, %v3440
    %v3442 = vpop.f32.mrf.mxu0
    %3443 = vdwg.mxu0
    %v3444 = vadd.f32 %v2963, %v3430
    %v3445 = vadd.f32 %v2964, %v3433
    %v3446 = vadd.f32 %v2965, %v3438
    %v3447 = vadd.f32 %v2966, %v3441
    %3448 = vrot.lane.b32.xlu0 %v1925, 32
    %v3449 = vpop.permute.xlu0 %3448
    %3450 = vrot.lane.b32.xlu0 %v1929, 32
    %v3451 = vpop.permute.xlu0 %3450
    %3452 = vrot.lane.b32.xlu0 %v1927, 32
    %v3453 = vpop.permute.xlu0 %3452
    %3454 = vrot.lane.b32.xlu0 %v1931, 32
    %v3455 = vpop.permute.xlu0 %3454
    %v3456 = vsel %vm2019, %v3449, 0
    %v3458 = vsel %vm2019, %v3451, 0
    %v3460 = vsel %vm2019, %v3453, 0
    %v3462 = vsel %vm2019, %v3455, 0
    %3464 = vmatprep.subr.mxu0 0.0
    %3465 = vmatpush1.xpose.msra.mxu0 0.0
    %3466 = vmatprep.subr.mxu0 0.0
    %3467 = vmatpush1.xpose.msra.mxu0 0.0
    %3468 = vmatprep.subr.mxu0 0.0
    %3469 = vmatpush1.xpose.msra.mxu0 0.0
    %3470 = vmatprep.subr.mxu0 0.0
    %3471 = vmatpush1.xpose.msra.mxu0 0.0
    %3472 = vmatprep.subr.mxu0 0.0
    %3473 = vmatpush1.xpose.msra.mxu0 0.0
    %3474 = vmatprep.subr.mxu0 0.0
    %3475 = vmatpush1.xpose.msra.mxu0 0.0
    %3476 = vmatprep.subr.mxu0 0.0
    %3477 = vmatpush1.xpose.msra.mxu0 0.0
    %3478 = vmatprep.subr.mxu0 0.0
    %3479 = vmatpush1.xpose.msra.mxu0 0.0
    %3480 = vmatprep.subr.mxu0 0.0
    %3481 = vmatpush1.xpose.msra.mxu0 0.0
    %3482 = vmatprep.subr.mxu0 0.0
    %3483 = vmatpush1.xpose.msra.mxu0 0.0
    %3484 = vmatprep.subr.mxu0 0.0
    %3485 = vmatpush1.xpose.msra.mxu0 0.0
    %3486 = vmatprep.subr.mxu0 0.0
    %3487 = vmatpush1.xpose.msra.mxu0 0.0
    %3488 = vmatprep.subr.mxu0 0.0
    %3489 = vmatpush1.xpose.msra.mxu0 0.0
    %3490 = vmatprep.subr.mxu0 0.0
    %3491 = vmatpush1.xpose.msra.mxu0 0.0
    %3492 = vmatprep.subr.mxu0 0.0
    %3493 = vmatpush1.xpose.msra.mxu0 %v3462
    %3494 = vmatprep.subr.mxu0 0.0
    %3495 = vmatpush1.xpose.msra.mxu0 %v3460
    %3496 = vmatprep.subr.mxu0 0.0
    %3497 = vmatpush2.xpose.msra.mxu0 0.0
    %3498 = vmatprep.subr.mxu0 0.0
    %3499 = vmatpush2.xpose.msra.mxu0 0.0
    %3500 = vmatprep.subr.mxu0 0.0
    %3501 = vmatpush2.xpose.msra.mxu0 0.0
    %3502 = vmatprep.subr.mxu0 0.0
    %3503 = vmatpush2.xpose.msra.mxu0 0.0
    %3504 = vmatprep.subr.mxu0 0.0
    %3505 = vmatpush2.xpose.msra.mxu0 0.0
    %3506 = vmatprep.subr.mxu0 0.0
    %3507 = vmatpush2.xpose.msra.mxu0 0.0
    %3508 = vmatprep.subr.mxu0 0.0
    %3509 = vmatpush2.xpose.msra.mxu0 0.0
    %3510 = vmatprep.subr.mxu0 0.0
    %3511 = vmatpush2.xpose.msra.mxu0 0.0
    %3512 = vmatprep.subr.mxu0 0.0
    %3513 = vmatpush2.xpose.msra.mxu0 0.0
    %3514 = vmatprep.subr.mxu0 0.0
    %3515 = vmatpush2.xpose.msra.mxu0 0.0
    %3516 = vmatprep.subr.mxu0 0.0
    %3517 = vmatpush2.xpose.msra.mxu0 0.0
    %3518 = vmatprep.subr.mxu0 0.0
    %3519 = vmatpush2.xpose.msra.mxu0 0.0
    %3520 = vmatprep.subr.mxu0 0.0
    %3521 = vmatpush2.xpose.msra.mxu0 0.0
    %3522 = vmatprep.subr.mxu0 0.0
    %3523 = vmatpush2.xpose.msra.mxu0 0.0
    %3524 = vmatprep.subr.mxu0 0.0
    %3525 = vmatpush2.xpose.msra.mxu0 0.0
    %3526 = vmatprep.subr.mxu0 0.0
    %3527 = vmatpush2.xpose.msra.mxu0 0.0
    %3528 = vmatprep.mubr.f32.mxu0 0.0
    %3529 = vmatmul.mubr.f32.gmra.mxu0 %v3456
    %v3530 = vpop.f32.mrf.mxu0
    %v3531 = vadd.f32 0.0, %v3530
    %v3532 = vpop.f32.mrf.mxu0
    %3533 = vmatprep.mubr.f32.mxu0 0.0
    %3534 = vmatmul.mubr.f32.gmra.mxu0 %v3458
    %v3535 = vpop.f32.mrf.mxu0
    %v3536 = vadd.f32 0.0, %v3535
    %v3537 = vpop.f32.mrf.mxu0
    %3538 = vdwg.mxu0
    %3539 = vrot.lane.b32.xlu0 %v1935, 32
    %v3540 = vpop.permute.xlu0 %3539
    %3541 = vrot.lane.b32.xlu0 %v1939, 32
    %v3542 = vpop.permute.xlu0 %3541
    %3543 = vrot.lane.b32.xlu0 %v1937, 32
    %v3544 = vpop.permute.xlu0 %3543
    %3545 = vrot.lane.b32.xlu0 %v1941, 32
    %v3546 = vpop.permute.xlu0 %3545
    %v3547 = vsel %vm2019, %v3540, 0
    %v3549 = vsel %vm2019, %v3542, 0
    %v3551 = vsel %vm2019, %v3544, 0
    %v3553 = vsel %vm2019, %v3546, 0
    %3555 = vmatprep.subr.mxu0 0.0
    %3556 = vmatpush1.xpose.msra.mxu0 0.0
    %3557 = vmatprep.subr.mxu0 0.0
    %3558 = vmatpush1.xpose.msra.mxu0 0.0
    %3559 = vmatprep.subr.mxu0 0.0
    %3560 = vmatpush1.xpose.msra.mxu0 0.0
    %3561 = vmatprep.subr.mxu0 0.0
    %3562 = vmatpush1.xpose.msra.mxu0 0.0
    %3563 = vmatprep.subr.mxu0 0.0
    %3564 = vmatpush1.xpose.msra.mxu0 0.0
    %3565 = vmatprep.subr.mxu0 0.0
    %3566 = vmatpush1.xpose.msra.mxu0 0.0
    %3567 = vmatprep.subr.mxu0 0.0
    %3568 = vmatpush1.xpose.msra.mxu0 0.0
    %3569 = vmatprep.subr.mxu0 0.0
    %3570 = vmatpush1.xpose.msra.mxu0 0.0
    %3571 = vmatprep.subr.mxu0 0.0
    %3572 = vmatpush1.xpose.msra.mxu0 0.0
    %3573 = vmatprep.subr.mxu0 0.0
    %3574 = vmatpush1.xpose.msra.mxu0 0.0
    %3575 = vmatprep.subr.mxu0 0.0
    %3576 = vmatpush1.xpose.msra.mxu0 0.0
    %3577 = vmatprep.subr.mxu0 0.0
    %3578 = vmatpush1.xpose.msra.mxu0 0.0
    %3579 = vmatprep.subr.mxu0 0.0
    %3580 = vmatpush1.xpose.msra.mxu0 0.0
    %3581 = vmatprep.subr.mxu0 0.0
    %3582 = vmatpush1.xpose.msra.mxu0 0.0
    %3583 = vmatprep.subr.mxu0 0.0
    %3584 = vmatpush1.xpose.msra.mxu0 %v3553
    %3585 = vmatprep.subr.mxu0 0.0
    %3586 = vmatpush1.xpose.msra.mxu0 %v3551
    %3587 = vmatprep.subr.mxu0 0.0
    %3588 = vmatpush2.xpose.msra.mxu0 0.0
    %3589 = vmatprep.subr.mxu0 0.0
    %3590 = vmatpush2.xpose.msra.mxu0 0.0
    %3591 = vmatprep.subr.mxu0 0.0
    %3592 = vmatpush2.xpose.msra.mxu0 0.0
    %3593 = vmatprep.subr.mxu0 0.0
    %3594 = vmatpush2.xpose.msra.mxu0 0.0
    %3595 = vmatprep.subr.mxu0 0.0
    %3596 = vmatpush2.xpose.msra.mxu0 0.0
    %3597 = vmatprep.subr.mxu0 0.0
    %3598 = vmatpush2.xpose.msra.mxu0 0.0
    %3599 = vmatprep.subr.mxu0 0.0
    %3600 = vmatpush2.xpose.msra.mxu0 0.0
    %3601 = vmatprep.subr.mxu0 0.0
    %3602 = vmatpush2.xpose.msra.mxu0 0.0
    %3603 = vmatprep.subr.mxu0 0.0
    %3604 = vmatpush2.xpose.msra.mxu0 0.0
    %3605 = vmatprep.subr.mxu0 0.0
    %3606 = vmatpush2.xpose.msra.mxu0 0.0
    %3607 = vmatprep.subr.mxu0 0.0
    %3608 = vmatpush2.xpose.msra.mxu0 0.0
    %3609 = vmatprep.subr.mxu0 0.0
    %3610 = vmatpush2.xpose.msra.mxu0 0.0
    %3611 = vmatprep.subr.mxu0 0.0
    %3612 = vmatpush2.xpose.msra.mxu0 0.0
    %3613 = vmatprep.subr.mxu0 0.0
    %3614 = vmatpush2.xpose.msra.mxu0 0.0
    %3615 = vmatprep.subr.mxu0 0.0
    %3616 = vmatpush2.xpose.msra.mxu0 0.0
    %3617 = vmatprep.subr.mxu0 0.0
    %3618 = vmatpush2.xpose.msra.mxu0 0.0
    %3619 = vmatprep.mubr.f32.mxu0 0.0
    %3620 = vmatmul.mubr.f32.gmra.mxu0 %v3547
    %v3621 = vpop.f32.mrf.mxu0
    %v3622 = vadd.f32 0.0, %v3621
    %v3623 = vpop.f32.mrf.mxu0
    %3624 = vmatprep.mubr.f32.mxu0 0.0
    %3625 = vmatmul.mubr.f32.gmra.mxu0 %v3549
    %v3626 = vpop.f32.mrf.mxu0
    %v3627 = vadd.f32 0.0, %v3626
    %v3628 = vpop.f32.mrf.mxu0
    %3629 = vdwg.mxu0
    %v3630 = vmul.f32 %v3531, 0.17677669
    %v3631 = vmul.f32 %v3536, 0.17677669
    %v3632 = vmul.f32 %v3622, 0.17677669
    %v3633 = vmul.f32 %v3627, 0.17677669
    %v3634 = vadd.f32 %v3630, %v1643
    %v3635 = vadd.f32 %v3631, %v1643
    %v3636 = vadd.f32 %v3632, %v1643
    %v3637 = vadd.f32 %v3633, %v1643
    %v3638 = vsel %vm2202, %v3634, -inf
    %3639 = vmax.xlane.f32.xlu0 %v3638
    %v3640 = vpop.xlane.xlu0 %3639
    %v3641 = vsel %vm2202, %v3635, -inf
    %3642 = vmax.xlane.f32.xlu0 %v3641
    %v3643 = vpop.xlane.xlu0 %3642
    %v3644 = vsel %vm2202, %v3636, -inf
    %3645 = vmax.xlane.f32.xlu0 %v3644
    %v3646 = vpop.xlane.xlu0 %3645
    %v3647 = vsel %vm2202, %v3637, -inf
    %3648 = vmax.xlane.f32.xlu0 %v3647
    %v3649 = vpop.xlane.xlu0 %3648
    %v3650 = vsub.f32 %v3634, %v3640
    %v3651 = vsub.f32 %v3635, %v3643
    %v3652 = vsub.f32 %v3636, %v3646
    %v3653 = vsub.f32 %v3637, %v3649
    %v3654 = vmul.f32 %v3650, 1.442695
    %v3655 = vpow.pop %v3654
    %v3656 = vmul.f32 %v3651, 1.442695
    %v3657 = vpow.pop %v3656
    %v3658 = vmul.f32 %v3652, 1.442695
    %v3659 = vpow.pop %v3658
    %v3660 = vmul.f32 %v3653, 1.442695
    %v3661 = vpow.pop %v3660
    %v3662 = vsel %vm2202, %v3655, 0.0
    %3663 = vadd.xlane.f32.xlu0 %v3662
    %v3664 = vpop.xlane.xlu0 %3663
    %v3665 = vsel %vm2202, %v3657, 0.0
    %3666 = vadd.xlane.f32.xlu0 %v3665
    %v3667 = vpop.xlane.xlu0 %3666
    %v3668 = vsel %vm2202, %v3659, 0.0
    %3669 = vadd.xlane.f32.xlu0 %v3668
    %v3670 = vpop.xlane.xlu0 %3669
    %v3671 = vsel %vm2202, %v3661, 0.0
    %3672 = vadd.xlane.f32.xlu0 %v3671
    %v3673 = vpop.xlane.xlu0 %3672
    %v3674 = vrcp.pop %v3664
    %v3675 = vrcp.pop %v3667
    %v3676 = vrcp.pop %v3670
    %v3677 = vrcp.pop %v3673
    %v3678 = vmul.f32 %v3655, %v3674
    %v3679 = vmul.f32 %v3657, %v3675
    %v3680 = vmul.f32 %v3659, %v3676
    %v3681 = vmul.f32 %v3661, %v3677
    %3682 = vrot.lane.b32.xlu0 %v1978, 32
    %v3683 = vpop.permute.xlu0 %3682
    %3684 = vrot.lane.b32.xlu0 %v1981, 32
    %v3685 = vpop.permute.xlu0 %3684
    %v3689 = vsel %vm2202, %v3678, 0
    %v3692 = vsel %vm2202, %v3679, 0
    %3694 = vmatprep.subr.mxu0 0.0
    %3695 = vmatpush1.msra.mxu0 0.0
    %3696 = vmatprep.subr.mxu0 0.0
    %3697 = vmatpush1.msra.mxu0 0.0
    %3698 = vmatprep.subr.mxu0 0.0
    %3699 = vmatpush1.msra.mxu0 0.0
    %3700 = vmatprep.subr.mxu0 0.0
    %3701 = vmatpush1.msra.mxu0 0.0
    %3702 = vmatprep.subr.mxu0 0.0
    %3703 = vmatpush1.msra.mxu0 0.0
    %3704 = vmatprep.subr.mxu0 0.0
    %3705 = vmatpush1.msra.mxu0 0.0
    %3706 = vmatprep.subr.mxu0 0.0
    %3707 = vmatpush1.msra.mxu0 0.0
    %3708 = vmatprep.subr.mxu0 0.0
    %3709 = vmatpush1.msra.mxu0 0.0
    %3710 = vmatprep.subr.mxu0 0.0
    %3711 = vmatpush1.msra.mxu0 0.0
    %3712 = vmatprep.subr.mxu0 0.0
    %3713 = vmatpush1.msra.mxu0 0.0
    %3714 = vmatprep.subr.mxu0 0.0
    %3715 = vmatpush1.msra.mxu0 0.0
    %3716 = vmatprep.subr.mxu0 0.0
    %3717 = vmatpush1.msra.mxu0 0.0
    %3718 = vmatprep.subr.mxu0 0.0
    %3719 = vmatpush1.msra.mxu0 0.0
    %3720 = vmatprep.subr.mxu0 0.0
    %3721 = vmatpush1.msra.mxu0 0.0
    %3722 = vmatprep.subr.mxu0 0.0
    %3723 = vmatpush1.msra.mxu0 %v3685
    %3724 = vmatprep.subr.mxu0 0.0
    %3725 = vmatpush1.msra.mxu0 %v3683
    %3726 = vmatprep.subr.mxu0 0.0
    %3727 = vmatpush2.msra.mxu0 0.0
    %3728 = vmatprep.subr.mxu0 0.0
    %3729 = vmatpush2.msra.mxu0 0.0
    %3730 = vmatprep.subr.mxu0 0.0
    %3731 = vmatpush2.msra.mxu0 0.0
    %3732 = vmatprep.subr.mxu0 0.0
    %3733 = vmatpush2.msra.mxu0 0.0
    %3734 = vmatprep.subr.mxu0 0.0
    %3735 = vmatpush2.msra.mxu0 0.0
    %3736 = vmatprep.subr.mxu0 0.0
    %3737 = vmatpush2.msra.mxu0 0.0
    %3738 = vmatprep.subr.mxu0 0.0
    %3739 = vmatpush2.msra.mxu0 0.0
    %3740 = vmatprep.subr.mxu0 0.0
    %3741 = vmatpush2.msra.mxu0 0.0
    %3742 = vmatprep.subr.mxu0 0.0
    %3743 = vmatpush2.msra.mxu0 0.0
    %3744 = vmatprep.subr.mxu0 0.0
    %3745 = vmatpush2.msra.mxu0 0.0
    %3746 = vmatprep.subr.mxu0 0.0
    %3747 = vmatpush2.msra.mxu0 0.0
    %3748 = vmatprep.subr.mxu0 0.0
    %3749 = vmatpush2.msra.mxu0 0.0
    %3750 = vmatprep.subr.mxu0 0.0
    %3751 = vmatpush2.msra.mxu0 0.0
    %3752 = vmatprep.subr.mxu0 0.0
    %3753 = vmatpush2.msra.mxu0 0.0
    %3754 = vmatprep.subr.mxu0 0.0
    %3755 = vmatpush2.msra.mxu0 0.0
    %3756 = vmatprep.subr.mxu0 0.0
    %3757 = vmatpush2.msra.mxu0 0.0
    %3758 = vmatprep.mubr.f32.mxu0 0.0
    %3759 = vmatmul.mubr.f32.gmra.mxu0 %v3689
    %v3760 = vpop.f32.mrf.mxu0
    %v3761 = vadd.f32 0.0, %v3760
    %v3762 = vpop.f32.mrf.mxu0
    %3763 = vmatprep.mubr.f32.mxu0 0.0
    %3764 = vmatmul.mubr.f32.gmra.mxu0 %v3692
    %v3765 = vpop.f32.mrf.mxu0
    %v3766 = vadd.f32 0.0, %v3765
    %v3767 = vpop.f32.mrf.mxu0
    %3768 = vdwg.mxu0
    %3769 = vrot.lane.b32.xlu0 %v1986, 32
    %v3770 = vpop.permute.xlu0 %3769
    %3771 = vrot.lane.b32.xlu0 %v1989, 32
    %v3772 = vpop.permute.xlu0 %3771
    %v3776 = vsel %vm2202, %v3680, 0
    %v3779 = vsel %vm2202, %v3681, 0
    %3781 = vmatprep.subr.mxu0 0.0
    %3782 = vmatpush1.msra.mxu0 0.0
    %3783 = vmatprep.subr.mxu0 0.0
    %3784 = vmatpush1.msra.mxu0 0.0
    %3785 = vmatprep.subr.mxu0 0.0
    %3786 = vmatpush1.msra.mxu0 0.0
    %3787 = vmatprep.subr.mxu0 0.0
    %3788 = vmatpush1.msra.mxu0 0.0
    %3789 = vmatprep.subr.mxu0 0.0
    %3790 = vmatpush1.msra.mxu0 0.0
    %3791 = vmatprep.subr.mxu0 0.0
    %3792 = vmatpush1.msra.mxu0 0.0
    %3793 = vmatprep.subr.mxu0 0.0
    %3794 = vmatpush1.msra.mxu0 0.0
    %3795 = vmatprep.subr.mxu0 0.0
    %3796 = vmatpush1.msra.mxu0 0.0
    %3797 = vmatprep.subr.mxu0 0.0
    %3798 = vmatpush1.msra.mxu0 0.0
    %3799 = vmatprep.subr.mxu0 0.0
    %3800 = vmatpush1.msra.mxu0 0.0
    %3801 = vmatprep.subr.mxu0 0.0
    %3802 = vmatpush1.msra.mxu0 0.0
    %3803 = vmatprep.subr.mxu0 0.0
    %3804 = vmatpush1.msra.mxu0 0.0
    %3805 = vmatprep.subr.mxu0 0.0
    %3806 = vmatpush1.msra.mxu0 0.0
    %3807 = vmatprep.subr.mxu0 0.0
    %3808 = vmatpush1.msra.mxu0 0.0
    %3809 = vmatprep.subr.mxu0 0.0
    %3810 = vmatpush1.msra.mxu0 %v3772
    %3811 = vmatprep.subr.mxu0 0.0
    %3812 = vmatpush1.msra.mxu0 %v3770
    %3813 = vmatprep.subr.mxu0 0.0
    %3814 = vmatpush2.msra.mxu0 0.0
    %3815 = vmatprep.subr.mxu0 0.0
    %3816 = vmatpush2.msra.mxu0 0.0
    %3817 = vmatprep.subr.mxu0 0.0
    %3818 = vmatpush2.msra.mxu0 0.0
    %3819 = vmatprep.subr.mxu0 0.0
    %3820 = vmatpush2.msra.mxu0 0.0
    %3821 = vmatprep.subr.mxu0 0.0
    %3822 = vmatpush2.msra.mxu0 0.0
    %3823 = vmatprep.subr.mxu0 0.0
    %3824 = vmatpush2.msra.mxu0 0.0
    %3825 = vmatprep.subr.mxu0 0.0
    %3826 = vmatpush2.msra.mxu0 0.0
    %3827 = vmatprep.subr.mxu0 0.0
    %3828 = vmatpush2.msra.mxu0 0.0
    %3829 = vmatprep.subr.mxu0 0.0
    %3830 = vmatpush2.msra.mxu0 0.0
    %3831 = vmatprep.subr.mxu0 0.0
    %3832 = vmatpush2.msra.mxu0 0.0
    %3833 = vmatprep.subr.mxu0 0.0
    %3834 = vmatpush2.msra.mxu0 0.0
    %3835 = vmatprep.subr.mxu0 0.0
    %3836 = vmatpush2.msra.mxu0 0.0
    %3837 = vmatprep.subr.mxu0 0.0
    %3838 = vmatpush2.msra.mxu0 0.0
    %3839 = vmatprep.subr.mxu0 0.0
    %3840 = vmatpush2.msra.mxu0 0.0
    %3841 = vmatprep.subr.mxu0 0.0
    %3842 = vmatpush2.msra.mxu0 0.0
    %3843 = vmatprep.subr.mxu0 0.0
    %3844 = vmatpush2.msra.mxu0 0.0
    %3845 = vmatprep.mubr.f32.mxu0 0.0
    %3846 = vmatmul.mubr.f32.gmra.mxu0 %v3776
    %v3847 = vpop.f32.mrf.mxu0
    %v3848 = vadd.f32 0.0, %v3847
    %v3849 = vpop.f32.mrf.mxu0
    %3850 = vmatprep.mubr.f32.mxu0 0.0
    %3851 = vmatmul.mubr.f32.gmra.mxu0 %v3779
    %v3852 = vpop.f32.mrf.mxu0
    %v3853 = vadd.f32 0.0, %v3852
    %v3854 = vpop.f32.mrf.mxu0
    %3855 = vdwg.mxu0
    %v3856 = vpack.c.bf16 %v3766, %v3761
    %v3857 = vpack.c.bf16 %v3853, %v3848
    %v3862 = vunpack.c.l.b16 %v2004
    %v3863 = vunpack.c.l.b16 %v2005
    %v3864 = vunpack.c.l.b16 %v2006
    %v3865 = vunpack.c.l.b16 %v2007
    %v3866 = vpack.c.b16 %v3863, %v3862
    %v3867 = vpack.c.b16 %v3865, %v3864
    %v3871 = vsel %vm2019, %v3856, 0
    %v3874 = vsel %vm2019, %v3857, 0
    %3876 = vmatprep.subr.bf16.mxu0 0
    %3877 = vmatpush1.bf16.msra.mxu0 0
    %3878 = vmatprep.subr.bf16.mxu0 0
    %3879 = vmatpush1.bf16.msra.mxu0 0
    %3880 = vmatprep.subr.bf16.mxu0 0
    %3881 = vmatpush1.bf16.msra.mxu0 0
    %3882 = vmatprep.subr.bf16.mxu0 0
    %3883 = vmatpush1.bf16.msra.mxu0 0
    %3884 = vmatprep.subr.bf16.mxu0 0
    %3885 = vmatpush1.bf16.msra.mxu0 0
    %3886 = vmatprep.subr.bf16.mxu0 0
    %3887 = vmatpush1.bf16.msra.mxu0 0
    %3888 = vmatprep.subr.bf16.mxu0 0
    %3889 = vmatpush1.bf16.msra.mxu0 %v3867
    %3890 = vmatprep.subr.bf16.mxu0 0
    %3891 = vmatpush1.bf16.msra.mxu0 %v3866
    %3892 = vmatprep.subr.bf16.mxu0 0
    %3893 = vmatpush2.bf16.msra.mxu0 0
    %3894 = vmatprep.subr.bf16.mxu0 0
    %3895 = vmatpush2.bf16.msra.mxu0 0
    %3896 = vmatprep.subr.bf16.mxu0 0
    %3897 = vmatpush2.bf16.msra.mxu0 0
    %3898 = vmatprep.subr.bf16.mxu0 0
    %3899 = vmatpush2.bf16.msra.mxu0 0
    %3900 = vmatprep.subr.bf16.mxu0 0
    %3901 = vmatpush2.bf16.msra.mxu0 0
    %3902 = vmatprep.subr.bf16.mxu0 0
    %3903 = vmatpush2.bf16.msra.mxu0 0
    %3904 = vmatprep.subr.bf16.mxu0 0
    %3905 = vmatpush2.bf16.msra.mxu0 0
    %3906 = vmatprep.subr.bf16.mxu0 0
    %3907 = vmatpush2.bf16.msra.mxu0 0
    %3908 = vmatprep.mubr.bf16.mxu0 0
    %3909 = vmatmul.mubr.bf16.gmra.mxu0 %v3871
    %v3910 = vpop.f32.mrf.mxu0
    %v3911 = vadd.f32 0.0, %v3910
    %v3912 = vpop.f32.mrf.mxu0
    %v3913 = vpop.f32.mrf.mxu0
    %v3914 = vadd.f32 0.0, %v3913
    %v3915 = vpop.f32.mrf.mxu0
    %3916 = vmatprep.mubr.bf16.mxu0 0
    %3917 = vmatmul.mubr.bf16.gmra.mxu0 %v3874
    %v3918 = vpop.f32.mrf.mxu0
    %v3919 = vadd.f32 0.0, %v3918
    %v3920 = vpop.f32.mrf.mxu0
    %v3921 = vpop.f32.mrf.mxu0
    %v3922 = vadd.f32 0.0, %v3921
    %v3923 = vpop.f32.mrf.mxu0
    %3924 = vdwg.mxu0
    %v3925 = vadd.f32 %v3444, %v3911
    %v3926 = vadd.f32 %v3445, %v3914
    %v3927 = vadd.f32 %v3446, %v3919
    %v3928 = vadd.f32 %v3447, %v3922
    %v3929 = vld [vmem:[#allocation14] sm:$0x1]
    %v3930 = vld [vmem:[%s10] sm:$0x1]
    %3931 = vadd.xlane.f32.xlu0 %v3925
    %v3932 = vpop.xlane.xlu0 %3931
    %3933 = vadd.xlane.f32.xlu0 %v3926
    %v3934 = vpop.xlane.xlu0 %3933
    %3935 = vadd.xlane.f32.xlu0 %v3927
    %v3936 = vpop.xlane.xlu0 %3935
    %3937 = vadd.xlane.f32.xlu0 %v3928
    %v3938 = vpop.xlane.xlu0 %3937
    %v3939 = vmul.f32 %v3932, %v1654
    %v3940 = vmul.f32 %v3934, %v1654
    %v3941 = vmul.f32 %v3936, %v1654
    %v3942 = vmul.f32 %v3938, %v1654
    %v3943 = vsub.f32 %v3925, %v3939
    %v3944 = vsub.f32 %v3926, %v3940
    %v3945 = vsub.f32 %v3927, %v3941
    %v3946 = vsub.f32 %v3928, %v3942
    %v3947 = vmul.f32 %v3943, %v3943
    %v3948 = vmul.f32 %v3944, %v3944
    %v3949 = vmul.f32 %v3945, %v3945
    %v3950 = vmul.f32 %v3946, %v3946
    %3951 = vadd.xlane.f32.xlu0 %v3947
    %v3952 = vpop.xlane.xlu0 %3951
    %3953 = vadd.xlane.f32.xlu0 %v3948
    %v3954 = vpop.xlane.xlu0 %3953
    %3955 = vadd.xlane.f32.xlu0 %v3949
    %v3956 = vpop.xlane.xlu0 %3955
    %3957 = vadd.xlane.f32.xlu0 %v3950
    %v3958 = vpop.xlane.xlu0 %3957
    %v3959 = vmul.f32 %v3952, %v1654
    %v3960 = vmul.f32 %v3954, %v1654
    %v3961 = vmul.f32 %v3956, %v1654
    %v3962 = vmul.f32 %v3958, %v1654
    %v3963 = vadd.f32 %v3959, 1e-05
    %v3964 = vadd.f32 %v3960, 1e-05
    %v3965 = vadd.f32 %v3961, 1e-05
    %v3966 = vadd.f32 %v3962, 1e-05
    %v3967 = vrsqrt.pop %v3963
    %v3968 = vrsqrt.pop %v3964
    %v3969 = vrsqrt.pop %v3965
    %v3970 = vrsqrt.pop %v3966
    %v3971 = vmul.f32 %v3943, %v3967
    %v3972 = vmul.f32 %v3944, %v3968
    %v3973 = vmul.f32 %v3945, %v3969
    %v3974 = vmul.f32 %v3946, %v3970
    %v3976 = vlaneseq
    %v3977 = vshrl.u32 %v3976, 7
    %v3978 = vsub.s32 0, %v3977
    %v3979 = vrot.slane %v3929, %v3978
    %v3981 = vmul.f32 %v3971, %v3979
    %v3982 = vmul.f32 %v3972, %v3979
    %v3983 = vmul.f32 %v3973, %v3979
    %v3984 = vmul.f32 %v3974, %v3979
    %v3986 = vlaneseq
    %v3987 = vshrl.u32 %v3986, 7
    %v3988 = vsub.s32 0, %v3987
    %v3989 = vrot.slane %v3930, %v3988
    %v3991 = vadd.f32 %v3981, %v3989
    %v3992 = vadd.f32 %v3982, %v3989
    %v3993 = vadd.f32 %v3983, %v3989
    %v3994 = vadd.f32 %v3984, %v3989
    %v3995 = vpack.c.bf16 %v3992, %v3991
    %v3996 = vpack.c.bf16 %v3994, %v3993
    %v3997 = vld [vmem:[#allocation16] sm:$0xff]
    %v3998 = vld [vmem:[#allocation16 + $0x8] sm:$0xff]
    %v3999 = vld [vmem:[#allocation16 + $0x10] sm:$0xff]
    %v4000 = vld [vmem:[#allocation16 + $0x18] sm:$0xff]
    %v4001 = vld [vmem:[#allocation16 + $0x20] sm:$0xff]
    %v4002 = vld [vmem:[#allocation16 + $0x28] sm:$0xff]
    %v4003 = vld [vmem:[#allocation16 + $0x30] sm:$0xff]
    %v4004 = vld [vmem:[#allocation16 + $0x38] sm:$0xff]
    %v4005 = vld [vmem:[#allocation16 + $0x40] sm:$0xff]
    %v4006 = vld [vmem:[#allocation16 + $0x48] sm:$0xff]
    %v4007 = vld [vmem:[#allocation16 + $0x50] sm:$0xff]
    %v4008 = vld [vmem:[#allocation16 + $0x58] sm:$0xff]
    %v4009 = vld [vmem:[#allocation16 + $0x60] sm:$0xff]
    %v4010 = vld [vmem:[#allocation16 + $0x68] sm:$0xff]
    %v4011 = vld [vmem:[#allocation16 + $0x70] sm:$0xff]
    %v4012 = vld [vmem:[#allocation16 + $0x78] sm:$0xff]
    %v4013 = vld [vmem:[#allocation16 + $0x80] sm:$0xff]
    %v4014 = vld [vmem:[#allocation16 + $0x88] sm:$0xff]
    %v4015 = vld [vmem:[#allocation16 + $0x90] sm:$0xff]
    %v4016 = vld [vmem:[#allocation16 + $0x98] sm:$0xff]
    %v4017 = vld [vmem:[#allocation16 + $0xa0] sm:$0xff]
    %v4018 = vld [vmem:[#allocation16 + $0xa8] sm:$0xff]
    %v4019 = vld [vmem:[#allocation16 + $0xb0] sm:$0xff]
    %v4020 = vld [vmem:[#allocation16 + $0xb8] sm:$0xff]
    %v4021 = vld [vmem:[#allocation16 + $0xc0] sm:$0xff]
    %v4022 = vld [vmem:[#allocation16 + $0xc8] sm:$0xff]
    %v4023 = vld [vmem:[#allocation16 + $0xd0] sm:$0xff]
    %v4024 = vld [vmem:[#allocation16 + $0xd8] sm:$0xff]
    %v4025 = vld [vmem:[#allocation16 + $0xe0] sm:$0xff]
    %v4026 = vld [vmem:[#allocation16 + $0xe8] sm:$0xff]
    %v4027 = vld [vmem:[#allocation16 + $0xf0] sm:$0xff]
    %v4028 = vld [vmem:[#allocation16 + $0xf8] sm:$0xff]
    %v4029 = vld [vmem:[%s12] sm:$0xf]
    %v4031 = vlaneseq
    %v4032 = vshrl.u32 %v4031, 7
    %v4033 = vsub.s32 0, %v4032
    %v4034 = vrot.slane %v4029, %v4033
    %v4035 = vlaneseq
    %v4036 = vshrl.u32 %v4035, 7
    %v4037 = vsub.s32 1, %v4036
    %v4038 = vrot.slane %v4029, %v4037
    %v4039 = vlaneseq
    %v4040 = vshrl.u32 %v4039, 7
    %v4041 = vsub.s32 2, %v4040
    %v4042 = vrot.slane %v4029, %v4041
    %v4043 = vlaneseq
    %v4044 = vshrl.u32 %v4043, 7
    %v4045 = vsub.s32 3, %v4044
    %v4046 = vrot.slane %v4029, %v4045
    %v4083 = vunpack.c.l.b16 %v3997
    %v4084 = vunpack.c.h.b16 %v3997
    %v4085 = vunpack.c.l.b16 %v3998
    %v4086 = vunpack.c.h.b16 %v3998
    %v4087 = vunpack.c.l.b16 %v3999
    %v4088 = vunpack.c.h.b16 %v3999
    %v4089 = vunpack.c.l.b16 %v4000
    %v4090 = vunpack.c.h.b16 %v4000
    %v4091 = vunpack.c.l.b16 %v4001
    %v4092 = vunpack.c.h.b16 %v4001
    %v4093 = vunpack.c.l.b16 %v4002
    %v4094 = vunpack.c.h.b16 %v4002
    %v4095 = vunpack.c.l.b16 %v4003
    %v4096 = vunpack.c.h.b16 %v4003
    %v4097 = vunpack.c.l.b16 %v4004
    %v4098 = vunpack.c.h.b16 %v4004
    %v4099 = vunpack.c.l.b16 %v4005
    %v4100 = vunpack.c.h.b16 %v4005
    %v4101 = vunpack.c.l.b16 %v4006
    %v4102 = vunpack.c.h.b16 %v4006
    %v4103 = vunpack.c.l.b16 %v4007
    %v4104 = vunpack.c.h.b16 %v4007
    %v4105 = vunpack.c.l.b16 %v4008
    %v4106 = vunpack.c.h.b16 %v4008
    %v4107 = vunpack.c.l.b16 %v4009
    %v4108 = vunpack.c.h.b16 %v4009
    %v4109 = vunpack.c.l.b16 %v4010
    %v4110 = vunpack.c.h.b16 %v4010
    %v4111 = vunpack.c.l.b16 %v4011
    %v4112 = vunpack.c.h.b16 %v4011
    %v4113 = vunpack.c.l.b16 %v4012
    %v4114 = vunpack.c.h.b16 %v4012
    %v4115 = vunpack.c.l.b16 %v4013
    %v4116 = vunpack.c.h.b16 %v4013
    %v4117 = vunpack.c.l.b16 %v4014
    %v4118 = vunpack.c.h.b16 %v4014
    %v4119 = vunpack.c.l.b16 %v4015
    %v4120 = vunpack.c.h.b16 %v4015
    %v4121 = vunpack.c.l.b16 %v4016
    %v4122 = vunpack.c.h.b16 %v4016
    %v4123 = vunpack.c.l.b16 %v4017
    %v4124 = vunpack.c.h.b16 %v4017
    %v4125 = vunpack.c.l.b16 %v4018
    %v4126 = vunpack.c.h.b16 %v4018
    %v4127 = vunpack.c.l.b16 %v4019
    %v4128 = vunpack.c.h.b16 %v4019
    %v4129 = vunpack.c.l.b16 %v4020
    %v4130 = vunpack.c.h.b16 %v4020
    %v4131 = vunpack.c.l.b16 %v4021
    %v4132 = vunpack.c.h.b16 %v4021
    %v4133 = vunpack.c.l.b16 %v4022
    %v4134 = vunpack.c.h.b16 %v4022
    %v4135 = vunpack.c.l.b16 %v4023
    %v4136 = vunpack.c.h.b16 %v4023
    %v4137 = vunpack.c.l.b16 %v4024
    %v4138 = vunpack.c.h.b16 %v4024
    %v4139 = vunpack.c.l.b16 %v4025
    %v4140 = vunpack.c.h.b16 %v4025
    %v4141 = vunpack.c.l.b16 %v4026
    %v4142 = vunpack.c.h.b16 %v4026
    %v4143 = vunpack.c.l.b16 %v4027
    %v4144 = vunpack.c.h.b16 %v4027
    %v4145 = vunpack.c.l.b16 %v4028
    %v4146 = vunpack.c.h.b16 %v4028
    %v4147 = vpack.c.b16 %v4087, %v4083
    %v4148 = vpack.c.b16 %v4088, %v4084
    %v4149 = vpack.c.b16 %v4089, %v4085
    %v4150 = vpack.c.b16 %v4090, %v4086
    %v4151 = vpack.c.b16 %v4095, %v4091
    %v4152 = vpack.c.b16 %v4096, %v4092
    %v4153 = vpack.c.b16 %v4097, %v4093
    %v4154 = vpack.c.b16 %v4098, %v4094
    %v4155 = vpack.c.b16 %v4103, %v4099
    %v4156 = vpack.c.b16 %v4104, %v4100
    %v4157 = vpack.c.b16 %v4105, %v4101
    %v4158 = vpack.c.b16 %v4106, %v4102
    %v4159 = vpack.c.b16 %v4111, %v4107
    %v4160 = vpack.c.b16 %v4112, %v4108
    %v4161 = vpack.c.b16 %v4113, %v4109
    %v4162 = vpack.c.b16 %v4114, %v4110
    %v4163 = vpack.c.b16 %v4119, %v4115
    %v4164 = vpack.c.b16 %v4120, %v4116
    %v4165 = vpack.c.b16 %v4121, %v4117
    %v4166 = vpack.c.b16 %v4122, %v4118
    %v4167 = vpack.c.b16 %v4127, %v4123
    %v4168 = vpack.c.b16 %v4128, %v4124
    %v4169 = vpack.c.b16 %v4129, %v4125
    %v4170 = vpack.c.b16 %v4130, %v4126
    %v4171 = vpack.c.b16 %v4135, %v4131
    %v4172 = vpack.c.b16 %v4136, %v4132
    %v4173 = vpack.c.b16 %v4137, %v4133
    %v4174 = vpack.c.b16 %v4138, %v4134
    %v4175 = vpack.c.b16 %v4143, %v4139
    %v4176 = vpack.c.b16 %v4144, %v4140
    %v4177 = vpack.c.b16 %v4145, %v4141
    %v4178 = vpack.c.b16 %v4146, %v4142
    %4211 = vmatprep.subr.bf16.mxu0 %v4176
    %4212 = vmatpush1.bf16.msra.mxu0 %v4175
    %4213 = vmatprep.subr.bf16.mxu0 %v4172
    %4214 = vmatpush1.bf16.msra.mxu0 %v4171
    %4215 = vmatprep.subr.bf16.mxu0 %v4168
    %4216 = vmatpush1.bf16.msra.mxu0 %v4167
    %4217 = vmatprep.subr.bf16.mxu0 %v4164
    %4218 = vmatpush1.bf16.msra.mxu0 %v4163
    %4219 = vmatprep.subr.bf16.mxu0 %v4160
    %4220 = vmatpush1.bf16.msra.mxu0 %v4159
    %4221 = vmatprep.subr.bf16.mxu0 %v4156
    %4222 = vmatpush1.bf16.msra.mxu0 %v4155
    %4223 = vmatprep.subr.bf16.mxu0 %v4152
    %4224 = vmatpush1.bf16.msra.mxu0 %v4151
    %4225 = vmatprep.subr.bf16.mxu0 %v4148
    %4226 = vmatpush1.bf16.msra.mxu0 %v4147
    %4227 = vmatprep.subr.bf16.mxu0 0
    %4228 = vmatpush2.bf16.msra.mxu0 0
    %4229 = vmatprep.subr.bf16.mxu0 0
    %4230 = vmatpush2.bf16.msra.mxu0 0
    %4231 = vmatprep.subr.bf16.mxu0 0
    %4232 = vmatpush2.bf16.msra.mxu0 0
    %4233 = vmatprep.subr.bf16.mxu0 0
    %4234 = vmatpush2.bf16.msra.mxu0 0
    %4235 = vmatprep.subr.bf16.mxu0 0
    %4236 = vmatpush2.bf16.msra.mxu0 0
    %4237 = vmatprep.subr.bf16.mxu0 0
    %4238 = vmatpush2.bf16.msra.mxu0 0
    %4239 = vmatprep.subr.bf16.mxu0 0
    %4240 = vmatpush2.bf16.msra.mxu0 0
    %4241 = vmatprep.subr.bf16.mxu0 0
    %4242 = vmatpush2.bf16.msra.mxu0 0
    %4243 = vmatprep.mubr.bf16.mxu0 0
    %4244 = vmatmul.mubr.bf16.gmra.mxu0 %v3995
    %v4245 = vpop.f32.mrf.mxu0
    %v4246 = vadd.f32 %v4034, %v4245
    %v4247 = vpop.f32.mrf.mxu0
    %v4248 = vadd.f32 %v4038, %v4247
    %v4249 = vpop.f32.mrf.mxu0
    %v4250 = vadd.f32 %v4034, %v4249
    %v4251 = vpop.f32.mrf.mxu0
    %v4252 = vadd.f32 %v4038, %v4251
    %4253 = vmatprep.mubr.bf16.mxu0 0
    %4254 = vmatmul.mubr.bf16.gmra.mxu0 %v3996
    %v4255 = vpop.f32.mrf.mxu0
    %v4256 = vadd.f32 %v4034, %v4255
    %v4257 = vpop.f32.mrf.mxu0
    %v4258 = vadd.f32 %v4038, %v4257
    %v4259 = vpop.f32.mrf.mxu0
    %v4260 = vadd.f32 %v4034, %v4259
    %v4261 = vpop.f32.mrf.mxu0
    %v4262 = vadd.f32 %v4038, %v4261
    %4263 = vdwg.mxu0
    %4264 = vmatprep.subr.bf16.mxu0 %v4178
    %4265 = vmatpush1.bf16.msra.mxu0 %v4177
    %4266 = vmatprep.subr.bf16.mxu0 %v4174
    %4267 = vmatpush1.bf16.msra.mxu0 %v4173
    %4268 = vmatprep.subr.bf16.mxu0 %v4170
    %4269 = vmatpush1.bf16.msra.mxu0 %v4169
    %4270 = vmatprep.subr.bf16.mxu0 %v4166
    %4271 = vmatpush1.bf16.msra.mxu0 %v4165
    %4272 = vmatprep.subr.bf16.mxu0 %v4162
    %4273 = vmatpush1.bf16.msra.mxu0 %v4161
    %4274 = vmatprep.subr.bf16.mxu0 %v4158
    %4275 = vmatpush1.bf16.msra.mxu0 %v4157
    %4276 = vmatprep.subr.bf16.mxu0 %v4154
    %4277 = vmatpush1.bf16.msra.mxu0 %v4153
    %4278 = vmatprep.subr.bf16.mxu0 %v4150
    %4279 = vmatpush1.bf16.msra.mxu0 %v4149
    %4280 = vmatprep.subr.bf16.mxu0 0
    %4281 = vmatpush2.bf16.msra.mxu0 0
    %4282 = vmatprep.subr.bf16.mxu0 0
    %4283 = vmatpush2.bf16.msra.mxu0 0
    %4284 = vmatprep.subr.bf16.mxu0 0
    %4285 = vmatpush2.bf16.msra.mxu0 0
    %4286 = vmatprep.subr.bf16.mxu0 0
    %4287 = vmatpush2.bf16.msra.mxu0 0
    %4288 = vmatprep.subr.bf16.mxu0 0
    %4289 = vmatpush2.bf16.msra.mxu0 0
    %4290 = vmatprep.subr.bf16.mxu0 0
    %4291 = vmatpush2.bf16.msra.mxu0 0
    %4292 = vmatprep.subr.bf16.mxu0 0
    %4293 = vmatpush2.bf16.msra.mxu0 0
    %4294 = vmatprep.subr.bf16.mxu0 0
    %4295 = vmatpush2.bf16.msra.mxu0 0
    %4296 = vmatprep.mubr.bf16.mxu0 0
    %4297 = vmatmul.mubr.bf16.gmra.mxu0 %v3995
    %v4298 = vpop.f32.mrf.mxu0
    %v4299 = vadd.f32 %v4042, %v4298
    %v4300 = vpop.f32.mrf.mxu0
    %v4301 = vadd.f32 %v4046, %v4300
    %v4302 = vpop.f32.mrf.mxu0
    %v4303 = vadd.f32 %v4042, %v4302
    %v4304 = vpop.f32.mrf.mxu0
    %v4305 = vadd.f32 %v4046, %v4304
    %4306 = vmatprep.mubr.bf16.mxu0 0
    %4307 = vmatmul.mubr.bf16.gmra.mxu0 %v3996
    %v4308 = vpop.f32.mrf.mxu0
    %v4309 = vadd.f32 %v4042, %v4308
    %v4310 = vpop.f32.mrf.mxu0
    %v4311 = vadd.f32 %v4046, %v4310
    %v4312 = vpop.f32.mrf.mxu0
    %v4313 = vadd.f32 %v4042, %v4312
    %v4314 = vpop.f32.mrf.mxu0
    %v4315 = vadd.f32 %v4046, %v4314
    %4316 = vdwg.mxu0
    %v4317 = vmul.f32 %v4246, %v4246
    %v4318 = vmul.f32 %v4248, %v4248
    %v4319 = vmul.f32 %v4299, %v4299
    %v4320 = vmul.f32 %v4301, %v4301
    %v4321 = vmul.f32 %v4250, %v4250
    %v4322 = vmul.f32 %v4252, %v4252
    %v4323 = vmul.f32 %v4303, %v4303
    %v4324 = vmul.f32 %v4305, %v4305
    %v4325 = vmul.f32 %v4256, %v4256
    %v4326 = vmul.f32 %v4258, %v4258
    %v4327 = vmul.f32 %v4309, %v4309
    %v4328 = vmul.f32 %v4311, %v4311
    %v4329 = vmul.f32 %v4260, %v4260
    %v4330 = vmul.f32 %v4262, %v4262
    %v4331 = vmul.f32 %v4313, %v4313
    %v4332 = vmul.f32 %v4315, %v4315
    %v4333 = vmul.f32 %v4246, %v4317
    %v4334 = vmul.f32 %v4248, %v4318
    %v4335 = vmul.f32 %v4299, %v4319
    %v4336 = vmul.f32 %v4301, %v4320
    %v4337 = vmul.f32 %v4250, %v4321
    %v4338 = vmul.f32 %v4252, %v4322
    %v4339 = vmul.f32 %v4303, %v4323
    %v4340 = vmul.f32 %v4305, %v4324
    %v4341 = vmul.f32 %v4256, %v4325
    %v4342 = vmul.f32 %v4258, %v4326
    %v4343 = vmul.f32 %v4309, %v4327
    %v4344 = vmul.f32 %v4311, %v4328
    %v4345 = vmul.f32 %v4260, %v4329
    %v4346 = vmul.f32 %v4262, %v4330
    %v4347 = vmul.f32 %v4313, %v4331
    %v4348 = vmul.f32 %v4315, %v4332
    %v4349 = vmul.f32 %v4333, 0.044715
    %v4350 = vmul.f32 %v4334, 0.044715
    %v4351 = vmul.f32 %v4335, 0.044715
    %v4352 = vmul.f32 %v4336, 0.044715
    %v4353 = vmul.f32 %v4337, 0.044715
    %v4354 = vmul.f32 %v4338, 0.044715
    %v4355 = vmul.f32 %v4339, 0.044715
    %v4356 = vmul.f32 %v4340, 0.044715
    %v4357 = vmul.f32 %v4341, 0.044715
    %v4358 = vmul.f32 %v4342, 0.044715
    %v4359 = vmul.f32 %v4343, 0.044715
    %v4360 = vmul.f32 %v4344, 0.044715
    %v4361 = vmul.f32 %v4345, 0.044715
    %v4362 = vmul.f32 %v4346, 0.044715
    %v4363 = vmul.f32 %v4347, 0.044715
    %v4364 = vmul.f32 %v4348, 0.044715
    %v4365 = vadd.f32 %v4246, %v4349
    %v4366 = vadd.f32 %v4248, %v4350
    %v4367 = vadd.f32 %v4299, %v4351
    %v4368 = vadd.f32 %v4301, %v4352
    %v4369 = vadd.f32 %v4250, %v4353
    %v4370 = vadd.f32 %v4252, %v4354
    %v4371 = vadd.f32 %v4303, %v4355
    %v4372 = vadd.f32 %v4305, %v4356
    %v4373 = vadd.f32 %v4256, %v4357
    %v4374 = vadd.f32 %v4258, %v4358
    %v4375 = vadd.f32 %v4309, %v4359
    %v4376 = vadd.f32 %v4311, %v4360
    %v4377 = vadd.f32 %v4260, %v4361
    %v4378 = vadd.f32 %v4262, %v4362
    %v4379 = vadd.f32 %v4313, %v4363
    %v4380 = vadd.f32 %v4315, %v4364
    %v4381 = vmul.f32 %v4365, 0.7978846
    %v4382 = vmul.f32 %v4366, 0.7978846
    %v4383 = vmul.f32 %v4367, 0.7978846
    %v4384 = vmul.f32 %v4368, 0.7978846
    %v4385 = vmul.f32 %v4369, 0.7978846
    %v4386 = vmul.f32 %v4370, 0.7978846
    %v4387 = vmul.f32 %v4371, 0.7978846
    %v4388 = vmul.f32 %v4372, 0.7978846
    %v4389 = vmul.f32 %v4373, 0.7978846
    %v4390 = vmul.f32 %v4374, 0.7978846
    %v4391 = vmul.f32 %v4375, 0.7978846
    %v4392 = vmul.f32 %v4376, 0.7978846
    %v4393 = vmul.f32 %v4377, 0.7978846
    %v4394 = vmul.f32 %v4378, 0.7978846
    %v4395 = vmul.f32 %v4379, 0.7978846
    %v4396 = vmul.f32 %v4380, 0.7978846
    %v4397 = vtanh.pop %v4381
    %v4398 = vtanh.pop %v4382
    %v4399 = vtanh.pop %v4383
    %v4400 = vtanh.pop %v4384
    %v4401 = vtanh.pop %v4385
    %v4402 = vtanh.pop %v4386
    %v4403 = vtanh.pop %v4387
    %v4404 = vtanh.pop %v4388
    %v4405 = vtanh.pop %v4389
    %v4406 = vtanh.pop %v4390
    %v4407 = vtanh.pop %v4391
    %v4408 = vtanh.pop %v4392
    %v4409 = vtanh.pop %v4393
    %v4410 = vtanh.pop %v4394
    %v4411 = vtanh.pop %v4395
    %v4412 = vtanh.pop %v4396
    %v4413 = vadd.f32 %v4397, 1.0
    %v4414 = vadd.f32 %v4398, 1.0
    %v4415 = vadd.f32 %v4399, 1.0
    %v4416 = vadd.f32 %v4400, 1.0
    %v4417 = vadd.f32 %v4401, 1.0
    %v4418 = vadd.f32 %v4402, 1.0
    %v4419 = vadd.f32 %v4403, 1.0
    %v4420 = vadd.f32 %v4404, 1.0
    %v4421 = vadd.f32 %v4405, 1.0
    %v4422 = vadd.f32 %v4406, 1.0
    %v4423 = vadd.f32 %v4407, 1.0
    %v4424 = vadd.f32 %v4408, 1.0
    %v4425 = vadd.f32 %v4409, 1.0
    %v4426 = vadd.f32 %v4410, 1.0
    %v4427 = vadd.f32 %v4411, 1.0
    %v4428 = vadd.f32 %v4412, 1.0
    %v4429 = vmul.f32 %v4413, 0.5
    %v4430 = vmul.f32 %v4414, 0.5
    %v4431 = vmul.f32 %v4415, 0.5
    %v4432 = vmul.f32 %v4416, 0.5
    %v4433 = vmul.f32 %v4417, 0.5
    %v4434 = vmul.f32 %v4418, 0.5
    %v4435 = vmul.f32 %v4419, 0.5
    %v4436 = vmul.f32 %v4420, 0.5
    %v4437 = vmul.f32 %v4421, 0.5
    %v4438 = vmul.f32 %v4422, 0.5
    %v4439 = vmul.f32 %v4423, 0.5
    %v4440 = vmul.f32 %v4424, 0.5
    %v4441 = vmul.f32 %v4425, 0.5
    %v4442 = vmul.f32 %v4426, 0.5
    %v4443 = vmul.f32 %v4427, 0.5
    %v4444 = vmul.f32 %v4428, 0.5
    %v4445 = vmul.f32 %v4246, %v4429
    %v4446 = vmul.f32 %v4248, %v4430
    %v4447 = vmul.f32 %v4299, %v4431
    %v4448 = vmul.f32 %v4301, %v4432
    %v4449 = vmul.f32 %v4250, %v4433
    %v4450 = vmul.f32 %v4252, %v4434
    %v4451 = vmul.f32 %v4303, %v4435
    %v4452 = vmul.f32 %v4305, %v4436
    %v4453 = vmul.f32 %v4256, %v4437
    %v4454 = vmul.f32 %v4258, %v4438
    %v4455 = vmul.f32 %v4309, %v4439
    %v4456 = vmul.f32 %v4311, %v4440
    %v4457 = vmul.f32 %v4260, %v4441
    %v4458 = vmul.f32 %v4262, %v4442
    %v4459 = vmul.f32 %v4313, %v4443
    %v4460 = vmul.f32 %v4315, %v4444
    %v4461 = vpack.c.bf16 %v4449, %v4445
    %v4462 = vpack.c.bf16 %v4450, %v4446
    %v4463 = vpack.c.bf16 %v4451, %v4447
    %v4464 = vpack.c.bf16 %v4452, %v4448
    %v4465 = vpack.c.bf16 %v4457, %v4453
    %v4466 = vpack.c.bf16 %v4458, %v4454
    %v4467 = vpack.c.bf16 %v4459, %v4455
    %v4468 = vpack.c.bf16 %v4460, %v4456
    %v4469 = vld [vmem:[#allocation17] sm:$0xf]
    %v4470 = vld [vmem:[#allocation17 + $0x4] sm:$0xf]
    %v4471 = vld [vmem:[#allocation17 + $0x8] sm:$0xf]
    %v4472 = vld [vmem:[#allocation17 + $0xc] sm:$0xf]
    %v4473 = vld [vmem:[#allocation17 + $0x10] sm:$0xf]
    %v4474 = vld [vmem:[#allocation17 + $0x14] sm:$0xf]
    %v4475 = vld [vmem:[#allocation17 + $0x18] sm:$0xf]
    %v4476 = vld [vmem:[#allocation17 + $0x1c] sm:$0xf]
    %v4477 = vld [vmem:[#allocation17 + $0x20] sm:$0xf]
    %v4478 = vld [vmem:[#allocation17 + $0x24] sm:$0xf]
    %v4479 = vld [vmem:[#allocation17 + $0x28] sm:$0xf]
    %v4480 = vld [vmem:[#allocation17 + $0x2c] sm:$0xf]
    %v4481 = vld [vmem:[#allocation17 + $0x30] sm:$0xf]
    %v4482 = vld [vmem:[#allocation17 + $0x34] sm:$0xf]
    %v4483 = vld [vmem:[#allocation17 + $0x38] sm:$0xf]
    %v4484 = vld [vmem:[#allocation17 + $0x3c] sm:$0xf]
    %v4485 = vld [vmem:[#allocation17 + $0x40] sm:$0xf]
    %v4486 = vld [vmem:[#allocation17 + $0x44] sm:$0xf]
    %v4487 = vld [vmem:[#allocation17 + $0x48] sm:$0xf]
    %v4488 = vld [vmem:[#allocation17 + $0x4c] sm:$0xf]
    %v4489 = vld [vmem:[#allocation17 + $0x50] sm:$0xf]
    %v4490 = vld [vmem:[#allocation17 + $0x54] sm:$0xf]
    %v4491 = vld [vmem:[#allocation17 + $0x58] sm:$0xf]
    %v4492 = vld [vmem:[#allocation17 + $0x5c] sm:$0xf]
    %v4493 = vld [vmem:[#allocation17 + $0x60] sm:$0xf]
    %v4494 = vld [vmem:[#allocation17 + $0x64] sm:$0xf]
    %v4495 = vld [vmem:[#allocation17 + $0x68] sm:$0xf]
    %v4496 = vld [vmem:[#allocation17 + $0x6c] sm:$0xf]
    %v4497 = vld [vmem:[#allocation17 + $0x70] sm:$0xf]
    %v4498 = vld [vmem:[#allocation17 + $0x74] sm:$0xf]
    %v4499 = vld [vmem:[#allocation17 + $0x78] sm:$0xf]
    %v4500 = vld [vmem:[#allocation17 + $0x7c] sm:$0xf]
    %v4501 = vld [vmem:[#allocation17 + $0x80] sm:$0xf]
    %v4502 = vld [vmem:[#allocation17 + $0x84] sm:$0xf]
    %v4503 = vld [vmem:[#allocation17 + $0x88] sm:$0xf]
    %v4504 = vld [vmem:[#allocation17 + $0x8c] sm:$0xf]
    %v4505 = vld [vmem:[#allocation17 + $0x90] sm:$0xf]
    %v4506 = vld [vmem:[#allocation17 + $0x94] sm:$0xf]
    %v4507 = vld [vmem:[#allocation17 + $0x98] sm:$0xf]
    %v4508 = vld [vmem:[#allocation17 + $0x9c] sm:$0xf]
    %v4509 = vld [vmem:[#allocation17 + $0xa0] sm:$0xf]
    %v4510 = vld [vmem:[#allocation17 + $0xa4] sm:$0xf]
    %v4511 = vld [vmem:[#allocation17 + $0xa8] sm:$0xf]
    %v4512 = vld [vmem:[#allocation17 + $0xac] sm:$0xf]
    %v4513 = vld [vmem:[#allocation17 + $0xb0] sm:$0xf]
    %v4514 = vld [vmem:[#allocation17 + $0xb4] sm:$0xf]
    %v4515 = vld [vmem:[#allocation17 + $0xb8] sm:$0xf]
    %v4516 = vld [vmem:[#allocation17 + $0xbc] sm:$0xf]
    %v4517 = vld [vmem:[#allocation17 + $0xc0] sm:$0xf]
    %v4518 = vld [vmem:[#allocation17 + $0xc4] sm:$0xf]
    %v4519 = vld [vmem:[#allocation17 + $0xc8] sm:$0xf]
    %v4520 = vld [vmem:[#allocation17 + $0xcc] sm:$0xf]
    %v4521 = vld [vmem:[#allocation17 + $0xd0] sm:$0xf]
    %v4522 = vld [vmem:[#allocation17 + $0xd4] sm:$0xf]
    %v4523 = vld [vmem:[#allocation17 + $0xd8] sm:$0xf]
    %v4524 = vld [vmem:[#allocation17 + $0xdc] sm:$0xf]
    %v4525 = vld [vmem:[#allocation17 + $0xe0] sm:$0xf]
    %v4526 = vld [vmem:[#allocation17 + $0xe4] sm:$0xf]
    %v4527 = vld [vmem:[#allocation17 + $0xe8] sm:$0xf]
    %v4528 = vld [vmem:[#allocation17 + $0xec] sm:$0xf]
    %v4529 = vld [vmem:[#allocation17 + $0xf0] sm:$0xf]
    %v4530 = vld [vmem:[#allocation17 + $0xf4] sm:$0xf]
    %v4531 = vld [vmem:[#allocation17 + $0xf8] sm:$0xf]
    %v4532 = vld [vmem:[#allocation17 + $0xfc] sm:$0xf]
    %v4597 = vunpack.c.l.b16 %v4469
    %v4598 = vunpack.c.l.b16 %v4470
    %v4599 = vunpack.c.l.b16 %v4471
    %v4600 = vunpack.c.l.b16 %v4472
    %v4601 = vunpack.c.l.b16 %v4473
    %v4602 = vunpack.c.l.b16 %v4474
    %v4603 = vunpack.c.l.b16 %v4475
    %v4604 = vunpack.c.l.b16 %v4476
    %v4605 = vunpack.c.l.b16 %v4477
    %v4606 = vunpack.c.l.b16 %v4478
    %v4607 = vunpack.c.l.b16 %v4479
    %v4608 = vunpack.c.l.b16 %v4480
    %v4609 = vunpack.c.l.b16 %v4481
    %v4610 = vunpack.c.l.b16 %v4482
    %v4611 = vunpack.c.l.b16 %v4483
    %v4612 = vunpack.c.l.b16 %v4484
    %v4613 = vunpack.c.l.b16 %v4485
    %v4614 = vunpack.c.l.b16 %v4486
    %v4615 = vunpack.c.l.b16 %v4487
    %v4616 = vunpack.c.l.b16 %v4488
    %v4617 = vunpack.c.l.b16 %v4489
    %v4618 = vunpack.c.l.b16 %v4490
    %v4619 = vunpack.c.l.b16 %v4491
    %v4620 = vunpack.c.l.b16 %v4492
    %v4621 = vunpack.c.l.b16 %v4493
    %v4622 = vunpack.c.l.b16 %v4494
    %v4623 = vunpack.c.l.b16 %v4495
    %v4624 = vunpack.c.l.b16 %v4496
    %v4625 = vunpack.c.l.b16 %v4497
    %v4626 = vunpack.c.l.b16 %v4498
    %v4627 = vunpack.c.l.b16 %v4499
    %v4628 = vunpack.c.l.b16 %v4500
    %v4629 = vunpack.c.l.b16 %v4501
    %v4630 = vunpack.c.l.b16 %v4502
    %v4631 = vunpack.c.l.b16 %v4503
    %v4632 = vunpack.c.l.b16 %v4504
    %v4633 = vunpack.c.l.b16 %v4505
    %v4634 = vunpack.c.l.b16 %v4506
    %v4635 = vunpack.c.l.b16 %v4507
    %v4636 = vunpack.c.l.b16 %v4508
    %v4637 = vunpack.c.l.b16 %v4509
    %v4638 = vunpack.c.l.b16 %v4510
    %v4639 = vunpack.c.l.b16 %v4511
    %v4640 = vunpack.c.l.b16 %v4512
    %v4641 = vunpack.c.l.b16 %v4513
    %v4642 = vunpack.c.l.b16 %v4514
    %v4643 = vunpack.c.l.b16 %v4515
    %v4644 = vunpack.c.l.b16 %v4516
    %v4645 = vunpack.c.l.b16 %v4517
    %v4646 = vunpack.c.l.b16 %v4518
    %v4647 = vunpack.c.l.b16 %v4519
    %v4648 = vunpack.c.l.b16 %v4520
    %v4649 = vunpack.c.l.b16 %v4521
    %v4650 = vunpack.c.l.b16 %v4522
    %v4651 = vunpack.c.l.b16 %v4523
    %v4652 = vunpack.c.l.b16 %v4524
    %v4653 = vunpack.c.l.b16 %v4525
    %v4654 = vunpack.c.l.b16 %v4526
    %v4655 = vunpack.c.l.b16 %v4527
    %v4656 = vunpack.c.l.b16 %v4528
    %v4657 = vunpack.c.l.b16 %v4529
    %v4658 = vunpack.c.l.b16 %v4530
    %v4659 = vunpack.c.l.b16 %v4531
    %v4660 = vunpack.c.l.b16 %v4532
    %v4661 = vpack.c.b16 %v4598, %v4597
    %v4662 = vpack.c.b16 %v4600, %v4599
    %v4663 = vpack.c.b16 %v4602, %v4601
    %v4664 = vpack.c.b16 %v4604, %v4603
    %v4665 = vpack.c.b16 %v4606, %v4605
    %v4666 = vpack.c.b16 %v4608, %v4607
    %v4667 = vpack.c.b16 %v4610, %v4609
    %v4668 = vpack.c.b16 %v4612, %v4611
    %v4669 = vpack.c.b16 %v4614, %v4613
    %v4670 = vpack.c.b16 %v4616, %v4615
    %v4671 = vpack.c.b16 %v4618, %v4617
    %v4672 = vpack.c.b16 %v4620, %v4619
    %v4673 = vpack.c.b16 %v4622, %v4621
    %v4674 = vpack.c.b16 %v4624, %v4623
    %v4675 = vpack.c.b16 %v4626, %v4625
    %v4676 = vpack.c.b16 %v4628, %v4627
    %v4677 = vpack.c.b16 %v4630, %v4629
    %v4678 = vpack.c.b16 %v4632, %v4631
    %v4679 = vpack.c.b16 %v4634, %v4633
    %v4680 = vpack.c.b16 %v4636, %v4635
    %v4681 = vpack.c.b16 %v4638, %v4637
    %v4682 = vpack.c.b16 %v4640, %v4639
    %v4683 = vpack.c.b16 %v4642, %v4641
    %v4684 = vpack.c.b16 %v4644, %v4643
    %v4685 = vpack.c.b16 %v4646, %v4645
    %v4686 = vpack.c.b16 %v4648, %v4647
    %v4687 = vpack.c.b16 %v4650, %v4649
    %v4688 = vpack.c.b16 %v4652, %v4651
    %v4689 = vpack.c.b16 %v4654, %v4653
    %v4690 = vpack.c.b16 %v4656, %v4655
    %v4691 = vpack.c.b16 %v4658, %v4657
    %v4692 = vpack.c.b16 %v4660, %v4659
    %4725 = vmatprep.subr.bf16.mxu0 0
    %4726 = vmatpush1.bf16.msra.mxu0 %v4668
    %4727 = vmatprep.subr.bf16.mxu0 0
    %4728 = vmatpush1.bf16.msra.mxu0 %v4667
    %4729 = vmatprep.subr.bf16.mxu0 0
    %4730 = vmatpush1.bf16.msra.mxu0 %v4666
    %4731 = vmatprep.subr.bf16.mxu0 0
    %4732 = vmatpush1.bf16.msra.mxu0 %v4665
    %4733 = vmatprep.subr.bf16.mxu0 0
    %4734 = vmatpush1.bf16.msra.mxu0 %v4664
    %4735 = vmatprep.subr.bf16.mxu0 0
    %4736 = vmatpush1.bf16.msra.mxu0 %v4663
    %4737 = vmatprep.subr.bf16.mxu0 0
    %4738 = vmatpush1.bf16.msra.mxu0 %v4662
    %4739 = vmatprep.subr.bf16.mxu0 0
    %4740 = vmatpush1.bf16.msra.mxu0 %v4661
    %4741 = vmatprep.subr.bf16.mxu0 0
    %4742 = vmatpush2.bf16.msra.mxu0 %v4676
    %4743 = vmatprep.subr.bf16.mxu0 0
    %4744 = vmatpush2.bf16.msra.mxu0 %v4675
    %4745 = vmatprep.subr.bf16.mxu0 0
    %4746 = vmatpush2.bf16.msra.mxu0 %v4674
    %4747 = vmatprep.subr.bf16.mxu0 0
    %4748 = vmatpush2.bf16.msra.mxu0 %v4673
    %4749 = vmatprep.subr.bf16.mxu0 0
    %4750 = vmatpush2.bf16.msra.mxu0 %v4672
    %4751 = vmatprep.subr.bf16.mxu0 0
    %4752 = vmatpush2.bf16.msra.mxu0 %v4671
    %4753 = vmatprep.subr.bf16.mxu0 0
    %4754 = vmatpush2.bf16.msra.mxu0 %v4670
    %4755 = vmatprep.subr.bf16.mxu0 0
    %4756 = vmatpush2.bf16.msra.mxu0 %v4669
    %4757 = vmatprep.mubr.bf16.mxu0 %v4462
    %4758 = vmatmul.mubr.bf16.gmra.mxu0 %v4461
    %v4759 = vpop.f32.mrf.mxu0
    %v4760 = vadd.f32 0.0, %v4759
    %v4761 = vpop.f32.mrf.mxu0
    %v4762 = vpop.f32.mrf.mxu0
    %v4763 = vadd.f32 0.0, %v4762
    %v4764 = vpop.f32.mrf.mxu0
    %4765 = vmatprep.mubr.bf16.mxu0 %v4466
    %4766 = vmatmul.mubr.bf16.gmra.mxu0 %v4465
    %v4767 = vpop.f32.mrf.mxu0
    %v4768 = vadd.f32 0.0, %v4767
    %v4769 = vpop.f32.mrf.mxu0
    %v4770 = vpop.f32.mrf.mxu0
    %v4771 = vadd.f32 0.0, %v4770
    %v4772 = vpop.f32.mrf.mxu0
    %4773 = vdwg.mxu0
    %4774 = vmatprep.subr.bf16.mxu0 0
    %4775 = vmatpush1.bf16.msra.mxu0 %v4684
    %4776 = vmatprep.subr.bf16.mxu0 0
    %4777 = vmatpush1.bf16.msra.mxu0 %v4683
    %4778 = vmatprep.subr.bf16.mxu0 0
    %4779 = vmatpush1.bf16.msra.mxu0 %v4682
    %4780 = vmatprep.subr.bf16.mxu0 0
    %4781 = vmatpush1.bf16.msra.mxu0 %v4681
    %4782 = vmatprep.subr.bf16.mxu0 0
    %4783 = vmatpush1.bf16.msra.mxu0 %v4680
    %4784 = vmatprep.subr.bf16.mxu0 0
    %4785 = vmatpush1.bf16.msra.mxu0 %v4679
    %4786 = vmatprep.subr.bf16.mxu0 0
    %4787 = vmatpush1.bf16.msra.mxu0 %v4678
    %4788 = vmatprep.subr.bf16.mxu0 0
    %4789 = vmatpush1.bf16.msra.mxu0 %v4677
    %4790 = vmatprep.subr.bf16.mxu0 0
    %4791 = vmatpush2.bf16.msra.mxu0 %v4692
    %4792 = vmatprep.subr.bf16.mxu0 0
    %4793 = vmatpush2.bf16.msra.mxu0 %v4691
    %4794 = vmatprep.subr.bf16.mxu0 0
    %4795 = vmatpush2.bf16.msra.mxu0 %v4690
    %4796 = vmatprep.subr.bf16.mxu0 0
    %4797 = vmatpush2.bf16.msra.mxu0 %v4689
    %4798 = vmatprep.subr.bf16.mxu0 0
    %4799 = vmatpush2.bf16.msra.mxu0 %v4688
    %4800 = vmatprep.subr.bf16.mxu0 0
    %4801 = vmatpush2.bf16.msra.mxu0 %v4687
    %4802 = vmatprep.subr.bf16.mxu0 0
    %4803 = vmatpush2.bf16.msra.mxu0 %v4686
    %4804 = vmatprep.subr.bf16.mxu0 0
    %4805 = vmatpush2.bf16.msra.mxu0 %v4685
    %4806 = vmatprep.mubr.bf16.mxu0 %v4464
    %4807 = vmatmul.mubr.bf16.gmra.mxu0 %v4463
    %v4808 = vpop.f32.mrf.mxu0
    %v4809 = vadd.f32 %v4760, %v4808
    %v4810 = vpop.f32.mrf.mxu0
    %v4811 = vpop.f32.mrf.mxu0
    %v4812 = vadd.f32 %v4763, %v4811
    %v4813 = vpop.f32.mrf.mxu0
    %4814 = vmatprep.mubr.bf16.mxu0 %v4468
    %4815 = vmatmul.mubr.bf16.gmra.mxu0 %v4467
    %v4816 = vpop.f32.mrf.mxu0
    %v4817 = vadd.f32 %v4768, %v4816
    %v4818 = vpop.f32.mrf.mxu0
    %v4819 = vpop.f32.mrf.mxu0
    %v4820 = vadd.f32 %v4771, %v4819
    %v4821 = vpop.f32.mrf.mxu0
    %4822 = vdwg.mxu0
    %v4823 = vadd.f32 %v3925, %v4809
    %v4824 = vadd.f32 %v3926, %v4812
    %v4825 = vadd.f32 %v3927, %v4817
    %v4826 = vadd.f32 %v3928, %v4820
    %v4827 = vld [vmem:[%s14] sm:$0x1]
    %v4829 = vlaneseq
    %v4830 = vshrl.u32 %v4829, 7
    %v4831 = vsub.s32 0, %v4830
    %v4832 = vrot.slane %v4827, %v4831
    %v4834 = vadd.f32 %v4823, %v4832
    %v4835 = vadd.f32 %v4824, %v4832
    %v4836 = vadd.f32 %v4825, %v4832
    %v4837 = vadd.f32 %v4826, %v4832
    %s4838 = scalar_lea.vmem %s3, 1
    %v4839 = vld [vmem:[%s4838] sm:$0x1]
    %s4840 = scalar_lea.vmem [#allocation8], 1
    %v4841 = vld [vmem:[%s4840] sm:$0x1]
    %4842 = vadd.xlane.f32.xlu0 %v4834
    %v4843 = vpop.xlane.xlu0 %4842
    %4844 = vadd.xlane.f32.xlu0 %v4835
    %v4845 = vpop.xlane.xlu0 %4844
    %4846 = vadd.xlane.f32.xlu0 %v4836
    %v4847 = vpop.xlane.xlu0 %4846
    %4848 = vadd.xlane.f32.xlu0 %v4837
    %v4849 = vpop.xlane.xlu0 %4848
    %v4850 = vmul.f32 %v4843, %v1654
    %v4851 = vmul.f32 %v4845, %v1654
    %v4852 = vmul.f32 %v4847, %v1654
    %v4853 = vmul.f32 %v4849, %v1654
    %v4854 = vsub.f32 %v4834, %v4850
    %v4855 = vsub.f32 %v4835, %v4851
    %v4856 = vsub.f32 %v4836, %v4852
    %v4857 = vsub.f32 %v4837, %v4853
    %v4858 = vmul.f32 %v4854, %v4854
    %v4859 = vmul.f32 %v4855, %v4855
    %v4860 = vmul.f32 %v4856, %v4856
    %v4861 = vmul.f32 %v4857, %v4857
    %4862 = vadd.xlane.f32.xlu0 %v4858
    %v4863 = vpop.xlane.xlu0 %4862
    %4864 = vadd.xlane.f32.xlu0 %v4859
    %v4865 = vpop.xlane.xlu0 %4864
    %4866 = vadd.xlane.f32.xlu0 %v4860
    %v4867 = vpop.xlane.xlu0 %4866
    %4868 = vadd.xlane.f32.xlu0 %v4861
    %v4869 = vpop.xlane.xlu0 %4868
    %v4870 = vmul.f32 %v4863, %v1654
    %v4871 = vmul.f32 %v4865, %v1654
    %v4872 = vmul.f32 %v4867, %v1654
    %v4873 = vmul.f32 %v4869, %v1654
    %v4874 = vadd.f32 %v4870, 1e-05
    %v4875 = vadd.f32 %v4871, 1e-05
    %v4876 = vadd.f32 %v4872, 1e-05
    %v4877 = vadd.f32 %v4873, 1e-05
    %v4878 = vrsqrt.pop %v4874
    %v4879 = vrsqrt.pop %v4875
    %v4880 = vrsqrt.pop %v4876
    %v4881 = vrsqrt.pop %v4877
    %v4882 = vmul.f32 %v4854, %v4878
    %v4883 = vmul.f32 %v4855, %v4879
    %v4884 = vmul.f32 %v4856, %v4880
    %v4885 = vmul.f32 %v4857, %v4881
    %v4887 = vlaneseq
    %v4888 = vshrl.u32 %v4887, 7
    %v4889 = vsub.s32 0, %v4888
    %v4890 = vrot.slane %v4839, %v4889
    %v4892 = vmul.f32 %v4882, %v4890
    %v4893 = vmul.f32 %v4883, %v4890
    %v4894 = vmul.f32 %v4884, %v4890
    %v4895 = vmul.f32 %v4885, %v4890
    %v4897 = vlaneseq
    %v4898 = vshrl.u32 %v4897, 7
    %v4899 = vsub.s32 0, %v4898
    %v4900 = vrot.slane %v4841, %v4899
    %v4902 = vadd.f32 %v4892, %v4900
    %v4903 = vadd.f32 %v4893, %v4900
    %v4904 = vadd.f32 %v4894, %v4900
    %v4905 = vadd.f32 %v4895, %v4900
    %v4906 = vpack.c.bf16 %v4903, %v4902
    %v4907 = vpack.c.bf16 %v4905, %v4904
    %s4908 = scalar_lea.vmem [#allocation10], 192
    %v4909 = vld [vmem:[%s4908] sm:$0xff]
    %v4910 = vld [vmem:[%s4908 + $0x8] sm:$0xf]
    %v4911 = vld [vmem:[%s4908 + $0xc] sm:$0xff]
    %v4912 = vld [vmem:[%s4908 + $0x14] sm:$0xf]
    %v4913 = vld [vmem:[%s4908 + $0x18] sm:$0xff]
    %v4914 = vld [vmem:[%s4908 + $0x20] sm:$0xf]
    %v4915 = vld [vmem:[%s4908 + $0x24] sm:$0xff]
    %v4916 = vld [vmem:[%s4908 + $0x2c] sm:$0xf]
    %v4917 = vld [vmem:[%s4908 + $0x30] sm:$0xff]
    %v4918 = vld [vmem:[%s4908 + $0x38] sm:$0xf]
    %v4919 = vld [vmem:[%s4908 + $0x3c] sm:$0xff]
    %v4920 = vld [vmem:[%s4908 + $0x44] sm:$0xf]
    %v4921 = vld [vmem:[%s4908 + $0x48] sm:$0xff]
    %v4922 = vld [vmem:[%s4908 + $0x50] sm:$0xf]
    %v4923 = vld [vmem:[%s4908 + $0x54] sm:$0xff]
    %v4924 = vld [vmem:[%s4908 + $0x5c] sm:$0xf]
    %v4925 = vld [vmem:[%s4908 + $0x60] sm:$0xff]
    %v4926 = vld [vmem:[%s4908 + $0x68] sm:$0xf]
    %v4927 = vld [vmem:[%s4908 + $0x6c] sm:$0xff]
    %v4928 = vld [vmem:[%s4908 + $0x74] sm:$0xf]
    %v4929 = vld [vmem:[%s4908 + $0x78] sm:$0xff]
    %v4930 = vld [vmem:[%s4908 + $0x80] sm:$0xf]
    %v4931 = vld [vmem:[%s4908 + $0x84] sm:$0xff]
    %v4932 = vld [vmem:[%s4908 + $0x8c] sm:$0xf]
    %v4933 = vld [vmem:[%s4908 + $0x90] sm:$0xff]
    %v4934 = vld [vmem:[%s4908 + $0x98] sm:$0xf]
    %v4935 = vld [vmem:[%s4908 + $0x9c] sm:$0xff]
    %v4936 = vld [vmem:[%s4908 + $0xa4] sm:$0xf]
    %v4937 = vld [vmem:[%s4908 + $0xa8] sm:$0xff]
    %v4938 = vld [vmem:[%s4908 + $0xb0] sm:$0xf]
    %v4939 = vld [vmem:[%s4908 + $0xb4] sm:$0xff]
    %v4940 = vld [vmem:[%s4908 + $0xbc] sm:$0xf]
    %s4941 = scalar_lea.vmem %s6, 3
    %v4942 = vld [vmem:[%s4941] sm:$0x7]
    %v4944 = vlaneseq
    %v4945 = vshrl.u32 %v4944, 7
    %v4946 = vsub.s32 0, %v4945
    %v4947 = vrot.slane %v4942, %v4946
    %v4948 = vlaneseq
    %v4949 = vshrl.u32 %v4948, 7
    %v4950 = vsub.s32 1, %v4949
    %v4951 = vrot.slane %v4942, %v4950
    %v4952 = vlaneseq
    %v4953 = vshrl.u32 %v4952, 7
    %v4954 = vsub.s32 2, %v4953
    %v4955 = vrot.slane %v4942, %v4954
    %v4991 = vunpack.c.l.b16 %v4909
    %v4992 = vunpack.c.h.b16 %v4909
    %v4993 = vunpack.c.l.b16 %v4910
    %v4994 = vunpack.c.l.b16 %v4911
    %v4995 = vunpack.c.h.b16 %v4911
    %v4996 = vunpack.c.l.b16 %v4912
    %v4997 = vunpack.c.l.b16 %v4913
    %v4998 = vunpack.c.h.b16 %v4913
    %v4999 = vunpack.c.l.b16 %v4914
    %v5000 = vunpack.c.l.b16 %v4915
    %v5001 = vunpack.c.h.b16 %v4915
    %v5002 = vunpack.c.l.b16 %v4916
    %v5003 = vunpack.c.l.b16 %v4917
    %v5004 = vunpack.c.h.b16 %v4917
    %v5005 = vunpack.c.l.b16 %v4918
    %v5006 = vunpack.c.l.b16 %v4919
    %v5007 = vunpack.c.h.b16 %v4919
    %v5008 = vunpack.c.l.b16 %v4920
    %v5009 = vunpack.c.l.b16 %v4921
    %v5010 = vunpack.c.h.b16 %v4921
    %v5011 = vunpack.c.l.b16 %v4922
    %v5012 = vunpack.c.l.b16 %v4923
    %v5013 = vunpack.c.h.b16 %v4923
    %v5014 = vunpack.c.l.b16 %v4924
    %v5015 = vunpack.c.l.b16 %v4925
    %v5016 = vunpack.c.h.b16 %v4925
    %v5017 = vunpack.c.l.b16 %v4926
    %v5018 = vunpack.c.l.b16 %v4927
    %v5019 = vunpack.c.h.b16 %v4927
    %v5020 = vunpack.c.l.b16 %v4928
    %v5021 = vunpack.c.l.b16 %v4929
    %v5022 = vunpack.c.h.b16 %v4929
    %v5023 = vunpack.c.l.b16 %v4930
    %v5024 = vunpack.c.l.b16 %v4931
    %v5025 = vunpack.c.h.b16 %v4931
    %v5026 = vunpack.c.l.b16 %v4932
    %v5027 = vunpack.c.l.b16 %v4933
    %v5028 = vunpack.c.h.b16 %v4933
    %v5029 = vunpack.c.l.b16 %v4934
    %v5030 = vunpack.c.l.b16 %v4935
    %v5031 = vunpack.c.h.b16 %v4935
    %v5032 = vunpack.c.l.b16 %v4936
    %v5033 = vunpack.c.l.b16 %v4937
    %v5034 = vunpack.c.h.b16 %v4937
    %v5035 = vunpack.c.l.b16 %v4938
    %v5036 = vunpack.c.l.b16 %v4939
    %v5037 = vunpack.c.h.b16 %v4939
    %v5038 = vunpack.c.l.b16 %v4940
    %v5039 = vpack.c.b16 %v4994, %v4991
    %v5040 = vpack.c.b16 %v4995, %v4992
    %v5041 = vpack.c.b16 %v4996, %v4993
    %v5042 = vpack.c.b16 %v5000, %v4997
    %v5043 = vpack.c.b16 %v5001, %v4998
    %v5044 = vpack.c.b16 %v5002, %v4999
    %v5045 = vpack.c.b16 %v5006, %v5003
    %v5046 = vpack.c.b16 %v5007, %v5004
    %v5047 = vpack.c.b16 %v5008, %v5005
    %v5048 = vpack.c.b16 %v5012, %v5009
    %v5049 = vpack.c.b16 %v5013, %v5010
    %v5050 = vpack.c.b16 %v5014, %v5011
    %v5051 = vpack.c.b16 %v5018, %v5015
    %v5052 = vpack.c.b16 %v5019, %v5016
    %v5053 = vpack.c.b16 %v5020, %v5017
    %v5054 = vpack.c.b16 %v5024, %v5021
    %v5055 = vpack.c.b16 %v5025, %v5022
    %v5056 = vpack.c.b16 %v5026, %v5023
    %v5057 = vpack.c.b16 %v5030, %v5027
    %v5058 = vpack.c.b16 %v5031, %v5028
    %v5059 = vpack.c.b16 %v5032, %v5029
    %v5060 = vpack.c.b16 %v5036, %v5033
    %v5061 = vpack.c.b16 %v5037, %v5034
    %v5062 = vpack.c.b16 %v5038, %v5035
    %5087 = vmatprep.subr.bf16.mxu0 %v5061
    %5088 = vmatpush1.bf16.msra.mxu0 %v5060
    %5089 = vmatprep.subr.bf16.mxu0 %v5058
    %5090 = vmatpush1.bf16.msra.mxu0 %v5057
    %5091 = vmatprep.subr.bf16.mxu0 %v5055
    %5092 = vmatpush1.bf16.msra.mxu0 %v5054
    %5093 = vmatprep.subr.bf16.mxu0 %v5052
    %5094 = vmatpush1.bf16.msra.mxu0 %v5051
    %5095 = vmatprep.subr.bf16.mxu0 %v5049
    %5096 = vmatpush1.bf16.msra.mxu0 %v5048
    %5097 = vmatprep.subr.bf16.mxu0 %v5046
    %5098 = vmatpush1.bf16.msra.mxu0 %v5045
    %5099 = vmatprep.subr.bf16.mxu0 %v5043
    %5100 = vmatpush1.bf16.msra.mxu0 %v5042
    %5101 = vmatprep.subr.bf16.mxu0 %v5040
    %5102 = vmatpush1.bf16.msra.mxu0 %v5039
    %5103 = vmatprep.subr.bf16.mxu0 0
    %5104 = vmatpush2.bf16.msra.mxu0 0
    %5105 = vmatprep.subr.bf16.mxu0 0
    %5106 = vmatpush2.bf16.msra.mxu0 0
    %5107 = vmatprep.subr.bf16.mxu0 0
    %5108 = vmatpush2.bf16.msra.mxu0 0
    %5109 = vmatprep.subr.bf16.mxu0 0
    %5110 = vmatpush2.bf16.msra.mxu0 0
    %5111 = vmatprep.subr.bf16.mxu0 0
    %5112 = vmatpush2.bf16.msra.mxu0 0
    %5113 = vmatprep.subr.bf16.mxu0 0
    %5114 = vmatpush2.bf16.msra.mxu0 0
    %5115 = vmatprep.subr.bf16.mxu0 0
    %5116 = vmatpush2.bf16.msra.mxu0 0
    %5117 = vmatprep.subr.bf16.mxu0 0
    %5118 = vmatpush2.bf16.msra.mxu0 0
    %5119 = vmatprep.mubr.bf16.mxu0 0
    %5120 = vmatmul.mubr.bf16.gmra.mxu0 %v4906
    %v5121 = vpop.f32.mrf.mxu0
    %v5122 = vadd.f32 %v4947, %v5121
    %v5123 = vpop.f32.mrf.mxu0
    %v5124 = vadd.f32 %v4951, %v5123
    %v5125 = vpop.f32.mrf.mxu0
    %v5126 = vadd.f32 %v4947, %v5125
    %v5127 = vpop.f32.mrf.mxu0
    %v5128 = vadd.f32 %v4951, %v5127
    %5129 = vmatprep.mubr.bf16.mxu0 0
    %5130 = vmatmul.mubr.bf16.gmra.mxu0 %v4907
    %v5131 = vpop.f32.mrf.mxu0
    %v5132 = vadd.f32 %v4947, %v5131
    %v5133 = vpop.f32.mrf.mxu0
    %v5134 = vadd.f32 %v4951, %v5133
    %v5135 = vpop.f32.mrf.mxu0
    %v5136 = vadd.f32 %v4947, %v5135
    %v5137 = vpop.f32.mrf.mxu0
    %v5138 = vadd.f32 %v4951, %v5137
    %5139 = vdwg.mxu0
    %5140 = vmatprep.subr.bf16.mxu0 0
    %5141 = vmatpush1.bf16.msra.mxu0 %v5062
    %5142 = vmatprep.subr.bf16.mxu0 0
    %5143 = vmatpush1.bf16.msra.mxu0 %v5059
    %5144 = vmatprep.subr.bf16.mxu0 0
    %5145 = vmatpush1.bf16.msra.mxu0 %v5056
    %5146 = vmatprep.subr.bf16.mxu0 0
    %5147 = vmatpush1.bf16.msra.mxu0 %v5053
    %5148 = vmatprep.subr.bf16.mxu0 0
    %5149 = vmatpush1.bf16.msra.mxu0 %v5050
    %5150 = vmatprep.subr.bf16.mxu0 0
    %5151 = vmatpush1.bf16.msra.mxu0 %v5047
    %5152 = vmatprep.subr.bf16.mxu0 0
    %5153 = vmatpush1.bf16.msra.mxu0 %v5044
    %5154 = vmatprep.subr.bf16.mxu0 0
    %5155 = vmatpush1.bf16.msra.mxu0 %v5041
    %5156 = vmatprep.subr.bf16.mxu0 0
    %5157 = vmatpush2.bf16.msra.mxu0 0
    %5158 = vmatprep.subr.bf16.mxu0 0
    %5159 = vmatpush2.bf16.msra.mxu0 0
    %5160 = vmatprep.subr.bf16.mxu0 0
    %5161 = vmatpush2.bf16.msra.mxu0 0
    %5162 = vmatprep.subr.bf16.mxu0 0
    %5163 = vmatpush2.bf16.msra.mxu0 0
    %5164 = vmatprep.subr.bf16.mxu0 0
    %5165 = vmatpush2.bf16.msra.mxu0 0
    %5166 = vmatprep.subr.bf16.mxu0 0
    %5167 = vmatpush2.bf16.msra.mxu0 0
    %5168 = vmatprep.subr.bf16.mxu0 0
    %5169 = vmatpush2.bf16.msra.mxu0 0
    %5170 = vmatprep.subr.bf16.mxu0 0
    %5171 = vmatpush2.bf16.msra.mxu0 0
    %5172 = vmatprep.mubr.bf16.mxu0 0
    %5173 = vmatmul.mubr.bf16.gmra.mxu0 %v4906
    %v5174 = vpop.f32.mrf.mxu0
    %v5175 = vadd.f32 %v4955, %v5174
    %v5176 = vpop.f32.mrf.mxu0
    %v5177 = vpop.f32.mrf.mxu0
    %v5178 = vadd.f32 %v4955, %v5177
    %v5179 = vpop.f32.mrf.mxu0
    %5180 = vmatprep.mubr.bf16.mxu0 0
    %5181 = vmatmul.mubr.bf16.gmra.mxu0 %v4907
    %v5182 = vpop.f32.mrf.mxu0
    %v5183 = vadd.f32 %v4955, %v5182
    %v5184 = vpop.f32.mrf.mxu0
    %v5185 = vpop.f32.mrf.mxu0
    %v5186 = vadd.f32 %v4955, %v5185
    %v5187 = vpop.f32.mrf.mxu0
    %5188 = vdwg.mxu0
    %s5189 = scalar_lea.vmem [#allocation11], 64
    %v5190 = vld [vmem:[%s5189] sm:$0xf]
    %v5191 = vld [vmem:[%s5189 + $0x4] sm:$0xf]
    %v5192 = vld [vmem:[%s5189 + $0x8] sm:$0xf]
    %v5193 = vld [vmem:[%s5189 + $0xc] sm:$0xf]
    %v5194 = vld [vmem:[%s5189 + $0x10] sm:$0xf]
    %v5195 = vld [vmem:[%s5189 + $0x14] sm:$0xf]
    %v5196 = vld [vmem:[%s5189 + $0x18] sm:$0xf]
    %v5197 = vld [vmem:[%s5189 + $0x1c] sm:$0xf]
    %v5198 = vld [vmem:[%s5189 + $0x20] sm:$0xf]
    %v5199 = vld [vmem:[%s5189 + $0x24] sm:$0xf]
    %v5200 = vld [vmem:[%s5189 + $0x28] sm:$0xf]
    %v5201 = vld [vmem:[%s5189 + $0x2c] sm:$0xf]
    %v5202 = vld [vmem:[%s5189 + $0x30] sm:$0xf]
    %v5203 = vld [vmem:[%s5189 + $0x34] sm:$0xf]
    %v5204 = vld [vmem:[%s5189 + $0x38] sm:$0xf]
    %v5205 = vld [vmem:[%s5189 + $0x3c] sm:$0xf]
    %s5206 = scalar_lea.vmem [#allocation13], 1
    %v5207 = vld [vmem:[%s5206] sm:$0x1]
    %v5209 = vlaneseq
    %v5210 = vshrl.u32 %v5209, 7
    %v5211 = vsub.s32 0, %v5210
    %v5212 = vrot.slane %v5207, %v5211
    %v5214 = vadd.f32 %v4834, %v5212
    %v5215 = vadd.f32 %v4835, %v5212
    %v5216 = vadd.f32 %v4836, %v5212
    %v5217 = vadd.f32 %v4837, %v5212
    %v5219 = vsel %vm2019, %v5122, 0
    %v5222 = vsel %vm2019, %v5126, 0
    %v5225 = vsel %vm2019, %v5124, 0
    %v5228 = vsel %vm2019, %v5128, 0
    %5230 = vmatprep.subr.mxu0 0.0
    %5231 = vmatpush1.xpose.msra.mxu0 0.0
    %5232 = vmatprep.subr.mxu0 0.0
    %5233 = vmatpush1.xpose.msra.mxu0 0.0
    %5234 = vmatprep.subr.mxu0 0.0
    %5235 = vmatpush1.xpose.msra.mxu0 0.0
    %5236 = vmatprep.subr.mxu0 0.0
    %5237 = vmatpush1.xpose.msra.mxu0 0.0
    %5238 = vmatprep.subr.mxu0 0.0
    %5239 = vmatpush1.xpose.msra.mxu0 0.0
    %5240 = vmatprep.subr.mxu0 0.0
    %5241 = vmatpush1.xpose.msra.mxu0 0.0
    %5242 = vmatprep.subr.mxu0 0.0
    %5243 = vmatpush1.xpose.msra.mxu0 0.0
    %5244 = vmatprep.subr.mxu0 0.0
    %5245 = vmatpush1.xpose.msra.mxu0 0.0
    %5246 = vmatprep.subr.mxu0 0.0
    %5247 = vmatpush1.xpose.msra.mxu0 0.0
    %5248 = vmatprep.subr.mxu0 0.0
    %5249 = vmatpush1.xpose.msra.mxu0 0.0
    %5250 = vmatprep.subr.mxu0 0.0
    %5251 = vmatpush1.xpose.msra.mxu0 0.0
    %5252 = vmatprep.subr.mxu0 0.0
    %5253 = vmatpush1.xpose.msra.mxu0 0.0
    %5254 = vmatprep.subr.mxu0 0.0
    %5255 = vmatpush1.xpose.msra.mxu0 0.0
    %5256 = vmatprep.subr.mxu0 0.0
    %5257 = vmatpush1.xpose.msra.mxu0 0.0
    %5258 = vmatprep.subr.mxu0 0.0
    %5259 = vmatpush1.xpose.msra.mxu0 %v5228
    %5260 = vmatprep.subr.mxu0 0.0
    %5261 = vmatpush1.xpose.msra.mxu0 %v5225
    %5262 = vmatprep.subr.mxu0 0.0
    %5263 = vmatpush2.xpose.msra.mxu0 0.0
    %5264 = vmatprep.subr.mxu0 0.0
    %5265 = vmatpush2.xpose.msra.mxu0 0.0
    %5266 = vmatprep.subr.mxu0 0.0
    %5267 = vmatpush2.xpose.msra.mxu0 0.0
    %5268 = vmatprep.subr.mxu0 0.0
    %5269 = vmatpush2.xpose.msra.mxu0 0.0
    %5270 = vmatprep.subr.mxu0 0.0
    %5271 = vmatpush2.xpose.msra.mxu0 0.0
    %5272 = vmatprep.subr.mxu0 0.0
    %5273 = vmatpush2.xpose.msra.mxu0 0.0
    %5274 = vmatprep.subr.mxu0 0.0
    %5275 = vmatpush2.xpose.msra.mxu0 0.0
    %5276 = vmatprep.subr.mxu0 0.0
    %5277 = vmatpush2.xpose.msra.mxu0 0.0
    %5278 = vmatprep.subr.mxu0 0.0
    %5279 = vmatpush2.xpose.msra.mxu0 0.0
    %5280 = vmatprep.subr.mxu0 0.0
    %5281 = vmatpush2.xpose.msra.mxu0 0.0
    %5282 = vmatprep.subr.mxu0 0.0
    %5283 = vmatpush2.xpose.msra.mxu0 0.0
    %5284 = vmatprep.subr.mxu0 0.0
    %5285 = vmatpush2.xpose.msra.mxu0 0.0
    %5286 = vmatprep.subr.mxu0 0.0
    %5287 = vmatpush2.xpose.msra.mxu0 0.0
    %5288 = vmatprep.subr.mxu0 0.0
    %5289 = vmatpush2.xpose.msra.mxu0 0.0
    %5290 = vmatprep.subr.mxu0 0.0
    %5291 = vmatpush2.xpose.msra.mxu0 0.0
    %5292 = vmatprep.subr.mxu0 0.0
    %5293 = vmatpush2.xpose.msra.mxu0 0.0
    %5294 = vmatprep.mubr.f32.mxu0 0.0
    %5295 = vmatmul.mubr.f32.gmra.mxu0 %v5219
    %v5296 = vpop.f32.mrf.mxu0
    %v5297 = vadd.f32 0.0, %v5296
    %v5298 = vpop.f32.mrf.mxu0
    %5299 = vmatprep.mubr.f32.mxu0 0.0
    %5300 = vmatmul.mubr.f32.gmra.mxu0 %v5222
    %v5301 = vpop.f32.mrf.mxu0
    %v5302 = vadd.f32 0.0, %v5301
    %v5303 = vpop.f32.mrf.mxu0
    %5304 = vdwg.mxu0
    %v5306 = vsel %vm2019, %v5132, 0
    %v5309 = vsel %vm2019, %v5136, 0
    %v5312 = vsel %vm2019, %v5134, 0
    %v5315 = vsel %vm2019, %v5138, 0
    %5317 = vmatprep.subr.mxu0 0.0
    %5318 = vmatpush1.xpose.msra.mxu0 0.0
    %5319 = vmatprep.subr.mxu0 0.0
    %5320 = vmatpush1.xpose.msra.mxu0 0.0
    %5321 = vmatprep.subr.mxu0 0.0
    %5322 = vmatpush1.xpose.msra.mxu0 0.0
    %5323 = vmatprep.subr.mxu0 0.0
    %5324 = vmatpush1.xpose.msra.mxu0 0.0
    %5325 = vmatprep.subr.mxu0 0.0
    %5326 = vmatpush1.xpose.msra.mxu0 0.0
    %5327 = vmatprep.subr.mxu0 0.0
    %5328 = vmatpush1.xpose.msra.mxu0 0.0
    %5329 = vmatprep.subr.mxu0 0.0
    %5330 = vmatpush1.xpose.msra.mxu0 0.0
    %5331 = vmatprep.subr.mxu0 0.0
    %5332 = vmatpush1.xpose.msra.mxu0 0.0
    %5333 = vmatprep.subr.mxu0 0.0
    %5334 = vmatpush1.xpose.msra.mxu0 0.0
    %5335 = vmatprep.subr.mxu0 0.0
    %5336 = vmatpush1.xpose.msra.mxu0 0.0
    %5337 = vmatprep.subr.mxu0 0.0
    %5338 = vmatpush1.xpose.msra.mxu0 0.0
    %5339 = vmatprep.subr.mxu0 0.0
    %5340 = vmatpush1.xpose.msra.mxu0 0.0
    %5341 = vmatprep.subr.mxu0 0.0
    %5342 = vmatpush1.xpose.msra.mxu0 0.0
    %5343 = vmatprep.subr.mxu0 0.0
    %5344 = vmatpush1.xpose.msra.mxu0 0.0
    %5345 = vmatprep.subr.mxu0 0.0
    %5346 = vmatpush1.xpose.msra.mxu0 %v5315
    %5347 = vmatprep.subr.mxu0 0.0
    %5348 = vmatpush1.xpose.msra.mxu0 %v5312
    %5349 = vmatprep.subr.mxu0 0.0
    %5350 = vmatpush2.xpose.msra.mxu0 0.0
    %5351 = vmatprep.subr.mxu0 0.0
    %5352 = vmatpush2.xpose.msra.mxu0 0.0
    %5353 = vmatprep.subr.mxu0 0.0
    %5354 = vmatpush2.xpose.msra.mxu0 0.0
    %5355 = vmatprep.subr.mxu0 0.0
    %5356 = vmatpush2.xpose.msra.mxu0 0.0
    %5357 = vmatprep.subr.mxu0 0.0
    %5358 = vmatpush2.xpose.msra.mxu0 0.0
    %5359 = vmatprep.subr.mxu0 0.0
    %5360 = vmatpush2.xpose.msra.mxu0 0.0
    %5361 = vmatprep.subr.mxu0 0.0
    %5362 = vmatpush2.xpose.msra.mxu0 0.0
    %5363 = vmatprep.subr.mxu0 0.0
    %5364 = vmatpush2.xpose.msra.mxu0 0.0
    %5365 = vmatprep.subr.mxu0 0.0
    %5366 = vmatpush2.xpose.msra.mxu0 0.0
    %5367 = vmatprep.subr.mxu0 0.0
    %5368 = vmatpush2.xpose.msra.mxu0 0.0
    %5369 = vmatprep.subr.mxu0 0.0
    %5370 = vmatpush2.xpose.msra.mxu0 0.0
    %5371 = vmatprep.subr.mxu0 0.0
    %5372 = vmatpush2.xpose.msra.mxu0 0.0
    %5373 = vmatprep.subr.mxu0 0.0
    %5374 = vmatpush2.xpose.msra.mxu0 0.0
    %5375 = vmatprep.subr.mxu0 0.0
    %5376 = vmatpush2.xpose.msra.mxu0 0.0
    %5377 = vmatprep.subr.mxu0 0.0
    %5378 = vmatpush2.xpose.msra.mxu0 0.0
    %5379 = vmatprep.subr.mxu0 0.0
    %5380 = vmatpush2.xpose.msra.mxu0 0.0
    %5381 = vmatprep.mubr.f32.mxu0 0.0
    %5382 = vmatmul.mubr.f32.gmra.mxu0 %v5306
    %v5383 = vpop.f32.mrf.mxu0
    %v5384 = vadd.f32 0.0, %v5383
    %v5385 = vpop.f32.mrf.mxu0
    %5386 = vmatprep.mubr.f32.mxu0 0.0
    %5387 = vmatmul.mubr.f32.gmra.mxu0 %v5309
    %v5388 = vpop.f32.mrf.mxu0
    %v5389 = vadd.f32 0.0, %v5388
    %v5390 = vpop.f32.mrf.mxu0
    %5391 = vdwg.mxu0
    %v5392 = vmul.f32 %v5297, 0.17677669
    %v5393 = vmul.f32 %v5302, 0.17677669
    %v5394 = vmul.f32 %v5384, 0.17677669
    %v5395 = vmul.f32 %v5389, 0.17677669
    %v5396 = vadd.f32 %v5392, %v1643
    %v5397 = vadd.f32 %v5393, %v1643
    %v5398 = vadd.f32 %v5394, %v1643
    %v5399 = vadd.f32 %v5395, %v1643
    %v5400 = vsel %vm2202, %v5396, -inf
    %5401 = vmax.xlane.f32.xlu0 %v5400
    %v5402 = vpop.xlane.xlu0 %5401
    %v5403 = vsel %vm2202, %v5397, -inf
    %5404 = vmax.xlane.f32.xlu0 %v5403
    %v5405 = vpop.xlane.xlu0 %5404
    %v5406 = vsel %vm2202, %v5398, -inf
    %5407 = vmax.xlane.f32.xlu0 %v5406
    %v5408 = vpop.xlane.xlu0 %5407
    %v5409 = vsel %vm2202, %v5399, -inf
    %5410 = vmax.xlane.f32.xlu0 %v5409
    %v5411 = vpop.xlane.xlu0 %5410
    %v5412 = vsub.f32 %v5396, %v5402
    %v5413 = vsub.f32 %v5397, %v5405
    %v5414 = vsub.f32 %v5398, %v5408
    %v5415 = vsub.f32 %v5399, %v5411
    %v5416 = vmul.f32 %v5412, 1.442695
    %v5417 = vpow.pop %v5416
    %v5418 = vmul.f32 %v5413, 1.442695
    %v5419 = vpow.pop %v5418
    %v5420 = vmul.f32 %v5414, 1.442695
    %v5421 = vpow.pop %v5420
    %v5422 = vmul.f32 %v5415, 1.442695
    %v5423 = vpow.pop %v5422
    %v5424 = vsel %vm2202, %v5417, 0.0
    %5425 = vadd.xlane.f32.xlu0 %v5424
    %v5426 = vpop.xlane.xlu0 %5425
    %v5427 = vsel %vm2202, %v5419, 0.0
    %5428 = vadd.xlane.f32.xlu0 %v5427
    %v5429 = vpop.xlane.xlu0 %5428
    %v5430 = vsel %vm2202, %v5421, 0.0
    %5431 = vadd.xlane.f32.xlu0 %v5430
    %v5432 = vpop.xlane.xlu0 %5431
    %v5433 = vsel %vm2202, %v5423, 0.0
    %5434 = vadd.xlane.f32.xlu0 %v5433
    %v5435 = vpop.xlane.xlu0 %5434
    %v5436 = vrcp.pop %v5426
    %v5437 = vrcp.pop %v5429
    %v5438 = vrcp.pop %v5432
    %v5439 = vrcp.pop %v5435
    %v5440 = vmul.f32 %v5417, %v5436
    %v5441 = vmul.f32 %v5419, %v5437
    %v5442 = vmul.f32 %v5421, %v5438
    %v5443 = vmul.f32 %v5423, %v5439
    %v5445 = vsel %vm2202, %v5440, 0
    %v5448 = vsel %vm2202, %v5441, 0
    %5450 = vmatprep.subr.mxu0 0.0
    %5451 = vmatpush1.msra.mxu0 0.0
    %5452 = vmatprep.subr.mxu0 0.0
    %5453 = vmatpush1.msra.mxu0 0.0
    %5454 = vmatprep.subr.mxu0 0.0
    %5455 = vmatpush1.msra.mxu0 0.0
    %5456 = vmatprep.subr.mxu0 0.0
    %5457 = vmatpush1.msra.mxu0 0.0
    %5458 = vmatprep.subr.mxu0 0.0
    %5459 = vmatpush1.msra.mxu0 0.0
    %5460 = vmatprep.subr.mxu0 0.0
    %5461 = vmatpush1.msra.mxu0 0.0
    %5462 = vmatprep.subr.mxu0 0.0
    %5463 = vmatpush1.msra.mxu0 0.0
    %5464 = vmatprep.subr.mxu0 0.0
    %5465 = vmatpush1.msra.mxu0 0.0
    %5466 = vmatprep.subr.mxu0 0.0
    %5467 = vmatpush1.msra.mxu0 0.0
    %5468 = vmatprep.subr.mxu0 0.0
    %5469 = vmatpush1.msra.mxu0 0.0
    %5470 = vmatprep.subr.mxu0 0.0
    %5471 = vmatpush1.msra.mxu0 0.0
    %5472 = vmatprep.subr.mxu0 0.0
    %5473 = vmatpush1.msra.mxu0 0.0
    %5474 = vmatprep.subr.mxu0 0.0
    %5475 = vmatpush1.msra.mxu0 0.0
    %5476 = vmatprep.subr.mxu0 0.0
    %5477 = vmatpush1.msra.mxu0 0.0
    %5478 = vmatprep.subr.mxu0 0.0
    %5479 = vmatpush1.msra.mxu0 %v5178
    %5480 = vmatprep.subr.mxu0 0.0
    %5481 = vmatpush1.msra.mxu0 %v5175
    %5482 = vmatprep.subr.mxu0 0.0
    %5483 = vmatpush2.msra.mxu0 0.0
    %5484 = vmatprep.subr.mxu0 0.0
    %5485 = vmatpush2.msra.mxu0 0.0
    %5486 = vmatprep.subr.mxu0 0.0
    %5487 = vmatpush2.msra.mxu0 0.0
    %5488 = vmatprep.subr.mxu0 0.0
    %5489 = vmatpush2.msra.mxu0 0.0
    %5490 = vmatprep.subr.mxu0 0.0
    %5491 = vmatpush2.msra.mxu0 0.0
    %5492 = vmatprep.subr.mxu0 0.0
    %5493 = vmatpush2.msra.mxu0 0.0
    %5494 = vmatprep.subr.mxu0 0.0
    %5495 = vmatpush2.msra.mxu0 0.0
    %5496 = vmatprep.subr.mxu0 0.0
    %5497 = vmatpush2.msra.mxu0 0.0
    %5498 = vmatprep.subr.mxu0 0.0
    %5499 = vmatpush2.msra.mxu0 0.0
    %5500 = vmatprep.subr.mxu0 0.0
    %5501 = vmatpush2.msra.mxu0 0.0
    %5502 = vmatprep.subr.mxu0 0.0
    %5503 = vmatpush2.msra.mxu0 0.0
    %5504 = vmatprep.subr.mxu0 0.0
    %5505 = vmatpush2.msra.mxu0 0.0
    %5506 = vmatprep.subr.mxu0 0.0
    %5507 = vmatpush2.msra.mxu0 0.0
    %5508 = vmatprep.subr.mxu0 0.0
    %5509 = vmatpush2.msra.mxu0 0.0
    %5510 = vmatprep.subr.mxu0 0.0
    %5511 = vmatpush2.msra.mxu0 0.0
    %5512 = vmatprep.subr.mxu0 0.0
    %5513 = vmatpush2.msra.mxu0 0.0
    %5514 = vmatprep.mubr.f32.mxu0 0.0
    %5515 = vmatmul.mubr.f32.gmra.mxu0 %v5445
    %v5516 = vpop.f32.mrf.mxu0
    %v5517 = vadd.f32 0.0, %v5516
    %v5518 = vpop.f32.mrf.mxu0
    %5519 = vmatprep.mubr.f32.mxu0 0.0
    %5520 = vmatmul.mubr.f32.gmra.mxu0 %v5448
    %v5521 = vpop.f32.mrf.mxu0
    %v5522 = vadd.f32 0.0, %v5521
    %v5523 = vpop.f32.mrf.mxu0
    %5524 = vdwg.mxu0
    %v5526 = vsel %vm2202, %v5442, 0
    %v5529 = vsel %vm2202, %v5443, 0
    %5531 = vmatprep.subr.mxu0 0.0
    %5532 = vmatpush1.msra.mxu0 0.0
    %5533 = vmatprep.subr.mxu0 0.0
    %5534 = vmatpush1.msra.mxu0 0.0
    %5535 = vmatprep.subr.mxu0 0.0
    %5536 = vmatpush1.msra.mxu0 0.0
    %5537 = vmatprep.subr.mxu0 0.0
    %5538 = vmatpush1.msra.mxu0 0.0
    %5539 = vmatprep.subr.mxu0 0.0
    %5540 = vmatpush1.msra.mxu0 0.0
    %5541 = vmatprep.subr.mxu0 0.0
    %5542 = vmatpush1.msra.mxu0 0.0
    %5543 = vmatprep.subr.mxu0 0.0
    %5544 = vmatpush1.msra.mxu0 0.0
    %5545 = vmatprep.subr.mxu0 0.0
    %5546 = vmatpush1.msra.mxu0 0.0
    %5547 = vmatprep.subr.mxu0 0.0
    %5548 = vmatpush1.msra.mxu0 0.0
    %5549 = vmatprep.subr.mxu0 0.0
    %5550 = vmatpush1.msra.mxu0 0.0
    %5551 = vmatprep.subr.mxu0 0.0
    %5552 = vmatpush1.msra.mxu0 0.0
    %5553 = vmatprep.subr.mxu0 0.0
    %5554 = vmatpush1.msra.mxu0 0.0
    %5555 = vmatprep.subr.mxu0 0.0
    %5556 = vmatpush1.msra.mxu0 0.0
    %5557 = vmatprep.subr.mxu0 0.0
    %5558 = vmatpush1.msra.mxu0 0.0
    %5559 = vmatprep.subr.mxu0 0.0
    %5560 = vmatpush1.msra.mxu0 %v5186
    %5561 = vmatprep.subr.mxu0 0.0
    %5562 = vmatpush1.msra.mxu0 %v5183
    %5563 = vmatprep.subr.mxu0 0.0
    %5564 = vmatpush2.msra.mxu0 0.0
    %5565 = vmatprep.subr.mxu0 0.0
    %5566 = vmatpush2.msra.mxu0 0.0
    %5567 = vmatprep.subr.mxu0 0.0
    %5568 = vmatpush2.msra.mxu0 0.0
    %5569 = vmatprep.subr.mxu0 0.0
    %5570 = vmatpush2.msra.mxu0 0.0
    %5571 = vmatprep.subr.mxu0 0.0
    %5572 = vmatpush2.msra.mxu0 0.0
    %5573 = vmatprep.subr.mxu0 0.0
    %5574 = vmatpush2.msra.mxu0 0.0
    %5575 = vmatprep.subr.mxu0 0.0
    %5576 = vmatpush2.msra.mxu0 0.0
    %5577 = vmatprep.subr.mxu0 0.0
    %5578 = vmatpush2.msra.mxu0 0.0
    %5579 = vmatprep.subr.mxu0 0.0
    %5580 = vmatpush2.msra.mxu0 0.0
    %5581 = vmatprep.subr.mxu0 0.0
    %5582 = vmatpush2.msra.mxu0 0.0
    %5583 = vmatprep.subr.mxu0 0.0
    %5584 = vmatpush2.msra.mxu0 0.0
    %5585 = vmatprep.subr.mxu0 0.0
    %5586 = vmatpush2.msra.mxu0 0.0
    %5587 = vmatprep.subr.mxu0 0.0
    %5588 = vmatpush2.msra.mxu0 0.0
    %5589 = vmatprep.subr.mxu0 0.0
    %5590 = vmatpush2.msra.mxu0 0.0
    %5591 = vmatprep.subr.mxu0 0.0
    %5592 = vmatpush2.msra.mxu0 0.0
    %5593 = vmatprep.subr.mxu0 0.0
    %5594 = vmatpush2.msra.mxu0 0.0
    %5595 = vmatprep.mubr.f32.mxu0 0.0
    %5596 = vmatmul.mubr.f32.gmra.mxu0 %v5526
    %v5597 = vpop.f32.mrf.mxu0
    %v5598 = vadd.f32 0.0, %v5597
    %v5599 = vpop.f32.mrf.mxu0
    %5600 = vmatprep.mubr.f32.mxu0 0.0
    %5601 = vmatmul.mubr.f32.gmra.mxu0 %v5529
    %v5602 = vpop.f32.mrf.mxu0
    %v5603 = vadd.f32 0.0, %v5602
    %v5604 = vpop.f32.mrf.mxu0
    %5605 = vdwg.mxu0
    %v5606 = vpack.c.bf16 %v5522, %v5517
    %v5607 = vpack.c.bf16 %v5603, %v5598
    %v5612 = vunpack.c.l.b16 %v5190
    %v5613 = vunpack.c.l.b16 %v5191
    %v5614 = vunpack.c.l.b16 %v5192
    %v5615 = vunpack.c.l.b16 %v5193
    %v5616 = vpack.c.b16 %v5613, %v5612
    %v5617 = vpack.c.b16 %v5615, %v5614
    %v5621 = vsel %vm2019, %v5606, 0
    %v5624 = vsel %vm2019, %v5607, 0
    %5626 = vmatprep.subr.bf16.mxu0 0
    %5627 = vmatpush1.bf16.msra.mxu0 0
    %5628 = vmatprep.subr.bf16.mxu0 0
    %5629 = vmatpush1.bf16.msra.mxu0 0
    %5630 = vmatprep.subr.bf16.mxu0 0
    %5631 = vmatpush1.bf16.msra.mxu0 0
    %5632 = vmatprep.subr.bf16.mxu0 0
    %5633 = vmatpush1.bf16.msra.mxu0 0
    %5634 = vmatprep.subr.bf16.mxu0 0
    %5635 = vmatpush1.bf16.msra.mxu0 0
    %5636 = vmatprep.subr.bf16.mxu0 0
    %5637 = vmatpush1.bf16.msra.mxu0 0
    %5638 = vmatprep.subr.bf16.mxu0 0
    %5639 = vmatpush1.bf16.msra.mxu0 %v5617
    %5640 = vmatprep.subr.bf16.mxu0 0
    %5641 = vmatpush1.bf16.msra.mxu0 %v5616
    %5642 = vmatprep.subr.bf16.mxu0 0
    %5643 = vmatpush2.bf16.msra.mxu0 0
    %5644 = vmatprep.subr.bf16.mxu0 0
    %5645 = vmatpush2.bf16.msra.mxu0 0
    %5646 = vmatprep.subr.bf16.mxu0 0
    %5647 = vmatpush2.bf16.msra.mxu0 0
    %5648 = vmatprep.subr.bf16.mxu0 0
    %5649 = vmatpush2.bf16.msra.mxu0 0
    %5650 = vmatprep.subr.bf16.mxu0 0
    %5651 = vmatpush2.bf16.msra.mxu0 0
    %5652 = vmatprep.subr.bf16.mxu0 0
    %5653 = vmatpush2.bf16.msra.mxu0 0
    %5654 = vmatprep.subr.bf16.mxu0 0
    %5655 = vmatpush2.bf16.msra.mxu0 0
    %5656 = vmatprep.subr.bf16.mxu0 0
    %5657 = vmatpush2.bf16.msra.mxu0 0
    %5658 = vmatprep.mubr.bf16.mxu0 0
    %5659 = vmatmul.mubr.bf16.gmra.mxu0 %v5621
    %v5660 = vpop.f32.mrf.mxu0
    %v5661 = vadd.f32 0.0, %v5660
    %v5662 = vpop.f32.mrf.mxu0
    %v5663 = vpop.f32.mrf.mxu0
    %v5664 = vadd.f32 0.0, %v5663
    %v5665 = vpop.f32.mrf.mxu0
    %5666 = vmatprep.mubr.bf16.mxu0 0
    %5667 = vmatmul.mubr.bf16.gmra.mxu0 %v5624
    %v5668 = vpop.f32.mrf.mxu0
    %v5669 = vadd.f32 0.0, %v5668
    %v5670 = vpop.f32.mrf.mxu0
    %v5671 = vpop.f32.mrf.mxu0
    %v5672 = vadd.f32 0.0, %v5671
    %v5673 = vpop.f32.mrf.mxu0
    %5674 = vdwg.mxu0
    %v5675 = vadd.f32 %v5214, %v5661
    %v5676 = vadd.f32 %v5215, %v5664
    %v5677 = vadd.f32 %v5216, %v5669
    %v5678 = vadd.f32 %v5217, %v5672
    %5679 = vrot.lane.b32.xlu0 %v5122, 96
    %v5680 = vpop.permute.xlu0 %5679
    %5681 = vrot.lane.b32.xlu0 %v5126, 96
    %v5682 = vpop.permute.xlu0 %5681
    %5683 = vrot.lane.b32.xlu0 %v5124, 96
    %v5684 = vpop.permute.xlu0 %5683
    %5685 = vrot.lane.b32.xlu0 %v5128, 96
    %v5686 = vpop.permute.xlu0 %5685
    %v5687 = vsel %vm2019, %v5680, 0
    %v5689 = vsel %vm2019, %v5682, 0
    %v5691 = vsel %vm2019, %v5684, 0
    %v5693 = vsel %vm2019, %v5686, 0
    %5695 = vmatprep.subr.mxu0 0.0
    %5696 = vmatpush1.xpose.msra.mxu0 0.0
    %5697 = vmatprep.subr.mxu0 0.0
    %5698 = vmatpush1.xpose.msra.mxu0 0.0
    %5699 = vmatprep.subr.mxu0 0.0
    %5700 = vmatpush1.xpose.msra.mxu0 0.0
    %5701 = vmatprep.subr.mxu0 0.0
    %5702 = vmatpush1.xpose.msra.mxu0 0.0
    %5703 = vmatprep.subr.mxu0 0.0
    %5704 = vmatpush1.xpose.msra.mxu0 0.0
    %5705 = vmatprep.subr.mxu0 0.0
    %5706 = vmatpush1.xpose.msra.mxu0 0.0
    %5707 = vmatprep.subr.mxu0 0.0
    %5708 = vmatpush1.xpose.msra.mxu0 0.0
    %5709 = vmatprep.subr.mxu0 0.0
    %5710 = vmatpush1.xpose.msra.mxu0 0.0
    %5711 = vmatprep.subr.mxu0 0.0
    %5712 = vmatpush1.xpose.msra.mxu0 0.0
    %5713 = vmatprep.subr.mxu0 0.0
    %5714 = vmatpush1.xpose.msra.mxu0 0.0
    %5715 = vmatprep.subr.mxu0 0.0
    %5716 = vmatpush1.xpose.msra.mxu0 0.0
    %5717 = vmatprep.subr.mxu0 0.0
    %5718 = vmatpush1.xpose.msra.mxu0 0.0
    %5719 = vmatprep.subr.mxu0 0.0
    %5720 = vmatpush1.xpose.msra.mxu0 0.0
    %5721 = vmatprep.subr.mxu0 0.0
    %5722 = vmatpush1.xpose.msra.mxu0 0.0
    %5723 = vmatprep.subr.mxu0 0.0
    %5724 = vmatpush1.xpose.msra.mxu0 %v5693
    %5725 = vmatprep.subr.mxu0 0.0
    %5726 = vmatpush1.xpose.msra.mxu0 %v5691
    %5727 = vmatprep.subr.mxu0 0.0
    %5728 = vmatpush2.xpose.msra.mxu0 0.0
    %5729 = vmatprep.subr.mxu0 0.0
    %5730 = vmatpush2.xpose.msra.mxu0 0.0
    %5731 = vmatprep.subr.mxu0 0.0
    %5732 = vmatpush2.xpose.msra.mxu0 0.0
    %5733 = vmatprep.subr.mxu0 0.0
    %5734 = vmatpush2.xpose.msra.mxu0 0.0
    %5735 = vmatprep.subr.mxu0 0.0
    %5736 = vmatpush2.xpose.msra.mxu0 0.0
    %5737 = vmatprep.subr.mxu0 0.0
    %5738 = vmatpush2.xpose.msra.mxu0 0.0
    %5739 = vmatprep.subr.mxu0 0.0
    %5740 = vmatpush2.xpose.msra.mxu0 0.0
    %5741 = vmatprep.subr.mxu0 0.0
    %5742 = vmatpush2.xpose.msra.mxu0 0.0
    %5743 = vmatprep.subr.mxu0 0.0
    %5744 = vmatpush2.xpose.msra.mxu0 0.0
    %5745 = vmatprep.subr.mxu0 0.0
    %5746 = vmatpush2.xpose.msra.mxu0 0.0
    %5747 = vmatprep.subr.mxu0 0.0
    %5748 = vmatpush2.xpose.msra.mxu0 0.0
    %5749 = vmatprep.subr.mxu0 0.0
    %5750 = vmatpush2.xpose.msra.mxu0 0.0
    %5751 = vmatprep.subr.mxu0 0.0
    %5752 = vmatpush2.xpose.msra.mxu0 0.0
    %5753 = vmatprep.subr.mxu0 0.0
    %5754 = vmatpush2.xpose.msra.mxu0 0.0
    %5755 = vmatprep.subr.mxu0 0.0
    %5756 = vmatpush2.xpose.msra.mxu0 0.0
    %5757 = vmatprep.subr.mxu0 0.0
    %5758 = vmatpush2.xpose.msra.mxu0 0.0
    %5759 = vmatprep.mubr.f32.mxu0 0.0
    %5760 = vmatmul.mubr.f32.gmra.mxu0 %v5687
    %v5761 = vpop.f32.mrf.mxu0
    %v5762 = vadd.f32 0.0, %v5761
    %v5763 = vpop.f32.mrf.mxu0
    %5764 = vmatprep.mubr.f32.mxu0 0.0
    %5765 = vmatmul.mubr.f32.gmra.mxu0 %v5689
    %v5766 = vpop.f32.mrf.mxu0
    %v5767 = vadd.f32 0.0, %v5766
    %v5768 = vpop.f32.mrf.mxu0
    %5769 = vdwg.mxu0
    %5770 = vrot.lane.b32.xlu0 %v5132, 96
    %v5771 = vpop.permute.xlu0 %5770
    %5772 = vrot.lane.b32.xlu0 %v5136, 96
    %v5773 = vpop.permute.xlu0 %5772
    %5774 = vrot.lane.b32.xlu0 %v5134, 96
    %v5775 = vpop.permute.xlu0 %5774
    %5776 = vrot.lane.b32.xlu0 %v5138, 96
    %v5777 = vpop.permute.xlu0 %5776
    %v5778 = vsel %vm2019, %v5771, 0
    %v5780 = vsel %vm2019, %v5773, 0
    %v5782 = vsel %vm2019, %v5775, 0
    %v5784 = vsel %vm2019, %v5777, 0
    %5786 = vmatprep.subr.mxu0 0.0
    %5787 = vmatpush1.xpose.msra.mxu0 0.0
    %5788 = vmatprep.subr.mxu0 0.0
    %5789 = vmatpush1.xpose.msra.mxu0 0.0
    %5790 = vmatprep.subr.mxu0 0.0
    %5791 = vmatpush1.xpose.msra.mxu0 0.0
    %5792 = vmatprep.subr.mxu0 0.0
    %5793 = vmatpush1.xpose.msra.mxu0 0.0
    %5794 = vmatprep.subr.mxu0 0.0
    %5795 = vmatpush1.xpose.msra.mxu0 0.0
    %5796 = vmatprep.subr.mxu0 0.0
    %5797 = vmatpush1.xpose.msra.mxu0 0.0
    %5798 = vmatprep.subr.mxu0 0.0
    %5799 = vmatpush1.xpose.msra.mxu0 0.0
    %5800 = vmatprep.subr.mxu0 0.0
    %5801 = vmatpush1.xpose.msra.mxu0 0.0
    %5802 = vmatprep.subr.mxu0 0.0
    %5803 = vmatpush1.xpose.msra.mxu0 0.0
    %5804 = vmatprep.subr.mxu0 0.0
    %5805 = vmatpush1.xpose.msra.mxu0 0.0
    %5806 = vmatprep.subr.mxu0 0.0
    %5807 = vmatpush1.xpose.msra.mxu0 0.0
    %5808 = vmatprep.subr.mxu0 0.0
    %5809 = vmatpush1.xpose.msra.mxu0 0.0
    %5810 = vmatprep.subr.mxu0 0.0
    %5811 = vmatpush1.xpose.msra.mxu0 0.0
    %5812 = vmatprep.subr.mxu0 0.0
    %5813 = vmatpush1.xpose.msra.mxu0 0.0
    %5814 = vmatprep.subr.mxu0 0.0
    %5815 = vmatpush1.xpose.msra.mxu0 %v5784
    %5816 = vmatprep.subr.mxu0 0.0
    %5817 = vmatpush1.xpose.msra.mxu0 %v5782
    %5818 = vmatprep.subr.mxu0 0.0
    %5819 = vmatpush2.xpose.msra.mxu0 0.0
    %5820 = vmatprep.subr.mxu0 0.0
    %5821 = vmatpush2.xpose.msra.mxu0 0.0
    %5822 = vmatprep.subr.mxu0 0.0
    %5823 = vmatpush2.xpose.msra.mxu0 0.0
    %5824 = vmatprep.subr.mxu0 0.0
    %5825 = vmatpush2.xpose.msra.mxu0 0.0
    %5826 = vmatprep.subr.mxu0 0.0
    %5827 = vmatpush2.xpose.msra.mxu0 0.0
    %5828 = vmatprep.subr.mxu0 0.0
    %5829 = vmatpush2.xpose.msra.mxu0 0.0
    %5830 = vmatprep.subr.mxu0 0.0
    %5831 = vmatpush2.xpose.msra.mxu0 0.0
    %5832 = vmatprep.subr.mxu0 0.0
    %5833 = vmatpush2.xpose.msra.mxu0 0.0
    %5834 = vmatprep.subr.mxu0 0.0
    %5835 = vmatpush2.xpose.msra.mxu0 0.0
    %5836 = vmatprep.subr.mxu0 0.0
    %5837 = vmatpush2.xpose.msra.mxu0 0.0
    %5838 = vmatprep.subr.mxu0 0.0
    %5839 = vmatpush2.xpose.msra.mxu0 0.0
    %5840 = vmatprep.subr.mxu0 0.0
    %5841 = vmatpush2.xpose.msra.mxu0 0.0
    %5842 = vmatprep.subr.mxu0 0.0
    %5843 = vmatpush2.xpose.msra.mxu0 0.0
    %5844 = vmatprep.subr.mxu0 0.0
    %5845 = vmatpush2.xpose.msra.mxu0 0.0
    %5846 = vmatprep.subr.mxu0 0.0
    %5847 = vmatpush2.xpose.msra.mxu0 0.0
    %5848 = vmatprep.subr.mxu0 0.0
    %5849 = vmatpush2.xpose.msra.mxu0 0.0
    %5850 = vmatprep.mubr.f32.mxu0 0.0
    %5851 = vmatmul.mubr.f32.gmra.mxu0 %v5778
    %v5852 = vpop.f32.mrf.mxu0
    %v5853 = vadd.f32 0.0, %v5852
    %v5854 = vpop.f32.mrf.mxu0
    %5855 = vmatprep.mubr.f32.mxu0 0.0
    %5856 = vmatmul.mubr.f32.gmra.mxu0 %v5780
    %v5857 = vpop.f32.mrf.mxu0
    %v5858 = vadd.f32 0.0, %v5857
    %v5859 = vpop.f32.mrf.mxu0
    %5860 = vdwg.mxu0
    %v5861 = vmul.f32 %v5762, 0.17677669
    %v5862 = vmul.f32 %v5767, 0.17677669
    %v5863 = vmul.f32 %v5853, 0.17677669
    %v5864 = vmul.f32 %v5858, 0.17677669
    %v5865 = vadd.f32 %v5861, %v1643
    %v5866 = vadd.f32 %v5862, %v1643
    %v5867 = vadd.f32 %v5863, %v1643
    %v5868 = vadd.f32 %v5864, %v1643
    %v5869 = vsel %vm2202, %v5865, -inf
    %5870 = vmax.xlane.f32.xlu0 %v5869
    %v5871 = vpop.xlane.xlu0 %5870
    %v5872 = vsel %vm2202, %v5866, -inf
    %5873 = vmax.xlane.f32.xlu0 %v5872
    %v5874 = vpop.xlane.xlu0 %5873
    %v5875 = vsel %vm2202, %v5867, -inf
    %5876 = vmax.xlane.f32.xlu0 %v5875
    %v5877 = vpop.xlane.xlu0 %5876
    %v5878 = vsel %vm2202, %v5868, -inf
    %5879 = vmax.xlane.f32.xlu0 %v5878
    %v5880 = vpop.xlane.xlu0 %5879
    %v5881 = vsub.f32 %v5865, %v5871
    %v5882 = vsub.f32 %v5866, %v5874
    %v5883 = vsub.f32 %v5867, %v5877
    %v5884 = vsub.f32 %v5868, %v5880
    %v5885 = vmul.f32 %v5881, 1.442695
    %v5886 = vpow.pop %v5885
    %v5887 = vmul.f32 %v5882, 1.442695
    %v5888 = vpow.pop %v5887
    %v5889 = vmul.f32 %v5883, 1.442695
    %v5890 = vpow.pop %v5889
    %v5891 = vmul.f32 %v5884, 1.442695
    %v5892 = vpow.pop %v5891
    %v5893 = vsel %vm2202, %v5886, 0.0
    %5894 = vadd.xlane.f32.xlu0 %v5893
    %v5895 = vpop.xlane.xlu0 %5894
    %v5896 = vsel %vm2202, %v5888, 0.0
    %5897 = vadd.xlane.f32.xlu0 %v5896
    %v5898 = vpop.xlane.xlu0 %5897
    %v5899 = vsel %vm2202, %v5890, 0.0
    %5900 = vadd.xlane.f32.xlu0 %v5899
    %v5901 = vpop.xlane.xlu0 %5900
    %v5902 = vsel %vm2202, %v5892, 0.0
    %5903 = vadd.xlane.f32.xlu0 %v5902
    %v5904 = vpop.xlane.xlu0 %5903
    %v5905 = vrcp.pop %v5895
    %v5906 = vrcp.pop %v5898
    %v5907 = vrcp.pop %v5901
    %v5908 = vrcp.pop %v5904
    %v5909 = vmul.f32 %v5886, %v5905
    %v5910 = vmul.f32 %v5888, %v5906
    %v5911 = vmul.f32 %v5890, %v5907
    %v5912 = vmul.f32 %v5892, %v5908
    %5915 = vrot.lane.b32.xlu0 %v5175, 96
    %v5916 = vpop.permute.xlu0 %5915
    %5917 = vrot.lane.b32.xlu0 %v5178, 96
    %v5918 = vpop.permute.xlu0 %5917
    %v5922 = vsel %vm2202, %v5909, 0
    %v5925 = vsel %vm2202, %v5910, 0
    %5927 = vmatprep.subr.mxu0 0.0
    %5928 = vmatpush1.msra.mxu0 0.0
    %5929 = vmatprep.subr.mxu0 0.0
    %5930 = vmatpush1.msra.mxu0 0.0
    %5931 = vmatprep.subr.mxu0 0.0
    %5932 = vmatpush1.msra.mxu0 0.0
    %5933 = vmatprep.subr.mxu0 0.0
    %5934 = vmatpush1.msra.mxu0 0.0
    %5935 = vmatprep.subr.mxu0 0.0
    %5936 = vmatpush1.msra.mxu0 0.0
    %5937 = vmatprep.subr.mxu0 0.0
    %5938 = vmatpush1.msra.mxu0 0.0
    %5939 = vmatprep.subr.mxu0 0.0
    %5940 = vmatpush1.msra.mxu0 0.0
    %5941 = vmatprep.subr.mxu0 0.0
    %5942 = vmatpush1.msra.mxu0 0.0
    %5943 = vmatprep.subr.mxu0 0.0
    %5944 = vmatpush1.msra.mxu0 0.0
    %5945 = vmatprep.subr.mxu0 0.0
    %5946 = vmatpush1.msra.mxu0 0.0
    %5947 = vmatprep.subr.mxu0 0.0
    %5948 = vmatpush1.msra.mxu0 0.0
    %5949 = vmatprep.subr.mxu0 0.0
    %5950 = vmatpush1.msra.mxu0 0.0
    %5951 = vmatprep.subr.mxu0 0.0
    %5952 = vmatpush1.msra.mxu0 0.0
    %5953 = vmatprep.subr.mxu0 0.0
    %5954 = vmatpush1.msra.mxu0 0.0
    %5955 = vmatprep.subr.mxu0 0.0
    %5956 = vmatpush1.msra.mxu0 %v5918
    %5957 = vmatprep.subr.mxu0 0.0
    %5958 = vmatpush1.msra.mxu0 %v5916
    %5959 = vmatprep.subr.mxu0 0.0
    %5960 = vmatpush2.msra.mxu0 0.0
    %5961 = vmatprep.subr.mxu0 0.0
    %5962 = vmatpush2.msra.mxu0 0.0
    %5963 = vmatprep.subr.mxu0 0.0
    %5964 = vmatpush2.msra.mxu0 0.0
    %5965 = vmatprep.subr.mxu0 0.0
    %5966 = vmatpush2.msra.mxu0 0.0
    %5967 = vmatprep.subr.mxu0 0.0
    %5968 = vmatpush2.msra.mxu0 0.0
    %5969 = vmatprep.subr.mxu0 0.0
    %5970 = vmatpush2.msra.mxu0 0.0
    %5971 = vmatprep.subr.mxu0 0.0
    %5972 = vmatpush2.msra.mxu0 0.0
    %5973 = vmatprep.subr.mxu0 0.0
    %5974 = vmatpush2.msra.mxu0 0.0
    %5975 = vmatprep.subr.mxu0 0.0
    %5976 = vmatpush2.msra.mxu0 0.0
    %5977 = vmatprep.subr.mxu0 0.0
    %5978 = vmatpush2.msra.mxu0 0.0
    %5979 = vmatprep.subr.mxu0 0.0
    %5980 = vmatpush2.msra.mxu0 0.0
    %5981 = vmatprep.subr.mxu0 0.0
    %5982 = vmatpush2.msra.mxu0 0.0
    %5983 = vmatprep.subr.mxu0 0.0
    %5984 = vmatpush2.msra.mxu0 0.0
    %5985 = vmatprep.subr.mxu0 0.0
    %5986 = vmatpush2.msra.mxu0 0.0
    %5987 = vmatprep.subr.mxu0 0.0
    %5988 = vmatpush2.msra.mxu0 0.0
    %5989 = vmatprep.subr.mxu0 0.0
    %5990 = vmatpush2.msra.mxu0 0.0
    %5991 = vmatprep.mubr.f32.mxu0 0.0
    %5992 = vmatmul.mubr.f32.gmra.mxu0 %v5922
    %v5993 = vpop.f32.mrf.mxu0
    %v5994 = vadd.f32 0.0, %v5993
    %v5995 = vpop.f32.mrf.mxu0
    %5996 = vmatprep.mubr.f32.mxu0 0.0
    %5997 = vmatmul.mubr.f32.gmra.mxu0 %v5925
    %v5998 = vpop.f32.mrf.mxu0
    %v5999 = vadd.f32 0.0, %v5998
    %v6000 = vpop.f32.mrf.mxu0
    %6001 = vdwg.mxu0
    %6004 = vrot.lane.b32.xlu0 %v5183, 96
    %v6005 = vpop.permute.xlu0 %6004
    %6006 = vrot.lane.b32.xlu0 %v5186, 96
    %v6007 = vpop.permute.xlu0 %6006
    %v6011 = vsel %vm2202, %v5911, 0
    %v6014 = vsel %vm2202, %v5912, 0
    %6016 = vmatprep.subr.mxu0 0.0
    %6017 = vmatpush1.msra.mxu0 0.0
    %6018 = vmatprep.subr.mxu0 0.0
    %6019 = vmatpush1.msra.mxu0 0.0
    %6020 = vmatprep.subr.mxu0 0.0
    %6021 = vmatpush1.msra.mxu0 0.0
    %6022 = vmatprep.subr.mxu0 0.0
    %6023 = vmatpush1.msra.mxu0 0.0
    %6024 = vmatprep.subr.mxu0 0.0
    %6025 = vmatpush1.msra.mxu0 0.0
    %6026 = vmatprep.subr.mxu0 0.0
    %6027 = vmatpush1.msra.mxu0 0.0
    %6028 = vmatprep.subr.mxu0 0.0
    %6029 = vmatpush1.msra.mxu0 0.0
    %6030 = vmatprep.subr.mxu0 0.0
    %6031 = vmatpush1.msra.mxu0 0.0
    %6032 = vmatprep.subr.mxu0 0.0
    %6033 = vmatpush1.msra.mxu0 0.0
    %6034 = vmatprep.subr.mxu0 0.0
    %6035 = vmatpush1.msra.mxu0 0.0
    %6036 = vmatprep.subr.mxu0 0.0
    %6037 = vmatpush1.msra.mxu0 0.0
    %6038 = vmatprep.subr.mxu0 0.0
    %6039 = vmatpush1.msra.mxu0 0.0
    %6040 = vmatprep.subr.mxu0 0.0
    %6041 = vmatpush1.msra.mxu0 0.0
    %6042 = vmatprep.subr.mxu0 0.0
    %6043 = vmatpush1.msra.mxu0 0.0
    %6044 = vmatprep.subr.mxu0 0.0
    %6045 = vmatpush1.msra.mxu0 %v6007
    %6046 = vmatprep.subr.mxu0 0.0
    %6047 = vmatpush1.msra.mxu0 %v6005
    %6048 = vmatprep.subr.mxu0 0.0
    %6049 = vmatpush2.msra.mxu0 0.0
    %6050 = vmatprep.subr.mxu0 0.0
    %6051 = vmatpush2.msra.mxu0 0.0
    %6052 = vmatprep.subr.mxu0 0.0
    %6053 = vmatpush2.msra.mxu0 0.0
    %6054 = vmatprep.subr.mxu0 0.0
    %6055 = vmatpush2.msra.mxu0 0.0
    %6056 = vmatprep.subr.mxu0 0.0
    %6057 = vmatpush2.msra.mxu0 0.0
    %6058 = vmatprep.subr.mxu0 0.0
    %6059 = vmatpush2.msra.mxu0 0.0
    %6060 = vmatprep.subr.mxu0 0.0
    %6061 = vmatpush2.msra.mxu0 0.0
    %6062 = vmatprep.subr.mxu0 0.0
    %6063 = vmatpush2.msra.mxu0 0.0
    %6064 = vmatprep.subr.mxu0 0.0
    %6065 = vmatpush2.msra.mxu0 0.0
    %6066 = vmatprep.subr.mxu0 0.0
    %6067 = vmatpush2.msra.mxu0 0.0
    %6068 = vmatprep.subr.mxu0 0.0
    %6069 = vmatpush2.msra.mxu0 0.0
    %6070 = vmatprep.subr.mxu0 0.0
    %6071 = vmatpush2.msra.mxu0 0.0
    %6072 = vmatprep.subr.mxu0 0.0
    %6073 = vmatpush2.msra.mxu0 0.0
    %6074 = vmatprep.subr.mxu0 0.0
    %6075 = vmatpush2.msra.mxu0 0.0
    %6076 = vmatprep.subr.mxu0 0.0
    %6077 = vmatpush2.msra.mxu0 0.0
    %6078 = vmatprep.subr.mxu0 0.0
    %6079 = vmatpush2.msra.mxu0 0.0
    %6080 = vmatprep.mubr.f32.mxu0 0.0
    %6081 = vmatmul.mubr.f32.gmra.mxu0 %v6011
    %v6082 = vpop.f32.mrf.mxu0
    %v6083 = vadd.f32 0.0, %v6082
    %v6084 = vpop.f32.mrf.mxu0
    %6085 = vmatprep.mubr.f32.mxu0 0.0
    %6086 = vmatmul.mubr.f32.gmra.mxu0 %v6014
    %v6087 = vpop.f32.mrf.mxu0
    %v6088 = vadd.f32 0.0, %v6087
    %v6089 = vpop.f32.mrf.mxu0
    %6090 = vdwg.mxu0
    %v6091 = vpack.c.bf16 %v5999, %v5994
    %v6092 = vpack.c.bf16 %v6088, %v6083
    %v6097 = vunpack.c.l.b16 %v5194
    %v6098 = vunpack.c.l.b16 %v5195
    %v6099 = vunpack.c.l.b16 %v5196
    %v6100 = vunpack.c.l.b16 %v5197
    %v6101 = vpack.c.b16 %v6098, %v6097
    %v6102 = vpack.c.b16 %v6100, %v6099
    %v6106 = vsel %vm2019, %v6091, 0
    %v6109 = vsel %vm2019, %v6092, 0
    %6111 = vmatprep.subr.bf16.mxu0 0
    %6112 = vmatpush1.bf16.msra.mxu0 0
    %6113 = vmatprep.subr.bf16.mxu0 0
    %6114 = vmatpush1.bf16.msra.mxu0 0
    %6115 = vmatprep.subr.bf16.mxu0 0
    %6116 = vmatpush1.bf16.msra.mxu0 0
    %6117 = vmatprep.subr.bf16.mxu0 0
    %6118 = vmatpush1.bf16.msra.mxu0 0
    %6119 = vmatprep.subr.bf16.mxu0 0
    %6120 = vmatpush1.bf16.msra.mxu0 0
    %6121 = vmatprep.subr.bf16.mxu0 0
    %6122 = vmatpush1.bf16.msra.mxu0 0
    %6123 = vmatprep.subr.bf16.mxu0 0
    %6124 = vmatpush1.bf16.msra.mxu0 %v6102
    %6125 = vmatprep.subr.bf16.mxu0 0
    %6126 = vmatpush1.bf16.msra.mxu0 %v6101
    %6127 = vmatprep.subr.bf16.mxu0 0
    %6128 = vmatpush2.bf16.msra.mxu0 0
    %6129 = vmatprep.subr.bf16.mxu0 0
    %6130 = vmatpush2.bf16.msra.mxu0 0
    %6131 = vmatprep.subr.bf16.mxu0 0
    %6132 = vmatpush2.bf16.msra.mxu0 0
    %6133 = vmatprep.subr.bf16.mxu0 0
    %6134 = vmatpush2.bf16.msra.mxu0 0
    %6135 = vmatprep.subr.bf16.mxu0 0
    %6136 = vmatpush2.bf16.msra.mxu0 0
    %6137 = vmatprep.subr.bf16.mxu0 0
    %6138 = vmatpush2.bf16.msra.mxu0 0
    %6139 = vmatprep.subr.bf16.mxu0 0
    %6140 = vmatpush2.bf16.msra.mxu0 0
    %6141 = vmatprep.subr.bf16.mxu0 0
    %6142 = vmatpush2.bf16.msra.mxu0 0
    %6143 = vmatprep.mubr.bf16.mxu0 0
    %6144 = vmatmul.mubr.bf16.gmra.mxu0 %v6106
    %v6145 = vpop.f32.mrf.mxu0
    %v6146 = vadd.f32 0.0, %v6145
    %v6147 = vpop.f32.mrf.mxu0
    %v6148 = vpop.f32.mrf.mxu0
    %v6149 = vadd.f32 0.0, %v6148
    %v6150 = vpop.f32.mrf.mxu0
    %6151 = vmatprep.mubr.bf16.mxu0 0
    %6152 = vmatmul.mubr.bf16.gmra.mxu0 %v6109
    %v6153 = vpop.f32.mrf.mxu0
    %v6154 = vadd.f32 0.0, %v6153
    %v6155 = vpop.f32.mrf.mxu0
    %v6156 = vpop.f32.mrf.mxu0
    %v6157 = vadd.f32 0.0, %v6156
    %v6158 = vpop.f32.mrf.mxu0
    %6159 = vdwg.mxu0
    %v6160 = vadd.f32 %v5675, %v6146
    %v6161 = vadd.f32 %v5676, %v6149
    %v6162 = vadd.f32 %v5677, %v6154
    %v6163 = vadd.f32 %v5678, %v6157
    %6164 = vrot.lane.b32.xlu0 %v5122, 64
    %v6165 = vpop.permute.xlu0 %6164
    %6166 = vrot.lane.b32.xlu0 %v5126, 64
    %v6167 = vpop.permute.xlu0 %6166
    %6168 = vrot.lane.b32.xlu0 %v5124, 64
    %v6169 = vpop.permute.xlu0 %6168
    %6170 = vrot.lane.b32.xlu0 %v5128, 64
    %v6171 = vpop.permute.xlu0 %6170
    %v6172 = vsel %vm2019, %v6165, 0
    %v6174 = vsel %vm2019, %v6167, 0
    %v6176 = vsel %vm2019, %v6169, 0
    %v6178 = vsel %vm2019, %v6171, 0
    %6180 = vmatprep.subr.mxu0 0.0
    %6181 = vmatpush1.xpose.msra.mxu0 0.0
    %6182 = vmatprep.subr.mxu0 0.0
    %6183 = vmatpush1.xpose.msra.mxu0 0.0
    %6184 = vmatprep.subr.mxu0 0.0
    %6185 = vmatpush1.xpose.msra.mxu0 0.0
    %6186 = vmatprep.subr.mxu0 0.0
    %6187 = vmatpush1.xpose.msra.mxu0 0.0
    %6188 = vmatprep.subr.mxu0 0.0
    %6189 = vmatpush1.xpose.msra.mxu0 0.0
    %6190 = vmatprep.subr.mxu0 0.0
    %6191 = vmatpush1.xpose.msra.mxu0 0.0
    %6192 = vmatprep.subr.mxu0 0.0
    %6193 = vmatpush1.xpose.msra.mxu0 0.0
    %6194 = vmatprep.subr.mxu0 0.0
    %6195 = vmatpush1.xpose.msra.mxu0 0.0
    %6196 = vmatprep.subr.mxu0 0.0
    %6197 = vmatpush1.xpose.msra.mxu0 0.0
    %6198 = vmatprep.subr.mxu0 0.0
    %6199 = vmatpush1.xpose.msra.mxu0 0.0
    %6200 = vmatprep.subr.mxu0 0.0
    %6201 = vmatpush1.xpose.msra.mxu0 0.0
    %6202 = vmatprep.subr.mxu0 0.0
    %6203 = vmatpush1.xpose.msra.mxu0 0.0
    %6204 = vmatprep.subr.mxu0 0.0
    %6205 = vmatpush1.xpose.msra.mxu0 0.0
    %6206 = vmatprep.subr.mxu0 0.0
    %6207 = vmatpush1.xpose.msra.mxu0 0.0
    %6208 = vmatprep.subr.mxu0 0.0
    %6209 = vmatpush1.xpose.msra.mxu0 %v6178
    %6210 = vmatprep.subr.mxu0 0.0
    %6211 = vmatpush1.xpose.msra.mxu0 %v6176
    %6212 = vmatprep.subr.mxu0 0.0
    %6213 = vmatpush2.xpose.msra.mxu0 0.0
    %6214 = vmatprep.subr.mxu0 0.0
    %6215 = vmatpush2.xpose.msra.mxu0 0.0
    %6216 = vmatprep.subr.mxu0 0.0
    %6217 = vmatpush2.xpose.msra.mxu0 0.0
    %6218 = vmatprep.subr.mxu0 0.0
    %6219 = vmatpush2.xpose.msra.mxu0 0.0
    %6220 = vmatprep.subr.mxu0 0.0
    %6221 = vmatpush2.xpose.msra.mxu0 0.0
    %6222 = vmatprep.subr.mxu0 0.0
    %6223 = vmatpush2.xpose.msra.mxu0 0.0
    %6224 = vmatprep.subr.mxu0 0.0
    %6225 = vmatpush2.xpose.msra.mxu0 0.0
    %6226 = vmatprep.subr.mxu0 0.0
    %6227 = vmatpush2.xpose.msra.mxu0 0.0
    %6228 = vmatprep.subr.mxu0 0.0
    %6229 = vmatpush2.xpose.msra.mxu0 0.0
    %6230 = vmatprep.subr.mxu0 0.0
    %6231 = vmatpush2.xpose.msra.mxu0 0.0
    %6232 = vmatprep.subr.mxu0 0.0
    %6233 = vmatpush2.xpose.msra.mxu0 0.0
    %6234 = vmatprep.subr.mxu0 0.0
    %6235 = vmatpush2.xpose.msra.mxu0 0.0
    %6236 = vmatprep.subr.mxu0 0.0
    %6237 = vmatpush2.xpose.msra.mxu0 0.0
    %6238 = vmatprep.subr.mxu0 0.0
    %6239 = vmatpush2.xpose.msra.mxu0 0.0
    %6240 = vmatprep.subr.mxu0 0.0
    %6241 = vmatpush2.xpose.msra.mxu0 0.0
    %6242 = vmatprep.subr.mxu0 0.0
    %6243 = vmatpush2.xpose.msra.mxu0 0.0
    %6244 = vmatprep.mubr.f32.mxu0 0.0
    %6245 = vmatmul.mubr.f32.gmra.mxu0 %v6172
    %v6246 = vpop.f32.mrf.mxu0
    %v6247 = vadd.f32 0.0, %v6246
    %v6248 = vpop.f32.mrf.mxu0
    %6249 = vmatprep.mubr.f32.mxu0 0.0
    %6250 = vmatmul.mubr.f32.gmra.mxu0 %v6174
    %v6251 = vpop.f32.mrf.mxu0
    %v6252 = vadd.f32 0.0, %v6251
    %v6253 = vpop.f32.mrf.mxu0
    %6254 = vdwg.mxu0
    %6255 = vrot.lane.b32.xlu0 %v5132, 64
    %v6256 = vpop.permute.xlu0 %6255
    %6257 = vrot.lane.b32.xlu0 %v5136, 64
    %v6258 = vpop.permute.xlu0 %6257
    %6259 = vrot.lane.b32.xlu0 %v5134, 64
    %v6260 = vpop.permute.xlu0 %6259
    %6261 = vrot.lane.b32.xlu0 %v5138, 64
    %v6262 = vpop.permute.xlu0 %6261
    %v6263 = vsel %vm2019, %v6256, 0
    %v6265 = vsel %vm2019, %v6258, 0
    %v6267 = vsel %vm2019, %v6260, 0
    %v6269 = vsel %vm2019, %v6262, 0
    %6271 = vmatprep.subr.mxu0 0.0
    %6272 = vmatpush1.xpose.msra.mxu0 0.0
    %6273 = vmatprep.subr.mxu0 0.0
    %6274 = vmatpush1.xpose.msra.mxu0 0.0
    %6275 = vmatprep.subr.mxu0 0.0
    %6276 = vmatpush1.xpose.msra.mxu0 0.0
    %6277 = vmatprep.subr.mxu0 0.0
    %6278 = vmatpush1.xpose.msra.mxu0 0.0
    %6279 = vmatprep.subr.mxu0 0.0
    %6280 = vmatpush1.xpose.msra.mxu0 0.0
    %6281 = vmatprep.subr.mxu0 0.0
    %6282 = vmatpush1.xpose.msra.mxu0 0.0
    %6283 = vmatprep.subr.mxu0 0.0
    %6284 = vmatpush1.xpose.msra.mxu0 0.0
    %6285 = vmatprep.subr.mxu0 0.0
    %6286 = vmatpush1.xpose.msra.mxu0 0.0
    %6287 = vmatprep.subr.mxu0 0.0
    %6288 = vmatpush1.xpose.msra.mxu0 0.0
    %6289 = vmatprep.subr.mxu0 0.0
    %6290 = vmatpush1.xpose.msra.mxu0 0.0
    %6291 = vmatprep.subr.mxu0 0.0
    %6292 = vmatpush1.xpose.msra.mxu0 0.0
    %6293 = vmatprep.subr.mxu0 0.0
    %6294 = vmatpush1.xpose.msra.mxu0 0.0
    %6295 = vmatprep.subr.mxu0 0.0
    %6296 = vmatpush1.xpose.msra.mxu0 0.0
    %6297 = vmatprep.subr.mxu0 0.0
    %6298 = vmatpush1.xpose.msra.mxu0 0.0
    %6299 = vmatprep.subr.mxu0 0.0
    %6300 = vmatpush1.xpose.msra.mxu0 %v6269
    %6301 = vmatprep.subr.mxu0 0.0
    %6302 = vmatpush1.xpose.msra.mxu0 %v6267
    %6303 = vmatprep.subr.mxu0 0.0
    %6304 = vmatpush2.xpose.msra.mxu0 0.0
    %6305 = vmatprep.subr.mxu0 0.0
    %6306 = vmatpush2.xpose.msra.mxu0 0.0
    %6307 = vmatprep.subr.mxu0 0.0
    %6308 = vmatpush2.xpose.msra.mxu0 0.0
    %6309 = vmatprep.subr.mxu0 0.0
    %6310 = vmatpush2.xpose.msra.mxu0 0.0
    %6311 = vmatprep.subr.mxu0 0.0
    %6312 = vmatpush2.xpose.msra.mxu0 0.0
    %6313 = vmatprep.subr.mxu0 0.0
    %6314 = vmatpush2.xpose.msra.mxu0 0.0
    %6315 = vmatprep.subr.mxu0 0.0
    %6316 = vmatpush2.xpose.msra.mxu0 0.0
    %6317 = vmatprep.subr.mxu0 0.0
    %6318 = vmatpush2.xpose.msra.mxu0 0.0
    %6319 = vmatprep.subr.mxu0 0.0
    %6320 = vmatpush2.xpose.msra.mxu0 0.0
    %6321 = vmatprep.subr.mxu0 0.0
    %6322 = vmatpush2.xpose.msra.mxu0 0.0
    %6323 = vmatprep.subr.mxu0 0.0
    %6324 = vmatpush2.xpose.msra.mxu0 0.0
    %6325 = vmatprep.subr.mxu0 0.0
    %6326 = vmatpush2.xpose.msra.mxu0 0.0
    %6327 = vmatprep.subr.mxu0 0.0
    %6328 = vmatpush2.xpose.msra.mxu0 0.0
    %6329 = vmatprep.subr.mxu0 0.0
    %6330 = vmatpush2.xpose.msra.mxu0 0.0
    %6331 = vmatprep.subr.mxu0 0.0
    %6332 = vmatpush2.xpose.msra.mxu0 0.0
    %6333 = vmatprep.subr.mxu0 0.0
    %6334 = vmatpush2.xpose.msra.mxu0 0.0
    %6335 = vmatprep.mubr.f32.mxu0 0.0
    %6336 = vmatmul.mubr.f32.gmra.mxu0 %v6263
    %v6337 = vpop.f32.mrf.mxu0
    %v6338 = vadd.f32 0.0, %v6337
    %v6339 = vpop.f32.mrf.mxu0
    %6340 = vmatprep.mubr.f32.mxu0 0.0
    %6341 = vmatmul.mubr.f32.gmra.mxu0 %v6265
    %v6342 = vpop.f32.mrf.mxu0
    %v6343 = vadd.f32 0.0, %v6342
    %v6344 = vpop.f32.mrf.mxu0
    %6345 = vdwg.mxu0
    %v6346 = vmul.f32 %v6247, 0.17677669
    %v6347 = vmul.f32 %v6252, 0.17677669
    %v6348 = vmul.f32 %v6338, 0.17677669
    %v6349 = vmul.f32 %v6343, 0.17677669
    %v6350 = vadd.f32 %v6346, %v1643
    %v6351 = vadd.f32 %v6347, %v1643
    %v6352 = vadd.f32 %v6348, %v1643
    %v6353 = vadd.f32 %v6349, %v1643
    %v6354 = vsel %vm2202, %v6350, -inf
    %6355 = vmax.xlane.f32.xlu0 %v6354
    %v6356 = vpop.xlane.xlu0 %6355
    %v6357 = vsel %vm2202, %v6351, -inf
    %6358 = vmax.xlane.f32.xlu0 %v6357
    %v6359 = vpop.xlane.xlu0 %6358
    %v6360 = vsel %vm2202, %v6352, -inf
    %6361 = vmax.xlane.f32.xlu0 %v6360
    %v6362 = vpop.xlane.xlu0 %6361
    %v6363 = vsel %vm2202, %v6353, -inf
    %6364 = vmax.xlane.f32.xlu0 %v6363
    %v6365 = vpop.xlane.xlu0 %6364
    %v6366 = vsub.f32 %v6350, %v6356
    %v6367 = vsub.f32 %v6351, %v6359
    %v6368 = vsub.f32 %v6352, %v6362
    %v6369 = vsub.f32 %v6353, %v6365
    %v6370 = vmul.f32 %v6366, 1.442695
    %v6371 = vpow.pop %v6370
    %v6372 = vmul.f32 %v6367, 1.442695
    %v6373 = vpow.pop %v6372
    %v6374 = vmul.f32 %v6368, 1.442695
    %v6375 = vpow.pop %v6374
    %v6376 = vmul.f32 %v6369, 1.442695
    %v6377 = vpow.pop %v6376
    %v6378 = vsel %vm2202, %v6371, 0.0
    %6379 = vadd.xlane.f32.xlu0 %v6378
    %v6380 = vpop.xlane.xlu0 %6379
    %v6381 = vsel %vm2202, %v6373, 0.0
    %6382 = vadd.xlane.f32.xlu0 %v6381
    %v6383 = vpop.xlane.xlu0 %6382
    %v6384 = vsel %vm2202, %v6375, 0.0
    %6385 = vadd.xlane.f32.xlu0 %v6384
    %v6386 = vpop.xlane.xlu0 %6385
    %v6387 = vsel %vm2202, %v6377, 0.0
    %6388 = vadd.xlane.f32.xlu0 %v6387
    %v6389 = vpop.xlane.xlu0 %6388
    %v6390 = vrcp.pop %v6380
    %v6391 = vrcp.pop %v6383
    %v6392 = vrcp.pop %v6386
    %v6393 = vrcp.pop %v6389
    %v6394 = vmul.f32 %v6371, %v6390
    %v6395 = vmul.f32 %v6373, %v6391
    %v6396 = vmul.f32 %v6375, %v6392
    %v6397 = vmul.f32 %v6377, %v6393
    %6398 = vrot.lane.b32.xlu0 %v5175, 64
    %v6399 = vpop.permute.xlu0 %6398
    %6400 = vrot.lane.b32.xlu0 %v5178, 64
    %v6401 = vpop.permute.xlu0 %6400
    %v6405 = vsel %vm2202, %v6394, 0
    %v6408 = vsel %vm2202, %v6395, 0
    %6410 = vmatprep.subr.mxu0 0.0
    %6411 = vmatpush1.msra.mxu0 0.0
    %6412 = vmatprep.subr.mxu0 0.0
    %6413 = vmatpush1.msra.mxu0 0.0
    %6414 = vmatprep.subr.mxu0 0.0
    %6415 = vmatpush1.msra.mxu0 0.0
    %6416 = vmatprep.subr.mxu0 0.0
    %6417 = vmatpush1.msra.mxu0 0.0
    %6418 = vmatprep.subr.mxu0 0.0
    %6419 = vmatpush1.msra.mxu0 0.0
    %6420 = vmatprep.subr.mxu0 0.0
    %6421 = vmatpush1.msra.mxu0 0.0
    %6422 = vmatprep.subr.mxu0 0.0
    %6423 = vmatpush1.msra.mxu0 0.0
    %6424 = vmatprep.subr.mxu0 0.0
    %6425 = vmatpush1.msra.mxu0 0.0
    %6426 = vmatprep.subr.mxu0 0.0
    %6427 = vmatpush1.msra.mxu0 0.0
    %6428 = vmatprep.subr.mxu0 0.0
    %6429 = vmatpush1.msra.mxu0 0.0
    %6430 = vmatprep.subr.mxu0 0.0
    %6431 = vmatpush1.msra.mxu0 0.0
    %6432 = vmatprep.subr.mxu0 0.0
    %6433 = vmatpush1.msra.mxu0 0.0
    %6434 = vmatprep.subr.mxu0 0.0
    %6435 = vmatpush1.msra.mxu0 0.0
    %6436 = vmatprep.subr.mxu0 0.0
    %6437 = vmatpush1.msra.mxu0 0.0
    %6438 = vmatprep.subr.mxu0 0.0
    %6439 = vmatpush1.msra.mxu0 %v6401
    %6440 = vmatprep.subr.mxu0 0.0
    %6441 = vmatpush1.msra.mxu0 %v6399
    %6442 = vmatprep.subr.mxu0 0.0
    %6443 = vmatpush2.msra.mxu0 0.0
    %6444 = vmatprep.subr.mxu0 0.0
    %6445 = vmatpush2.msra.mxu0 0.0
    %6446 = vmatprep.subr.mxu0 0.0
    %6447 = vmatpush2.msra.mxu0 0.0
    %6448 = vmatprep.subr.mxu0 0.0
    %6449 = vmatpush2.msra.mxu0 0.0
    %6450 = vmatprep.subr.mxu0 0.0
    %6451 = vmatpush2.msra.mxu0 0.0
    %6452 = vmatprep.subr.mxu0 0.0
    %6453 = vmatpush2.msra.mxu0 0.0
    %6454 = vmatprep.subr.mxu0 0.0
    %6455 = vmatpush2.msra.mxu0 0.0
    %6456 = vmatprep.subr.mxu0 0.0
    %6457 = vmatpush2.msra.mxu0 0.0
    %6458 = vmatprep.subr.mxu0 0.0
    %6459 = vmatpush2.msra.mxu0 0.0
    %6460 = vmatprep.subr.mxu0 0.0
    %6461 = vmatpush2.msra.mxu0 0.0
    %6462 = vmatprep.subr.mxu0 0.0
    %6463 = vmatpush2.msra.mxu0 0.0
    %6464 = vmatprep.subr.mxu0 0.0
    %6465 = vmatpush2.msra.mxu0 0.0
    %6466 = vmatprep.subr.mxu0 0.0
    %6467 = vmatpush2.msra.mxu0 0.0
    %6468 = vmatprep.subr.mxu0 0.0
    %6469 = vmatpush2.msra.mxu0 0.0
    %6470 = vmatprep.subr.mxu0 0.0
    %6471 = vmatpush2.msra.mxu0 0.0
    %6472 = vmatprep.subr.mxu0 0.0
    %6473 = vmatpush2.msra.mxu0 0.0
    %6474 = vmatprep.mubr.f32.mxu0 0.0
    %6475 = vmatmul.mubr.f32.gmra.mxu0 %v6405
    %v6476 = vpop.f32.mrf.mxu0
    %v6477 = vadd.f32 0.0, %v6476
    %v6478 = vpop.f32.mrf.mxu0
    %6479 = vmatprep.mubr.f32.mxu0 0.0
    %6480 = vmatmul.mubr.f32.gmra.mxu0 %v6408
    %v6481 = vpop.f32.mrf.mxu0
    %v6482 = vadd.f32 0.0, %v6481
    %v6483 = vpop.f32.mrf.mxu0
    %6484 = vdwg.mxu0
    %6485 = vrot.lane.b32.xlu0 %v5183, 64
    %v6486 = vpop.permute.xlu0 %6485
    %6487 = vrot.lane.b32.xlu0 %v5186, 64
    %v6488 = vpop.permute.xlu0 %6487
    %v6492 = vsel %vm2202, %v6396, 0
    %v6495 = vsel %vm2202, %v6397, 0
    %6497 = vmatprep.subr.mxu0 0.0
    %6498 = vmatpush1.msra.mxu0 0.0
    %6499 = vmatprep.subr.mxu0 0.0
    %6500 = vmatpush1.msra.mxu0 0.0
    %6501 = vmatprep.subr.mxu0 0.0
    %6502 = vmatpush1.msra.mxu0 0.0
    %6503 = vmatprep.subr.mxu0 0.0
    %6504 = vmatpush1.msra.mxu0 0.0
    %6505 = vmatprep.subr.mxu0 0.0
    %6506 = vmatpush1.msra.mxu0 0.0
    %6507 = vmatprep.subr.mxu0 0.0
    %6508 = vmatpush1.msra.mxu0 0.0
    %6509 = vmatprep.subr.mxu0 0.0
    %6510 = vmatpush1.msra.mxu0 0.0
    %6511 = vmatprep.subr.mxu0 0.0
    %6512 = vmatpush1.msra.mxu0 0.0
    %6513 = vmatprep.subr.mxu0 0.0
    %6514 = vmatpush1.msra.mxu0 0.0
    %6515 = vmatprep.subr.mxu0 0.0
    %6516 = vmatpush1.msra.mxu0 0.0
    %6517 = vmatprep.subr.mxu0 0.0
    %6518 = vmatpush1.msra.mxu0 0.0
    %6519 = vmatprep.subr.mxu0 0.0
    %6520 = vmatpush1.msra.mxu0 0.0
    %6521 = vmatprep.subr.mxu0 0.0
    %6522 = vmatpush1.msra.mxu0 0.0
    %6523 = vmatprep.subr.mxu0 0.0
    %6524 = vmatpush1.msra.mxu0 0.0
    %6525 = vmatprep.subr.mxu0 0.0
    %6526 = vmatpush1.msra.mxu0 %v6488
    %6527 = vmatprep.subr.mxu0 0.0
    %6528 = vmatpush1.msra.mxu0 %v6486
    %6529 = vmatprep.subr.mxu0 0.0
    %6530 = vmatpush2.msra.mxu0 0.0
    %6531 = vmatprep.subr.mxu0 0.0
    %6532 = vmatpush2.msra.mxu0 0.0
    %6533 = vmatprep.subr.mxu0 0.0
    %6534 = vmatpush2.msra.mxu0 0.0
    %6535 = vmatprep.subr.mxu0 0.0
    %6536 = vmatpush2.msra.mxu0 0.0
    %6537 = vmatprep.subr.mxu0 0.0
    %6538 = vmatpush2.msra.mxu0 0.0
    %6539 = vmatprep.subr.mxu0 0.0
    %6540 = vmatpush2.msra.mxu0 0.0
    %6541 = vmatprep.subr.mxu0 0.0
    %6542 = vmatpush2.msra.mxu0 0.0
    %6543 = vmatprep.subr.mxu0 0.0
    %6544 = vmatpush2.msra.mxu0 0.0
    %6545 = vmatprep.subr.mxu0 0.0
    %6546 = vmatpush2.msra.mxu0 0.0
    %6547 = vmatprep.subr.mxu0 0.0
    %6548 = vmatpush2.msra.mxu0 0.0
    %6549 = vmatprep.subr.mxu0 0.0
    %6550 = vmatpush2.msra.mxu0 0.0
    %6551 = vmatprep.subr.mxu0 0.0
    %6552 = vmatpush2.msra.mxu0 0.0
    %6553 = vmatprep.subr.mxu0 0.0
    %6554 = vmatpush2.msra.mxu0 0.0
    %6555 = vmatprep.subr.mxu0 0.0
    %6556 = vmatpush2.msra.mxu0 0.0
    %6557 = vmatprep.subr.mxu0 0.0
    %6558 = vmatpush2.msra.mxu0 0.0
    %6559 = vmatprep.subr.mxu0 0.0
    %6560 = vmatpush2.msra.mxu0 0.0
    %6561 = vmatprep.mubr.f32.mxu0 0.0
    %6562 = vmatmul.mubr.f32.gmra.mxu0 %v6492
    %v6563 = vpop.f32.mrf.mxu0
    %v6564 = vadd.f32 0.0, %v6563
    %v6565 = vpop.f32.mrf.mxu0
    %6566 = vmatprep.mubr.f32.mxu0 0.0
    %6567 = vmatmul.mubr.f32.gmra.mxu0 %v6495
    %v6568 = vpop.f32.mrf.mxu0
    %v6569 = vadd.f32 0.0, %v6568
    %v6570 = vpop.f32.mrf.mxu0
    %6571 = vdwg.mxu0
    %v6572 = vpack.c.bf16 %v6482, %v6477
    %v6573 = vpack.c.bf16 %v6569, %v6564
    %v6578 = vunpack.c.l.b16 %v5198
    %v6579 = vunpack.c.l.b16 %v5199
    %v6580 = vunpack.c.l.b16 %v5200
    %v6581 = vunpack.c.l.b16 %v5201
    %v6582 = vpack.c.b16 %v6579, %v6578
    %v6583 = vpack.c.b16 %v6581, %v6580
    %v6587 = vsel %vm2019, %v6572, 0
    %v6590 = vsel %vm2019, %v6573, 0
    %6592 = vmatprep.subr.bf16.mxu0 0
    %6593 = vmatpush1.bf16.msra.mxu0 0
    %6594 = vmatprep.subr.bf16.mxu0 0
    %6595 = vmatpush1.bf16.msra.mxu0 0
    %6596 = vmatprep.subr.bf16.mxu0 0
    %6597 = vmatpush1.bf16.msra.mxu0 0
    %6598 = vmatprep.subr.bf16.mxu0 0
    %6599 = vmatpush1.bf16.msra.mxu0 0
    %6600 = vmatprep.subr.bf16.mxu0 0
    %6601 = vmatpush1.bf16.msra.mxu0 0
    %6602 = vmatprep.subr.bf16.mxu0 0
    %6603 = vmatpush1.bf16.msra.mxu0 0
    %6604 = vmatprep.subr.bf16.mxu0 0
    %6605 = vmatpush1.bf16.msra.mxu0 %v6583
    %6606 = vmatprep.subr.bf16.mxu0 0
    %6607 = vmatpush1.bf16.msra.mxu0 %v6582
    %6608 = vmatprep.subr.bf16.mxu0 0
    %6609 = vmatpush2.bf16.msra.mxu0 0
    %6610 = vmatprep.subr.bf16.mxu0 0
    %6611 = vmatpush2.bf16.msra.mxu0 0
    %6612 = vmatprep.subr.bf16.mxu0 0
    %6613 = vmatpush2.bf16.msra.mxu0 0
    %6614 = vmatprep.subr.bf16.mxu0 0
    %6615 = vmatpush2.bf16.msra.mxu0 0
    %6616 = vmatprep.subr.bf16.mxu0 0
    %6617 = vmatpush2.bf16.msra.mxu0 0
    %6618 = vmatprep.subr.bf16.mxu0 0
    %6619 = vmatpush2.bf16.msra.mxu0 0
    %6620 = vmatprep.subr.bf16.mxu0 0
    %6621 = vmatpush2.bf16.msra.mxu0 0
    %6622 = vmatprep.subr.bf16.mxu0 0
    %6623 = vmatpush2.bf16.msra.mxu0 0
    %6624 = vmatprep.mubr.bf16.mxu0 0
    %6625 = vmatmul.mubr.bf16.gmra.mxu0 %v6587
    %v6626 = vpop.f32.mrf.mxu0
    %v6627 = vadd.f32 0.0, %v6626
    %v6628 = vpop.f32.mrf.mxu0
    %v6629 = vpop.f32.mrf.mxu0
    %v6630 = vadd.f32 0.0, %v6629
    %v6631 = vpop.f32.mrf.mxu0
    %6632 = vmatprep.mubr.bf16.mxu0 0
    %6633 = vmatmul.mubr.bf16.gmra.mxu0 %v6590
    %v6634 = vpop.f32.mrf.mxu0
    %v6635 = vadd.f32 0.0, %v6634
    %v6636 = vpop.f32.mrf.mxu0
    %v6637 = vpop.f32.mrf.mxu0
    %v6638 = vadd.f32 0.0, %v6637
    %v6639 = vpop.f32.mrf.mxu0
    %6640 = vdwg.mxu0
    %v6641 = vadd.f32 %v6160, %v6627
    %v6642 = vadd.f32 %v6161, %v6630
    %v6643 = vadd.f32 %v6162, %v6635
    %v6644 = vadd.f32 %v6163, %v6638
    %6645 = vrot.lane.b32.xlu0 %v5122, 32
    %v6646 = vpop.permute.xlu0 %6645
    %6647 = vrot.lane.b32.xlu0 %v5126, 32
    %v6648 = vpop.permute.xlu0 %6647
    %6649 = vrot.lane.b32.xlu0 %v5124, 32
    %v6650 = vpop.permute.xlu0 %6649
    %6651 = vrot.lane.b32.xlu0 %v5128, 32
    %v6652 = vpop.permute.xlu0 %6651
    %v6653 = vsel %vm2019, %v6646, 0
    %v6655 = vsel %vm2019, %v6648, 0
    %v6657 = vsel %vm2019, %v6650, 0
    %v6659 = vsel %vm2019, %v6652, 0
    %6661 = vmatprep.subr.mxu0 0.0
    %6662 = vmatpush1.xpose.msra.mxu0 0.0
    %6663 = vmatprep.subr.mxu0 0.0
    %6664 = vmatpush1.xpose.msra.mxu0 0.0
    %6665 = vmatprep.subr.mxu0 0.0
    %6666 = vmatpush1.xpose.msra.mxu0 0.0
    %6667 = vmatprep.subr.mxu0 0.0
    %6668 = vmatpush1.xpose.msra.mxu0 0.0
    %6669 = vmatprep.subr.mxu0 0.0
    %6670 = vmatpush1.xpose.msra.mxu0 0.0
    %6671 = vmatprep.subr.mxu0 0.0
    %6672 = vmatpush1.xpose.msra.mxu0 0.0
    %6673 = vmatprep.subr.mxu0 0.0
    %6674 = vmatpush1.xpose.msra.mxu0 0.0
    %6675 = vmatprep.subr.mxu0 0.0
    %6676 = vmatpush1.xpose.msra.mxu0 0.0
    %6677 = vmatprep.subr.mxu0 0.0
    %6678 = vmatpush1.xpose.msra.mxu0 0.0
    %6679 = vmatprep.subr.mxu0 0.0
    %6680 = vmatpush1.xpose.msra.mxu0 0.0
    %6681 = vmatprep.subr.mxu0 0.0
    %6682 = vmatpush1.xpose.msra.mxu0 0.0
    %6683 = vmatprep.subr.mxu0 0.0
    %6684 = vmatpush1.xpose.msra.mxu0 0.0
    %6685 = vmatprep.subr.mxu0 0.0
    %6686 = vmatpush1.xpose.msra.mxu0 0.0
    %6687 = vmatprep.subr.mxu0 0.0
    %6688 = vmatpush1.xpose.msra.mxu0 0.0
    %6689 = vmatprep.subr.mxu0 0.0
    %6690 = vmatpush1.xpose.msra.mxu0 %v6659
    %6691 = vmatprep.subr.mxu0 0.0
    %6692 = vmatpush1.xpose.msra.mxu0 %v6657
    %6693 = vmatprep.subr.mxu0 0.0
    %6694 = vmatpush2.xpose.msra.mxu0 0.0
    %6695 = vmatprep.subr.mxu0 0.0
    %6696 = vmatpush2.xpose.msra.mxu0 0.0
    %6697 = vmatprep.subr.mxu0 0.0
    %6698 = vmatpush2.xpose.msra.mxu0 0.0
    %6699 = vmatprep.subr.mxu0 0.0
    %6700 = vmatpush2.xpose.msra.mxu0 0.0
    %6701 = vmatprep.subr.mxu0 0.0
    %6702 = vmatpush2.xpose.msra.mxu0 0.0
    %6703 = vmatprep.subr.mxu0 0.0
    %6704 = vmatpush2.xpose.msra.mxu0 0.0
    %6705 = vmatprep.subr.mxu0 0.0
    %6706 = vmatpush2.xpose.msra.mxu0 0.0
    %6707 = vmatprep.subr.mxu0 0.0
    %6708 = vmatpush2.xpose.msra.mxu0 0.0
    %6709 = vmatprep.subr.mxu0 0.0
    %6710 = vmatpush2.xpose.msra.mxu0 0.0
    %6711 = vmatprep.subr.mxu0 0.0
    %6712 = vmatpush2.xpose.msra.mxu0 0.0
    %6713 = vmatprep.subr.mxu0 0.0
    %6714 = vmatpush2.xpose.msra.mxu0 0.0
    %6715 = vmatprep.subr.mxu0 0.0
    %6716 = vmatpush2.xpose.msra.mxu0 0.0
    %6717 = vmatprep.subr.mxu0 0.0
    %6718 = vmatpush2.xpose.msra.mxu0 0.0
    %6719 = vmatprep.subr.mxu0 0.0
    %6720 = vmatpush2.xpose.msra.mxu0 0.0
    %6721 = vmatprep.subr.mxu0 0.0
    %6722 = vmatpush2.xpose.msra.mxu0 0.0
    %6723 = vmatprep.subr.mxu0 0.0
    %6724 = vmatpush2.xpose.msra.mxu0 0.0
    %6725 = vmatprep.mubr.f32.mxu0 0.0
    %6726 = vmatmul.mubr.f32.gmra.mxu0 %v6653
    %v6727 = vpop.f32.mrf.mxu0
    %v6728 = vadd.f32 0.0, %v6727
    %v6729 = vpop.f32.mrf.mxu0
    %6730 = vmatprep.mubr.f32.mxu0 0.0
    %6731 = vmatmul.mubr.f32.gmra.mxu0 %v6655
    %v6732 = vpop.f32.mrf.mxu0
    %v6733 = vadd.f32 0.0, %v6732
    %v6734 = vpop.f32.mrf.mxu0
    %6735 = vdwg.mxu0
    %6736 = vrot.lane.b32.xlu0 %v5132, 32
    %v6737 = vpop.permute.xlu0 %6736
    %6738 = vrot.lane.b32.xlu0 %v5136, 32
    %v6739 = vpop.permute.xlu0 %6738
    %6740 = vrot.lane.b32.xlu0 %v5134, 32
    %v6741 = vpop.permute.xlu0 %6740
    %6742 = vrot.lane.b32.xlu0 %v5138, 32
    %v6743 = vpop.permute.xlu0 %6742
    %v6744 = vsel %vm2019, %v6737, 0
    %v6746 = vsel %vm2019, %v6739, 0
    %v6748 = vsel %vm2019, %v6741, 0
    %v6750 = vsel %vm2019, %v6743, 0
    %6752 = vmatprep.subr.mxu0 0.0
    %6753 = vmatpush1.xpose.msra.mxu0 0.0
    %6754 = vmatprep.subr.mxu0 0.0
    %6755 = vmatpush1.xpose.msra.mxu0 0.0
    %6756 = vmatprep.subr.mxu0 0.0
    %6757 = vmatpush1.xpose.msra.mxu0 0.0
    %6758 = vmatprep.subr.mxu0 0.0
    %6759 = vmatpush1.xpose.msra.mxu0 0.0
    %6760 = vmatprep.subr.mxu0 0.0
    %6761 = vmatpush1.xpose.msra.mxu0 0.0
    %6762 = vmatprep.subr.mxu0 0.0
    %6763 = vmatpush1.xpose.msra.mxu0 0.0
    %6764 = vmatprep.subr.mxu0 0.0
    %6765 = vmatpush1.xpose.msra.mxu0 0.0
    %6766 = vmatprep.subr.mxu0 0.0
    %6767 = vmatpush1.xpose.msra.mxu0 0.0
    %6768 = vmatprep.subr.mxu0 0.0
    %6769 = vmatpush1.xpose.msra.mxu0 0.0
    %6770 = vmatprep.subr.mxu0 0.0
    %6771 = vmatpush1.xpose.msra.mxu0 0.0
    %6772 = vmatprep.subr.mxu0 0.0
    %6773 = vmatpush1.xpose.msra.mxu0 0.0
    %6774 = vmatprep.subr.mxu0 0.0
    %6775 = vmatpush1.xpose.msra.mxu0 0.0
    %6776 = vmatprep.subr.mxu0 0.0
    %6777 = vmatpush1.xpose.msra.mxu0 0.0
    %6778 = vmatprep.subr.mxu0 0.0
    %6779 = vmatpush1.xpose.msra.mxu0 0.0
    %6780 = vmatprep.subr.mxu0 0.0
    %6781 = vmatpush1.xpose.msra.mxu0 %v6750
    %6782 = vmatprep.subr.mxu0 0.0
    %6783 = vmatpush1.xpose.msra.mxu0 %v6748
    %6784 = vmatprep.subr.mxu0 0.0
    %6785 = vmatpush2.xpose.msra.mxu0 0.0
    %6786 = vmatprep.subr.mxu0 0.0
    %6787 = vmatpush2.xpose.msra.mxu0 0.0
    %6788 = vmatprep.subr.mxu0 0.0
    %6789 = vmatpush2.xpose.msra.mxu0 0.0
    %6790 = vmatprep.subr.mxu0 0.0
    %6791 = vmatpush2.xpose.msra.mxu0 0.0
    %6792 = vmatprep.subr.mxu0 0.0
    %6793 = vmatpush2.xpose.msra.mxu0 0.0
    %6794 = vmatprep.subr.mxu0 0.0
    %6795 = vmatpush2.xpose.msra.mxu0 0.0
    %6796 = vmatprep.subr.mxu0 0.0
    %6797 = vmatpush2.xpose.msra.mxu0 0.0
    %6798 = vmatprep.subr.mxu0 0.0
    %6799 = vmatpush2.xpose.msra.mxu0 0.0
    %6800 = vmatprep.subr.mxu0 0.0
    %6801 = vmatpush2.xpose.msra.mxu0 0.0
    %6802 = vmatprep.subr.mxu0 0.0
    %6803 = vmatpush2.xpose.msra.mxu0 0.0
    %6804 = vmatprep.subr.mxu0 0.0
    %6805 = vmatpush2.xpose.msra.mxu0 0.0
    %6806 = vmatprep.subr.mxu0 0.0
    %6807 = vmatpush2.xpose.msra.mxu0 0.0
    %6808 = vmatprep.subr.mxu0 0.0
    %6809 = vmatpush2.xpose.msra.mxu0 0.0
    %6810 = vmatprep.subr.mxu0 0.0
    %6811 = vmatpush2.xpose.msra.mxu0 0.0
    %6812 = vmatprep.subr.mxu0 0.0
    %6813 = vmatpush2.xpose.msra.mxu0 0.0
    %6814 = vmatprep.subr.mxu0 0.0
    %6815 = vmatpush2.xpose.msra.mxu0 0.0
    %6816 = vmatprep.mubr.f32.mxu0 0.0
    %6817 = vmatmul.mubr.f32.gmra.mxu0 %v6744
    %v6818 = vpop.f32.mrf.mxu0
    %v6819 = vadd.f32 0.0, %v6818
    %v6820 = vpop.f32.mrf.mxu0
    %6821 = vmatprep.mubr.f32.mxu0 0.0
    %6822 = vmatmul.mubr.f32.gmra.mxu0 %v6746
    %v6823 = vpop.f32.mrf.mxu0
    %v6824 = vadd.f32 0.0, %v6823
    %v6825 = vpop.f32.mrf.mxu0
    %6826 = vdwg.mxu0
    %v6827 = vmul.f32 %v6728, 0.17677669
    %v6828 = vmul.f32 %v6733, 0.17677669
    %v6829 = vmul.f32 %v6819, 0.17677669
    %v6830 = vmul.f32 %v6824, 0.17677669
    %v6831 = vadd.f32 %v6827, %v1643
    %v6832 = vadd.f32 %v6828, %v1643
    %v6833 = vadd.f32 %v6829, %v1643
    %v6834 = vadd.f32 %v6830, %v1643
    %v6835 = vsel %vm2202, %v6831, -inf
    %6836 = vmax.xlane.f32.xlu0 %v6835
    %v6837 = vpop.xlane.xlu0 %6836
    %v6838 = vsel %vm2202, %v6832, -inf
    %6839 = vmax.xlane.f32.xlu0 %v6838
    %v6840 = vpop.xlane.xlu0 %6839
    %v6841 = vsel %vm2202, %v6833, -inf
    %6842 = vmax.xlane.f32.xlu0 %v6841
    %v6843 = vpop.xlane.xlu0 %6842
    %v6844 = vsel %vm2202, %v6834, -inf
    %6845 = vmax.xlane.f32.xlu0 %v6844
    %v6846 = vpop.xlane.xlu0 %6845
    %v6847 = vsub.f32 %v6831, %v6837
    %v6848 = vsub.f32 %v6832, %v6840
    %v6849 = vsub.f32 %v6833, %v6843
    %v6850 = vsub.f32 %v6834, %v6846
    %v6851 = vmul.f32 %v6847, 1.442695
    %v6852 = vpow.pop %v6851
    %v6853 = vmul.f32 %v6848, 1.442695
    %v6854 = vpow.pop %v6853
    %v6855 = vmul.f32 %v6849, 1.442695
    %v6856 = vpow.pop %v6855
    %v6857 = vmul.f32 %v6850, 1.442695
    %v6858 = vpow.pop %v6857
    %v6859 = vsel %vm2202, %v6852, 0.0
    %6860 = vadd.xlane.f32.xlu0 %v6859
    %v6861 = vpop.xlane.xlu0 %6860
    %v6862 = vsel %vm2202, %v6854, 0.0
    %6863 = vadd.xlane.f32.xlu0 %v6862
    %v6864 = vpop.xlane.xlu0 %6863
    %v6865 = vsel %vm2202, %v6856, 0.0
    %6866 = vadd.xlane.f32.xlu0 %v6865
    %v6867 = vpop.xlane.xlu0 %6866
    %v6868 = vsel %vm2202, %v6858, 0.0
    %6869 = vadd.xlane.f32.xlu0 %v6868
    %v6870 = vpop.xlane.xlu0 %6869
    %v6871 = vrcp.pop %v6861
    %v6872 = vrcp.pop %v6864
    %v6873 = vrcp.pop %v6867
    %v6874 = vrcp.pop %v6870
    %v6875 = vmul.f32 %v6852, %v6871
    %v6876 = vmul.f32 %v6854, %v6872
    %v6877 = vmul.f32 %v6856, %v6873
    %v6878 = vmul.f32 %v6858, %v6874
    %6879 = vrot.lane.b32.xlu0 %v5175, 32
    %v6880 = vpop.permute.xlu0 %6879
    %6881 = vrot.lane.b32.xlu0 %v5178, 32
    %v6882 = vpop.permute.xlu0 %6881
    %v6886 = vsel %vm2202, %v6875, 0
    %v6889 = vsel %vm2202, %v6876, 0
    %6891 = vmatprep.subr.mxu0 0.0
    %6892 = vmatpush1.msra.mxu0 0.0
    %6893 = vmatprep.subr.mxu0 0.0
    %6894 = vmatpush1.msra.mxu0 0.0
    %6895 = vmatprep.subr.mxu0 0.0
    %6896 = vmatpush1.msra.mxu0 0.0
    %6897 = vmatprep.subr.mxu0 0.0
    %6898 = vmatpush1.msra.mxu0 0.0
    %6899 = vmatprep.subr.mxu0 0.0
    %6900 = vmatpush1.msra.mxu0 0.0
    %6901 = vmatprep.subr.mxu0 0.0
    %6902 = vmatpush1.msra.mxu0 0.0
    %6903 = vmatprep.subr.mxu0 0.0
    %6904 = vmatpush1.msra.mxu0 0.0
    %6905 = vmatprep.subr.mxu0 0.0
    %6906 = vmatpush1.msra.mxu0 0.0
    %6907 = vmatprep.subr.mxu0 0.0
    %6908 = vmatpush1.msra.mxu0 0.0
    %6909 = vmatprep.subr.mxu0 0.0
    %6910 = vmatpush1.msra.mxu0 0.0
    %6911 = vmatprep.subr.mxu0 0.0
    %6912 = vmatpush1.msra.mxu0 0.0
    %6913 = vmatprep.subr.mxu0 0.0
    %6914 = vmatpush1.msra.mxu0 0.0
    %6915 = vmatprep.subr.mxu0 0.0
    %6916 = vmatpush1.msra.mxu0 0.0
    %6917 = vmatprep.subr.mxu0 0.0
    %6918 = vmatpush1.msra.mxu0 0.0
    %6919 = vmatprep.subr.mxu0 0.0
    %6920 = vmatpush1.msra.mxu0 %v6882
    %6921 = vmatprep.subr.mxu0 0.0
    %6922 = vmatpush1.msra.mxu0 %v6880
    %6923 = vmatprep.subr.mxu0 0.0
    %6924 = vmatpush2.msra.mxu0 0.0
    %6925 = vmatprep.subr.mxu0 0.0
    %6926 = vmatpush2.msra.mxu0 0.0
    %6927 = vmatprep.subr.mxu0 0.0
    %6928 = vmatpush2.msra.mxu0 0.0
    %6929 = vmatprep.subr.mxu0 0.0
    %6930 = vmatpush2.msra.mxu0 0.0
    %6931 = vmatprep.subr.mxu0 0.0
    %6932 = vmatpush2.msra.mxu0 0.0
    %6933 = vmatprep.subr.mxu0 0.0
    %6934 = vmatpush2.msra.mxu0 0.0
    %6935 = vmatprep.subr.mxu0 0.0
    %6936 = vmatpush2.msra.mxu0 0.0
    %6937 = vmatprep.subr.mxu0 0.0
    %6938 = vmatpush2.msra.mxu0 0.0
    %6939 = vmatprep.subr.mxu0 0.0
    %6940 = vmatpush2.msra.mxu0 0.0
    %6941 = vmatprep.subr.mxu0 0.0
    %6942 = vmatpush2.msra.mxu0 0.0
    %6943 = vmatprep.subr.mxu0 0.0
    %6944 = vmatpush2.msra.mxu0 0.0
    %6945 = vmatprep.subr.mxu0 0.0
    %6946 = vmatpush2.msra.mxu0 0.0
    %6947 = vmatprep.subr.mxu0 0.0
    %6948 = vmatpush2.msra.mxu0 0.0
    %6949 = vmatprep.subr.mxu0 0.0
    %6950 = vmatpush2.msra.mxu0 0.0
    %6951 = vmatprep.subr.mxu0 0.0
    %6952 = vmatpush2.msra.mxu0 0.0
    %6953 = vmatprep.subr.mxu0 0.0
    %6954 = vmatpush2.msra.mxu0 0.0
    %6955 = vmatprep.mubr.f32.mxu0 0.0
    %6956 = vmatmul.mubr.f32.gmra.mxu0 %v6886
    %v6957 = vpop.f32.mrf.mxu0
    %v6958 = vadd.f32 0.0, %v6957
    %v6959 = vpop.f32.mrf.mxu0
    %6960 = vmatprep.mubr.f32.mxu0 0.0
    %6961 = vmatmul.mubr.f32.gmra.mxu0 %v6889
    %v6962 = vpop.f32.mrf.mxu0
    %v6963 = vadd.f32 0.0, %v6962
    %v6964 = vpop.f32.mrf.mxu0
    %6965 = vdwg.mxu0
    %6966 = vrot.lane.b32.xlu0 %v5183, 32
    %v6967 = vpop.permute.xlu0 %6966
    %6968 = vrot.lane.b32.xlu0 %v5186, 32
    %v6969 = vpop.permute.xlu0 %6968
    %v6973 = vsel %vm2202, %v6877, 0
    %v6976 = vsel %vm2202, %v6878, 0
    %6978 = vmatprep.subr.mxu0 0.0
    %6979 = vmatpush1.msra.mxu0 0.0
    %6980 = vmatprep.subr.mxu0 0.0
    %6981 = vmatpush1.msra.mxu0 0.0
    %6982 = vmatprep.subr.mxu0 0.0
    %6983 = vmatpush1.msra.mxu0 0.0
    %6984 = vmatprep.subr.mxu0 0.0
    %6985 = vmatpush1.msra.mxu0 0.0
    %6986 = vmatprep.subr.mxu0 0.0
    %6987 = vmatpush1.msra.mxu0 0.0
    %6988 = vmatprep.subr.mxu0 0.0
    %6989 = vmatpush1.msra.mxu0 0.0
    %6990 = vmatprep.subr.mxu0 0.0
    %6991 = vmatpush1.msra.mxu0 0.0
    %6992 = vmatprep.subr.mxu0 0.0
    %6993 = vmatpush1.msra.mxu0 0.0
    %6994 = vmatprep.subr.mxu0 0.0
    %6995 = vmatpush1.msra.mxu0 0.0
    %6996 = vmatprep.subr.mxu0 0.0
    %6997 = vmatpush1.msra.mxu0 0.0
    %6998 = vmatprep.subr.mxu0 0.0
    %6999 = vmatpush1.msra.mxu0 0.0
    %7000 = vmatprep.subr.mxu0 0.0
    %7001 = vmatpush1.msra.mxu0 0.0
    %7002 = vmatprep.subr.mxu0 0.0
    %7003 = vmatpush1.msra.mxu0 0.0
    %7004 = vmatprep.subr.mxu0 0.0
    %7005 = vmatpush1.msra.mxu0 0.0
    %7006 = vmatprep.subr.mxu0 0.0
    %7007 = vmatpush1.msra.mxu0 %v6969
    %7008 = vmatprep.subr.mxu0 0.0
    %7009 = vmatpush1.msra.mxu0 %v6967
    %7010 = vmatprep.subr.mxu0 0.0
    %7011 = vmatpush2.msra.mxu0 0.0
    %7012 = vmatprep.subr.mxu0 0.0
    %7013 = vmatpush2.msra.mxu0 0.0
    %7014 = vmatprep.subr.mxu0 0.0
    %7015 = vmatpush2.msra.mxu0 0.0
    %7016 = vmatprep.subr.mxu0 0.0
    %7017 = vmatpush2.msra.mxu0 0.0
    %7018 = vmatprep.subr.mxu0 0.0
    %7019 = vmatpush2.msra.mxu0 0.0
    %7020 = vmatprep.subr.mxu0 0.0
    %7021 = vmatpush2.msra.mxu0 0.0
    %7022 = vmatprep.subr.mxu0 0.0
    %7023 = vmatpush2.msra.mxu0 0.0
    %7024 = vmatprep.subr.mxu0 0.0
    %7025 = vmatpush2.msra.mxu0 0.0
    %7026 = vmatprep.subr.mxu0 0.0
    %7027 = vmatpush2.msra.mxu0 0.0
    %7028 = vmatprep.subr.mxu0 0.0
    %7029 = vmatpush2.msra.mxu0 0.0
    %7030 = vmatprep.subr.mxu0 0.0
    %7031 = vmatpush2.msra.mxu0 0.0
    %7032 = vmatprep.subr.mxu0 0.0
    %7033 = vmatpush2.msra.mxu0 0.0
    %7034 = vmatprep.subr.mxu0 0.0
    %7035 = vmatpush2.msra.mxu0 0.0
    %7036 = vmatprep.subr.mxu0 0.0
    %7037 = vmatpush2.msra.mxu0 0.0
    %7038 = vmatprep.subr.mxu0 0.0
    %7039 = vmatpush2.msra.mxu0 0.0
    %7040 = vmatprep.subr.mxu0 0.0
    %7041 = vmatpush2.msra.mxu0 0.0
    %7042 = vmatprep.mubr.f32.mxu0 0.0
    %7043 = vmatmul.mubr.f32.gmra.mxu0 %v6973
    %v7044 = vpop.f32.mrf.mxu0
    %v7045 = vadd.f32 0.0, %v7044
    %v7046 = vpop.f32.mrf.mxu0
    %7047 = vmatprep.mubr.f32.mxu0 0.0
    %7048 = vmatmul.mubr.f32.gmra.mxu0 %v6976
    %v7049 = vpop.f32.mrf.mxu0
    %v7050 = vadd.f32 0.0, %v7049
    %v7051 = vpop.f32.mrf.mxu0
    %7052 = vdwg.mxu0
    %v7053 = vpack.c.bf16 %v6963, %v6958
    %v7054 = vpack.c.bf16 %v7050, %v7045
    %v7059 = vunpack.c.l.b16 %v5202
    %v7060 = vunpack.c.l.b16 %v5203
    %v7061 = vunpack.c.l.b16 %v5204
    %v7062 = vunpack.c.l.b16 %v5205
    %v7063 = vpack.c.b16 %v7060, %v7059
    %v7064 = vpack.c.b16 %v7062, %v7061
    %v7068 = vsel %vm2019, %v7053, 0
    %v7071 = vsel %vm2019, %v7054, 0
    %7073 = vmatprep.subr.bf16.mxu0 0
    %7074 = vmatpush1.bf16.msra.mxu0 0
    %7075 = vmatprep.subr.bf16.mxu0 0
    %7076 = vmatpush1.bf16.msra.mxu0 0
    %7077 = vmatprep.subr.bf16.mxu0 0
    %7078 = vmatpush1.bf16.msra.mxu0 0
    %7079 = vmatprep.subr.bf16.mxu0 0
    %7080 = vmatpush1.bf16.msra.mxu0 0
    %7081 = vmatprep.subr.bf16.mxu0 0
    %7082 = vmatpush1.bf16.msra.mxu0 0
    %7083 = vmatprep.subr.bf16.mxu0 0
    %7084 = vmatpush1.bf16.msra.mxu0 0
    %7085 = vmatprep.subr.bf16.mxu0 0
    %7086 = vmatpush1.bf16.msra.mxu0 %v7064
    %7087 = vmatprep.subr.bf16.mxu0 0
    %7088 = vmatpush1.bf16.msra.mxu0 %v7063
    %7089 = vmatprep.subr.bf16.mxu0 0
    %7090 = vmatpush2.bf16.msra.mxu0 0
    %7091 = vmatprep.subr.bf16.mxu0 0
    %7092 = vmatpush2.bf16.msra.mxu0 0
    %7093 = vmatprep.subr.bf16.mxu0 0
    %7094 = vmatpush2.bf16.msra.mxu0 0
    %7095 = vmatprep.subr.bf16.mxu0 0
    %7096 = vmatpush2.bf16.msra.mxu0 0
    %7097 = vmatprep.subr.bf16.mxu0 0
    %7098 = vmatpush2.bf16.msra.mxu0 0
    %7099 = vmatprep.subr.bf16.mxu0 0
    %7100 = vmatpush2.bf16.msra.mxu0 0
    %7101 = vmatprep.subr.bf16.mxu0 0
    %7102 = vmatpush2.bf16.msra.mxu0 0
    %7103 = vmatprep.subr.bf16.mxu0 0
    %7104 = vmatpush2.bf16.msra.mxu0 0
    %7105 = vmatprep.mubr.bf16.mxu0 0
    %7106 = vmatmul.mubr.bf16.gmra.mxu0 %v7068
    %v7107 = vpop.f32.mrf.mxu0
    %v7108 = vadd.f32 0.0, %v7107
    %v7109 = vpop.f32.mrf.mxu0
    %v7110 = vpop.f32.mrf.mxu0
    %v7111 = vadd.f32 0.0, %v7110
    %v7112 = vpop.f32.mrf.mxu0
    %7113 = vmatprep.mubr.bf16.mxu0 0
    %7114 = vmatmul.mubr.bf16.gmra.mxu0 %v7071
    %v7115 = vpop.f32.mrf.mxu0
    %v7116 = vadd.f32 0.0, %v7115
    %v7117 = vpop.f32.mrf.mxu0
    %v7118 = vpop.f32.mrf.mxu0
    %v7119 = vadd.f32 0.0, %v7118
    %v7120 = vpop.f32.mrf.mxu0
    %7121 = vdwg.mxu0
    %v7122 = vadd.f32 %v6641, %v7108
    %v7123 = vadd.f32 %v6642, %v7111
    %v7124 = vadd.f32 %v6643, %v7116
    %v7125 = vadd.f32 %v6644, %v7119
    %s7126 = scalar_lea.vmem [#allocation14], 1
    %v7127 = vld [vmem:[%s7126] sm:$0x1]
    %s7128 = scalar_lea.vmem %s10, 1
    %v7129 = vld [vmem:[%s7128] sm:$0x1]
    %7130 = vadd.xlane.f32.xlu0 %v7122
    %v7131 = vpop.xlane.xlu0 %7130
    %7132 = vadd.xlane.f32.xlu0 %v7123
    %v7133 = vpop.xlane.xlu0 %7132
    %7134 = vadd.xlane.f32.xlu0 %v7124
    %v7135 = vpop.xlane.xlu0 %7134
    %7136 = vadd.xlane.f32.xlu0 %v7125
    %v7137 = vpop.xlane.xlu0 %7136
    %v7138 = vmul.f32 %v7131, %v1654
    %v7139 = vmul.f32 %v7133, %v1654
    %v7140 = vmul.f32 %v7135, %v1654
    %v7141 = vmul.f32 %v7137, %v1654
    %v7142 = vsub.f32 %v7122, %v7138
    %v7143 = vsub.f32 %v7123, %v7139
    %v7144 = vsub.f32 %v7124, %v7140
    %v7145 = vsub.f32 %v7125, %v7141
    %v7146 = vmul.f32 %v7142, %v7142
    %v7147 = vmul.f32 %v7143, %v7143
    %v7148 = vmul.f32 %v7144, %v7144
    %v7149 = vmul.f32 %v7145, %v7145
    %7150 = vadd.xlane.f32.xlu0 %v7146
    %v7151 = vpop.xlane.xlu0 %7150
    %7152 = vadd.xlane.f32.xlu0 %v7147
    %v7153 = vpop.xlane.xlu0 %7152
    %7154 = vadd.xlane.f32.xlu0 %v7148
    %v7155 = vpop.xlane.xlu0 %7154
    %7156 = vadd.xlane.f32.xlu0 %v7149
    %v7157 = vpop.xlane.xlu0 %7156
    %v7158 = vmul.f32 %v7151, %v1654
    %v7159 = vmul.f32 %v7153, %v1654
    %v7160 = vmul.f32 %v7155, %v1654
    %v7161 = vmul.f32 %v7157, %v1654
    %v7162 = vadd.f32 %v7158, 1e-05
    %v7163 = vadd.f32 %v7159, 1e-05
    %v7164 = vadd.f32 %v7160, 1e-05
    %v7165 = vadd.f32 %v7161, 1e-05
    %v7166 = vrsqrt.pop %v7162
    %v7167 = vrsqrt.pop %v7163
    %v7168 = vrsqrt.pop %v7164
    %v7169 = vrsqrt.pop %v7165
    %v7170 = vmul.f32 %v7142, %v7166
    %v7171 = vmul.f32 %v7143, %v7167
    %v7172 = vmul.f32 %v7144, %v7168
    %v7173 = vmul.f32 %v7145, %v7169
    %v7175 = vlaneseq
    %v7176 = vshrl.u32 %v7175, 7
    %v7177 = vsub.s32 0, %v7176
    %v7178 = vrot.slane %v7127, %v7177
    %v7180 = vmul.f32 %v7170, %v7178
    %v7181 = vmul.f32 %v7171, %v7178
    %v7182 = vmul.f32 %v7172, %v7178
    %v7183 = vmul.f32 %v7173, %v7178
    %v7185 = vlaneseq
    %v7186 = vshrl.u32 %v7185, 7
    %v7187 = vsub.s32 0, %v7186
    %v7188 = vrot.slane %v7129, %v7187
    %v7190 = vadd.f32 %v7180, %v7188
    %v7191 = vadd.f32 %v7181, %v7188
    %v7192 = vadd.f32 %v7182, %v7188
    %v7193 = vadd.f32 %v7183, %v7188
    %v7194 = vpack.c.bf16 %v7191, %v7190
    %v7195 = vpack.c.bf16 %v7193, %v7192
    %s7196 = scalar_lea.vmem [#allocation16], 256
    %v7197 = vld [vmem:[%s7196] sm:$0xff]
    %v7198 = vld [vmem:[%s7196 + $0x8] sm:$0xff]
    %v7199 = vld [vmem:[%s7196 + $0x10] sm:$0xff]
    %v7200 = vld [vmem:[%s7196 + $0x18] sm:$0xff]
    %v7201 = vld [vmem:[%s7196 + $0x20] sm:$0xff]
    %v7202 = vld [vmem:[%s7196 + $0x28] sm:$0xff]
    %v7203 = vld [vmem:[%s7196 + $0x30] sm:$0xff]
    %v7204 = vld [vmem:[%s7196 + $0x38] sm:$0xff]
    %v7205 = vld [vmem:[%s7196 + $0x40] sm:$0xff]
    %v7206 = vld [vmem:[%s7196 + $0x48] sm:$0xff]
    %v7207 = vld [vmem:[%s7196 + $0x50] sm:$0xff]
    %v7208 = vld [vmem:[%s7196 + $0x58] sm:$0xff]
    %v7209 = vld [vmem:[%s7196 + $0x60] sm:$0xff]
    %v7210 = vld [vmem:[%s7196 + $0x68] sm:$0xff]
    %v7211 = vld [vmem:[%s7196 + $0x70] sm:$0xff]
    %v7212 = vld [vmem:[%s7196 + $0x78] sm:$0xff]
    %v7213 = vld [vmem:[%s7196 + $0x80] sm:$0xff]
    %v7214 = vld [vmem:[%s7196 + $0x88] sm:$0xff]
    %v7215 = vld [vmem:[%s7196 + $0x90] sm:$0xff]
    %v7216 = vld [vmem:[%s7196 + $0x98] sm:$0xff]
    %v7217 = vld [vmem:[%s7196 + $0xa0] sm:$0xff]
    %v7218 = vld [vmem:[%s7196 + $0xa8] sm:$0xff]
    %v7219 = vld [vmem:[%s7196 + $0xb0] sm:$0xff]
    %v7220 = vld [vmem:[%s7196 + $0xb8] sm:$0xff]
    %v7221 = vld [vmem:[%s7196 + $0xc0] sm:$0xff]
    %v7222 = vld [vmem:[%s7196 + $0xc8] sm:$0xff]
    %v7223 = vld [vmem:[%s7196 + $0xd0] sm:$0xff]
    %v7224 = vld [vmem:[%s7196 + $0xd8] sm:$0xff]
    %v7225 = vld [vmem:[%s7196 + $0xe0] sm:$0xff]
    %v7226 = vld [vmem:[%s7196 + $0xe8] sm:$0xff]
    %v7227 = vld [vmem:[%s7196 + $0xf0] sm:$0xff]
    %v7228 = vld [vmem:[%s7196 + $0xf8] sm:$0xff]
    %s7229 = scalar_lea.vmem %s12, 4
    %v7230 = vld [vmem:[%s7229] sm:$0xf]
    %v7232 = vlaneseq
    %v7233 = vshrl.u32 %v7232, 7
    %v7234 = vsub.s32 0, %v7233
    %v7235 = vrot.slane %v7230, %v7234
    %v7236 = vlaneseq
    %v7237 = vshrl.u32 %v7236, 7
    %v7238 = vsub.s32 1, %v7237
    %v7239 = vrot.slane %v7230, %v7238
    %v7240 = vlaneseq
    %v7241 = vshrl.u32 %v7240, 7
    %v7242 = vsub.s32 2, %v7241
    %v7243 = vrot.slane %v7230, %v7242
    %v7244 = vlaneseq
    %v7245 = vshrl.u32 %v7244, 7
    %v7246 = vsub.s32 3, %v7245
    %v7247 = vrot.slane %v7230, %v7246
    %v7284 = vunpack.c.l.b16 %v7197
    %v7285 = vunpack.c.h.b16 %v7197
    %v7286 = vunpack.c.l.b16 %v7198
    %v7287 = vunpack.c.h.b16 %v7198
    %v7288 = vunpack.c.l.b16 %v7199
    %v7289 = vunpack.c.h.b16 %v7199
    %v7290 = vunpack.c.l.b16 %v7200
    %v7291 = vunpack.c.h.b16 %v7200
    %v7292 = vunpack.c.l.b16 %v7201
    %v7293 = vunpack.c.h.b16 %v7201
    %v7294 = vunpack.c.l.b16 %v7202
    %v7295 = vunpack.c.h.b16 %v7202
    %v7296 = vunpack.c.l.b16 %v7203
    %v7297 = vunpack.c.h.b16 %v7203
    %v7298 = vunpack.c.l.b16 %v7204
    %v7299 = vunpack.c.h.b16 %v7204
    %v7300 = vunpack.c.l.b16 %v7205
    %v7301 = vunpack.c.h.b16 %v7205
    %v7302 = vunpack.c.l.b16 %v7206
    %v7303 = vunpack.c.h.b16 %v7206
    %v7304 = vunpack.c.l.b16 %v7207
    %v7305 = vunpack.c.h.b16 %v7207
    %v7306 = vunpack.c.l.b16 %v7208
    %v7307 = vunpack.c.h.b16 %v7208
    %v7308 = vunpack.c.l.b16 %v7209
    %v7309 = vunpack.c.h.b16 %v7209
    %v7310 = vunpack.c.l.b16 %v7210
    %v7311 = vunpack.c.h.b16 %v7210
    %v7312 = vunpack.c.l.b16 %v7211
    %v7313 = vunpack.c.h.b16 %v7211
    %v7314 = vunpack.c.l.b16 %v7212
    %v7315 = vunpack.c.h.b16 %v7212
    %v7316 = vunpack.c.l.b16 %v7213
    %v7317 = vunpack.c.h.b16 %v7213
    %v7318 = vunpack.c.l.b16 %v7214
    %v7319 = vunpack.c.h.b16 %v7214
    %v7320 = vunpack.c.l.b16 %v7215
    %v7321 = vunpack.c.h.b16 %v7215
    %v7322 = vunpack.c.l.b16 %v7216
    %v7323 = vunpack.c.h.b16 %v7216
    %v7324 = vunpack.c.l.b16 %v7217
    %v7325 = vunpack.c.h.b16 %v7217
    %v7326 = vunpack.c.l.b16 %v7218
    %v7327 = vunpack.c.h.b16 %v7218
    %v7328 = vunpack.c.l.b16 %v7219
    %v7329 = vunpack.c.h.b16 %v7219
    %v7330 = vunpack.c.l.b16 %v7220
    %v7331 = vunpack.c.h.b16 %v7220
    %v7332 = vunpack.c.l.b16 %v7221
    %v7333 = vunpack.c.h.b16 %v7221
    %v7334 = vunpack.c.l.b16 %v7222
    %v7335 = vunpack.c.h.b16 %v7222
    %v7336 = vunpack.c.l.b16 %v7223
    %v7337 = vunpack.c.h.b16 %v7223
    %v7338 = vunpack.c.l.b16 %v7224
    %v7339 = vunpack.c.h.b16 %v7224
    %v7340 = vunpack.c.l.b16 %v7225
    %v7341 = vunpack.c.h.b16 %v7225
    %v7342 = vunpack.c.l.b16 %v7226
    %v7343 = vunpack.c.h.b16 %v7226
    %v7344 = vunpack.c.l.b16 %v7227
    %v7345 = vunpack.c.h.b16 %v7227
    %v7346 = vunpack.c.l.b16 %v7228
    %v7347 = vunpack.c.h.b16 %v7228
    %v7348 = vpack.c.b16 %v7288, %v7284
    %v7349 = vpack.c.b16 %v7289, %v7285
    %v7350 = vpack.c.b16 %v7290, %v7286
    %v7351 = vpack.c.b16 %v7291, %v7287
    %v7352 = vpack.c.b16 %v7296, %v7292
    %v7353 = vpack.c.b16 %v7297, %v7293
    %v7354 = vpack.c.b16 %v7298, %v7294
    %v7355 = vpack.c.b16 %v7299, %v7295
    %v7356 = vpack.c.b16 %v7304, %v7300
    %v7357 = vpack.c.b16 %v7305, %v7301
    %v7358 = vpack.c.b16 %v7306, %v7302
    %v7359 = vpack.c.b16 %v7307, %v7303
    %v7360 = vpack.c.b16 %v7312, %v7308
    %v7361 = vpack.c.b16 %v7313, %v7309
    %v7362 = vpack.c.b16 %v7314, %v7310
    %v7363 = vpack.c.b16 %v7315, %v7311
    %v7364 = vpack.c.b16 %v7320, %v7316
    %v7365 = vpack.c.b16 %v7321, %v7317
    %v7366 = vpack.c.b16 %v7322, %v7318
    %v7367 = vpack.c.b16 %v7323, %v7319
    %v7368 = vpack.c.b16 %v7328, %v7324
    %v7369 = vpack.c.b16 %v7329, %v7325
    %v7370 = vpack.c.b16 %v7330, %v7326
    %v7371 = vpack.c.b16 %v7331, %v7327
    %v7372 = vpack.c.b16 %v7336, %v7332
    %v7373 = vpack.c.b16 %v7337, %v7333
    %v7374 = vpack.c.b16 %v7338, %v7334
    %v7375 = vpack.c.b16 %v7339, %v7335
    %v7376 = vpack.c.b16 %v7344, %v7340
    %v7377 = vpack.c.b16 %v7345, %v7341
    %v7378 = vpack.c.b16 %v7346, %v7342
    %v7379 = vpack.c.b16 %v7347, %v7343
    %7412 = vmatprep.subr.bf16.mxu0 %v7377
    %7413 = vmatpush1.bf16.msra.mxu0 %v7376
    %7414 = vmatprep.subr.bf16.mxu0 %v7373
    %7415 = vmatpush1.bf16.msra.mxu0 %v7372
    %7416 = vmatprep.subr.bf16.mxu0 %v7369
    %7417 = vmatpush1.bf16.msra.mxu0 %v7368
    %7418 = vmatprep.subr.bf16.mxu0 %v7365
    %7419 = vmatpush1.bf16.msra.mxu0 %v7364
    %7420 = vmatprep.subr.bf16.mxu0 %v7361
    %7421 = vmatpush1.bf16.msra.mxu0 %v7360
    %7422 = vmatprep.subr.bf16.mxu0 %v7357
    %7423 = vmatpush1.bf16.msra.mxu0 %v7356
    %7424 = vmatprep.subr.bf16.mxu0 %v7353
    %7425 = vmatpush1.bf16.msra.mxu0 %v7352
    %7426 = vmatprep.subr.bf16.mxu0 %v7349
    %7427 = vmatpush1.bf16.msra.mxu0 %v7348
    %7428 = vmatprep.subr.bf16.mxu0 0
    %7429 = vmatpush2.bf16.msra.mxu0 0
    %7430 = vmatprep.subr.bf16.mxu0 0
    %7431 = vmatpush2.bf16.msra.mxu0 0
    %7432 = vmatprep.subr.bf16.mxu0 0
    %7433 = vmatpush2.bf16.msra.mxu0 0
    %7434 = vmatprep.subr.bf16.mxu0 0
    %7435 = vmatpush2.bf16.msra.mxu0 0
    %7436 = vmatprep.subr.bf16.mxu0 0
    %7437 = vmatpush2.bf16.msra.mxu0 0
    %7438 = vmatprep.subr.bf16.mxu0 0
    %7439 = vmatpush2.bf16.msra.mxu0 0
    %7440 = vmatprep.subr.bf16.mxu0 0
    %7441 = vmatpush2.bf16.msra.mxu0 0
    %7442 = vmatprep.subr.bf16.mxu0 0
    %7443 = vmatpush2.bf16.msra.mxu0 0
    %7444 = vmatprep.mubr.bf16.mxu0 0
    %7445 = vmatmul.mubr.bf16.gmra.mxu0 %v7194
    %v7446 = vpop.f32.mrf.mxu0
    %v7447 = vadd.f32 %v7235, %v7446
    %v7448 = vpop.f32.mrf.mxu0
    %v7449 = vadd.f32 %v7239, %v7448
    %v7450 = vpop.f32.mrf.mxu0
    %v7451 = vadd.f32 %v7235, %v7450
    %v7452 = vpop.f32.mrf.mxu0
    %v7453 = vadd.f32 %v7239, %v7452
    %7454 = vmatprep.mubr.bf16.mxu0 0
    %7455 = vmatmul.mubr.bf16.gmra.mxu0 %v7195
    %v7456 = vpop.f32.mrf.mxu0
    %v7457 = vadd.f32 %v7235, %v7456
    %v7458 = vpop.f32.mrf.mxu0
    %v7459 = vadd.f32 %v7239, %v7458
    %v7460 = vpop.f32.mrf.mxu0
    %v7461 = vadd.f32 %v7235, %v7460
    %v7462 = vpop.f32.mrf.mxu0
    %v7463 = vadd.f32 %v7239, %v7462
    %7464 = vdwg.mxu0
    %7465 = vmatprep.subr.bf16.mxu0 %v7379
    %7466 = vmatpush1.bf16.msra.mxu0 %v7378
    %7467 = vmatprep.subr.bf16.mxu0 %v7375
    %7468 = vmatpush1.bf16.msra.mxu0 %v7374
    %7469 = vmatprep.subr.bf16.mxu0 %v7371
    %7470 = vmatpush1.bf16.msra.mxu0 %v7370
    %7471 = vmatprep.subr.bf16.mxu0 %v7367
    %7472 = vmatpush1.bf16.msra.mxu0 %v7366
    %7473 = vmatprep.subr.bf16.mxu0 %v7363
    %7474 = vmatpush1.bf16.msra.mxu0 %v7362
    %7475 = vmatprep.subr.bf16.mxu0 %v7359
    %7476 = vmatpush1.bf16.msra.mxu0 %v7358
    %7477 = vmatprep.subr.bf16.mxu0 %v7355
    %7478 = vmatpush1.bf16.msra.mxu0 %v7354
    %7479 = vmatprep.subr.bf16.mxu0 %v7351
    %7480 = vmatpush1.bf16.msra.mxu0 %v7350
    %7481 = vmatprep.subr.bf16.mxu0 0
    %7482 = vmatpush2.bf16.msra.mxu0 0
    %7483 = vmatprep.subr.bf16.mxu0 0
    %7484 = vmatpush2.bf16.msra.mxu0 0
    %7485 = vmatprep.subr.bf16.mxu0 0
    %7486 = vmatpush2.bf16.msra.mxu0 0
    %7487 = vmatprep.subr.bf16.mxu0 0
    %7488 = vmatpush2.bf16.msra.mxu0 0
    %7489 = vmatprep.subr.bf16.mxu0 0
    %7490 = vmatpush2.bf16.msra.mxu0 0
    %7491 = vmatprep.subr.bf16.mxu0 0
    %7492 = vmatpush2.bf16.msra.mxu0 0
    %7493 = vmatprep.subr.bf16.mxu0 0
    %7494 = vmatpush2.bf16.msra.mxu0 0
    %7495 = vmatprep.subr.bf16.mxu0 0
    %7496 = vmatpush2.bf16.msra.mxu0 0
    %7497 = vmatprep.mubr.bf16.mxu0 0
    %7498 = vmatmul.mubr.bf16.gmra.mxu0 %v7194
    %v7499 = vpop.f32.mrf.mxu0
    %v7500 = vadd.f32 %v7243, %v7499
    %v7501 = vpop.f32.mrf.mxu0
    %v7502 = vadd.f32 %v7247, %v7501
    %v7503 = vpop.f32.mrf.mxu0
    %v7504 = vadd.f32 %v7243, %v7503
    %v7505 = vpop.f32.mrf.mxu0
    %v7506 = vadd.f32 %v7247, %v7505
    %7507 = vmatprep.mubr.bf16.mxu0 0
    %7508 = vmatmul.mubr.bf16.gmra.mxu0 %v7195
    %v7509 = vpop.f32.mrf.mxu0
    %v7510 = vadd.f32 %v7243, %v7509
    %v7511 = vpop.f32.mrf.mxu0
    %v7512 = vadd.f32 %v7247, %v7511
    %v7513 = vpop.f32.mrf.mxu0
    %v7514 = vadd.f32 %v7243, %v7513
    %v7515 = vpop.f32.mrf.mxu0
    %v7516 = vadd.f32 %v7247, %v7515
    %7517 = vdwg.mxu0
    %v7518 = vmul.f32 %v7447, %v7447
    %v7519 = vmul.f32 %v7449, %v7449
    %v7520 = vmul.f32 %v7500, %v7500
    %v7521 = vmul.f32 %v7502, %v7502
    %v7522 = vmul.f32 %v7451, %v7451
    %v7523 = vmul.f32 %v7453, %v7453
    %v7524 = vmul.f32 %v7504, %v7504
    %v7525 = vmul.f32 %v7506, %v7506
    %v7526 = vmul.f32 %v7457, %v7457
    %v7527 = vmul.f32 %v7459, %v7459
    %v7528 = vmul.f32 %v7510, %v7510
    %v7529 = vmul.f32 %v7512, %v7512
    %v7530 = vmul.f32 %v7461, %v7461
    %v7531 = vmul.f32 %v7463, %v7463
    %v7532 = vmul.f32 %v7514, %v7514
    %v7533 = vmul.f32 %v7516, %v7516
    %v7534 = vmul.f32 %v7447, %v7518
    %v7535 = vmul.f32 %v7449, %v7519
    %v7536 = vmul.f32 %v7500, %v7520
    %v7537 = vmul.f32 %v7502, %v7521
    %v7538 = vmul.f32 %v7451, %v7522
    %v7539 = vmul.f32 %v7453, %v7523
    %v7540 = vmul.f32 %v7504, %v7524
    %v7541 = vmul.f32 %v7506, %v7525
    %v7542 = vmul.f32 %v7457, %v7526
    %v7543 = vmul.f32 %v7459, %v7527
    %v7544 = vmul.f32 %v7510, %v7528
    %v7545 = vmul.f32 %v7512, %v7529
    %v7546 = vmul.f32 %v7461, %v7530
    %v7547 = vmul.f32 %v7463, %v7531
    %v7548 = vmul.f32 %v7514, %v7532
    %v7549 = vmul.f32 %v7516, %v7533
    %v7550 = vmul.f32 %v7534, 0.044715
    %v7551 = vmul.f32 %v7535, 0.044715
    %v7552 = vmul.f32 %v7536, 0.044715
    %v7553 = vmul.f32 %v7537, 0.044715
    %v7554 = vmul.f32 %v7538, 0.044715
    %v7555 = vmul.f32 %v7539, 0.044715
    %v7556 = vmul.f32 %v7540, 0.044715
    %v7557 = vmul.f32 %v7541, 0.044715
    %v7558 = vmul.f32 %v7542, 0.044715
    %v7559 = vmul.f32 %v7543, 0.044715
    %v7560 = vmul.f32 %v7544, 0.044715
    %v7561 = vmul.f32 %v7545, 0.044715
    %v7562 = vmul.f32 %v7546, 0.044715
    %v7563 = vmul.f32 %v7547, 0.044715
    %v7564 = vmul.f32 %v7548, 0.044715
    %v7565 = vmul.f32 %v7549, 0.044715
    %v7566 = vadd.f32 %v7447, %v7550
    %v7567 = vadd.f32 %v7449, %v7551
    %v7568 = vadd.f32 %v7500, %v7552
    %v7569 = vadd.f32 %v7502, %v7553
    %v7570 = vadd.f32 %v7451, %v7554
    %v7571 = vadd.f32 %v7453, %v7555
    %v7572 = vadd.f32 %v7504, %v7556
    %v7573 = vadd.f32 %v7506, %v7557
    %v7574 = vadd.f32 %v7457, %v7558
    %v7575 = vadd.f32 %v7459, %v7559
    %v7576 = vadd.f32 %v7510, %v7560
    %v7577 = vadd.f32 %v7512, %v7561
    %v7578 = vadd.f32 %v7461, %v7562
    %v7579 = vadd.f32 %v7463, %v7563
    %v7580 = vadd.f32 %v7514, %v7564
    %v7581 = vadd.f32 %v7516, %v7565
    %v7582 = vmul.f32 %v7566, 0.7978846
    %v7583 = vmul.f32 %v7567, 0.7978846
    %v7584 = vmul.f32 %v7568, 0.7978846
    %v7585 = vmul.f32 %v7569, 0.7978846
    %v7586 = vmul.f32 %v7570, 0.7978846
    %v7587 = vmul.f32 %v7571, 0.7978846
    %v7588 = vmul.f32 %v7572, 0.7978846
    %v7589 = vmul.f32 %v7573, 0.7978846
    %v7590 = vmul.f32 %v7574, 0.7978846
    %v7591 = vmul.f32 %v7575, 0.7978846
    %v7592 = vmul.f32 %v7576, 0.7978846
    %v7593 = vmul.f32 %v7577, 0.7978846
    %v7594 = vmul.f32 %v7578, 0.7978846
    %v7595 = vmul.f32 %v7579, 0.7978846
    %v7596 = vmul.f32 %v7580, 0.7978846
    %v7597 = vmul.f32 %v7581, 0.7978846
    %v7598 = vtanh.pop %v7582
    %v7599 = vtanh.pop %v7583
    %v7600 = vtanh.pop %v7584
    %v7601 = vtanh.pop %v7585
    %v7602 = vtanh.pop %v7586
    %v7603 = vtanh.pop %v7587
    %v7604 = vtanh.pop %v7588
    %v7605 = vtanh.pop %v7589
    %v7606 = vtanh.pop %v7590
    %v7607 = vtanh.pop %v7591
    %v7608 = vtanh.pop %v7592
    %v7609 = vtanh.pop %v7593
    %v7610 = vtanh.pop %v7594
    %v7611 = vtanh.pop %v7595
    %v7612 = vtanh.pop %v7596
    %v7613 = vtanh.pop %v7597
    %v7614 = vadd.f32 %v7598, 1.0
    %v7615 = vadd.f32 %v7599, 1.0
    %v7616 = vadd.f32 %v7600, 1.0
    %v7617 = vadd.f32 %v7601, 1.0
    %v7618 = vadd.f32 %v7602, 1.0
    %v7619 = vadd.f32 %v7603, 1.0
    %v7620 = vadd.f32 %v7604, 1.0
    %v7621 = vadd.f32 %v7605, 1.0
    %v7622 = vadd.f32 %v7606, 1.0
    %v7623 = vadd.f32 %v7607, 1.0
    %v7624 = vadd.f32 %v7608, 1.0
    %v7625 = vadd.f32 %v7609, 1.0
    %v7626 = vadd.f32 %v7610, 1.0
    %v7627 = vadd.f32 %v7611, 1.0
    %v7628 = vadd.f32 %v7612, 1.0
    %v7629 = vadd.f32 %v7613, 1.0
    %v7630 = vmul.f32 %v7614, 0.5
    %v7631 = vmul.f32 %v7615, 0.5
    %v7632 = vmul.f32 %v7616, 0.5
    %v7633 = vmul.f32 %v7617, 0.5
    %v7634 = vmul.f32 %v7618, 0.5
    %v7635 = vmul.f32 %v7619, 0.5
    %v7636 = vmul.f32 %v7620, 0.5
    %v7637 = vmul.f32 %v7621, 0.5
    %v7638 = vmul.f32 %v7622, 0.5
    %v7639 = vmul.f32 %v7623, 0.5
    %v7640 = vmul.f32 %v7624, 0.5
    %v7641 = vmul.f32 %v7625, 0.5
    %v7642 = vmul.f32 %v7626, 0.5
    %v7643 = vmul.f32 %v7627, 0.5
    %v7644 = vmul.f32 %v7628, 0.5
    %v7645 = vmul.f32 %v7629, 0.5
    %v7646 = vmul.f32 %v7447, %v7630
    %v7647 = vmul.f32 %v7449, %v7631
    %v7648 = vmul.f32 %v7500, %v7632
    %v7649 = vmul.f32 %v7502, %v7633
    %v7650 = vmul.f32 %v7451, %v7634
    %v7651 = vmul.f32 %v7453, %v7635
    %v7652 = vmul.f32 %v7504, %v7636
    %v7653 = vmul.f32 %v7506, %v7637
    %v7654 = vmul.f32 %v7457, %v7638
    %v7655 = vmul.f32 %v7459, %v7639
    %v7656 = vmul.f32 %v7510, %v7640
    %v7657 = vmul.f32 %v7512, %v7641
    %v7658 = vmul.f32 %v7461, %v7642
    %v7659 = vmul.f32 %v7463, %v7643
    %v7660 = vmul.f32 %v7514, %v7644
    %v7661 = vmul.f32 %v7516, %v7645
    %v7662 = vpack.c.bf16 %v7650, %v7646
    %v7663 = vpack.c.bf16 %v7651, %v7647
    %v7664 = vpack.c.bf16 %v7652, %v7648
    %v7665 = vpack.c.bf16 %v7653, %v7649
    %v7666 = vpack.c.bf16 %v7658, %v7654
    %v7667 = vpack.c.bf16 %v7659, %v7655
    %v7668 = vpack.c.bf16 %v7660, %v7656
    %v7669 = vpack.c.bf16 %v7661, %v7657
    %s7670 = scalar_lea.vmem [#allocation17], 256
    %v7671 = vld [vmem:[%s7670] sm:$0xf]
    %v7672 = vld [vmem:[%s7670 + $0x4] sm:$0xf]
    %v7673 = vld [vmem:[%s7670 + $0x8] sm:$0xf]
    %v7674 = vld [vmem:[%s7670 + $0xc] sm:$0xf]
    %v7675 = vld [vmem:[%s7670 + $0x10] sm:$0xf]
    %v7676 = vld [vmem:[%s7670 + $0x14] sm:$0xf]
    %v7677 = vld [vmem:[%s7670 + $0x18] sm:$0xf]
    %v7678 = vld [vmem:[%s7670 + $0x1c] sm:$0xf]
    %v7679 = vld [vmem:[%s7670 + $0x20] sm:$0xf]
    %v7680 = vld [vmem:[%s7670 + $0x24] sm:$0xf]
    %v7681 = vld [vmem:[%s7670 + $0x28] sm:$0xf]
    %v7682 = vld [vmem:[%s7670 + $0x2c] sm:$0xf]
    %v7683 = vld [vmem:[%s7670 + $0x30] sm:$0xf]
    %v7684 = vld [vmem:[%s7670 + $0x34] sm:$0xf]
    %v7685 = vld [vmem:[%s7670 + $0x38] sm:$0xf]
    %v7686 = vld [vmem:[%s7670 + $0x3c] sm:$0xf]
    %v7687 = vld [vmem:[%s7670 + $0x40] sm:$0xf]
    %v7688 = vld [vmem:[%s7670 + $0x44] sm:$0xf]
    %v7689 = vld [vmem:[%s7670 + $0x48] sm:$0xf]
    %v7690 = vld [vmem:[%s7670 + $0x4c] sm:$0xf]
    %v7691 = vld [vmem:[%s7670 + $0x50] sm:$0xf]
    %v7692 = vld [vmem:[%s7670 + $0x54] sm:$0xf]
    %v7693 = vld [vmem:[%s7670 + $0x58] sm:$0xf]
    %v7694 = vld [vmem:[%s7670 + $0x5c] sm:$0xf]
    %v7695 = vld [vmem:[%s7670 + $0x60] sm:$0xf]
    %v7696 = vld [vmem:[%s7670 + $0x64] sm:$0xf]
    %v7697 = vld [vmem:[%s7670 + $0x68] sm:$0xf]
    %v7698 = vld [vmem:[%s7670 + $0x6c] sm:$0xf]
    %v7699 = vld [vmem:[%s7670 + $0x70] sm:$0xf]
    %v7700 = vld [vmem:[%s7670 + $0x74] sm:$0xf]
    %v7701 = vld [vmem:[%s7670 + $0x78] sm:$0xf]
    %v7702 = vld [vmem:[%s7670 + $0x7c] sm:$0xf]
    %v7703 = vld [vmem:[%s7670 + $0x80] sm:$0xf]
    %v7704 = vld [vmem:[%s7670 + $0x84] sm:$0xf]
    %v7705 = vld [vmem:[%s7670 + $0x88] sm:$0xf]
    %v7706 = vld [vmem:[%s7670 + $0x8c] sm:$0xf]
    %v7707 = vld [vmem:[%s7670 + $0x90] sm:$0xf]
    %v7708 = vld [vmem:[%s7670 + $0x94] sm:$0xf]
    %v7709 = vld [vmem:[%s7670 + $0x98] sm:$0xf]
    %v7710 = vld [vmem:[%s7670 + $0x9c] sm:$0xf]
    %v7711 = vld [vmem:[%s7670 + $0xa0] sm:$0xf]
    %v7712 = vld [vmem:[%s7670 + $0xa4] sm:$0xf]
    %v7713 = vld [vmem:[%s7670 + $0xa8] sm:$0xf]
    %v7714 = vld [vmem:[%s7670 + $0xac] sm:$0xf]
    %v7715 = vld [vmem:[%s7670 + $0xb0] sm:$0xf]
    %v7716 = vld [vmem:[%s7670 + $0xb4] sm:$0xf]
    %v7717 = vld [vmem:[%s7670 + $0xb8] sm:$0xf]
    %v7718 = vld [vmem:[%s7670 + $0xbc] sm:$0xf]
    %v7719 = vld [vmem:[%s7670 + $0xc0] sm:$0xf]
    %v7720 = vld [vmem:[%s7670 + $0xc4] sm:$0xf]
    %v7721 = vld [vmem:[%s7670 + $0xc8] sm:$0xf]
    %v7722 = vld [vmem:[%s7670 + $0xcc] sm:$0xf]
    %v7723 = vld [vmem:[%s7670 + $0xd0] sm:$0xf]
    %v7724 = vld [vmem:[%s7670 + $0xd4] sm:$0xf]
    %v7725 = vld [vmem:[%s7670 + $0xd8] sm:$0xf]
    %v7726 = vld [vmem:[%s7670 + $0xdc] sm:$0xf]
    %v7727 = vld [vmem:[%s7670 + $0xe0] sm:$0xf]
    %v7728 = vld [vmem:[%s7670 + $0xe4] sm:$0xf]
    %v7729 = vld [vmem:[%s7670 + $0xe8] sm:$0xf]
    %v7730 = vld [vmem:[%s7670 + $0xec] sm:$0xf]
    %v7731 = vld [vmem:[%s7670 + $0xf0] sm:$0xf]
    %v7732 = vld [vmem:[%s7670 + $0xf4] sm:$0xf]
    %v7733 = vld [vmem:[%s7670 + $0xf8] sm:$0xf]
    %v7734 = vld [vmem:[%s7670 + $0xfc] sm:$0xf]
    %v7799 = vunpack.c.l.b16 %v7671
    %v7800 = vunpack.c.l.b16 %v7672
    %v7801 = vunpack.c.l.b16 %v7673
    %v7802 = vunpack.c.l.b16 %v7674
    %v7803 = vunpack.c.l.b16 %v7675
    %v7804 = vunpack.c.l.b16 %v7676
    %v7805 = vunpack.c.l.b16 %v7677
    %v7806 = vunpack.c.l.b16 %v7678
    %v7807 = vunpack.c.l.b16 %v7679
    %v7808 = vunpack.c.l.b16 %v7680
    %v7809 = vunpack.c.l.b16 %v7681
    %v7810 = vunpack.c.l.b16 %v7682
    %v7811 = vunpack.c.l.b16 %v7683
    %v7812 = vunpack.c.l.b16 %v7684
    %v7813 = vunpack.c.l.b16 %v7685
    %v7814 = vunpack.c.l.b16 %v7686
    %v7815 = vunpack.c.l.b16 %v7687
    %v7816 = vunpack.c.l.b16 %v7688
    %v7817 = vunpack.c.l.b16 %v7689
    %v7818 = vunpack.c.l.b16 %v7690
    %v7819 = vunpack.c.l.b16 %v7691
    %v7820 = vunpack.c.l.b16 %v7692
    %v7821 = vunpack.c.l.b16 %v7693
    %v7822 = vunpack.c.l.b16 %v7694
    %v7823 = vunpack.c.l.b16 %v7695
    %v7824 = vunpack.c.l.b16 %v7696
    %v7825 = vunpack.c.l.b16 %v7697
    %v7826 = vunpack.c.l.b16 %v7698
    %v7827 = vunpack.c.l.b16 %v7699
    %v7828 = vunpack.c.l.b16 %v7700
    %v7829 = vunpack.c.l.b16 %v7701
    %v7830 = vunpack.c.l.b16 %v7702
    %v7831 = vunpack.c.l.b16 %v7703
    %v7832 = vunpack.c.l.b16 %v7704
    %v7833 = vunpack.c.l.b16 %v7705
    %v7834 = vunpack.c.l.b16 %v7706
    %v7835 = vunpack.c.l.b16 %v7707
    %v7836 = vunpack.c.l.b16 %v7708
    %v7837 = vunpack.c.l.b16 %v7709
    %v7838 = vunpack.c.l.b16 %v7710
    %v7839 = vunpack.c.l.b16 %v7711
    %v7840 = vunpack.c.l.b16 %v7712
    %v7841 = vunpack.c.l.b16 %v7713
    %v7842 = vunpack.c.l.b16 %v7714
    %v7843 = vunpack.c.l.b16 %v7715
    %v7844 = vunpack.c.l.b16 %v7716
    %v7845 = vunpack.c.l.b16 %v7717
    %v7846 = vunpack.c.l.b16 %v7718
    %v7847 = vunpack.c.l.b16 %v7719
    %v7848 = vunpack.c.l.b16 %v7720
    %v7849 = vunpack.c.l.b16 %v7721
    %v7850 = vunpack.c.l.b16 %v7722
    %v7851 = vunpack.c.l.b16 %v7723
    %v7852 = vunpack.c.l.b16 %v7724
    %v7853 = vunpack.c.l.b16 %v7725
    %v7854 = vunpack.c.l.b16 %v7726
    %v7855 = vunpack.c.l.b16 %v7727
    %v7856 = vunpack.c.l.b16 %v7728
    %v7857 = vunpack.c.l.b16 %v7729
    %v7858 = vunpack.c.l.b16 %v7730
    %v7859 = vunpack.c.l.b16 %v7731
    %v7860 = vunpack.c.l.b16 %v7732
    %v7861 = vunpack.c.l.b16 %v7733
    %v7862 = vunpack.c.l.b16 %v7734
    %v7863 = vpack.c.b16 %v7800, %v7799
    %v7864 = vpack.c.b16 %v7802, %v7801
    %v7865 = vpack.c.b16 %v7804, %v7803
    %v7866 = vpack.c.b16 %v7806, %v7805
    %v7867 = vpack.c.b16 %v7808, %v7807
    %v7868 = vpack.c.b16 %v7810, %v7809
    %v7869 = vpack.c.b16 %v7812, %v7811
    %v7870 = vpack.c.b16 %v7814, %v7813
    %v7871 = vpack.c.b16 %v7816, %v7815
    %v7872 = vpack.c.b16 %v7818, %v7817
    %v7873 = vpack.c.b16 %v7820, %v7819
    %v7874 = vpack.c.b16 %v7822, %v7821
    %v7875 = vpack.c.b16 %v7824, %v7823
    %v7876 = vpack.c.b16 %v7826, %v7825
    %v7877 = vpack.c.b16 %v7828, %v7827
    %v7878 = vpack.c.b16 %v7830, %v7829
    %v7879 = vpack.c.b16 %v7832, %v7831
    %v7880 = vpack.c.b16 %v7834, %v7833
    %v7881 = vpack.c.b16 %v7836, %v7835
    %v7882 = vpack.c.b16 %v7838, %v7837
    %v7883 = vpack.c.b16 %v7840, %v7839
    %v7884 = vpack.c.b16 %v7842, %v7841
    %v7885 = vpack.c.b16 %v7844, %v7843
    %v7886 = vpack.c.b16 %v7846, %v7845
    %v7887 = vpack.c.b16 %v7848, %v7847
    %v7888 = vpack.c.b16 %v7850, %v7849
    %v7889 = vpack.c.b16 %v7852, %v7851
    %v7890 = vpack.c.b16 %v7854, %v7853
    %v7891 = vpack.c.b16 %v7856, %v7855
    %v7892 = vpack.c.b16 %v7858, %v7857
    %v7893 = vpack.c.b16 %v7860, %v7859
    %v7894 = vpack.c.b16 %v7862, %v7861
    %7927 = vmatprep.subr.bf16.mxu0 0
    %7928 = vmatpush1.bf16.msra.mxu0 %v7870
    %7929 = vmatprep.subr.bf16.mxu0 0
    %7930 = vmatpush1.bf16.msra.mxu0 %v7869
    %7931 = vmatprep.subr.bf16.mxu0 0
    %7932 = vmatpush1.bf16.msra.mxu0 %v7868
    %7933 = vmatprep.subr.bf16.mxu0 0
    %7934 = vmatpush1.bf16.msra.mxu0 %v7867
    %7935 = vmatprep.subr.bf16.mxu0 0
    %7936 = vmatpush1.bf16.msra.mxu0 %v7866
    %7937 = vmatprep.subr.bf16.mxu0 0
    %7938 = vmatpush1.bf16.msra.mxu0 %v7865
    %7939 = vmatprep.subr.bf16.mxu0 0
    %7940 = vmatpush1.bf16.msra.mxu0 %v7864
    %7941 = vmatprep.subr.bf16.mxu0 0
    %7942 = vmatpush1.bf16.msra.mxu0 %v7863
    %7943 = vmatprep.subr.bf16.mxu0 0
    %7944 = vmatpush2.bf16.msra.mxu0 %v7878
    %7945 = vmatprep.subr.bf16.mxu0 0
    %7946 = vmatpush2.bf16.msra.mxu0 %v7877
    %7947 = vmatprep.subr.bf16.mxu0 0
    %7948 = vmatpush2.bf16.msra.mxu0 %v7876
    %7949 = vmatprep.subr.bf16.mxu0 0
    %7950 = vmatpush2.bf16.msra.mxu0 %v7875
    %7951 = vmatprep.subr.bf16.mxu0 0
    %7952 = vmatpush2.bf16.msra.mxu0 %v7874
    %7953 = vmatprep.subr.bf16.mxu0 0
    %7954 = vmatpush2.bf16.msra.mxu0 %v7873
    %7955 = vmatprep.subr.bf16.mxu0 0
    %7956 = vmatpush2.bf16.msra.mxu0 %v7872
    %7957 = vmatprep.subr.bf16.mxu0 0
    %7958 = vmatpush2.bf16.msra.mxu0 %v7871
    %7959 = vmatprep.mubr.bf16.mxu0 %v7663
    %7960 = vmatmul.mubr.bf16.gmra.mxu0 %v7662
    %v7961 = vpop.f32.mrf.mxu0
    %v7962 = vadd.f32 0.0, %v7961
    %v7963 = vpop.f32.mrf.mxu0
    %v7964 = vpop.f32.mrf.mxu0
    %v7965 = vadd.f32 0.0, %v7964
    %v7966 = vpop.f32.mrf.mxu0
    %7967 = vmatprep.mubr.bf16.mxu0 %v7667
    %7968 = vmatmul.mubr.bf16.gmra.mxu0 %v7666
    %v7969 = vpop.f32.mrf.mxu0
    %v7970 = vadd.f32 0.0, %v7969
    %v7971 = vpop.f32.mrf.mxu0
    %v7972 = vpop.f32.mrf.mxu0
    %v7973 = vadd.f32 0.0, %v7972
    %v7974 = vpop.f32.mrf.mxu0
    %7975 = vdwg.mxu0
    %7976 = vmatprep.subr.bf16.mxu0 0
    %7977 = vmatpush1.bf16.msra.mxu0 %v7886
    %7978 = vmatprep.subr.bf16.mxu0 0
    %7979 = vmatpush1.bf16.msra.mxu0 %v7885
    %7980 = vmatprep.subr.bf16.mxu0 0
    %7981 = vmatpush1.bf16.msra.mxu0 %v7884
    %7982 = vmatprep.subr.bf16.mxu0 0
    %7983 = vmatpush1.bf16.msra.mxu0 %v7883
    %7984 = vmatprep.subr.bf16.mxu0 0
    %7985 = vmatpush1.bf16.msra.mxu0 %v7882
    %7986 = vmatprep.subr.bf16.mxu0 0
    %7987 = vmatpush1.bf16.msra.mxu0 %v7881
    %7988 = vmatprep.subr.bf16.mxu0 0
    %7989 = vmatpush1.bf16.msra.mxu0 %v7880
    %7990 = vmatprep.subr.bf16.mxu0 0
    %7991 = vmatpush1.bf16.msra.mxu0 %v7879
    %7992 = vmatprep.subr.bf16.mxu0 0
    %7993 = vmatpush2.bf16.msra.mxu0 %v7894
    %7994 = vmatprep.subr.bf16.mxu0 0
    %7995 = vmatpush2.bf16.msra.mxu0 %v7893
    %7996 = vmatprep.subr.bf16.mxu0 0
    %7997 = vmatpush2.bf16.msra.mxu0 %v7892
    %7998 = vmatprep.subr.bf16.mxu0 0
    %7999 = vmatpush2.bf16.msra.mxu0 %v7891
    %8000 = vmatprep.subr.bf16.mxu0 0
    %8001 = vmatpush2.bf16.msra.mxu0 %v7890
    %8002 = vmatprep.subr.bf16.mxu0 0
    %8003 = vmatpush2.bf16.msra.mxu0 %v7889
    %8004 = vmatprep.subr.bf16.mxu0 0
    %8005 = vmatpush2.bf16.msra.mxu0 %v7888
    %8006 = vmatprep.subr.bf16.mxu0 0
    %8007 = vmatpush2.bf16.msra.mxu0 %v7887
    %8008 = vmatprep.mubr.bf16.mxu0 %v7665
    %8009 = vmatmul.mubr.bf16.gmra.mxu0 %v7664
    %v8010 = vpop.f32.mrf.mxu0
    %v8011 = vadd.f32 %v7962, %v8010
    %v8012 = vpop.f32.mrf.mxu0
    %v8013 = vpop.f32.mrf.mxu0
    %v8014 = vadd.f32 %v7965, %v8013
    %v8015 = vpop.f32.mrf.mxu0
    %8016 = vmatprep.mubr.bf16.mxu0 %v7669
    %8017 = vmatmul.mubr.bf16.gmra.mxu0 %v7668
    %v8018 = vpop.f32.mrf.mxu0
    %v8019 = vadd.f32 %v7970, %v8018
    %v8020 = vpop.f32.mrf.mxu0
    %v8021 = vpop.f32.mrf.mxu0
    %v8022 = vadd.f32 %v7973, %v8021
    %v8023 = vpop.f32.mrf.mxu0
    %8024 = vdwg.mxu0
    %v8025 = vadd.f32 %v7122, %v8011
    %v8026 = vadd.f32 %v7123, %v8014
    %v8027 = vadd.f32 %v7124, %v8019
    %v8028 = vadd.f32 %v7125, %v8022
    %s8029 = scalar_lea.vmem %s14, 1
    %v8030 = vld [vmem:[%s8029] sm:$0x1]
    %v8032 = vlaneseq
    %v8033 = vshrl.u32 %v8032, 7
    %v8034 = vsub.s32 0, %v8033
    %v8035 = vrot.slane %v8030, %v8034
    %v8037 = vadd.f32 %v8025, %v8035
    %v8038 = vadd.f32 %v8026, %v8035
    %v8039 = vadd.f32 %v8027, %v8035
    %v8040 = vadd.f32 %v8028, %v8035
    %v8041 = vld [vmem:[%s15] sm:$0x1]
    %v8042 = vld [vmem:[%s16] sm:$0x1]
    %8043 = vadd.xlane.f32.xlu0 %v8037
    %v8044 = vpop.xlane.xlu0 %8043
    %8045 = vadd.xlane.f32.xlu0 %v8038
    %v8046 = vpop.xlane.xlu0 %8045
    %8047 = vadd.xlane.f32.xlu0 %v8039
    %v8048 = vpop.xlane.xlu0 %8047
    %8049 = vadd.xlane.f32.xlu0 %v8040
    %v8050 = vpop.xlane.xlu0 %8049
    %v8051 = vmul.f32 %v8044, %v1654
    %v8052 = vmul.f32 %v8046, %v1654
    %v8053 = vmul.f32 %v8048, %v1654
    %v8054 = vmul.f32 %v8050, %v1654
    %v8055 = vsub.f32 %v8037, %v8051
    %v8056 = vsub.f32 %v8038, %v8052
    %v8057 = vsub.f32 %v8039, %v8053
    %v8058 = vsub.f32 %v8040, %v8054
    %v8059 = vmul.f32 %v8055, %v8055
    %v8060 = vmul.f32 %v8056, %v8056
    %v8061 = vmul.f32 %v8057, %v8057
    %v8062 = vmul.f32 %v8058, %v8058
    %8063 = vadd.xlane.f32.xlu0 %v8059
    %v8064 = vpop.xlane.xlu0 %8063
    %8065 = vadd.xlane.f32.xlu0 %v8060
    %v8066 = vpop.xlane.xlu0 %8065
    %8067 = vadd.xlane.f32.xlu0 %v8061
    %v8068 = vpop.xlane.xlu0 %8067
    %8069 = vadd.xlane.f32.xlu0 %v8062
    %v8070 = vpop.xlane.xlu0 %8069
    %v8071 = vmul.f32 %v8064, %v1654
    %v8072 = vmul.f32 %v8066, %v1654
    %v8073 = vmul.f32 %v8068, %v1654
    %v8074 = vmul.f32 %v8070, %v1654
    %v8075 = vadd.f32 %v8071, 1e-05
    %v8076 = vadd.f32 %v8072, 1e-05
    %v8077 = vadd.f32 %v8073, 1e-05
    %v8078 = vadd.f32 %v8074, 1e-05
    %v8079 = vrsqrt.pop %v8075
    %v8080 = vrsqrt.pop %v8076
    %v8081 = vrsqrt.pop %v8077
    %v8082 = vrsqrt.pop %v8078
    %v8083 = vmul.f32 %v8055, %v8079
    %v8084 = vmul.f32 %v8056, %v8080
    %v8085 = vmul.f32 %v8057, %v8081
    %v8086 = vmul.f32 %v8058, %v8082
    %v8088 = vlaneseq
    %v8089 = vshrl.u32 %v8088, 7
    %v8090 = vsub.s32 0, %v8089
    %v8091 = vrot.slane %v8041, %v8090
    %v8093 = vmul.f32 %v8083, %v8091
    %v8094 = vmul.f32 %v8084, %v8091
    %v8095 = vmul.f32 %v8085, %v8091
    %v8096 = vmul.f32 %v8086, %v8091
    %v8098 = vlaneseq
    %v8099 = vshrl.u32 %v8098, 7
    %v8100 = vsub.s32 0, %v8099
    %v8101 = vrot.slane %v8042, %v8100
    %v8103 = vadd.f32 %v8093, %v8101
    %v8104 = vadd.f32 %v8094, %v8101
    %v8105 = vadd.f32 %v8095, %v8101
    %v8106 = vadd.f32 %v8096, %v8101
    %8107 = vst [vmem:[#allocation19] sm:$0xff] %v8103
    %8108 = vst [vmem:[#allocation19 + $0x8] sm:$0xff] %v8104
    %8109 = vst [vmem:[#allocation19 + $0x10] sm:$0xff] %v8105
    %8110 = vst [vmem:[#allocation19 + $0x18] sm:$0xff] %v8106
    // Predicated region
    $region110: #{tpu_custom_call.1} parent=1 // pred_check
      _
    $region111: #{tpu_custom_call.1} parent=1 // pred_check_branch
      %8112 = sbr.rel (0) target = $region113
    $region112: #{tpu_custom_call.1} parent=1 // pred_region
      %s8114 = ssub.s32 512, 512
      %8115 = vsyncadd [#allocation4], %s8114
      %s8116 = sshll.u32 [#allocation19], 4
      %s8117 = int_to_ptr.vmem [resolvable:$true] %s8116
      %8122 = dma.vmem_to_hbm [thread:$0]  %s8117, 512, %s17, [#allocation4], 128, 128, 8
    $region113: #{tpu_custom_call.1} parent=1 // pred_fallthru
      _
    // Predicated region
    $region114: #{tpu_custom_call.1} parent=1 // pred_check
      _
    $region115: #{tpu_custom_call.1} parent=1 // pred_check_branch
      %8124 = sbr.rel (0) target = $region117
    $region116: #{tpu_custom_call.1} parent=1 // pred_region
      %8125 = dma.done [#allocation4], 512
    $region117: #{tpu_custom_call.1} parent=1 // pred_fallthru
      _
    %8126 = vsyncpa [#allocation3], 1
    %8127 = vsyncpa [#allocation6], 1
    %8128 = vsyncpa [#allocation9], 1
    %8129 = vsyncpa [#allocation12], 1
    %8130 = vsyncpa [#allocation15], 1
    %8131 = vsyncpa [#allocation18], 1
    %8132 = vsyncpa [#allocation4], 1

</llo_original>
